<compile_context>
chip_gen: v5e
topology: v5e:2x2
jax: 0.10.0
libtpu: 0.0.40
codegen_flags: <defaults>
</compile_context>

<pallas_src>
import functools

import jax
import jax.numpy as jnp
from jax import lax
from jax.experimental import pallas as pl
from jax.experimental.pallas import tpu as pltpu

BN_EPS = 1e-5                 # PyTorch BatchNorm2d default
ACT_DTYPE = jnp.bfloat16      # activation / weight storage dtype


def _round_up(x, m):
    return (x + m - 1) // m * m


# ------------------------------------------------------------------ kernel ----

@functools.lru_cache(maxsize=None)
def _build_conv_kernel(N, H, W, Cin, Cout, th, use_bn, add_res, fuse_pred):
    """Fused 3x3 conv (+bias) [+BN batch-stats] +ReLU [+res] [+1x1-conv+tanh]."""
    T = H // th
    Wp = _round_up(W + 2, 8)           # sublane-aligned padded slab width
    ROWS = th * Wp                     # matmul M (includes discarded columns)
    count = float(N * H * W)           # BN pixel count (batch statistics)

    def kernel(*refs):
        idx = 0
        x_ref = refs[idx]; idx += 1                # (1, H, W, Cin) bf16, resident per image
        w_ref = refs[idx]; idx += 1                # (9*Cin, Cout)  bf16, resident
        b_ref = refs[idx]; idx += 1                # (1, Cout) f32
        if use_bn:
            g_ref = refs[idx]; idx += 1            # (1, Cout) f32
            beta_ref = refs[idx]; idx += 1         # (1, Cout) f32
        if add_res:
            r_ref = refs[idx]; idx += 1            # (1, th, W, Cout) bf16
        if fuse_pred:
            pw_ref = refs[idx]; idx += 1           # (1, 1, Cout) f32
            pb_ref = refs[idx]; idx += 1           # (1, 1) f32
        o_ref = refs[idx]; idx += 1                # (1, th, W, Cout) bf16 | (1, th, W) f32
        xpad_ref = refs[idx]; idx += 1             # (th+4, Wp, Cin) bf16 scratch
        if use_bn:
            ssum_ref = refs[idx]; idx += 1         # (1, Cout) f32 scratch
            ssq_ref = refs[idx]; idx += 1          # (1, Cout) f32 scratch

        p = pl.program_id(0)
        n = pl.program_id(1)
        t = pl.program_id(2)
        is_final = p == pl.num_programs(0) - 1

        # --- in-kernel "same" padding: zero halo scratch, copy rows from the
        #     VMEM-resident image (no HBM pad copy).  Columns 0 and W+1..Wp-1
        #     and the boundary halo rows stay zero.
        xpad_ref[...] = jnp.zeros_like(xpad_ref)
        xpad_ref[1:th + 1, 1:W + 1, :] = x_ref[0, pl.ds(t * th, th), :, :]

        @pl.when(t > 0)
        def _():                                   # top halo row from previous tile
            xpad_ref[0:1, 1:W + 1, :] = x_ref[0, pl.ds(t * th - 1, 1), :, :]

        @pl.when(t < T - 1)
        def _():                                   # bottom halo row from next tile
            xpad_ref[th + 1:th + 2, 1:W + 1, :] = x_ref[0, pl.ds(t * th + th, 1), :, :]

        # --- im2col with K = 9*Cin: 9 static row-offset slices of the flattened
        #     slab, lane-concatenated -> one big MXU matmul.
        flat = xpad_ref[...].reshape((th + 4) * Wp, Cin)
        taps = []
        for dy in range(3):                        # tap k = dy*3 + dx  (matches
            for dx in range(3):                    # PyTorch weight[:, :, dy, dx])
                o = dy * Wp + dx
                taps.append(flat[o:o + ROWS, :])
        patch = jnp.concatenate(taps, axis=-1)                       # (ROWS, 9*Cin) bf16
        conv = jnp.dot(patch, w_ref[...],
                       preferred_element_type=jnp.float32)           # (ROWS, Cout) f32
        conv = conv + b_ref[...]
        h = conv.reshape(th, Wp, Cout)[:, :W, :]                     # valid columns only

        if use_bn:
            @pl.when((p == 0) & (n == 0) & (t == 0))
            def _():
                ssum_ref[...] = jnp.zeros_like(ssum_ref)
                ssq_ref[...] = jnp.zeros_like(ssq_ref)

            @pl.when(p == 0)                       # phase 0: single-pass stats
            def _():
                s1 = jnp.sum(h, axis=(0, 1))
                s2 = jnp.sum(h * h, axis=(0, 1))
                ssum_ref[...] += s1[None, :]
                ssq_ref[...] += s2[None, :]

        @pl.when(is_final)                         # phase 1 (or the only phase)
        def _():
            hv = h
            if use_bn:
                mean = ssum_ref[...] * (1.0 / count)
                var = jnp.maximum(ssq_ref[...] * (1.0 / count) - mean * mean, 0.0)
                scale = g_ref[...] * lax.rsqrt(var + BN_EPS)
                shift = beta_ref[...] - mean * scale
                hv = hv * scale.reshape(1, 1, Cout) + shift.reshape(1, 1, Cout)
            hv = jnp.maximum(hv, 0.0)              # ReLU (present on every conv here)
            if add_res:
                hv = hv + r_ref[0].astype(jnp.float32)
            if fuse_pred:
                # fused 1x1 conv (64 -> 1) + tanh, stored lane-dense as (th, W)
                pred = jnp.tanh(jnp.sum(hv * pw_ref[...], axis=-1) + pb_ref[...])
                o_ref[0] = pred
            else:
                o_ref[0] = hv.astype(ACT_DTYPE)

    return kernel


# ------------------------------------------------------------------ wrapper ---

def _pick_tile_rows(H, W):
    """Largest divisor of H whose im2col slab stays ~<=1024 rows; prefer >=2
    tiles (pipelining) and th % 8 == 0 (layout-friendly 3-D pred output)."""
    wp = _round_up(W + 2, 8)
    divs = [d for d in range(1, H + 1) if H % d == 0]
    ok = [d for d in divs if d * wp <= 1024] or [1]
    th = max(ok)
    if th == H:
        smaller = [d for d in ok if d < H]
        if smaller:
            th = max(smaller)
    if th % 8 != 0 and th != H:
        mult8 = [d for d in ok if d % 8 == 0]
        th = max(mult8) if mult8 else H
    return th


def conv3x3_fused(x, w, b, gamma=None, beta=None, res=None,
                  pred_w=None, pred_b=None, *, tile_rows):
    """x: (N, H, W, Cin) bf16.  Returns bf16 activation or f32 (N, H, W) pred."""
    N, H, W, Cin = x.shape
    Cout = w.shape[1]
    use_bn = gamma is not None
    add_res = res is not None
    fuse_pred = pred_w is not None
    th = tile_rows
    T = H // th
    num_phase = 2 if use_bn else 1

    kernel = _build_conv_kernel(N, H, W, Cin, Cout, th,
                                bool(use_bn), bool(add_res), bool(fuse_pred))

    # During phase 0 tiled outputs/residuals collapse to block 0 (t * p trick)
    # so nothing extra is streamed while statistics are being accumulated.
    if use_bn:
        tile_idx4 = lambda p, n, t: (n, t * p, 0, 0)
        tile_idx3 = lambda p, n, t: (n, t * p, 0)
    else:
        tile_idx4 = lambda p, n, t: (n, t, 0, 0)
        tile_idx3 = lambda p, n, t: (n, t, 0)

    x_spec = pl.BlockSpec((1, H, W, Cin), lambda p, n, t: (n, 0, 0, 0))
    w_spec = pl.BlockSpec((9 * Cin, Cout), lambda p, n, t: (0, 0))
    vec_spec = pl.BlockSpec((1, Cout), lambda p, n, t: (0, 0))

    in_specs = [x_spec, w_spec, vec_spec]
    args = [x, w, b]
    if use_bn:
        in_specs += [vec_spec, vec_spec]
        args += [gamma, beta]
    if add_res:
        in_specs += [pl.BlockSpec((1, th, W, Cout), tile_idx4)]
        args += [res]
    if fuse_pred:
        in_specs += [pl.BlockSpec((1, 1, Cout), lambda p, n, t: (0, 0, 0)),
                     pl.BlockSpec((1, 1), lambda p, n, t: (0, 0))]
        args += [pred_w, pred_b]

    if fuse_pred:
        out_shape = jax.ShapeDtypeStruct((N, H, W), jnp.float32)
        out_spec = pl.BlockSpec((1, th, W), tile_idx3)
    else:
        out_shape = jax.ShapeDtypeStruct((N, H, W, Cout), ACT_DTYPE)
        out_spec = pl.BlockSpec((1, th, W, Cout), tile_idx4)

    scratch = [pltpu.VMEM((th + 4, _round_up(W + 2, 8), Cin), ACT_DTYPE)]
    if use_bn:
        scratch += [pltpu.VMEM((1, Cout), jnp.float32),
                    pltpu.VMEM((1, Cout), jnp.float32)]

    return pl.pallas_call(
        kernel,
        out_shape=out_shape,
        grid=(num_phase, N, T),
        in_specs=in_specs,
        out_specs=out_spec,
        scratch_shapes=scratch,
        compiler_params=pltpu.CompilerParams(
            # BN batch statistics couple all tiles -> every axis must stay
            # "arbitrary" (a "parallel" axis would split the stat scratch
            # across v7x's two TensorCores and change the math).
            dimension_semantics=("arbitrary", "arbitrary", "arbitrary"),
            vmem_limit_bytes=32 * 1024 * 1024),
    )(*args)


# ------------------------------------------------------------------ params ----

def _init_conv_weights(key, cin, cout, cin_pad=None):
    """PyTorch-style init; weight stored as (9*cin_pad, cout) bf16 in tap-major
    layout: row k*Cin + c  <->  torch_weight[co, c, k // 3, k % 3]."""
    kw, kb = jax.random.split(key)
    fan_in = cin * 9
    bound = 1.0 / (fan_in ** 0.5)
    w = jax.random.uniform(kw, (9, cin, cout), jnp.float32, -bound, bound)
    if cin_pad is not None and cin_pad > cin:
        w = jnp.pad(w, ((0, 0), (0, cin_pad - cin), (0, 0)))
        cin = cin_pad
    b = jax.random.uniform(kb, (1, cout), jnp.float32, -bound, bound)
    return w.reshape(9 * cin, cout).astype(ACT_DTYPE), b


def _init_block(key, c):
    k1, k2 = jax.random.split(key)
    w1, b1 = _init_conv_weights(k1, c, c)
    w2, b2 = _init_conv_weights(k2, c, c)
    ones = jnp.ones((1, c), jnp.float32)
    zeros = jnp.zeros((1, c), jnp.float32)
    return dict(w1=w1, b1=b1, g1=ones, bt1=zeros,
                w2=w2, b2=b2, g2=ones, bt2=zeros)


def init_params(key):
    C = 64
    keys = iter(jax.random.split(key, 64))
    p = {}
    w, b = _init_conv_weights(next(keys), 1, C, cin_pad=8); p['p_conv1'] = dict(w=w, b=b)
    w, b = _init_conv_weights(next(keys), 1, C, cin_pad=8); p['n_conv1'] = dict(w=w, b=b)
    p['p_encoder'] = [_init_block(next(keys), C) for _ in range(8)]
    p['n_encoder'] = [_init_block(next(keys), C) for _ in range(8)]
    w, b = _init_conv_weights(next(keys), C, C)
    p['p_conv2'] = dict(w=w, b=b, g=jnp.ones((1, C)), bt=jnp.zeros((1, C)))
    w, b = _init_conv_weights(next(keys), C, C)
    p['n_conv2'] = dict(w=w, b=b, g=jnp.ones((1, C)), bt=jnp.zeros((1, C)))
    p['combined_decoder'] = [_init_block(next(keys), C) for _ in range(4)]
    w, b = _init_conv_weights(next(keys), C, C)
    p['combined_conv'] = dict(w=w, b=b, g=jnp.ones((1, C)), bt=jnp.zeros((1, C)))
    kpw, kpb = jax.random.split(next(keys))
    bound = 1.0 / (C ** 0.5)                       # predict 1x1 conv (64 -> 1)
    p['predict'] = dict(
        w=jax.random.uniform(kpw, (1, 1, C), jnp.float32, -bound, bound),
        b=jax.random.uniform(kpb, (1, 1), jnp.float32, -bound, bound))
    return p


# ------------------------------------------------------------------ forward ---

def residual_block(x, blk, th):
    h = conv3x3_fused(x, blk['w1'], blk['b1'], blk['g1'], blk['bt1'], tile_rows=th)
    h = conv3x3_fused(h, blk['w2'], blk['b2'], blk['g2'], blk['bt2'],
                      res=x, tile_rows=th)
    return h


def srgan_g_forward(params, prev_nchw, next_nchw):
    N, _, H, W = prev_nchw.shape
    th = _pick_tile_rows(H, W)

    def prep(img_nchw):                                 # NCHW f32 -> NHWC bf16, Cin padded to 8
        x = jnp.transpose(img_nchw, (0, 2, 3, 1))
        x = jnp.pad(x, ((0, 0), (0, 0), (0, 0), (0, 8 - x.shape[-1])))
        return x.astype(ACT_DTYPE)

    prev = conv3x3_fused(prep(prev_nchw), params['p_conv1']['w'],
                         params['p_conv1']['b'], tile_rows=th)
    temp_prev = prev
    nxt = conv3x3_fused(prep(next_nchw), params['n_conv1']['w'],
                        params['n_conv1']['b'], tile_rows=th)
    temp_next = nxt

    for blk in params['p_encoder']:
        prev = residual_block(prev, blk, th)
    for blk in params['n_encoder']:
        nxt = residual_block(nxt, blk, th)

    pc2 = params['p_conv2']
    prev = conv3x3_fused(prev, pc2['w'], pc2['b'], pc2['g'], pc2['bt'],
                         res=temp_prev, tile_rows=th)
    nc2 = params['n_conv2']
    nxt = conv3x3_fused(nxt, nc2['w'], nc2['b'], nc2['g'], nc2['bt'],
                        res=temp_next, tile_rows=th)

    # TODO(synk): this add (and its use as the decoder residual) could be folded
    # into the first decoder conv to save one more HBM round trip.
    combined = prev + nxt
    temp_combined = combined
    for blk in params['combined_decoder']:
        combined = residual_block(combined, blk, th)

    cc = params['combined_conv']
    pred = conv3x3_fused(combined, cc['w'], cc['b'], cc['g'], cc['bt'],
                         res=temp_combined,
                         pred_w=params['predict']['w'],
                         pred_b=params['predict']['b'],
                         tile_rows=th)                  # (N, H, W) f32, tanh'd
    return pred[:, None, :, :]                          # NCHW like PyTorch


# ------------------------------------------------------------------ main ------

if __name__ == "__main__":
    key = jax.random.PRNGKey(0)
    kp, ka, kb = jax.random.split(key, 3)
    params = init_params(kp)

    N, H, W = 2, 16, 16
    prev_img = jax.random.normal(ka, (N, 1, H, W), jnp.float32)   # NCHW like PyTorch
    next_img = jax.random.normal(kb, (N, 1, H, W), jnp.float32)

    fwd = jax.jit(srgan_g_forward)
    out = jax.block_until_ready(fwd(params, prev_img, next_img))

    assert out.shape == (N, 1, H, W), out.shape
    assert bool(jnp.all(jnp.isfinite(out)))
    assert bool(jnp.all(jnp.abs(out) <= 1.0 + 1e-6))   # tanh output range
    print("KERNEL_OK")
</pallas_src>

<mosaic_0001>
module attributes {stable_mosaic.version = 11 : i64} {
  func.func @kernel(%arg0: i32, %arg1: i32, %arg2: i32, %arg3: memref<1x16x16x64xbf16, #tpu.memory_space<vmem>>, %arg4: memref<576x64xbf16, #tpu.memory_space<vmem>>, %arg5: memref<1x64xf32, #tpu.memory_space<vmem>>, %arg6: memref<1x64xf32, #tpu.memory_space<vmem>>, %arg7: memref<1x64xf32, #tpu.memory_space<vmem>>, %arg8: memref<1x8x16x64xbf16, #tpu.memory_space<vmem>>, %arg9: memref<12x24x64xbf16, #tpu.memory_space<vmem>>, %arg10: memref<1x64xf32, #tpu.memory_space<vmem>>, %arg11: memref<1x64xf32, #tpu.memory_space<vmem>>) attributes {dimension_semantics = [#tpu.dimension_semantics<arbitrary>, #tpu.dimension_semantics<arbitrary>, #tpu.dimension_semantics<arbitrary>], iteration_bounds = array<i64: 2, 2, 2>, scalar_prefetch = 0 : i64, scratch_operands = 3 : i64, tpu.core_type = #tpu.core_type<tc>, window_params = [{transform_indices = @transform_0, window_bounds = array<i64: 1, 16, 16, 64>}, {pipeline_mode = #tpu.pipeline_mode<synchronous>, transform_indices = @transform_1, window_bounds = array<i64: 576, 64>}, {pipeline_mode = #tpu.pipeline_mode<synchronous>, transform_indices = @transform_2, window_bounds = array<i64: 1, 64>}, {pipeline_mode = #tpu.pipeline_mode<synchronous>, transform_indices = @transform_3, window_bounds = array<i64: 1, 64>}, {pipeline_mode = #tpu.pipeline_mode<synchronous>, transform_indices = @transform_4, window_bounds = array<i64: 1, 64>}, {transform_indices = @transform_5, window_bounds = array<i64: 1, 8, 16, 64>}]} {
    %c1_i32 = arith.constant 1 : i32
    %0 = arith.cmpi eq, %arg0, %c1_i32 : i32
    %cst = arith.constant 0.000000e+00 : bf16
    %1 = vector.broadcast %cst : bf16 to vector<12x24x64xbf16>
    %c0 = arith.constant 0 : index
    %c0_0 = arith.constant 0 : index
    %c0_1 = arith.constant 0 : index
    %2 = vector.load %arg9[%c0, %c0_0, %c0_1] : memref<12x24x64xbf16, #tpu.memory_space<vmem>>, vector<12x24x64xbf16>
    tpu.vector_store %arg9[%c0, %c0_0, %c0_1], %1 {strides = array<i32>} : memref<12x24x64xbf16, #tpu.memory_space<vmem>>, vector<12x24x64xbf16>,
    %c8_i32 = arith.constant 8 : i32
    %3 = arith.muli %arg2, %c8_i32 : i32
    %c0_2 = arith.constant 0 : index
    %4 = arith.index_cast %3 : i32 to index
    %c0_3 = arith.constant 0 : index
    %c0_4 = arith.constant 0 : index
    %5 = vector.load %arg3[%c0_2, %4, %c0_3, %c0_4] : memref<1x16x16x64xbf16, #tpu.memory_space<vmem>>, vector<1x8x16x64xbf16>
    %6 = vector.shape_cast %5 : vector<1x8x16x64xbf16> to vector<8x16x64xbf16>
    %c1 = arith.constant 1 : index
    %c1_5 = arith.constant 1 : index
    %c0_6 = arith.constant 0 : index
    %7 = vector.load %arg9[%c1, %c1_5, %c0_6] : memref<12x24x64xbf16, #tpu.memory_space<vmem>>, vector<8x16x64xbf16>
    tpu.vector_store %arg9[%c1, %c1_5, %c0_6], %6 {strides = array<i32>} : memref<12x24x64xbf16, #tpu.memory_space<vmem>>, vector<8x16x64xbf16>,
    %c0_i32 = arith.constant 0 : i32
    %8 = arith.cmpi sgt, %arg2, %c0_i32 : i32
    %9 = arith.extui %8 : i1 to i32
    %c0_i32_7 = arith.constant 0 : i32
    %10 = arith.cmpi ne, %9, %c0_i32_7 : i32
    scf.if %10 {
      %c8_i32_25 = arith.constant 8 : i32
      %45 = arith.muli %arg2, %c8_i32_25 : i32
      %c1_i32_26 = arith.constant 1 : i32
      %46 = arith.subi %45, %c1_i32_26 : i32
      %c0_27 = arith.constant 0 : index
      %47 = arith.index_cast %46 : i32 to index
      %c0_28 = arith.constant 0 : index
      %c0_29 = arith.constant 0 : index
      %48 = vector.load %arg3[%c0_27, %47, %c0_28, %c0_29] : memref<1x16x16x64xbf16, #tpu.memory_space<vmem>>, vector<1x1x16x64xbf16>
      %49 = vector.shape_cast %48 : vector<1x1x16x64xbf16> to vector<1x16x64xbf16>
      %c0_30 = arith.constant 0 : index
      %c1_31 = arith.constant 1 : index
      %c0_32 = arith.constant 0 : index
      %50 = vector.load %arg9[%c0_30, %c1_31, %c0_32] : memref<12x24x64xbf16, #tpu.memory_space<vmem>>, vector<1x16x64xbf16>
      tpu.vector_store %arg9[%c0_30, %c1_31, %c0_32], %49 {strides = array<i32>} : memref<12x24x64xbf16, #tpu.memory_space<vmem>>, vector<1x16x64xbf16>,
    } else {
    }
    %c1_i32_8 = arith.constant 1 : i32
    %11 = arith.cmpi slt, %arg2, %c1_i32_8 : i32
    %12 = arith.extui %11 : i1 to i32
    %c0_i32_9 = arith.constant 0 : i32
    %13 = arith.cmpi ne, %12, %c0_i32_9 : i32
    scf.if %13 {
      %c8_i32_25 = arith.constant 8 : i32
      %45 = arith.muli %arg2, %c8_i32_25 : i32
      %c8_i32_26 = arith.constant 8 : i32
      %46 = arith.addi %45, %c8_i32_26 : i32
      %c0_27 = arith.constant 0 : index
      %47 = arith.index_cast %46 : i32 to index
      %c0_28 = arith.constant 0 : index
      %c0_29 = arith.constant 0 : index
      %48 = vector.load %arg3[%c0_27, %47, %c0_28, %c0_29] : memref<1x16x16x64xbf16, #tpu.memory_space<vmem>>, vector<1x1x16x64xbf16>
      %49 = vector.shape_cast %48 : vector<1x1x16x64xbf16> to vector<1x16x64xbf16>
      %c9 = arith.constant 9 : index
      %c1_30 = arith.constant 1 : index
      %c0_31 = arith.constant 0 : index
      %50 = vector.load %arg9[%c9, %c1_30, %c0_31] : memref<12x24x64xbf16, #tpu.memory_space<vmem>>, vector<1x16x64xbf16>
      tpu.vector_store %arg9[%c9, %c1_30, %c0_31], %49 {strides = array<i32>} : memref<12x24x64xbf16, #tpu.memory_space<vmem>>, vector<1x16x64xbf16>,
    } else {
    }
    %c0_10 = arith.constant 0 : index
    %c0_11 = arith.constant 0 : index
    %c0_12 = arith.constant 0 : index
    %14 = vector.load %arg9[%c0_10, %c0_11, %c0_12] : memref<12x24x64xbf16, #tpu.memory_space<vmem>>, vector<12x24x64xbf16>
    %15 = vector.shape_cast %14 : vector<12x24x64xbf16> to vector<288x64xbf16>
    %16 = vector.extract_strided_slice %15 {offsets = [0, 0], sizes = [192, 64], strides = [1, 1]} : vector<288x64xbf16> to vector<192x64xbf16>
    %17 = vector.extract_strided_slice %15 {offsets = [1, 0], sizes = [192, 64], strides = [1, 1]} : vector<288x64xbf16> to vector<192x64xbf16>
    %18 = vector.extract_strided_slice %15 {offsets = [2, 0], sizes = [192, 64], strides = [1, 1]} : vector<288x64xbf16> to vector<192x64xbf16>
    %19 = vector.extract_strided_slice %15 {offsets = [24, 0], sizes = [192, 64], strides = [1, 1]} : vector<288x64xbf16> to vector<192x64xbf16>
    %20 = vector.extract_strided_slice %15 {offsets = [25, 0], sizes = [192, 64], strides = [1, 1]} : vector<288x64xbf16> to vector<192x64xbf16>
    %21 = vector.extract_strided_slice %15 {offsets = [26, 0], sizes = [192, 64], strides = [1, 1]} : vector<288x64xbf16> to vector<192x64xbf16>
    %22 = vector.extract_strided_slice %15 {offsets = [48, 0], sizes = [192, 64], strides = [1, 1]} : vector<288x64xbf16> to vector<192x64xbf16>
    %23 = vector.extract_strided_slice %15 {offsets = [49, 0], sizes = [192, 64], strides = [1, 1]} : vector<288x64xbf16> to vector<192x64xbf16>
    %24 = vector.extract_strided_slice %15 {offsets = [50, 0], sizes = [192, 64], strides = [1, 1]} : vector<288x64xbf16> to vector<192x64xbf16>
    %25 = tpu.concatenate %16, %17, %18, %19, %20, %21, %22, %23, %24 in 1 : vector<192x64xbf16>, vector<192x64xbf16>, vector<192x64xbf16>, vector<192x64xbf16>, vector<192x64xbf16>, vector<192x64xbf16>, vector<192x64xbf16>, vector<192x64xbf16>, vector<192x64xbf16> -> vector<192x576xbf16>
    %c0_13 = arith.constant 0 : index
    %c0_14 = arith.constant 0 : index
    %26 = vector.load %arg4[%c0_13, %c0_14] : memref<576x64xbf16, #tpu.memory_space<vmem>>, vector<576x64xbf16>
    %cst_15 = arith.constant dense<0.000000e+00> : vector<192x64xf32>
    %27 = tpu.matmul %25, %26, %cst_15 {dimension_numbers = #tpu.dot_dimension_numbers<[1], [0], [0], [1], [0, 0, 1, 1], [], []>} : vector<192x576xbf16>, vector<576x64xbf16>, vector<192x64xf32> -> vector<192x64xf32>
    %c0_16 = arith.constant 0 : index
    %c0_17 = arith.constant 0 : index
    %28 = vector.load %arg5[%c0_16, %c0_17] : memref<1x64xf32, #tpu.memory_space<vmem>>, vector<1x64xf32>
    %29 = vector.broadcast %28 : vector<1x64xf32> to vector<192x64xf32>
    %30 = arith.addf %27, %29 : vector<192x64xf32>
    %31 = vector.shape_cast %30 : vector<192x64xf32> to vector<8x24x64xf32>
    %32 = vector.extract_strided_slice %31 {offsets = [0, 0, 0], sizes = [8, 16, 64], strides = [1, 1, 1]} : vector<8x24x64xf32> to vector<8x16x64xf32>
    %c0_i32_18 = arith.constant 0 : i32
    %33 = arith.cmpi eq, %arg0, %c0_i32_18 : i32
    %c0_i32_19 = arith.constant 0 : i32
    %34 = arith.cmpi eq, %arg1, %c0_i32_19 : i32
    %35 = arith.andi %33, %34 : i1
    %c0_i32_20 = arith.constant 0 : i32
    %36 = arith.cmpi eq, %arg2, %c0_i32_20 : i32
    %37 = arith.andi %35, %36 : i1
    %38 = arith.extui %37 : i1 to i32
    %c0_i32_21 = arith.constant 0 : i32
    %39 = arith.cmpi ne, %38, %c0_i32_21 : i32
    scf.if %39 {
      %cst_25 = arith.constant 0.000000e+00 : f32
      %45 = vector.broadcast %cst_25 : f32 to vector<1x64xf32>
      %c0_26 = arith.constant 0 : index
      %c0_27 = arith.constant 0 : index
      %46 = vector.load %arg10[%c0_26, %c0_27] : memref<1x64xf32, #tpu.memory_space<vmem>>, vector<1x64xf32>
      tpu.vector_store %arg10[%c0_26, %c0_27], %45 {strides = array<i32>} : memref<1x64xf32, #tpu.memory_space<vmem>>, vector<1x64xf32>,
      %cst_28 = arith.constant 0.000000e+00 : f32
      %47 = vector.broadcast %cst_28 : f32 to vector<1x64xf32>
      %c0_29 = arith.constant 0 : index
      %c0_30 = arith.constant 0 : index
      %48 = vector.load %arg11[%c0_29, %c0_30] : memref<1x64xf32, #tpu.memory_space<vmem>>, vector<1x64xf32>
      tpu.vector_store %arg11[%c0_29, %c0_30], %47 {strides = array<i32>} : memref<1x64xf32, #tpu.memory_space<vmem>>, vector<1x64xf32>,
    } else {
    }
    %c0_i32_22 = arith.constant 0 : i32
    %40 = arith.cmpi eq, %arg0, %c0_i32_22 : i32
    %41 = arith.extui %40 : i1 to i32
    %c0_i32_23 = arith.constant 0 : i32
    %42 = arith.cmpi ne, %41, %c0_i32_23 : i32
    scf.if %42 {
      %cst_25 = arith.constant dense<0.000000e+00> : vector<64xf32>
      %45 = vector.multi_reduction <add>, %32, %cst_25 [0, 1] : vector<8x16x64xf32> to vector<64xf32>
      %46 = arith.mulf %32, %32 : vector<8x16x64xf32>
      %cst_26 = arith.constant dense<0.000000e+00> : vector<64xf32>
      %47 = vector.multi_reduction <add>, %46, %cst_26 [0, 1] : vector<8x16x64xf32> to vector<64xf32>
      %c0_27 = arith.constant 0 : index
      %c0_28 = arith.constant 0 : index
      %48 = vector.load %arg10[%c0_27, %c0_28] : memref<1x64xf32, #tpu.memory_space<vmem>>, vector<1x64xf32>
      %49 = vector.shape_cast %45 : vector<64xf32> to vector<1x64xf32>
      %50 = arith.addf %48, %49 : vector<1x64xf32>
      %c0_29 = arith.constant 0 : index
      %c0_30 = arith.constant 0 : index
      %51 = vector.load %arg10[%c0_29, %c0_30] : memref<1x64xf32, #tpu.memory_space<vmem>>, vector<1x64xf32>
      tpu.vector_store %arg10[%c0_29, %c0_30], %50 {strides = array<i32>} : memref<1x64xf32, #tpu.memory_space<vmem>>, vector<1x64xf32>,
      %c0_31 = arith.constant 0 : index
      %c0_32 = arith.constant 0 : index
      %52 = vector.load %arg11[%c0_31, %c0_32] : memref<1x64xf32, #tpu.memory_space<vmem>>, vector<1x64xf32>
      %53 = vector.shape_cast %47 : vector<64xf32> to vector<1x64xf32>
      %54 = arith.addf %52, %53 : vector<1x64xf32>
      %c0_33 = arith.constant 0 : index
      %c0_34 = arith.constant 0 : index
      %55 = vector.load %arg11[%c0_33, %c0_34] : memref<1x64xf32, #tpu.memory_space<vmem>>, vector<1x64xf32>
      tpu.vector_store %arg11[%c0_33, %c0_34], %54 {strides = array<i32>} : memref<1x64xf32, #tpu.memory_space<vmem>>, vector<1x64xf32>,
    } else {
    }
    %43 = arith.extui %0 : i1 to i32
    %c0_i32_24 = arith.constant 0 : i32
    %44 = arith.cmpi ne, %43, %c0_i32_24 : i32
    scf.if %44 {
      %c0_25 = arith.constant 0 : index
      %c0_26 = arith.constant 0 : index
      %45 = vector.load %arg10[%c0_25, %c0_26] : memref<1x64xf32, #tpu.memory_space<vmem>>, vector<1x64xf32>
      %cst_27 = arith.constant 0.001953125 : f32
      %46 = vector.broadcast %cst_27 : f32 to vector<1x64xf32>
      %47 = arith.mulf %45, %46 : vector<1x64xf32>
      %c0_28 = arith.constant 0 : index
      %c0_29 = arith.constant 0 : index
      %48 = vector.load %arg11[%c0_28, %c0_29] : memref<1x64xf32, #tpu.memory_space<vmem>>, vector<1x64xf32>
      %cst_30 = arith.constant 0.001953125 : f32
      %49 = vector.broadcast %cst_30 : f32 to vector<1x64xf32>
      %50 = arith.mulf %48, %49 : vector<1x64xf32>
      %51 = arith.mulf %47, %47 : vector<1x64xf32>
      %52 = arith.subf %50, %51 : vector<1x64xf32>
      %cst_31 = arith.constant 0.000000e+00 : f32
      %53 = vector.broadcast %cst_31 : f32 to vector<1x64xf32>
      %54 = arith.maximumf %52, %53 : vector<1x64xf32>
      %c0_32 = arith.constant 0 : index
      %c0_33 = arith.constant 0 : index
      %55 = vector.load %arg6[%c0_32, %c0_33] : memref<1x64xf32, #tpu.memory_space<vmem>>, vector<1x64xf32>
      %cst_34 = arith.constant 9.99999974E-6 : f32
      %56 = vector.broadcast %cst_34 : f32 to vector<1x64xf32>
      %57 = arith.addf %54, %56 : vector<1x64xf32>
      %58 = math.rsqrt %57 : vector<1x64xf32>
      %59 = arith.mulf %55, %58 : vector<1x64xf32>
      %c0_35 = arith.constant 0 : index
      %c0_36 = arith.constant 0 : index
      %60 = vector.load %arg7[%c0_35, %c0_36] : memref<1x64xf32, #tpu.memory_space<vmem>>, vector<1x64xf32>
      %61 = arith.mulf %47, %59 : vector<1x64xf32>
      %62 = arith.subf %60, %61 : vector<1x64xf32>
      %63 = vector.shape_cast %59 : vector<1x64xf32> to vector<1x1x64xf32>
      %64 = vector.broadcast %63 : vector<1x1x64xf32> to vector<8x16x64xf32>
      %65 = arith.mulf %32, %64 : vector<8x16x64xf32>
      %66 = vector.shape_cast %62 : vector<1x64xf32> to vector<1x1x64xf32>
      %67 = vector.broadcast %66 : vector<1x1x64xf32> to vector<8x16x64xf32>
      %68 = arith.addf %65, %67 : vector<8x16x64xf32>
      %cst_37 = arith.constant 0.000000e+00 : f32
      %69 = vector.broadcast %cst_37 : f32 to vector<8x16x64xf32>
      %70 = arith.maximumf %68, %69 : vector<8x16x64xf32>
      %71 = arith.truncf %70 : vector<8x16x64xf32> to vector<8x16x64xbf16>
      %c0_38 = arith.constant 0 : index
      %c0_39 = arith.constant 0 : index
      %c0_40 = arith.constant 0 : index
      %c0_41 = arith.constant 0 : index
      %72 = vector.load %arg8[%c0_38, %c0_39, %c0_40, %c0_41] : memref<1x8x16x64xbf16, #tpu.memory_space<vmem>>, vector<1x8x16x64xbf16>
      %73 = vector.shape_cast %72 : vector<1x8x16x64xbf16> to vector<8x16x64xbf16>
      %74 = vector.shape_cast %71 : vector<8x16x64xbf16> to vector<1x8x16x64xbf16>
      tpu.vector_store %arg8[%c0_38, %c0_39, %c0_40, %c0_41], %74 {strides = array<i32>} : memref<1x8x16x64xbf16, #tpu.memory_space<vmem>>, vector<1x8x16x64xbf16>,
    } else {
    }
    return
  }
  func.func @transform_0(%arg0: i32, %arg1: i32, %arg2: i32) -> (i32, i32, i32, i32) {
    %c0_i32 = arith.constant 0 : i32
    %c0_i32_0 = arith.constant 0 : i32
    %c0_i32_1 = arith.constant 0 : i32
    %c0_i32_2 = arith.constant 0 : i32
    return %arg1, %c0_i32, %c0_i32_0, %c0_i32_1 : i32, i32, i32, i32
  }
  func.func @transform_1(%arg0: i32, %arg1: i32, %arg2: i32) -> (i32, i32) {
    %c0_i32 = arith.constant 0 : i32
    %c0_i32_0 = arith.constant 0 : i32
    %c0_i32_1 = arith.constant 0 : i32
    return %c0_i32, %c0_i32_0 : i32, i32
  }
  func.func @transform_2(%arg0: i32, %arg1: i32, %arg2: i32) -> (i32, i32) {
    %c0_i32 = arith.constant 0 : i32
    %c0_i32_0 = arith.constant 0 : i32
    %c0_i32_1 = arith.constant 0 : i32
    return %c0_i32, %c0_i32_0 : i32, i32
  }
  func.func @transform_3(%arg0: i32, %arg1: i32, %arg2: i32) -> (i32, i32) {
    %c0_i32 = arith.constant 0 : i32
    %c0_i32_0 = arith.constant 0 : i32
    %c0_i32_1 = arith.constant 0 : i32
    return %c0_i32, %c0_i32_0 : i32, i32
  }
  func.func @transform_4(%arg0: i32, %arg1: i32, %arg2: i32) -> (i32, i32) {
    %c0_i32 = arith.constant 0 : i32
    %c0_i32_0 = arith.constant 0 : i32
    %c0_i32_1 = arith.constant 0 : i32
    return %c0_i32, %c0_i32_0 : i32, i32
  }
  func.func @transform_5(%arg0: i32, %arg1: i32, %arg2: i32) -> (i32, i32, i32, i32) {
    %0 = arith.muli %arg2, %arg0 : i32
    %c0_i32 = arith.constant 0 : i32
    %c0_i32_0 = arith.constant 0 : i32
    %c0_i32_1 = arith.constant 0 : i32
    return %arg1, %0, %c0_i32, %c0_i32_0 : i32, i32, i32, i32
  }
}

module attributes {stable_mosaic.version = 11 : i64} {
  func.func @kernel(%arg0: i32, %arg1: i32, %arg2: i32, %arg3: memref<1x16x16x8xbf16, #tpu.memory_space<vmem>>, %arg4: memref<72x64xbf16, #tpu.memory_space<vmem>>, %arg5: memref<1x64xf32, #tpu.memory_space<vmem>>, %arg6: memref<1x8x16x64xbf16, #tpu.memory_space<vmem>>, %arg7: memref<12x24x8xbf16, #tpu.memory_space<vmem>>) attributes {dimension_semantics = [#tpu.dimension_semantics<arbitrary>, #tpu.dimension_semantics<arbitrary>, #tpu.dimension_semantics<arbitrary>], iteration_bounds = array<i64: 1, 2, 2>, scalar_prefetch = 0 : i64, scratch_operands = 1 : i64, tpu.core_type = #tpu.core_type<tc>, window_params = [{transform_indices = @transform_0, window_bounds = array<i64: 1, 16, 16, 8>}, {pipeline_mode = #tpu.pipeline_mode<synchronous>, transform_indices = @transform_1, window_bounds = array<i64: 72, 64>}, {pipeline_mode = #tpu.pipeline_mode<synchronous>, transform_indices = @transform_2, window_bounds = array<i64: 1, 64>}, {transform_indices = @transform_3, window_bounds = array<i64: 1, 8, 16, 64>}]} {
    %c0_i32 = arith.constant 0 : i32
    %0 = arith.cmpi eq, %arg0, %c0_i32 : i32
    %cst = arith.constant 0.000000e+00 : bf16
    %1 = vector.broadcast %cst : bf16 to vector<12x24x8xbf16>
    %c0 = arith.constant 0 : index
    %c0_0 = arith.constant 0 : index
    %c0_1 = arith.constant 0 : index
    %2 = vector.load %arg7[%c0, %c0_0, %c0_1] : memref<12x24x8xbf16, #tpu.memory_space<vmem>>, vector<12x24x8xbf16>
    tpu.vector_store %arg7[%c0, %c0_0, %c0_1], %1 {strides = array<i32>} : memref<12x24x8xbf16, #tpu.memory_space<vmem>>, vector<12x24x8xbf16>,
    %c8_i32 = arith.constant 8 : i32
    %3 = arith.muli %arg2, %c8_i32 : i32
    %c0_2 = arith.constant 0 : index
    %4 = arith.index_cast %3 : i32 to index
    %c0_3 = arith.constant 0 : index
    %c0_4 = arith.constant 0 : index
    %5 = vector.load %arg3[%c0_2, %4, %c0_3, %c0_4] : memref<1x16x16x8xbf16, #tpu.memory_space<vmem>>, vector<1x8x16x8xbf16>
    %6 = vector.shape_cast %5 : vector<1x8x16x8xbf16> to vector<8x16x8xbf16>
    %c1 = arith.constant 1 : index
    %c1_5 = arith.constant 1 : index
    %c0_6 = arith.constant 0 : index
    %7 = vector.load %arg7[%c1, %c1_5, %c0_6] : memref<12x24x8xbf16, #tpu.memory_space<vmem>>, vector<8x16x8xbf16>
    tpu.vector_store %arg7[%c1, %c1_5, %c0_6], %6 {strides = array<i32>} : memref<12x24x8xbf16, #tpu.memory_space<vmem>>, vector<8x16x8xbf16>,
    %c0_i32_7 = arith.constant 0 : i32
    %8 = arith.cmpi sgt, %arg2, %c0_i32_7 : i32
    %9 = arith.extui %8 : i1 to i32
    %c0_i32_8 = arith.constant 0 : i32
    %10 = arith.cmpi ne, %9, %c0_i32_8 : i32
    scf.if %10 {
      %c8_i32_19 = arith.constant 8 : i32
      %35 = arith.muli %arg2, %c8_i32_19 : i32
      %c1_i32_20 = arith.constant 1 : i32
      %36 = arith.subi %35, %c1_i32_20 : i32
      %c0_21 = arith.constant 0 : index
      %37 = arith.index_cast %36 : i32 to index
      %c0_22 = arith.constant 0 : index
      %c0_23 = arith.constant 0 : index
      %38 = vector.load %arg3[%c0_21, %37, %c0_22, %c0_23] : memref<1x16x16x8xbf16, #tpu.memory_space<vmem>>, vector<1x1x16x8xbf16>
      %39 = vector.shape_cast %38 : vector<1x1x16x8xbf16> to vector<1x16x8xbf16>
      %c0_24 = arith.constant 0 : index
      %c1_25 = arith.constant 1 : index
      %c0_26 = arith.constant 0 : index
      %40 = vector.load %arg7[%c0_24, %c1_25, %c0_26] : memref<12x24x8xbf16, #tpu.memory_space<vmem>>, vector<1x16x8xbf16>
      tpu.vector_store %arg7[%c0_24, %c1_25, %c0_26], %39 {strides = array<i32>} : memref<12x24x8xbf16, #tpu.memory_space<vmem>>, vector<1x16x8xbf16>,
    } else {
    }
    %c1_i32 = arith.constant 1 : i32
    %11 = arith.cmpi slt, %arg2, %c1_i32 : i32
    %12 = arith.extui %11 : i1 to i32
    %c0_i32_9 = arith.constant 0 : i32
    %13 = arith.cmpi ne, %12, %c0_i32_9 : i32
    scf.if %13 {
      %c8_i32_19 = arith.constant 8 : i32
      %35 = arith.muli %arg2, %c8_i32_19 : i32
      %c8_i32_20 = arith.constant 8 : i32
      %36 = arith.addi %35, %c8_i32_20 : i32
      %c0_21 = arith.constant 0 : index
      %37 = arith.index_cast %36 : i32 to index
      %c0_22 = arith.constant 0 : index
      %c0_23 = arith.constant 0 : index
      %38 = vector.load %arg3[%c0_21, %37, %c0_22, %c0_23] : memref<1x16x16x8xbf16, #tpu.memory_space<vmem>>, vector<1x1x16x8xbf16>
      %39 = vector.shape_cast %38 : vector<1x1x16x8xbf16> to vector<1x16x8xbf16>
      %c9 = arith.constant 9 : index
      %c1_24 = arith.constant 1 : index
      %c0_25 = arith.constant 0 : index
      %40 = vector.load %arg7[%c9, %c1_24, %c0_25] : memref<12x24x8xbf16, #tpu.memory_space<vmem>>, vector<1x16x8xbf16>
      tpu.vector_store %arg7[%c9, %c1_24, %c0_25], %39 {strides = array<i32>} : memref<12x24x8xbf16, #tpu.memory_space<vmem>>, vector<1x16x8xbf16>,
    } else {
    }
    %c0_10 = arith.constant 0 : index
    %c0_11 = arith.constant 0 : index
    %c0_12 = arith.constant 0 : index
    %14 = vector.load %arg7[%c0_10, %c0_11, %c0_12] : memref<12x24x8xbf16, #tpu.memory_space<vmem>>, vector<12x24x8xbf16>
    %15 = vector.shape_cast %14 : vector<12x24x8xbf16> to vector<288x8xbf16>
    %16 = vector.extract_strided_slice %15 {offsets = [0, 0], sizes = [192, 8], strides = [1, 1]} : vector<288x8xbf16> to vector<192x8xbf16>
    %17 = vector.extract_strided_slice %15 {offsets = [1, 0], sizes = [192, 8], strides = [1, 1]} : vector<288x8xbf16> to vector<192x8xbf16>
    %18 = vector.extract_strided_slice %15 {offsets = [2, 0], sizes = [192, 8], strides = [1, 1]} : vector<288x8xbf16> to vector<192x8xbf16>
    %19 = vector.extract_strided_slice %15 {offsets = [24, 0], sizes = [192, 8], strides = [1, 1]} : vector<288x8xbf16> to vector<192x8xbf16>
    %20 = vector.extract_strided_slice %15 {offsets = [25, 0], sizes = [192, 8], strides = [1, 1]} : vector<288x8xbf16> to vector<192x8xbf16>
    %21 = vector.extract_strided_slice %15 {offsets = [26, 0], sizes = [192, 8], strides = [1, 1]} : vector<288x8xbf16> to vector<192x8xbf16>
    %22 = vector.extract_strided_slice %15 {offsets = [48, 0], sizes = [192, 8], strides = [1, 1]} : vector<288x8xbf16> to vector<192x8xbf16>
    %23 = vector.extract_strided_slice %15 {offsets = [49, 0], sizes = [192, 8], strides = [1, 1]} : vector<288x8xbf16> to vector<192x8xbf16>
    %24 = vector.extract_strided_slice %15 {offsets = [50, 0], sizes = [192, 8], strides = [1, 1]} : vector<288x8xbf16> to vector<192x8xbf16>
    %25 = tpu.concatenate %16, %17, %18, %19, %20, %21, %22, %23, %24 in 1 : vector<192x8xbf16>, vector<192x8xbf16>, vector<192x8xbf16>, vector<192x8xbf16>, vector<192x8xbf16>, vector<192x8xbf16>, vector<192x8xbf16>, vector<192x8xbf16>, vector<192x8xbf16> -> vector<192x72xbf16>
    %c0_13 = arith.constant 0 : index
    %c0_14 = arith.constant 0 : index
    %26 = vector.load %arg4[%c0_13, %c0_14] : memref<72x64xbf16, #tpu.memory_space<vmem>>, vector<72x64xbf16>
    %cst_15 = arith.constant dense<0.000000e+00> : vector<192x64xf32>
    %27 = tpu.matmul %25, %26, %cst_15 {dimension_numbers = #tpu.dot_dimension_numbers<[1], [0], [0], [1], [0, 0, 1, 1], [], []>} : vector<192x72xbf16>, vector<72x64xbf16>, vector<192x64xf32> -> vector<192x64xf32>
    %c0_16 = arith.constant 0 : index
    %c0_17 = arith.constant 0 : index
    %28 = vector.load %arg5[%c0_16, %c0_17] : memref<1x64xf32, #tpu.memory_space<vmem>>, vector<1x64xf32>
    %29 = vector.broadcast %28 : vector<1x64xf32> to vector<192x64xf32>
    %30 = arith.addf %27, %29 : vector<192x64xf32>
    %31 = vector.shape_cast %30 : vector<192x64xf32> to vector<8x24x64xf32>
    %32 = vector.extract_strided_slice %31 {offsets = [0, 0, 0], sizes = [8, 16, 64], strides = [1, 1, 1]} : vector<8x24x64xf32> to vector<8x16x64xf32>
    %33 = arith.extui %0 : i1 to i32
    %c0_i32_18 = arith.constant 0 : i32
    %34 = arith.cmpi ne, %33, %c0_i32_18 : i32
    scf.if %34 {
      %cst_19 = arith.constant 0.000000e+00 : f32
      %35 = vector.broadcast %cst_19 : f32 to vector<8x16x64xf32>
      %36 = arith.maximumf %32, %35 : vector<8x16x64xf32>
      %37 = arith.truncf %36 : vector<8x16x64xf32> to vector<8x16x64xbf16>
      %c0_20 = arith.constant 0 : index
      %c0_21 = arith.constant 0 : index
      %c0_22 = arith.constant 0 : index
      %c0_23 = arith.constant 0 : index
      %38 = vector.load %arg6[%c0_20, %c0_21, %c0_22, %c0_23] : memref<1x8x16x64xbf16, #tpu.memory_space<vmem>>, vector<1x8x16x64xbf16>
      %39 = vector.shape_cast %38 : vector<1x8x16x64xbf16> to vector<8x16x64xbf16>
      %40 = vector.shape_cast %37 : vector<8x16x64xbf16> to vector<1x8x16x64xbf16>
      tpu.vector_store %arg6[%c0_20, %c0_21, %c0_22, %c0_23], %40 {strides = array<i32>} : memref<1x8x16x64xbf16, #tpu.memory_space<vmem>>, vector<1x8x16x64xbf16>,
    } else {
    }
    return
  }
  func.func @transform_0(%arg0: i32, %arg1: i32, %arg2: i32) -> (i32, i32, i32, i32) {
    %c0_i32 = arith.constant 0 : i32
    %c0_i32_0 = arith.constant 0 : i32
    %c0_i32_1 = arith.constant 0 : i32
    %c0_i32_2 = arith.constant 0 : i32
    return %arg1, %c0_i32, %c0_i32_0, %c0_i32_1 : i32, i32, i32, i32
  }
  func.func @transform_1(%arg0: i32, %arg1: i32, %arg2: i32) -> (i32, i32) {
    %c0_i32 = arith.constant 0 : i32
    %c0_i32_0 = arith.constant 0 : i32
    %c0_i32_1 = arith.constant 0 : i32
    return %c0_i32, %c0_i32_0 : i32, i32
  }
  func.func @transform_2(%arg0: i32, %arg1: i32, %arg2: i32) -> (i32, i32) {
    %c0_i32 = arith.constant 0 : i32
    %c0_i32_0 = arith.constant 0 : i32
    %c0_i32_1 = arith.constant 0 : i32
    return %c0_i32, %c0_i32_0 : i32, i32
  }
  func.func @transform_3(%arg0: i32, %arg1: i32, %arg2: i32) -> (i32, i32, i32, i32) {
    %c0_i32 = arith.constant 0 : i32
    %c0_i32_0 = arith.constant 0 : i32
    %c0_i32_1 = arith.constant 0 : i32
    return %arg1, %arg2, %c0_i32, %c0_i32_0 : i32, i32, i32, i32
  }
}

module attributes {stable_mosaic.version = 11 : i64} {
  func.func @kernel(%arg0: i32, %arg1: i32, %arg2: i32, %arg3: memref<1x16x16x64xbf16, #tpu.memory_space<vmem>>, %arg4: memref<576x64xbf16, #tpu.memory_space<vmem>>, %arg5: memref<1x64xf32, #tpu.memory_space<vmem>>, %arg6: memref<1x64xf32, #tpu.memory_space<vmem>>, %arg7: memref<1x64xf32, #tpu.memory_space<vmem>>, %arg8: memref<1x8x16x64xbf16, #tpu.memory_space<vmem>>, %arg9: memref<1x8x16x64xbf16, #tpu.memory_space<vmem>>, %arg10: memref<12x24x64xbf16, #tpu.memory_space<vmem>>, %arg11: memref<1x64xf32, #tpu.memory_space<vmem>>, %arg12: memref<1x64xf32, #tpu.memory_space<vmem>>) attributes {dimension_semantics = [#tpu.dimension_semantics<arbitrary>, #tpu.dimension_semantics<arbitrary>, #tpu.dimension_semantics<arbitrary>], iteration_bounds = array<i64: 2, 2, 2>, scalar_prefetch = 0 : i64, scratch_operands = 3 : i64, tpu.core_type = #tpu.core_type<tc>, window_params = [{transform_indices = @transform_0, window_bounds = array<i64: 1, 16, 16, 64>}, {pipeline_mode = #tpu.pipeline_mode<synchronous>, transform_indices = @transform_1, window_bounds = array<i64: 576, 64>}, {pipeline_mode = #tpu.pipeline_mode<synchronous>, transform_indices = @transform_2, window_bounds = array<i64: 1, 64>}, {pipeline_mode = #tpu.pipeline_mode<synchronous>, transform_indices = @transform_3, window_bounds = array<i64: 1, 64>}, {pipeline_mode = #tpu.pipeline_mode<synchronous>, transform_indices = @transform_4, window_bounds = array<i64: 1, 64>}, {transform_indices = @transform_5, window_bounds = array<i64: 1, 8, 16, 64>}, {transform_indices = @transform_6, window_bounds = array<i64: 1, 8, 16, 64>}]} {
    %c1_i32 = arith.constant 1 : i32
    %0 = arith.cmpi eq, %arg0, %c1_i32 : i32
    %cst = arith.constant 0.000000e+00 : bf16
    %1 = vector.broadcast %cst : bf16 to vector<12x24x64xbf16>
    %c0 = arith.constant 0 : index
    %c0_0 = arith.constant 0 : index
    %c0_1 = arith.constant 0 : index
    %2 = vector.load %arg10[%c0, %c0_0, %c0_1] : memref<12x24x64xbf16, #tpu.memory_space<vmem>>, vector<12x24x64xbf16>
    tpu.vector_store %arg10[%c0, %c0_0, %c0_1], %1 {strides = array<i32>} : memref<12x24x64xbf16, #tpu.memory_space<vmem>>, vector<12x24x64xbf16>,
    %c8_i32 = arith.constant 8 : i32
    %3 = arith.muli %arg2, %c8_i32 : i32
    %c0_2 = arith.constant 0 : index
    %4 = arith.index_cast %3 : i32 to index
    %c0_3 = arith.constant 0 : index
    %c0_4 = arith.constant 0 : index
    %5 = vector.load %arg3[%c0_2, %4, %c0_3, %c0_4] : memref<1x16x16x64xbf16, #tpu.memory_space<vmem>>, vector<1x8x16x64xbf16>
    %6 = vector.shape_cast %5 : vector<1x8x16x64xbf16> to vector<8x16x64xbf16>
    %c1 = arith.constant 1 : index
    %c1_5 = arith.constant 1 : index
    %c0_6 = arith.constant 0 : index
    %7 = vector.load %arg10[%c1, %c1_5, %c0_6] : memref<12x24x64xbf16, #tpu.memory_space<vmem>>, vector<8x16x64xbf16>
    tpu.vector_store %arg10[%c1, %c1_5, %c0_6], %6 {strides = array<i32>} : memref<12x24x64xbf16, #tpu.memory_space<vmem>>, vector<8x16x64xbf16>,
    %c0_i32 = arith.constant 0 : i32
    %8 = arith.cmpi sgt, %arg2, %c0_i32 : i32
    %9 = arith.extui %8 : i1 to i32
    %c0_i32_7 = arith.constant 0 : i32
    %10 = arith.cmpi ne, %9, %c0_i32_7 : i32
    scf.if %10 {
      %c8_i32_25 = arith.constant 8 : i32
      %45 = arith.muli %arg2, %c8_i32_25 : i32
      %c1_i32_26 = arith.constant 1 : i32
      %46 = arith.subi %45, %c1_i32_26 : i32
      %c0_27 = arith.constant 0 : index
      %47 = arith.index_cast %46 : i32 to index
      %c0_28 = arith.constant 0 : index
      %c0_29 = arith.constant 0 : index
      %48 = vector.load %arg3[%c0_27, %47, %c0_28, %c0_29] : memref<1x16x16x64xbf16, #tpu.memory_space<vmem>>, vector<1x1x16x64xbf16>
      %49 = vector.shape_cast %48 : vector<1x1x16x64xbf16> to vector<1x16x64xbf16>
      %c0_30 = arith.constant 0 : index
      %c1_31 = arith.constant 1 : index
      %c0_32 = arith.constant 0 : index
      %50 = vector.load %arg10[%c0_30, %c1_31, %c0_32] : memref<12x24x64xbf16, #tpu.memory_space<vmem>>, vector<1x16x64xbf16>
      tpu.vector_store %arg10[%c0_30, %c1_31, %c0_32], %49 {strides = array<i32>} : memref<12x24x64xbf16, #tpu.memory_space<vmem>>, vector<1x16x64xbf16>,
    } else {
    }
    %c1_i32_8 = arith.constant 1 : i32
    %11 = arith.cmpi slt, %arg2, %c1_i32_8 : i32
    %12 = arith.extui %11 : i1 to i32
    %c0_i32_9 = arith.constant 0 : i32
    %13 = arith.cmpi ne, %12, %c0_i32_9 : i32
    scf.if %13 {
      %c8_i32_25 = arith.constant 8 : i32
      %45 = arith.muli %arg2, %c8_i32_25 : i32
      %c8_i32_26 = arith.constant 8 : i32
      %46 = arith.addi %45, %c8_i32_26 : i32
      %c0_27 = arith.constant 0 : index
      %47 = arith.index_cast %46 : i32 to index
      %c0_28 = arith.constant 0 : index
      %c0_29 = arith.constant 0 : index
      %48 = vector.load %arg3[%c0_27, %47, %c0_28, %c0_29] : memref<1x16x16x64xbf16, #tpu.memory_space<vmem>>, vector<1x1x16x64xbf16>
      %49 = vector.shape_cast %48 : vector<1x1x16x64xbf16> to vector<1x16x64xbf16>
      %c9 = arith.constant 9 : index
      %c1_30 = arith.constant 1 : index
      %c0_31 = arith.constant 0 : index
      %50 = vector.load %arg10[%c9, %c1_30, %c0_31] : memref<12x24x64xbf16, #tpu.memory_space<vmem>>, vector<1x16x64xbf16>
      tpu.vector_store %arg10[%c9, %c1_30, %c0_31], %49 {strides = array<i32>} : memref<12x24x64xbf16, #tpu.memory_space<vmem>>, vector<1x16x64xbf16>,
    } else {
    }
    %c0_10 = arith.constant 0 : index
    %c0_11 = arith.constant 0 : index
    %c0_12 = arith.constant 0 : index
    %14 = vector.load %arg10[%c0_10, %c0_11, %c0_12] : memref<12x24x64xbf16, #tpu.memory_space<vmem>>, vector<12x24x64xbf16>
    %15 = vector.shape_cast %14 : vector<12x24x64xbf16> to vector<288x64xbf16>
    %16 = vector.extract_strided_slice %15 {offsets = [0, 0], sizes = [192, 64], strides = [1, 1]} : vector<288x64xbf16> to vector<192x64xbf16>
    %17 = vector.extract_strided_slice %15 {offsets = [1, 0], sizes = [192, 64], strides = [1, 1]} : vector<288x64xbf16> to vector<192x64xbf16>
    %18 = vector.extract_strided_slice %15 {offsets = [2, 0], sizes = [192, 64], strides = [1, 1]} : vector<288x64xbf16> to vector<192x64xbf16>
    %19 = vector.extract_strided_slice %15 {offsets = [24, 0], sizes = [192, 64], strides = [1, 1]} : vector<288x64xbf16> to vector<192x64xbf16>
    %20 = vector.extract_strided_slice %15 {offsets = [25, 0], sizes = [192, 64], strides = [1, 1]} : vector<288x64xbf16> to vector<192x64xbf16>
    %21 = vector.extract_strided_slice %15 {offsets = [26, 0], sizes = [192, 64], strides = [1, 1]} : vector<288x64xbf16> to vector<192x64xbf16>
    %22 = vector.extract_strided_slice %15 {offsets = [48, 0], sizes = [192, 64], strides = [1, 1]} : vector<288x64xbf16> to vector<192x64xbf16>
    %23 = vector.extract_strided_slice %15 {offsets = [49, 0], sizes = [192, 64], strides = [1, 1]} : vector<288x64xbf16> to vector<192x64xbf16>
    %24 = vector.extract_strided_slice %15 {offsets = [50, 0], sizes = [192, 64], strides = [1, 1]} : vector<288x64xbf16> to vector<192x64xbf16>
    %25 = tpu.concatenate %16, %17, %18, %19, %20, %21, %22, %23, %24 in 1 : vector<192x64xbf16>, vector<192x64xbf16>, vector<192x64xbf16>, vector<192x64xbf16>, vector<192x64xbf16>, vector<192x64xbf16>, vector<192x64xbf16>, vector<192x64xbf16>, vector<192x64xbf16> -> vector<192x576xbf16>
    %c0_13 = arith.constant 0 : index
    %c0_14 = arith.constant 0 : index
    %26 = vector.load %arg4[%c0_13, %c0_14] : memref<576x64xbf16, #tpu.memory_space<vmem>>, vector<576x64xbf16>
    %cst_15 = arith.constant dense<0.000000e+00> : vector<192x64xf32>
    %27 = tpu.matmul %25, %26, %cst_15 {dimension_numbers = #tpu.dot_dimension_numbers<[1], [0], [0], [1], [0, 0, 1, 1], [], []>} : vector<192x576xbf16>, vector<576x64xbf16>, vector<192x64xf32> -> vector<192x64xf32>
    %c0_16 = arith.constant 0 : index
    %c0_17 = arith.constant 0 : index
    %28 = vector.load %arg5[%c0_16, %c0_17] : memref<1x64xf32, #tpu.memory_space<vmem>>, vector<1x64xf32>
    %29 = vector.broadcast %28 : vector<1x64xf32> to vector<192x64xf32>
    %30 = arith.addf %27, %29 : vector<192x64xf32>
    %31 = vector.shape_cast %30 : vector<192x64xf32> to vector<8x24x64xf32>
    %32 = vector.extract_strided_slice %31 {offsets = [0, 0, 0], sizes = [8, 16, 64], strides = [1, 1, 1]} : vector<8x24x64xf32> to vector<8x16x64xf32>
    %c0_i32_18 = arith.constant 0 : i32
    %33 = arith.cmpi eq, %arg0, %c0_i32_18 : i32
    %c0_i32_19 = arith.constant 0 : i32
    %34 = arith.cmpi eq, %arg1, %c0_i32_19 : i32
    %35 = arith.andi %33, %34 : i1
    %c0_i32_20 = arith.constant 0 : i32
    %36 = arith.cmpi eq, %arg2, %c0_i32_20 : i32
    %37 = arith.andi %35, %36 : i1
    %38 = arith.extui %37 : i1 to i32
    %c0_i32_21 = arith.constant 0 : i32
    %39 = arith.cmpi ne, %38, %c0_i32_21 : i32
    scf.if %39 {
      %cst_25 = arith.constant 0.000000e+00 : f32
      %45 = vector.broadcast %cst_25 : f32 to vector<1x64xf32>
      %c0_26 = arith.constant 0 : index
      %c0_27 = arith.constant 0 : index
      %46 = vector.load %arg11[%c0_26, %c0_27] : memref<1x64xf32, #tpu.memory_space<vmem>>, vector<1x64xf32>
      tpu.vector_store %arg11[%c0_26, %c0_27], %45 {strides = array<i32>} : memref<1x64xf32, #tpu.memory_space<vmem>>, vector<1x64xf32>,
      %cst_28 = arith.constant 0.000000e+00 : f32
      %47 = vector.broadcast %cst_28 : f32 to vector<1x64xf32>
      %c0_29 = arith.constant 0 : index
      %c0_30 = arith.constant 0 : index
      %48 = vector.load %arg12[%c0_29, %c0_30] : memref<1x64xf32, #tpu.memory_space<vmem>>, vector<1x64xf32>
      tpu.vector_store %arg12[%c0_29, %c0_30], %47 {strides = array<i32>} : memref<1x64xf32, #tpu.memory_space<vmem>>, vector<1x64xf32>,
    } else {
    }
    %c0_i32_22 = arith.constant 0 : i32
    %40 = arith.cmpi eq, %arg0, %c0_i32_22 : i32
    %41 = arith.extui %40 : i1 to i32
    %c0_i32_23 = arith.constant 0 : i32
    %42 = arith.cmpi ne, %41, %c0_i32_23 : i32
    scf.if %42 {
      %cst_25 = arith.constant dense<0.000000e+00> : vector<64xf32>
      %45 = vector.multi_reduction <add>, %32, %cst_25 [0, 1] : vector<8x16x64xf32> to vector<64xf32>
      %46 = arith.mulf %32, %32 : vector<8x16x64xf32>
      %cst_26 = arith.constant dense<0.000000e+00> : vector<64xf32>
      %47 = vector.multi_reduction <add>, %46, %cst_26 [0, 1] : vector<8x16x64xf32> to vector<64xf32>
      %c0_27 = arith.constant 0 : index
      %c0_28 = arith.constant 0 : index
      %48 = vector.load %arg11[%c0_27, %c0_28] : memref<1x64xf32, #tpu.memory_space<vmem>>, vector<1x64xf32>
      %49 = vector.shape_cast %45 : vector<64xf32> to vector<1x64xf32>
      %50 = arith.addf %48, %49 : vector<1x64xf32>
      %c0_29 = arith.constant 0 : index
      %c0_30 = arith.constant 0 : index
      %51 = vector.load %arg11[%c0_29, %c0_30] : memref<1x64xf32, #tpu.memory_space<vmem>>, vector<1x64xf32>
      tpu.vector_store %arg11[%c0_29, %c0_30], %50 {strides = array<i32>} : memref<1x64xf32, #tpu.memory_space<vmem>>, vector<1x64xf32>,
      %c0_31 = arith.constant 0 : index
      %c0_32 = arith.constant 0 : index
      %52 = vector.load %arg12[%c0_31, %c0_32] : memref<1x64xf32, #tpu.memory_space<vmem>>, vector<1x64xf32>
      %53 = vector.shape_cast %47 : vector<64xf32> to vector<1x64xf32>
      %54 = arith.addf %52, %53 : vector<1x64xf32>
      %c0_33 = arith.constant 0 : index
      %c0_34 = arith.constant 0 : index
      %55 = vector.load %arg12[%c0_33, %c0_34] : memref<1x64xf32, #tpu.memory_space<vmem>>, vector<1x64xf32>
      tpu.vector_store %arg12[%c0_33, %c0_34], %54 {strides = array<i32>} : memref<1x64xf32, #tpu.memory_space<vmem>>, vector<1x64xf32>,
    } else {
    }
    %43 = arith.extui %0 : i1 to i32
    %c0_i32_24 = arith.constant 0 : i32
    %44 = arith.cmpi ne, %43, %c0_i32_24 : i32
    scf.if %44 {
      %c0_25 = arith.constant 0 : index
      %c0_26 = arith.constant 0 : index
      %45 = vector.load %arg11[%c0_25, %c0_26] : memref<1x64xf32, #tpu.memory_space<vmem>>, vector<1x64xf32>
      %cst_27 = arith.constant 0.001953125 : f32
      %46 = vector.broadcast %cst_27 : f32 to vector<1x64xf32>
      %47 = arith.mulf %45, %46 : vector<1x64xf32>
      %c0_28 = arith.constant 0 : index
      %c0_29 = arith.constant 0 : index
      %48 = vector.load %arg12[%c0_28, %c0_29] : memref<1x64xf32, #tpu.memory_space<vmem>>, vector<1x64xf32>
      %cst_30 = arith.constant 0.001953125 : f32
      %49 = vector.broadcast %cst_30 : f32 to vector<1x64xf32>
      %50 = arith.mulf %48, %49 : vector<1x64xf32>
      %51 = arith.mulf %47, %47 : vector<1x64xf32>
      %52 = arith.subf %50, %51 : vector<1x64xf32>
      %cst_31 = arith.constant 0.000000e+00 : f32
      %53 = vector.broadcast %cst_31 : f32 to vector<1x64xf32>
      %54 = arith.maximumf %52, %53 : vector<1x64xf32>
      %c0_32 = arith.constant 0 : index
      %c0_33 = arith.constant 0 : index
      %55 = vector.load %arg6[%c0_32, %c0_33] : memref<1x64xf32, #tpu.memory_space<vmem>>, vector<1x64xf32>
      %cst_34 = arith.constant 9.99999974E-6 : f32
      %56 = vector.broadcast %cst_34 : f32 to vector<1x64xf32>
      %57 = arith.addf %54, %56 : vector<1x64xf32>
      %58 = math.rsqrt %57 : vector<1x64xf32>
      %59 = arith.mulf %55, %58 : vector<1x64xf32>
      %c0_35 = arith.constant 0 : index
      %c0_36 = arith.constant 0 : index
      %60 = vector.load %arg7[%c0_35, %c0_36] : memref<1x64xf32, #tpu.memory_space<vmem>>, vector<1x64xf32>
      %61 = arith.mulf %47, %59 : vector<1x64xf32>
      %62 = arith.subf %60, %61 : vector<1x64xf32>
      %63 = vector.shape_cast %59 : vector<1x64xf32> to vector<1x1x64xf32>
      %64 = vector.broadcast %63 : vector<1x1x64xf32> to vector<8x16x64xf32>
      %65 = arith.mulf %32, %64 : vector<8x16x64xf32>
      %66 = vector.shape_cast %62 : vector<1x64xf32> to vector<1x1x64xf32>
      %67 = vector.broadcast %66 : vector<1x1x64xf32> to vector<8x16x64xf32>
      %68 = arith.addf %65, %67 : vector<8x16x64xf32>
      %cst_37 = arith.constant 0.000000e+00 : f32
      %69 = vector.broadcast %cst_37 : f32 to vector<8x16x64xf32>
      %70 = arith.maximumf %68, %69 : vector<8x16x64xf32>
      %c0_38 = arith.constant 0 : index
      %c0_39 = arith.constant 0 : index
      %c0_40 = arith.constant 0 : index
      %c0_41 = arith.constant 0 : index
      %71 = vector.load %arg8[%c0_38, %c0_39, %c0_40, %c0_41] : memref<1x8x16x64xbf16, #tpu.memory_space<vmem>>, vector<1x8x16x64xbf16>
      %72 = vector.shape_cast %71 : vector<1x8x16x64xbf16> to vector<8x16x64xbf16>
      %73 = arith.extf %72 : vector<8x16x64xbf16> to vector<8x16x64xf32>
      %74 = arith.addf %70, %73 : vector<8x16x64xf32>
      %75 = arith.truncf %74 : vector<8x16x64xf32> to vector<8x16x64xbf16>
      %c0_42 = arith.constant 0 : index
      %c0_43 = arith.constant 0 : index
      %c0_44 = arith.constant 0 : index
      %c0_45 = arith.constant 0 : index
      %76 = vector.load %arg9[%c0_42, %c0_43, %c0_44, %c0_45] : memref<1x8x16x64xbf16, #tpu.memory_space<vmem>>, vector<1x8x16x64xbf16>
      %77 = vector.shape_cast %76 : vector<1x8x16x64xbf16> to vector<8x16x64xbf16>
      %78 = vector.shape_cast %75 : vector<8x16x64xbf16> to vector<1x8x16x64xbf16>
      tpu.vector_store %arg9[%c0_42, %c0_43, %c0_44, %c0_45], %78 {strides = array<i32>} : memref<1x8x16x64xbf16, #tpu.memory_space<vmem>>, vector<1x8x16x64xbf16>,
    } else {
    }
    return
  }
  func.func @transform_0(%arg0: i32, %arg1: i32, %arg2: i32) -> (i32, i32, i32, i32) {
    %c0_i32 = arith.constant 0 : i32
    %c0_i32_0 = arith.constant 0 : i32
    %c0_i32_1 = arith.constant 0 : i32
    %c0_i32_2 = arith.constant 0 : i32
    return %arg1, %c0_i32, %c0_i32_0, %c0_i32_1 : i32, i32, i32, i32
  }
  func.func @transform_1(%arg0: i32, %arg1: i32, %arg2: i32) -> (i32, i32) {
    %c0_i32 = arith.constant 0 : i32
    %c0_i32_0 = arith.constant 0 : i32
    %c0_i32_1 = arith.constant 0 : i32
    return %c0_i32, %c0_i32_0 : i32, i32
  }
  func.func @transform_2(%arg0: i32, %arg1: i32, %arg2: i32) -> (i32, i32) {
    %c0_i32 = arith.constant 0 : i32
    %c0_i32_0 = arith.constant 0 : i32
    %c0_i32_1 = arith.constant 0 : i32
    return %c0_i32, %c0_i32_0 : i32, i32
  }
  func.func @transform_3(%arg0: i32, %arg1: i32, %arg2: i32) -> (i32, i32) {
    %c0_i32 = arith.constant 0 : i32
    %c0_i32_0 = arith.constant 0 : i32
    %c0_i32_1 = arith.constant 0 : i32
    return %c0_i32, %c0_i32_0 : i32, i32
  }
  func.func @transform_4(%arg0: i32, %arg1: i32, %arg2: i32) -> (i32, i32) {
    %c0_i32 = arith.constant 0 : i32
    %c0_i32_0 = arith.constant 0 : i32
    %c0_i32_1 = arith.constant 0 : i32
    return %c0_i32, %c0_i32_0 : i32, i32
  }
  func.func @transform_5(%arg0: i32, %arg1: i32, %arg2: i32) -> (i32, i32, i32, i32) {
    %0 = arith.muli %arg2, %arg0 : i32
    %c0_i32 = arith.constant 0 : i32
    %c0_i32_0 = arith.constant 0 : i32
    %c0_i32_1 = arith.constant 0 : i32
    return %arg1, %0, %c0_i32, %c0_i32_0 : i32, i32, i32, i32
  }
  func.func @transform_6(%arg0: i32, %arg1: i32, %arg2: i32) -> (i32, i32, i32, i32) {
    %0 = arith.muli %arg2, %arg0 : i32
    %c0_i32 = arith.constant 0 : i32
    %c0_i32_0 = arith.constant 0 : i32
    %c0_i32_1 = arith.constant 0 : i32
    return %arg1, %0, %c0_i32, %c0_i32_0 : i32, i32, i32, i32
  }
}

module attributes {stable_mosaic.version = 11 : i64} {
  func.func @kernel(%arg0: i32, %arg1: i32, %arg2: i32, %arg3: memref<1x16x16x64xbf16, #tpu.memory_space<vmem>>, %arg4: memref<576x64xbf16, #tpu.memory_space<vmem>>, %arg5: memref<1x64xf32, #tpu.memory_space<vmem>>, %arg6: memref<1x64xf32, #tpu.memory_space<vmem>>, %arg7: memref<1x64xf32, #tpu.memory_space<vmem>>, %arg8: memref<1x8x16x64xbf16, #tpu.memory_space<vmem>>, %arg9: memref<1x1x64xf32, #tpu.memory_space<vmem>>, %arg10: memref<1x1xf32, #tpu.memory_space<vmem>>, %arg11: memref<1x8x16xf32, #tpu.memory_space<vmem>>, %arg12: memref<12x24x64xbf16, #tpu.memory_space<vmem>>, %arg13: memref<1x64xf32, #tpu.memory_space<vmem>>, %arg14: memref<1x64xf32, #tpu.memory_space<vmem>>) attributes {dimension_semantics = [#tpu.dimension_semantics<arbitrary>, #tpu.dimension_semantics<arbitrary>, #tpu.dimension_semantics<arbitrary>], iteration_bounds = array<i64: 2, 2, 2>, scalar_prefetch = 0 : i64, scratch_operands = 3 : i64, tpu.core_type = #tpu.core_type<tc>, window_params = [{transform_indices = @transform_0, window_bounds = array<i64: 1, 16, 16, 64>}, {pipeline_mode = #tpu.pipeline_mode<synchronous>, transform_indices = @transform_1, window_bounds = array<i64: 576, 64>}, {pipeline_mode = #tpu.pipeline_mode<synchronous>, transform_indices = @transform_2, window_bounds = array<i64: 1, 64>}, {pipeline_mode = #tpu.pipeline_mode<synchronous>, transform_indices = @transform_3, window_bounds = array<i64: 1, 64>}, {pipeline_mode = #tpu.pipeline_mode<synchronous>, transform_indices = @transform_4, window_bounds = array<i64: 1, 64>}, {transform_indices = @transform_5, window_bounds = array<i64: 1, 8, 16, 64>}, {pipeline_mode = #tpu.pipeline_mode<synchronous>, transform_indices = @transform_6, window_bounds = array<i64: 1, 1, 64>}, {pipeline_mode = #tpu.pipeline_mode<synchronous>, transform_indices = @transform_7, window_bounds = array<i64: 1, 1>}, {transform_indices = @transform_8, window_bounds = array<i64: 1, 8, 16>}]} {
    %c1_i32 = arith.constant 1 : i32
    %0 = arith.cmpi eq, %arg0, %c1_i32 : i32
    %cst = arith.constant 0.000000e+00 : bf16
    %1 = vector.broadcast %cst : bf16 to vector<12x24x64xbf16>
    %c0 = arith.constant 0 : index
    %c0_0 = arith.constant 0 : index
    %c0_1 = arith.constant 0 : index
    %2 = vector.load %arg12[%c0, %c0_0, %c0_1] : memref<12x24x64xbf16, #tpu.memory_space<vmem>>, vector<12x24x64xbf16>
    tpu.vector_store %arg12[%c0, %c0_0, %c0_1], %1 {strides = array<i32>} : memref<12x24x64xbf16, #tpu.memory_space<vmem>>, vector<12x24x64xbf16>,
    %c8_i32 = arith.constant 8 : i32
    %3 = arith.muli %arg2, %c8_i32 : i32
    %c0_2 = arith.constant 0 : index
    %4 = arith.index_cast %3 : i32 to index
    %c0_3 = arith.constant 0 : index
    %c0_4 = arith.constant 0 : index
    %5 = vector.load %arg3[%c0_2, %4, %c0_3, %c0_4] : memref<1x16x16x64xbf16, #tpu.memory_space<vmem>>, vector<1x8x16x64xbf16>
    %6 = vector.shape_cast %5 : vector<1x8x16x64xbf16> to vector<8x16x64xbf16>
    %c1 = arith.constant 1 : index
    %c1_5 = arith.constant 1 : index
    %c0_6 = arith.constant 0 : index
    %7 = vector.load %arg12[%c1, %c1_5, %c0_6] : memref<12x24x64xbf16, #tpu.memory_space<vmem>>, vector<8x16x64xbf16>
    tpu.vector_store %arg12[%c1, %c1_5, %c0_6], %6 {strides = array<i32>} : memref<12x24x64xbf16, #tpu.memory_space<vmem>>, vector<8x16x64xbf16>,
    %c0_i32 = arith.constant 0 : i32
    %8 = arith.cmpi sgt, %arg2, %c0_i32 : i32
    %9 = arith.extui %8 : i1 to i32
    %c0_i32_7 = arith.constant 0 : i32
    %10 = arith.cmpi ne, %9, %c0_i32_7 : i32
    scf.if %10 {
      %c8_i32_25 = arith.constant 8 : i32
      %45 = arith.muli %arg2, %c8_i32_25 : i32
      %c1_i32_26 = arith.constant 1 : i32
      %46 = arith.subi %45, %c1_i32_26 : i32
      %c0_27 = arith.constant 0 : index
      %47 = arith.index_cast %46 : i32 to index
      %c0_28 = arith.constant 0 : index
      %c0_29 = arith.constant 0 : index
      %48 = vector.load %arg3[%c0_27, %47, %c0_28, %c0_29] : memref<1x16x16x64xbf16, #tpu.memory_space<vmem>>, vector<1x1x16x64xbf16>
      %49 = vector.shape_cast %48 : vector<1x1x16x64xbf16> to vector<1x16x64xbf16>
      %c0_30 = arith.constant 0 : index
      %c1_31 = arith.constant 1 : index
      %c0_32 = arith.constant 0 : index
      %50 = vector.load %arg12[%c0_30, %c1_31, %c0_32] : memref<12x24x64xbf16, #tpu.memory_space<vmem>>, vector<1x16x64xbf16>
      tpu.vector_store %arg12[%c0_30, %c1_31, %c0_32], %49 {strides = array<i32>} : memref<12x24x64xbf16, #tpu.memory_space<vmem>>, vector<1x16x64xbf16>,
    } else {
    }
    %c1_i32_8 = arith.constant 1 : i32
    %11 = arith.cmpi slt, %arg2, %c1_i32_8 : i32
    %12 = arith.extui %11 : i1 to i32
    %c0_i32_9 = arith.constant 0 : i32
    %13 = arith.cmpi ne, %12, %c0_i32_9 : i32
    scf.if %13 {
      %c8_i32_25 = arith.constant 8 : i32
      %45 = arith.muli %arg2, %c8_i32_25 : i32
      %c8_i32_26 = arith.constant 8 : i32
      %46 = arith.addi %45, %c8_i32_26 : i32
      %c0_27 = arith.constant 0 : index
      %47 = arith.index_cast %46 : i32 to index
      %c0_28 = arith.constant 0 : index
      %c0_29 = arith.constant 0 : index
      %48 = vector.load %arg3[%c0_27, %47, %c0_28, %c0_29] : memref<1x16x16x64xbf16, #tpu.memory_space<vmem>>, vector<1x1x16x64xbf16>
      %49 = vector.shape_cast %48 : vector<1x1x16x64xbf16> to vector<1x16x64xbf16>
      %c9 = arith.constant 9 : index
      %c1_30 = arith.constant 1 : index
      %c0_31 = arith.constant 0 : index
      %50 = vector.load %arg12[%c9, %c1_30, %c0_31] : memref<12x24x64xbf16, #tpu.memory_space<vmem>>, vector<1x16x64xbf16>
      tpu.vector_store %arg12[%c9, %c1_30, %c0_31], %49 {strides = array<i32>} : memref<12x24x64xbf16, #tpu.memory_space<vmem>>, vector<1x16x64xbf16>,
    } else {
    }
    %c0_10 = arith.constant 0 : index
    %c0_11 = arith.constant 0 : index
    %c0_12 = arith.constant 0 : index
    %14 = vector.load %arg12[%c0_10, %c0_11, %c0_12] : memref<12x24x64xbf16, #tpu.memory_space<vmem>>, vector<12x24x64xbf16>
    %15 = vector.shape_cast %14 : vector<12x24x64xbf16> to vector<288x64xbf16>
    %16 = vector.extract_strided_slice %15 {offsets = [0, 0], sizes = [192, 64], strides = [1, 1]} : vector<288x64xbf16> to vector<192x64xbf16>
    %17 = vector.extract_strided_slice %15 {offsets = [1, 0], sizes = [192, 64], strides = [1, 1]} : vector<288x64xbf16> to vector<192x64xbf16>
    %18 = vector.extract_strided_slice %15 {offsets = [2, 0], sizes = [192, 64], strides = [1, 1]} : vector<288x64xbf16> to vector<192x64xbf16>
    %19 = vector.extract_strided_slice %15 {offsets = [24, 0], sizes = [192, 64], strides = [1, 1]} : vector<288x64xbf16> to vector<192x64xbf16>
    %20 = vector.extract_strided_slice %15 {offsets = [25, 0], sizes = [192, 64], strides = [1, 1]} : vector<288x64xbf16> to vector<192x64xbf16>
    %21 = vector.extract_strided_slice %15 {offsets = [26, 0], sizes = [192, 64], strides = [1, 1]} : vector<288x64xbf16> to vector<192x64xbf16>
    %22 = vector.extract_strided_slice %15 {offsets = [48, 0], sizes = [192, 64], strides = [1, 1]} : vector<288x64xbf16> to vector<192x64xbf16>
    %23 = vector.extract_strided_slice %15 {offsets = [49, 0], sizes = [192, 64], strides = [1, 1]} : vector<288x64xbf16> to vector<192x64xbf16>
    %24 = vector.extract_strided_slice %15 {offsets = [50, 0], sizes = [192, 64], strides = [1, 1]} : vector<288x64xbf16> to vector<192x64xbf16>
    %25 = tpu.concatenate %16, %17, %18, %19, %20, %21, %22, %23, %24 in 1 : vector<192x64xbf16>, vector<192x64xbf16>, vector<192x64xbf16>, vector<192x64xbf16>, vector<192x64xbf16>, vector<192x64xbf16>, vector<192x64xbf16>, vector<192x64xbf16>, vector<192x64xbf16> -> vector<192x576xbf16>
    %c0_13 = arith.constant 0 : index
    %c0_14 = arith.constant 0 : index
    %26 = vector.load %arg4[%c0_13, %c0_14] : memref<576x64xbf16, #tpu.memory_space<vmem>>, vector<576x64xbf16>
    %cst_15 = arith.constant dense<0.000000e+00> : vector<192x64xf32>
    %27 = tpu.matmul %25, %26, %cst_15 {dimension_numbers = #tpu.dot_dimension_numbers<[1], [0], [0], [1], [0, 0, 1, 1], [], []>} : vector<192x576xbf16>, vector<576x64xbf16>, vector<192x64xf32> -> vector<192x64xf32>
    %c0_16 = arith.constant 0 : index
    %c0_17 = arith.constant 0 : index
    %28 = vector.load %arg5[%c0_16, %c0_17] : memref<1x64xf32, #tpu.memory_space<vmem>>, vector<1x64xf32>
    %29 = vector.broadcast %28 : vector<1x64xf32> to vector<192x64xf32>
    %30 = arith.addf %27, %29 : vector<192x64xf32>
    %31 = vector.shape_cast %30 : vector<192x64xf32> to vector<8x24x64xf32>
    %32 = vector.extract_strided_slice %31 {offsets = [0, 0, 0], sizes = [8, 16, 64], strides = [1, 1, 1]} : vector<8x24x64xf32> to vector<8x16x64xf32>
    %c0_i32_18 = arith.constant 0 : i32
    %33 = arith.cmpi eq, %arg0, %c0_i32_18 : i32
    %c0_i32_19 = arith.constant 0 : i32
    %34 = arith.cmpi eq, %arg1, %c0_i32_19 : i32
    %35 = arith.andi %33, %34 : i1
    %c0_i32_20 = arith.constant 0 : i32
    %36 = arith.cmpi eq, %arg2, %c0_i32_20 : i32
    %37 = arith.andi %35, %36 : i1
    %38 = arith.extui %37 : i1 to i32
    %c0_i32_21 = arith.constant 0 : i32
    %39 = arith.cmpi ne, %38, %c0_i32_21 : i32
    scf.if %39 {
      %cst_25 = arith.constant 0.000000e+00 : f32
      %45 = vector.broadcast %cst_25 : f32 to vector<1x64xf32>
      %c0_26 = arith.constant 0 : index
      %c0_27 = arith.constant 0 : index
      %46 = vector.load %arg13[%c0_26, %c0_27] : memref<1x64xf32, #tpu.memory_space<vmem>>, vector<1x64xf32>
      tpu.vector_store %arg13[%c0_26, %c0_27], %45 {strides = array<i32>} : memref<1x64xf32, #tpu.memory_space<vmem>>, vector<1x64xf32>,
      %cst_28 = arith.constant 0.000000e+00 : f32
      %47 = vector.broadcast %cst_28 : f32 to vector<1x64xf32>
      %c0_29 = arith.constant 0 : index
      %c0_30 = arith.constant 0 : index
      %48 = vector.load %arg14[%c0_29, %c0_30] : memref<1x64xf32, #tpu.memory_space<vmem>>, vector<1x64xf32>
      tpu.vector_store %arg14[%c0_29, %c0_30], %47 {strides = array<i32>} : memref<1x64xf32, #tpu.memory_space<vmem>>, vector<1x64xf32>,
    } else {
    }
    %c0_i32_22 = arith.constant 0 : i32
    %40 = arith.cmpi eq, %arg0, %c0_i32_22 : i32
    %41 = arith.extui %40 : i1 to i32
    %c0_i32_23 = arith.constant 0 : i32
    %42 = arith.cmpi ne, %41, %c0_i32_23 : i32
    scf.if %42 {
      %cst_25 = arith.constant dense<0.000000e+00> : vector<64xf32>
      %45 = vector.multi_reduction <add>, %32, %cst_25 [0, 1] : vector<8x16x64xf32> to vector<64xf32>
      %46 = arith.mulf %32, %32 : vector<8x16x64xf32>
      %cst_26 = arith.constant dense<0.000000e+00> : vector<64xf32>
      %47 = vector.multi_reduction <add>, %46, %cst_26 [0, 1] : vector<8x16x64xf32> to vector<64xf32>
      %c0_27 = arith.constant 0 : index
      %c0_28 = arith.constant 0 : index
      %48 = vector.load %arg13[%c0_27, %c0_28] : memref<1x64xf32, #tpu.memory_space<vmem>>, vector<1x64xf32>
      %49 = vector.shape_cast %45 : vector<64xf32> to vector<1x64xf32>
      %50 = arith.addf %48, %49 : vector<1x64xf32>
      %c0_29 = arith.constant 0 : index
      %c0_30 = arith.constant 0 : index
      %51 = vector.load %arg13[%c0_29, %c0_30] : memref<1x64xf32, #tpu.memory_space<vmem>>, vector<1x64xf32>
      tpu.vector_store %arg13[%c0_29, %c0_30], %50 {strides = array<i32>} : memref<1x64xf32, #tpu.memory_space<vmem>>, vector<1x64xf32>,
      %c0_31 = arith.constant 0 : index
      %c0_32 = arith.constant 0 : index
      %52 = vector.load %arg14[%c0_31, %c0_32] : memref<1x64xf32, #tpu.memory_space<vmem>>, vector<1x64xf32>
      %53 = vector.shape_cast %47 : vector<64xf32> to vector<1x64xf32>
      %54 = arith.addf %52, %53 : vector<1x64xf32>
      %c0_33 = arith.constant 0 : index
      %c0_34 = arith.constant 0 : index
      %55 = vector.load %arg14[%c0_33, %c0_34] : memref<1x64xf32, #tpu.memory_space<vmem>>, vector<1x64xf32>
      tpu.vector_store %arg14[%c0_33, %c0_34], %54 {strides = array<i32>} : memref<1x64xf32, #tpu.memory_space<vmem>>, vector<1x64xf32>,
    } else {
    }
    %43 = arith.extui %0 : i1 to i32
    %c0_i32_24 = arith.constant 0 : i32
    %44 = arith.cmpi ne, %43, %c0_i32_24 : i32
    scf.if %44 {
      %c0_25 = arith.constant 0 : index
      %c0_26 = arith.constant 0 : index
      %45 = vector.load %arg13[%c0_25, %c0_26] : memref<1x64xf32, #tpu.memory_space<vmem>>, vector<1x64xf32>
      %cst_27 = arith.constant 0.001953125 : f32
      %46 = vector.broadcast %cst_27 : f32 to vector<1x64xf32>
      %47 = arith.mulf %45, %46 : vector<1x64xf32>
      %c0_28 = arith.constant 0 : index
      %c0_29 = arith.constant 0 : index
      %48 = vector.load %arg14[%c0_28, %c0_29] : memref<1x64xf32, #tpu.memory_space<vmem>>, vector<1x64xf32>
      %cst_30 = arith.constant 0.001953125 : f32
      %49 = vector.broadcast %cst_30 : f32 to vector<1x64xf32>
      %50 = arith.mulf %48, %49 : vector<1x64xf32>
      %51 = arith.mulf %47, %47 : vector<1x64xf32>
      %52 = arith.subf %50, %51 : vector<1x64xf32>
      %cst_31 = arith.constant 0.000000e+00 : f32
      %53 = vector.broadcast %cst_31 : f32 to vector<1x64xf32>
      %54 = arith.maximumf %52, %53 : vector<1x64xf32>
      %c0_32 = arith.constant 0 : index
      %c0_33 = arith.constant 0 : index
      %55 = vector.load %arg6[%c0_32, %c0_33] : memref<1x64xf32, #tpu.memory_space<vmem>>, vector<1x64xf32>
      %cst_34 = arith.constant 9.99999974E-6 : f32
      %56 = vector.broadcast %cst_34 : f32 to vector<1x64xf32>
      %57 = arith.addf %54, %56 : vector<1x64xf32>
      %58 = math.rsqrt %57 : vector<1x64xf32>
      %59 = arith.mulf %55, %58 : vector<1x64xf32>
      %c0_35 = arith.constant 0 : index
      %c0_36 = arith.constant 0 : index
      %60 = vector.load %arg7[%c0_35, %c0_36] : memref<1x64xf32, #tpu.memory_space<vmem>>, vector<1x64xf32>
      %61 = arith.mulf %47, %59 : vector<1x64xf32>
      %62 = arith.subf %60, %61 : vector<1x64xf32>
      %63 = vector.shape_cast %59 : vector<1x64xf32> to vector<1x1x64xf32>
      %64 = vector.broadcast %63 : vector<1x1x64xf32> to vector<8x16x64xf32>
      %65 = arith.mulf %32, %64 : vector<8x16x64xf32>
      %66 = vector.shape_cast %62 : vector<1x64xf32> to vector<1x1x64xf32>
      %67 = vector.broadcast %66 : vector<1x1x64xf32> to vector<8x16x64xf32>
      %68 = arith.addf %65, %67 : vector<8x16x64xf32>
      %cst_37 = arith.constant 0.000000e+00 : f32
      %69 = vector.broadcast %cst_37 : f32 to vector<8x16x64xf32>
      %70 = arith.maximumf %68, %69 : vector<8x16x64xf32>
      %c0_38 = arith.constant 0 : index
      %c0_39 = arith.constant 0 : index
      %c0_40 = arith.constant 0 : index
      %c0_41 = arith.constant 0 : index
      %71 = vector.load %arg8[%c0_38, %c0_39, %c0_40, %c0_41] : memref<1x8x16x64xbf16, #tpu.memory_space<vmem>>, vector<1x8x16x64xbf16>
      %72 = vector.shape_cast %71 : vector<1x8x16x64xbf16> to vector<8x16x64xbf16>
      %73 = arith.extf %72 : vector<8x16x64xbf16> to vector<8x16x64xf32>
      %74 = arith.addf %70, %73 : vector<8x16x64xf32>
      %c0_42 = arith.constant 0 : index
      %c0_43 = arith.constant 0 : index
      %c0_44 = arith.constant 0 : index
      %75 = vector.load %arg9[%c0_42, %c0_43, %c0_44] : memref<1x1x64xf32, #tpu.memory_space<vmem>>, vector<1x1x64xf32>
      %76 = vector.broadcast %75 : vector<1x1x64xf32> to vector<8x16x64xf32>
      %77 = arith.mulf %74, %76 : vector<8x16x64xf32>
      %cst_45 = arith.constant dense<0.000000e+00> : vector<8x16xf32>
      %78 = vector.multi_reduction <add>, %77, %cst_45 [2] : vector<8x16x64xf32> to vector<8x16xf32>
      %c0_46 = arith.constant 0 : index
      %c0_47 = arith.constant 0 : index
      %79 = vector.load %arg10[%c0_46, %c0_47] : memref<1x1xf32, #tpu.memory_space<vmem>>, vector<1x1xf32>
      %80 = vector.broadcast %79 : vector<1x1xf32> to vector<8x16xf32>
      %81 = arith.addf %78, %80 : vector<8x16xf32>
      %82 = math.tanh %81 : vector<8x16xf32>
      %c0_48 = arith.constant 0 : index
      %c0_49 = arith.constant 0 : index
      %c0_50 = arith.constant 0 : index
      %83 = vector.load %arg11[%c0_48, %c0_49, %c0_50] : memref<1x8x16xf32, #tpu.memory_space<vmem>>, vector<1x8x16xf32>
      %84 = vector.shape_cast %83 : vector<1x8x16xf32> to vector<8x16xf32>
      %85 = vector.shape_cast %82 : vector<8x16xf32> to vector<1x8x16xf32>
      tpu.vector_store %arg11[%c0_48, %c0_49, %c0_50], %85 {strides = array<i32>} : memref<1x8x16xf32, #tpu.memory_space<vmem>>, vector<1x8x16xf32>,
    } else {
    }
    return
  }
  func.func @transform_0(%arg0: i32, %arg1: i32, %arg2: i32) -> (i32, i32, i32, i32) {
    %c0_i32 = arith.constant 0 : i32
    %c0_i32_0 = arith.constant 0 : i32
    %c0_i32_1 = arith.constant 0 : i32
    %c0_i32_2 = arith.constant 0 : i32
    return %arg1, %c0_i32, %c0_i32_0, %c0_i32_1 : i32, i32, i32, i32
  }
  func.func @transform_1(%arg0: i32, %arg1: i32, %arg2: i32) -> (i32, i32) {
    %c0_i32 = arith.constant 0 : i32
    %c0_i32_0 = arith.constant 0 : i32
    %c0_i32_1 = arith.constant 0 : i32
    return %c0_i32, %c0_i32_0 : i32, i32
  }
  func.func @transform_2(%arg0: i32, %arg1: i32, %arg2: i32) -> (i32, i32) {
    %c0_i32 = arith.constant 0 : i32
    %c0_i32_0 = arith.constant 0 : i32
    %c0_i32_1 = arith.constant 0 : i32
    return %c0_i32, %c0_i32_0 : i32, i32
  }
  func.func @transform_3(%arg0: i32, %arg1: i32, %arg2: i32) -> (i32, i32) {
    %c0_i32 = arith.constant 0 : i32
    %c0_i32_0 = arith.constant 0 : i32
    %c0_i32_1 = arith.constant 0 : i32
    return %c0_i32, %c0_i32_0 : i32, i32
  }
  func.func @transform_4(%arg0: i32, %arg1: i32, %arg2: i32) -> (i32, i32) {
    %c0_i32 = arith.constant 0 : i32
    %c0_i32_0 = arith.constant 0 : i32
    %c0_i32_1 = arith.constant 0 : i32
    return %c0_i32, %c0_i32_0 : i32, i32
  }
  func.func @transform_5(%arg0: i32, %arg1: i32, %arg2: i32) -> (i32, i32, i32, i32) {
    %0 = arith.muli %arg2, %arg0 : i32
    %c0_i32 = arith.constant 0 : i32
    %c0_i32_0 = arith.constant 0 : i32
    %c0_i32_1 = arith.constant 0 : i32
    return %arg1, %0, %c0_i32, %c0_i32_0 : i32, i32, i32, i32
  }
  func.func @transform_6(%arg0: i32, %arg1: i32, %arg2: i32) -> (i32, i32, i32) {
    %c0_i32 = arith.constant 0 : i32
    %c0_i32_0 = arith.constant 0 : i32
    %c0_i32_1 = arith.constant 0 : i32
    %c0_i32_2 = arith.constant 0 : i32
    return %c0_i32, %c0_i32_0, %c0_i32_1 : i32, i32, i32
  }
  func.func @transform_7(%arg0: i32, %arg1: i32, %arg2: i32) -> (i32, i32) {
    %c0_i32 = arith.constant 0 : i32
    %c0_i32_0 = arith.constant 0 : i32
    %c0_i32_1 = arith.constant 0 : i32
    return %c0_i32, %c0_i32_0 : i32, i32
  }
  func.func @transform_8(%arg0: i32, %arg1: i32, %arg2: i32) -> (i32, i32, i32) {
    %0 = arith.muli %arg2, %arg0 : i32
    %c0_i32 = arith.constant 0 : i32
    %c0_i32_0 = arith.constant 0 : i32
    return %arg1, %0, %c0_i32 : i32, i32, i32
  }
}

</mosaic_0001>

<llo_original>
// kernel: srgan_g_forward.46
$region0: #{srgan_g_forward.46}
  #allocation0 [shape = 'u32[]', space=smem, size = 0x4, offset = 0x4, fixed_abs, tag = 'smem constant byte address 0x4 - core index']
  #allocation1 [shape = 'u32[72,128]{1,0:T(1,128)}', space=vmem, size = 0x9000, scoped, tag = 'internal scratch']
  #allocation2 [shape = 'bf16[12,24,8]{2,1,0:T(8,128)(2,1)}', space=vmem, size = 0x12000, scoped, tag = 'scratch operand']
  %s0 = inlined_call_operand.vmem [shape: bf16[2,16,16,8], index: 0, kind: input, shape index: {}]
  %s1 = inlined_call_operand.vmem [shape: bf16[72,64], index: 1, kind: input, shape index: {}]
  %s2 = inlined_call_operand.vmem [shape: f32[1,64], index: 2, kind: input, shape index: {}]
  %s3 = inlined_call_operand.vmem [shape: bf16[2,16,16,64], index: 3, kind: output, shape index: {}]
  %s4 = sld [smem:[#allocation0]]
  $region57: #{srgan_g_forward.46} parent=0
    _
  %s6 = ssub.s32 1, %s4
  %s7 = scalar_select 0, %s6, %s4
  loop: start=0, step=1, limit=6
  $region2: #{srgan_g_forward.46} parent=0 // loop_pre_header
    _
  $region3: #{srgan_g_forward.46} parent=0 // loop_header
    %s9 = sphi 0, %s13
    %p10 = scmp.ge.s32.totalorder %s9, 6
    %s16 = sphi 0, %s35
    %s17 = sphi 0, %s31
    %s18 = sphi 0, %s27
    %s19 = sphi 0, %s16
    %s20 = sphi 0, %s17
    %s21 = sphi 0, %s18
    %s22 = sphi 0, %s19
    %s23 = sphi 0, %s20
    %s24 = sphi 0, %s21
    %s38 = sphi 0, %s40
    %s41 = sphi 0, %s38
    %s42 = sphi 0, %s41
    %s58 = sphi 0, %s42
    %s62 = sphi 0, %s62
    %s64 = sphi 0, %s62
    %s65 = sphi 0, %s64
    %s79 = sphi 0, %s65
    %s83 = sphi 0, %s83
    %s85 = sphi 0, %s83
    %s86 = sphi 0, %s85
    %s100 = sphi 0, %s86
    %s108 = sphi 0, %s110
    %s111 = sphi 0, %s108
    %s112 = sphi 0, %s111
    %s128 = sphi 0, %s112
  $region4: #{srgan_g_forward.46} parent=0 // loop_header_branch
    %12 = sbr.rel (%p10) target = $region8
  $region5: #{srgan_g_forward.46} parent=0 // loop_body
    %s14 = ssub.s32 %s9, 1
    %s15 = ssub.s32 %s9, 2
    %s25 = sadd.s32 1, %s18
    %p26 = scmp.ge.s32.totalorder %s25, 2
    %s27 = scalar_select %p26, 0, %s25
    %s28 = sadd.s32 1, %s17
    %s29 = scalar_select %p26, %s28, %s17
    %p30 = scmp.ge.s32.totalorder %s29, 2
    %s31 = scalar_select %p30, 0, %s29
    %s32 = sadd.s32 1, %s16
    %s33 = scalar_select %p30, %s32, %s16
    %p34 = scmp.ge.s32.totalorder %s33, 1
    %s35 = scalar_select %p34, 0, %s33
    %s36 = ssub.s32 %s17, %s31
    %p37 = scmp.eq.s32.totalorder %s36, 0
    %s39 = sadd.s32 %s38, 1
    %s40 = scalar_select %p37, %s38, %s39
    %p43 = pneg %p37
    %p44 = scmp.eq.s32.totalorder %s9, 3
    %p45 = por %p43, %p44
    %p46 = scmp.ne.s32.totalorder %s38, %s41
    %p47 = scmp.eq.s32.totalorder %s9, 0
    %p48 = por %p46, %p47
    %p49 = scmp.ne.s32.totalorder %s38, %s41
    %p50 = scmp.eq.s32.totalorder %s14, 3
    %p51 = por %p49, %p50
    %p52 = scmp.ne.s32.totalorder %s41, %s42
    %p53 = scmp.eq.s32.totalorder %s14, 0
    %p54 = por %p52, %p53
    %p55 = scmp.ne.s32.totalorder %s41, %s42
    %p56 = scmp.eq.s32.totalorder %s15, 3
    %p57 = por %p55, %p56
    %p59 = scmp.ne.s32.totalorder %s42, %s58
    %p60 = scmp.eq.s32.totalorder %s15, 0
    %p61 = por %p59, %p60
    %s63 = sadd.s32 %s62, 1
    %p66 = scmp.eq.s32.totalorder %s9, 3
    %p67 = scmp.ne.s32.totalorder %s62, %s64
    %p68 = scmp.eq.s32.totalorder %s9, 0
    %p69 = por %p67, %p68
    %p70 = scmp.ne.s32.totalorder %s62, %s64
    %p71 = scmp.eq.s32.totalorder %s14, 3
    %p72 = por %p70, %p71
    %p73 = scmp.ne.s32.totalorder %s64, %s65
    %p74 = scmp.eq.s32.totalorder %s14, 0
    %p75 = por %p73, %p74
    %p76 = scmp.ne.s32.totalorder %s64, %s65
    %p77 = scmp.eq.s32.totalorder %s15, 3
    %p78 = por %p76, %p77
    %p80 = scmp.ne.s32.totalorder %s65, %s79
    %p81 = scmp.eq.s32.totalorder %s15, 0
    %p82 = por %p80, %p81
    %s84 = sadd.s32 %s83, 1
    %p87 = scmp.eq.s32.totalorder %s9, 3
    %p88 = scmp.ne.s32.totalorder %s83, %s85
    %p89 = scmp.eq.s32.totalorder %s9, 0
    %p90 = por %p88, %p89
    %p91 = scmp.ne.s32.totalorder %s83, %s85
    %p92 = scmp.eq.s32.totalorder %s14, 3
    %p93 = por %p91, %p92
    %p94 = scmp.ne.s32.totalorder %s85, %s86
    %p95 = scmp.eq.s32.totalorder %s14, 0
    %p96 = por %p94, %p95
    %p97 = scmp.ne.s32.totalorder %s85, %s86
    %p98 = scmp.eq.s32.totalorder %s15, 3
    %p99 = por %p97, %p98
    %p101 = scmp.ne.s32.totalorder %s86, %s100
    %p102 = scmp.eq.s32.totalorder %s15, 0
    %p103 = por %p101, %p102
    %s104 = ssub.s32 %s17, %s31
    %s105 = ssub.s32 %s18, %s27
    %s106 = sor.u32 %s104, %s105
    %p107 = scmp.eq.s32.totalorder %s106, 0
    %s109 = sadd.s32 %s108, 1
    %s110 = scalar_select %p107, %s108, %s109
    %p113 = pneg %p107
    %p114 = scmp.eq.s32.totalorder %s9, 3
    %p115 = por %p113, %p114
    %p116 = scmp.ne.s32.totalorder %s108, %s111
    %p117 = scmp.eq.s32.totalorder %s9, 0
    %p118 = por %p116, %p117
    %p119 = scmp.ne.s32.totalorder %s108, %s111
    %p120 = scmp.eq.s32.totalorder %s14, 3
    %p121 = por %p119, %p120
    %p122 = scmp.ne.s32.totalorder %s111, %s112
    %p123 = scmp.eq.s32.totalorder %s14, 0
    %p124 = por %p122, %p123
    %p125 = scmp.ne.s32.totalorder %s111, %s112
    %p126 = scmp.eq.s32.totalorder %s15, 3
    %p127 = por %p125, %p126
    %p129 = scmp.ne.s32.totalorder %s112, %s128
    %p130 = scmp.eq.s32.totalorder %s15, 0
    %p131 = por %p129, %p130
    %p132 = scmp.le.s32.totalorder 1, %s9
    %p133 = scmp.lt.s32.totalorder %s9, 5
    %p134 = pnand %p132, %p133
    %p135 = pneg %p134
    // Predicated region
    $region9: #{srgan_g_forward.46} parent=5 // pred_check
      _
    $region10: #{srgan_g_forward.46} parent=5 // pred_check_branch
      %137 = sbr.rel (%p134) target = $region12
    $region11: #{srgan_g_forward.46} parent=5 // pred_region
      %s138 = ssub.s32 %s9, 1
      // Predicated region
      $region13: #{srgan_g_forward.46} parent=11 // pred_check
        %p139 = pneg %p75
      $region14: #{srgan_g_forward.46} parent=11 // pred_check_branch
        %141 = sbr.rel (%p139) target = $region16
      $region15: #{srgan_g_forward.46} parent=11 // pred_region
        _
      $region16: #{srgan_g_forward.46} parent=11 // pred_fallthru
        _
      // Predicated region
      $region17: #{srgan_g_forward.46} parent=11 // pred_check
        %p142 = pneg %p96
      $region18: #{srgan_g_forward.46} parent=11 // pred_check_branch
        %144 = sbr.rel (%p142) target = $region20
      $region19: #{srgan_g_forward.46} parent=11 // pred_region
        _
      $region20: #{srgan_g_forward.46} parent=11 // pred_fallthru
        _
    $region12: #{srgan_g_forward.46} parent=5 // pred_fallthru
      _
    %p145 = scmp.lt.s32.totalorder %s9, 4
    // Predicated region
    $region21: #{srgan_g_forward.46} parent=5 // pred_check
      %p146 = pneg %p145
    $region22: #{srgan_g_forward.46} parent=5 // pred_check_branch
      %148 = sbr.rel (%p146) target = $region24
    $region23: #{srgan_g_forward.46} parent=5 // pred_region
      // Predicated region
      $region25: #{srgan_g_forward.46} parent=23 // pred_check
        %p149 = pneg %p48
      $region26: #{srgan_g_forward.46} parent=23 // pred_check_branch
        %151 = sbr.rel (%p149) target = $region28
      $region27: #{srgan_g_forward.46} parent=23 // pred_region
        %p152 = scmp.lt.s32.totalorder %s17, 1
        %s153 = scalar_select %p152, %s17, 1
        %s154 = smul.addr %s153, 32
        %s155 = smul.addr %s154, 4
        %s156 = scalar_lea.vmem %s0, %s155
      $region28: #{srgan_g_forward.46} parent=23 // pred_fallthru
        _
    $region24: #{srgan_g_forward.46} parent=5 // pred_fallthru
      _
    %p157 = scmp.le.s32.totalorder 1, %s9
    %p158 = scmp.lt.s32.totalorder %s9, 5
    %p159 = pnand %p157, %p158
    %p160 = pneg %p159
    // Predicated region
    $region29: #{srgan_g_forward.46} parent=5 // pred_check
      _
    $region30: #{srgan_g_forward.46} parent=5 // pred_check_branch
      %162 = sbr.rel (%p159) target = $region32
    $region31: #{srgan_g_forward.46} parent=5 // pred_region
      %s163 = ssub.s32 %s9, 1
      %p164 = scmp.lt.s32.totalorder %s20, 1
      %s165 = scalar_select %p164, %s20, 1
      %s166 = smul.addr %s165, 32
      %s167 = smul.addr %s166, 4
      %s168 = scalar_lea.vmem %s0, %s167
      %p169 = pneg %p54
      %p170 = pneg %p51
      %p171 = pneg %p75
      %p172 = pneg %p72
      %p173 = pneg %p96
      %p174 = pneg %p93
      %p175 = pneg %p124
      %p176 = pneg %p121
      %s177 = smul.u32 8, %s21
      %p178 = scmp.lt.s32.totalorder %s20, 1
      %s179 = scalar_select %p178, %s20, 1
      %p180 = scmp.lt.s32.totalorder %s177, 15
      %s181 = scalar_select %p180, %s177, 15
      %s182 = smul.addr %s181, 2
      %s183 = smul.addr %s179, 32
      %s184 = sadd.s32 %s182, %s183
      %s185 = smul.addr %s184, 4
      %s186 = scalar_lea.vmem %s3, %s185
      %p187 = scmp.lt.s32.totalorder %s20, 1
      %s188 = scalar_select %p187, %s20, 1
      %s189 = smul.addr %s188, 32
      %s190 = smul.addr %s189, 4
      %s191 = scalar_lea.vmem %s0, %s190
      %s192 = smul.u32 8, %s21
      %p193 = scmp.lt.s32.totalorder %s20, 1
      %s194 = scalar_select %p193, %s20, 1
      %p195 = scmp.lt.s32.totalorder %s192, 15
      %s196 = scalar_select %p195, %s192, 15
      %s197 = smul.addr %s196, 2
      %s198 = smul.addr %s194, 32
      %s199 = sadd.s32 %s197, %s198
      %s200 = smul.addr %s199, 4
      %s201 = scalar_lea.vmem %s3, %s200
      %s202 = smul.u32 8, %s21
      %p204 = scmp.eq.s32.totalorder %s19, 0
      %vm205 = vcmask 60416
      %206 = vst.msk [vmem:[#allocation2] sm:$0xf] %vm205, 0
      %207 = vst.msk [vmem:[#allocation2 + $0x4] sm:$0xf] %vm205, 0
      %208 = vst.msk [vmem:[#allocation2 + $0x8] sm:$0xf] %vm205, 0
      %209 = vst.msk [vmem:[#allocation2 + $0xc] sm:$0xf] %vm205, 0
      %210 = vst.msk [vmem:[#allocation2 + $0x10] sm:$0xf] %vm205, 0
      %211 = vst.msk [vmem:[#allocation2 + $0x14] sm:$0xf] %vm205, 0
      %212 = vst.msk [vmem:[#allocation2 + $0x18] sm:$0xf] %vm205, 0
      %213 = vst.msk [vmem:[#allocation2 + $0x1c] sm:$0xf] %vm205, 0
      %214 = vst.msk [vmem:[#allocation2 + $0x20] sm:$0xf] %vm205, 0
      %215 = vst.msk [vmem:[#allocation2 + $0x24] sm:$0xf] %vm205, 0
      %216 = vst.msk [vmem:[#allocation2 + $0x28] sm:$0xf] %vm205, 0
      %217 = vst.msk [vmem:[#allocation2 + $0x2c] sm:$0xf] %vm205, 0
      %218 = vst.msk [vmem:[#allocation2 + $0x30] sm:$0xf] %vm205, 0
      %219 = vst.msk [vmem:[#allocation2 + $0x34] sm:$0xf] %vm205, 0
      %220 = vst.msk [vmem:[#allocation2 + $0x38] sm:$0xf] %vm205, 0
      %221 = vst.msk [vmem:[#allocation2 + $0x3c] sm:$0xf] %vm205, 0
      %222 = vst.msk [vmem:[#allocation2 + $0x40] sm:$0xf] %vm205, 0
      %223 = vst.msk [vmem:[#allocation2 + $0x44] sm:$0xf] %vm205, 0
      %224 = vst.msk [vmem:[#allocation2 + $0x48] sm:$0xf] %vm205, 0
      %225 = vst.msk [vmem:[#allocation2 + $0x4c] sm:$0xf] %vm205, 0
      %226 = vst.msk [vmem:[#allocation2 + $0x50] sm:$0xf] %vm205, 0
      %227 = vst.msk [vmem:[#allocation2 + $0x54] sm:$0xf] %vm205, 0
      %228 = vst.msk [vmem:[#allocation2 + $0x58] sm:$0xf] %vm205, 0
      %229 = vst.msk [vmem:[#allocation2 + $0x5c] sm:$0xf] %vm205, 0
      %230 = vst.msk [vmem:[#allocation2 + $0x60] sm:$0xf] %vm205, 0
      %231 = vst.msk [vmem:[#allocation2 + $0x64] sm:$0xf] %vm205, 0
      %232 = vst.msk [vmem:[#allocation2 + $0x68] sm:$0xf] %vm205, 0
      %233 = vst.msk [vmem:[#allocation2 + $0x6c] sm:$0xf] %vm205, 0
      %234 = vst.msk [vmem:[#allocation2 + $0x70] sm:$0xf] %vm205, 0
      %235 = vst.msk [vmem:[#allocation2 + $0x74] sm:$0xf] %vm205, 0
      %236 = vst.msk [vmem:[#allocation2 + $0x78] sm:$0xf] %vm205, 0
      %237 = vst.msk [vmem:[#allocation2 + $0x7c] sm:$0xf] %vm205, 0
      %238 = vst.msk [vmem:[#allocation2 + $0x80] sm:$0xf] %vm205, 0
      %239 = vst.msk [vmem:[#allocation2 + $0x84] sm:$0xf] %vm205, 0
      %240 = vst.msk [vmem:[#allocation2 + $0x88] sm:$0xf] %vm205, 0
      %241 = vst.msk [vmem:[#allocation2 + $0x8c] sm:$0xf] %vm205, 0
      %s242 = smul.u32 %s21, 8
      %s243 = smul.u32 %s242, 2
      %s244 = smul.addr %s243, 4
      %s245 = scalar_lea.vmem %s191, %s244
      %v246 = vld [vmem:[%s245] sm:$0xf]
      %v247 = vld [vmem:[%s245 + $0x4] sm:$0xf]
      %v248 = vld [vmem:[%s245 + $0x8] sm:$0xf]
      %v249 = vld [vmem:[%s245 + $0xc] sm:$0xf]
      %v250 = vld [vmem:[%s245 + $0x10] sm:$0xf]
      %v251 = vld [vmem:[%s245 + $0x14] sm:$0xf]
      %v252 = vld [vmem:[%s245 + $0x18] sm:$0xf]
      %v253 = vld [vmem:[%s245 + $0x1c] sm:$0xf]
      %v254 = vld [vmem:[%s245 + $0x20] sm:$0xf]
      %v255 = vld [vmem:[%s245 + $0x24] sm:$0xf]
      %v256 = vld [vmem:[%s245 + $0x28] sm:$0xf]
      %v257 = vld [vmem:[%s245 + $0x2c] sm:$0xf]
      %v258 = vld [vmem:[%s245 + $0x30] sm:$0xf]
      %v259 = vld [vmem:[%s245 + $0x34] sm:$0xf]
      %v260 = vld [vmem:[%s245 + $0x38] sm:$0xf]
      %v261 = vld [vmem:[%s245 + $0x3c] sm:$0xf]
      %vm262 = vsmask.f32 256
      %vm263 = vsmask.f32 4368
      %vm264 = vmor %vm262, %vm263
      %v266 = vshrl.u32 %v246, 16
      %v268 = vrot.slane %v266, 7
      %v269 = vshll.u32 %v246, 16
      %v271 = vor.u32 %v268, %v269
      %v272 = vrot.slane %v268, 4
      %v274 = vshrl.u32 %v247, 16
      %v276 = vrot.slane %v274, 7
      %v277 = vshll.u32 %v247, 16
      %v279 = vor.u32 %v276, %v277
      %v280 = vsel %vm264, %v272, %v279
      %v281 = vrot.slane %v276, 4
      %v283 = vshrl.u32 %v248, 16
      %v285 = vrot.slane %v283, 7
      %v286 = vshll.u32 %v248, 16
      %v288 = vor.u32 %v285, %v286
      %v289 = vrot.slane %v285, 4
      %v291 = vshrl.u32 %v249, 16
      %v293 = vrot.slane %v291, 7
      %v294 = vshll.u32 %v249, 16
      %v296 = vor.u32 %v293, %v294
      %v297 = vsel %vm264, %v289, %v296
      %v298 = vrot.slane %v293, 4
      %v300 = vshrl.u32 %v250, 16
      %v302 = vrot.slane %v300, 7
      %v303 = vshll.u32 %v250, 16
      %v305 = vor.u32 %v302, %v303
      %v306 = vrot.slane %v302, 4
      %v308 = vshrl.u32 %v251, 16
      %v310 = vrot.slane %v308, 7
      %v311 = vshll.u32 %v251, 16
      %v313 = vor.u32 %v310, %v311
      %v314 = vsel %vm264, %v306, %v313
      %v315 = vrot.slane %v310, 4
      %v317 = vshrl.u32 %v252, 16
      %v319 = vrot.slane %v317, 7
      %v320 = vshll.u32 %v252, 16
      %v322 = vor.u32 %v319, %v320
      %v323 = vrot.slane %v319, 4
      %v325 = vshrl.u32 %v253, 16
      %v327 = vrot.slane %v325, 7
      %v328 = vshll.u32 %v253, 16
      %v330 = vor.u32 %v327, %v328
      %v331 = vsel %vm264, %v323, %v330
      %v332 = vrot.slane %v327, 4
      %v334 = vshrl.u32 %v254, 16
      %v336 = vrot.slane %v334, 7
      %v337 = vshll.u32 %v254, 16
      %v339 = vor.u32 %v336, %v337
      %v340 = vrot.slane %v336, 4
      %v342 = vshrl.u32 %v255, 16
      %v344 = vrot.slane %v342, 7
      %v345 = vshll.u32 %v255, 16
      %v347 = vor.u32 %v344, %v345
      %v348 = vsel %vm264, %v340, %v347
      %v349 = vrot.slane %v344, 4
      %v351 = vshrl.u32 %v256, 16
      %v353 = vrot.slane %v351, 7
      %v354 = vshll.u32 %v256, 16
      %v356 = vor.u32 %v353, %v354
      %v357 = vrot.slane %v353, 4
      %v359 = vshrl.u32 %v257, 16
      %v361 = vrot.slane %v359, 7
      %v362 = vshll.u32 %v257, 16
      %v364 = vor.u32 %v361, %v362
      %v365 = vsel %vm264, %v357, %v364
      %v366 = vrot.slane %v361, 4
      %v368 = vshrl.u32 %v258, 16
      %v370 = vrot.slane %v368, 7
      %v371 = vshll.u32 %v258, 16
      %v373 = vor.u32 %v370, %v371
      %v374 = vrot.slane %v370, 4
      %v376 = vshrl.u32 %v259, 16
      %v378 = vrot.slane %v376, 7
      %v379 = vshll.u32 %v259, 16
      %v381 = vor.u32 %v378, %v379
      %v382 = vsel %vm264, %v374, %v381
      %v383 = vrot.slane %v378, 4
      %v385 = vshrl.u32 %v260, 16
      %v387 = vrot.slane %v385, 7
      %v388 = vshll.u32 %v260, 16
      %v390 = vor.u32 %v387, %v388
      %v391 = vrot.slane %v387, 4
      %v393 = vshrl.u32 %v261, 16
      %v395 = vrot.slane %v393, 7
      %v396 = vshll.u32 %v261, 16
      %v398 = vor.u32 %v395, %v396
      %v399 = vsel %vm264, %v391, %v398
      %v400 = vrot.slane %v395, 4
      %s425 = scalar_lea.vmem [#allocation2], 12
      %vm426 = vcmask 60416
      %vm427 = vsmask.f32 7938
      %vm428 = vmand %vm426, %vm427
      %v429 = vld [vmem:[%s425] sm:$0xf]
      %v430 = vsel %vm428, %v271, %v429
      %431 = vst [vmem:[%s425] sm:$0xf] %v430
      %432 = vst.msk [vmem:[%s425 + $0x4] sm:$0xf] %vm205, %v280
      %vm433 = vcmask 57344
      %vm434 = vmand %vm433, %vm262
      %v435 = vld [vmem:[%s425 + $0x8] sm:$0x1]
      %v436 = vsel %vm434, %v281, %v435
      %437 = vst [vmem:[%s425 + $0x8] sm:$0x1] %v436
      %v438 = vld [vmem:[%s425 + $0xc] sm:$0xf]
      %v439 = vsel %vm428, %v288, %v438
      %440 = vst [vmem:[%s425 + $0xc] sm:$0xf] %v439
      %441 = vst.msk [vmem:[%s425 + $0x10] sm:$0xf] %vm205, %v297
      %v442 = vld [vmem:[%s425 + $0x14] sm:$0x1]
      %v443 = vsel %vm434, %v298, %v442
      %444 = vst [vmem:[%s425 + $0x14] sm:$0x1] %v443
      %v445 = vld [vmem:[%s425 + $0x18] sm:$0xf]
      %v446 = vsel %vm428, %v305, %v445
      %447 = vst [vmem:[%s425 + $0x18] sm:$0xf] %v446
      %448 = vst.msk [vmem:[%s425 + $0x1c] sm:$0xf] %vm205, %v314
      %v449 = vld [vmem:[%s425 + $0x20] sm:$0x1]
      %v450 = vsel %vm434, %v315, %v449
      %451 = vst [vmem:[%s425 + $0x20] sm:$0x1] %v450
      %v452 = vld [vmem:[%s425 + $0x24] sm:$0xf]
      %v453 = vsel %vm428, %v322, %v452
      %454 = vst [vmem:[%s425 + $0x24] sm:$0xf] %v453
      %455 = vst.msk [vmem:[%s425 + $0x28] sm:$0xf] %vm205, %v331
      %v456 = vld [vmem:[%s425 + $0x2c] sm:$0x1]
      %v457 = vsel %vm434, %v332, %v456
      %458 = vst [vmem:[%s425 + $0x2c] sm:$0x1] %v457
      %v459 = vld [vmem:[%s425 + $0x30] sm:$0xf]
      %v460 = vsel %vm428, %v339, %v459
      %461 = vst [vmem:[%s425 + $0x30] sm:$0xf] %v460
      %462 = vst.msk [vmem:[%s425 + $0x34] sm:$0xf] %vm205, %v348
      %v463 = vld [vmem:[%s425 + $0x38] sm:$0x1]
      %v464 = vsel %vm434, %v349, %v463
      %465 = vst [vmem:[%s425 + $0x38] sm:$0x1] %v464
      %v466 = vld [vmem:[%s425 + $0x3c] sm:$0xf]
      %v467 = vsel %vm428, %v356, %v466
      %468 = vst [vmem:[%s425 + $0x3c] sm:$0xf] %v467
      %469 = vst.msk [vmem:[%s425 + $0x40] sm:$0xf] %vm205, %v365
      %v470 = vld [vmem:[%s425 + $0x44] sm:$0x1]
      %v471 = vsel %vm434, %v366, %v470
      %472 = vst [vmem:[%s425 + $0x44] sm:$0x1] %v471
      %v473 = vld [vmem:[%s425 + $0x48] sm:$0xf]
      %v474 = vsel %vm428, %v373, %v473
      %475 = vst [vmem:[%s425 + $0x48] sm:$0xf] %v474
      %476 = vst.msk [vmem:[%s425 + $0x4c] sm:$0xf] %vm205, %v382
      %v477 = vld [vmem:[%s425 + $0x50] sm:$0x1]
      %v478 = vsel %vm434, %v383, %v477
      %479 = vst [vmem:[%s425 + $0x50] sm:$0x1] %v478
      %v480 = vld [vmem:[%s425 + $0x54] sm:$0xf]
      %v481 = vsel %vm428, %v390, %v480
      %482 = vst [vmem:[%s425 + $0x54] sm:$0xf] %v481
      %483 = vst.msk [vmem:[%s425 + $0x58] sm:$0xf] %vm205, %v399
      %v484 = vld [vmem:[%s425 + $0x5c] sm:$0x1]
      %v485 = vsel %vm434, %v400, %v484
      %486 = vst [vmem:[%s425 + $0x5c] sm:$0x1] %v485
      %p487 = scmp.gt.s32.totalorder %s21, 0
      // Predicated region
      $region33: #{srgan_g_forward.46} parent=31 // pred_check
        %p488 = pneg %p487
      $region34: #{srgan_g_forward.46} parent=31 // pred_check_branch
        %490 = sbr.rel (%p488) target = $region36
      $region35: #{srgan_g_forward.46} parent=31 // pred_region
        %s491 = ssub.s32 %s242, 1
        %s492 = smul.u32 %s491, 2
        %s493 = smul.addr %s492, 4
        %s494 = scalar_lea.vmem %s191, %s493
        %v495 = vld [vmem:[%s494] sm:$0xf]
        %v496 = vld [vmem:[%s494 + $0x4] sm:$0xf]
        %v498 = vshrl.u32 %v495, 16
        %v500 = vrot.slane %v498, 7
        %v501 = vshll.u32 %v495, 16
        %v503 = vor.u32 %v500, %v501
        %v504 = vrot.slane %v500, 4
        %v506 = vshrl.u32 %v496, 16
        %v508 = vrot.slane %v506, 7
        %v509 = vshll.u32 %v496, 16
        %v511 = vor.u32 %v508, %v509
        %v512 = vsel %vm264, %v504, %v511
        %v513 = vrot.slane %v508, 4
        %v517 = vld [vmem:[#allocation2] sm:$0xf]
        %v518 = vsel %vm428, %v503, %v517
        %519 = vst [vmem:[#allocation2] sm:$0xf] %v518
        %520 = vst.msk [vmem:[#allocation2 + $0x4] sm:$0xf] %vm205, %v512
        %v521 = vld [vmem:[#allocation2 + $0x8] sm:$0x1]
        %v522 = vsel %vm434, %v513, %v521
        %523 = vst [vmem:[#allocation2 + $0x8] sm:$0x1] %v522
      $region36: #{srgan_g_forward.46} parent=31 // pred_fallthru
        _
      %p524 = scmp.lt.s32.totalorder %s21, 1
      // Predicated region
      $region37: #{srgan_g_forward.46} parent=31 // pred_check
        %p525 = pneg %p524
      $region38: #{srgan_g_forward.46} parent=31 // pred_check_branch
        %527 = sbr.rel (%p525) target = $region40
      $region39: #{srgan_g_forward.46} parent=31 // pred_region
        %s528 = sadd.s32 %s242, 8
        %s529 = smul.u32 %s528, 2
        %s530 = smul.addr %s529, 4
        %s531 = scalar_lea.vmem %s191, %s530
        %v532 = vld [vmem:[%s531] sm:$0xf]
        %v533 = vld [vmem:[%s531 + $0x4] sm:$0xf]
        %v535 = vshrl.u32 %v532, 16
        %v537 = vrot.slane %v535, 7
        %v538 = vshll.u32 %v532, 16
        %v540 = vor.u32 %v537, %v538
        %v541 = vrot.slane %v537, 4
        %v543 = vshrl.u32 %v533, 16
        %v545 = vrot.slane %v543, 7
        %v546 = vshll.u32 %v533, 16
        %v548 = vor.u32 %v545, %v546
        %v549 = vsel %vm264, %v541, %v548
        %v550 = vrot.slane %v545, 4
        %s554 = scalar_lea.vmem [#allocation2], 108
        %v555 = vld [vmem:[%s554] sm:$0xf]
        %v556 = vsel %vm428, %v540, %v555
        %557 = vst [vmem:[%s554] sm:$0xf] %v556
        %558 = vst.msk [vmem:[%s554 + $0x4] sm:$0xf] %vm205, %v549
        %v559 = vld [vmem:[%s554 + $0x8] sm:$0x1]
        %v560 = vsel %vm434, %v550, %v559
        %561 = vst [vmem:[%s554 + $0x8] sm:$0x1] %v560
      $region40: #{srgan_g_forward.46} parent=31 // pred_fallthru
        _
      %v562 = vld [vmem:[#allocation2] sm:$0xf]
      %v563 = vld [vmem:[#allocation2 + $0x4] sm:$0xf]
      %v564 = vld [vmem:[#allocation2 + $0x8] sm:$0xf]
      %v565 = vld [vmem:[#allocation2 + $0xc] sm:$0xf]
      %v566 = vld [vmem:[#allocation2 + $0x10] sm:$0xf]
      %v567 = vld [vmem:[#allocation2 + $0x14] sm:$0xf]
      %v568 = vld [vmem:[#allocation2 + $0x18] sm:$0xf]
      %v569 = vld [vmem:[#allocation2 + $0x1c] sm:$0xf]
      %v570 = vld [vmem:[#allocation2 + $0x20] sm:$0xf]
      %v571 = vld [vmem:[#allocation2 + $0x24] sm:$0xf]
      %v572 = vld [vmem:[#allocation2 + $0x28] sm:$0xf]
      %v573 = vld [vmem:[#allocation2 + $0x2c] sm:$0xf]
      %v574 = vld [vmem:[#allocation2 + $0x30] sm:$0xf]
      %v575 = vld [vmem:[#allocation2 + $0x34] sm:$0xf]
      %v576 = vld [vmem:[#allocation2 + $0x38] sm:$0xf]
      %v577 = vld [vmem:[#allocation2 + $0x3c] sm:$0xf]
      %v578 = vld [vmem:[#allocation2 + $0x40] sm:$0xf]
      %v579 = vld [vmem:[#allocation2 + $0x44] sm:$0xf]
      %v580 = vld [vmem:[#allocation2 + $0x48] sm:$0xf]
      %v581 = vld [vmem:[#allocation2 + $0x4c] sm:$0xf]
      %v582 = vld [vmem:[#allocation2 + $0x50] sm:$0xf]
      %v583 = vld [vmem:[#allocation2 + $0x54] sm:$0xf]
      %v584 = vld [vmem:[#allocation2 + $0x58] sm:$0xf]
      %v585 = vld [vmem:[#allocation2 + $0x5c] sm:$0xf]
      %v586 = vld [vmem:[#allocation2 + $0x60] sm:$0xf]
      %v587 = vld [vmem:[#allocation2 + $0x64] sm:$0xf]
      %v588 = vld [vmem:[#allocation2 + $0x68] sm:$0xf]
      %v589 = vld [vmem:[#allocation2 + $0x6c] sm:$0xf]
      %v590 = vld [vmem:[#allocation2 + $0x70] sm:$0xf]
      %v591 = vld [vmem:[#allocation2 + $0x74] sm:$0xf]
      %v592 = vld [vmem:[#allocation2 + $0x78] sm:$0xf]
      %v617 = vunpack.c.l.b16 %v562
      %v618 = vunpack.c.l.b16 %v563
      %v619 = vunpack.c.l.b16 %v564
      %v620 = vunpack.c.l.b16 %v565
      %v621 = vunpack.c.l.b16 %v566
      %v622 = vunpack.c.l.b16 %v567
      %v623 = vunpack.c.l.b16 %v568
      %v624 = vunpack.c.l.b16 %v569
      %v625 = vunpack.c.l.b16 %v570
      %v626 = vunpack.c.l.b16 %v571
      %v627 = vunpack.c.l.b16 %v572
      %v628 = vunpack.c.l.b16 %v573
      %v629 = vunpack.c.l.b16 %v574
      %v630 = vunpack.c.l.b16 %v575
      %v631 = vunpack.c.l.b16 %v576
      %v632 = vunpack.c.l.b16 %v577
      %v633 = vunpack.c.l.b16 %v578
      %v634 = vunpack.c.l.b16 %v579
      %v635 = vunpack.c.l.b16 %v580
      %v636 = vunpack.c.l.b16 %v581
      %v637 = vunpack.c.l.b16 %v582
      %v638 = vunpack.c.l.b16 %v583
      %v639 = vunpack.c.l.b16 %v584
      %v640 = vunpack.c.l.b16 %v585
      %v641 = vpack.c.b16 %v618, %v617
      %v642 = vpack.c.b16 %v620, %v619
      %v643 = vpack.c.b16 %v622, %v621
      %v644 = vpack.c.b16 %v624, %v623
      %v645 = vpack.c.b16 %v626, %v625
      %v646 = vpack.c.b16 %v628, %v627
      %v647 = vpack.c.b16 %v630, %v629
      %v648 = vpack.c.b16 %v632, %v631
      %v649 = vpack.c.b16 %v634, %v633
      %v650 = vpack.c.b16 %v636, %v635
      %v651 = vpack.c.b16 %v638, %v637
      %v652 = vpack.c.b16 %v640, %v639
      %v654 = vunpack.c.l.b16 %v586
      %v655 = vpack.c.b16 %v654, %v654
      %vm656 = vsmask.f32 7424
      %v658 = vshrl.u32 %v641, 16
      %v660 = vshll.u32 %v641, 16
      %v662 = vrot.slane %v660, 1
      %v663 = vor.u32 %v658, %v662
      %v665 = vshll.u32 %v642, 16
      %v667 = vrot.slane %v665, 1
      %v668 = vsel %vm656, %v663, %v667
      %v669 = vshrl.u32 %v642, 16
      %v671 = vor.u32 %v669, %v667
      %v673 = vshll.u32 %v643, 16
      %v675 = vrot.slane %v673, 1
      %v676 = vsel %vm656, %v671, %v675
      %v677 = vshrl.u32 %v643, 16
      %v679 = vor.u32 %v677, %v675
      %v681 = vshll.u32 %v644, 16
      %v683 = vrot.slane %v681, 1
      %v684 = vsel %vm656, %v679, %v683
      %v685 = vshrl.u32 %v644, 16
      %v687 = vor.u32 %v685, %v683
      %v689 = vshll.u32 %v645, 16
      %v691 = vrot.slane %v689, 1
      %v692 = vsel %vm656, %v687, %v691
      %v693 = vshrl.u32 %v645, 16
      %v695 = vor.u32 %v693, %v691
      %v697 = vshll.u32 %v646, 16
      %v699 = vrot.slane %v697, 1
      %v700 = vsel %vm656, %v695, %v699
      %v701 = vshrl.u32 %v646, 16
      %v703 = vor.u32 %v701, %v699
      %v705 = vshll.u32 %v647, 16
      %v707 = vrot.slane %v705, 1
      %v708 = vsel %vm656, %v703, %v707
      %v709 = vshrl.u32 %v647, 16
      %v711 = vor.u32 %v709, %v707
      %v713 = vshll.u32 %v648, 16
      %v715 = vrot.slane %v713, 1
      %v716 = vsel %vm656, %v711, %v715
      %v717 = vshrl.u32 %v648, 16
      %v719 = vor.u32 %v717, %v715
      %v721 = vshll.u32 %v649, 16
      %v723 = vrot.slane %v721, 1
      %v724 = vsel %vm656, %v719, %v723
      %v725 = vshrl.u32 %v649, 16
      %v727 = vor.u32 %v725, %v723
      %v729 = vshll.u32 %v650, 16
      %v731 = vrot.slane %v729, 1
      %v732 = vsel %vm656, %v727, %v731
      %v733 = vshrl.u32 %v650, 16
      %v735 = vor.u32 %v733, %v731
      %v737 = vshll.u32 %v651, 16
      %v739 = vrot.slane %v737, 1
      %v740 = vsel %vm656, %v735, %v739
      %v741 = vshrl.u32 %v651, 16
      %v743 = vor.u32 %v741, %v739
      %v745 = vshll.u32 %v652, 16
      %v747 = vrot.slane %v745, 1
      %v748 = vsel %vm656, %v743, %v747
      %v749 = vshrl.u32 %v652, 16
      %v751 = vor.u32 %v749, %v747
      %v753 = vshll.u32 %v655, 16
      %v755 = vrot.slane %v753, 1
      %v756 = vsel %vm656, %v751, %v755
      %757 = vrot.lane.b32.xlu0 %v668, 8
      %v758 = vpop.permute.xlu0 %757
      %759 = vrot.lane.b32.xlu0 %v676, 8
      %v760 = vpop.permute.xlu0 %759
      %761 = vrot.lane.b32.xlu0 %v684, 8
      %v762 = vpop.permute.xlu0 %761
      %763 = vrot.lane.b32.xlu0 %v692, 8
      %v764 = vpop.permute.xlu0 %763
      %765 = vrot.lane.b32.xlu0 %v700, 8
      %v766 = vpop.permute.xlu0 %765
      %767 = vrot.lane.b32.xlu0 %v708, 8
      %v768 = vpop.permute.xlu0 %767
      %769 = vrot.lane.b32.xlu0 %v716, 8
      %v770 = vpop.permute.xlu0 %769
      %771 = vrot.lane.b32.xlu0 %v724, 8
      %v772 = vpop.permute.xlu0 %771
      %773 = vrot.lane.b32.xlu0 %v732, 8
      %v774 = vpop.permute.xlu0 %773
      %775 = vrot.lane.b32.xlu0 %v740, 8
      %v776 = vpop.permute.xlu0 %775
      %777 = vrot.lane.b32.xlu0 %v748, 8
      %v778 = vpop.permute.xlu0 %777
      %779 = vrot.lane.b32.xlu0 %v756, 8
      %v780 = vpop.permute.xlu0 %779
      %vm781 = vcmask 1046528
      %v782 = vrot.slane %v641, 1
      %v783 = vrot.slane %v642, 1
      %v784 = vsel %vm781, %v782, %v783
      %v785 = vrot.slane %v643, 1
      %v786 = vsel %vm781, %v783, %v785
      %v787 = vrot.slane %v644, 1
      %v788 = vsel %vm781, %v785, %v787
      %v789 = vrot.slane %v645, 1
      %v790 = vsel %vm781, %v787, %v789
      %v791 = vrot.slane %v646, 1
      %v792 = vsel %vm781, %v789, %v791
      %v793 = vrot.slane %v647, 1
      %v794 = vsel %vm781, %v791, %v793
      %v795 = vrot.slane %v648, 1
      %v796 = vsel %vm781, %v793, %v795
      %v797 = vrot.slane %v649, 1
      %v798 = vsel %vm781, %v795, %v797
      %v799 = vrot.slane %v650, 1
      %v800 = vsel %vm781, %v797, %v799
      %v801 = vrot.slane %v651, 1
      %v802 = vsel %vm781, %v799, %v801
      %v803 = vrot.slane %v652, 1
      %v804 = vsel %vm781, %v801, %v803
      %v805 = vrot.slane %v655, 1
      %v806 = vsel %vm781, %v803, %v805
      %807 = vrot.lane.b32.xlu0 %v784, 16
      %v808 = vpop.permute.xlu0 %807
      %809 = vrot.lane.b32.xlu0 %v786, 16
      %v810 = vpop.permute.xlu0 %809
      %811 = vrot.lane.b32.xlu0 %v788, 16
      %v812 = vpop.permute.xlu0 %811
      %813 = vrot.lane.b32.xlu0 %v790, 16
      %v814 = vpop.permute.xlu0 %813
      %815 = vrot.lane.b32.xlu0 %v792, 16
      %v816 = vpop.permute.xlu0 %815
      %817 = vrot.lane.b32.xlu0 %v794, 16
      %v818 = vpop.permute.xlu0 %817
      %819 = vrot.lane.b32.xlu0 %v796, 16
      %v820 = vpop.permute.xlu0 %819
      %821 = vrot.lane.b32.xlu0 %v798, 16
      %v822 = vpop.permute.xlu0 %821
      %823 = vrot.lane.b32.xlu0 %v800, 16
      %v824 = vpop.permute.xlu0 %823
      %825 = vrot.lane.b32.xlu0 %v802, 16
      %v826 = vpop.permute.xlu0 %825
      %827 = vrot.lane.b32.xlu0 %v804, 16
      %v828 = vpop.permute.xlu0 %827
      %829 = vrot.lane.b32.xlu0 %v806, 16
      %v830 = vpop.permute.xlu0 %829
      %v833 = vunpack.c.l.b16 %v587
      %v834 = vunpack.c.l.b16 %v588
      %v835 = vpack.c.b16 %v621, %v620
      %v836 = vpack.c.b16 %v623, %v622
      %v837 = vpack.c.b16 %v625, %v624
      %v838 = vpack.c.b16 %v627, %v626
      %v839 = vpack.c.b16 %v629, %v628
      %v840 = vpack.c.b16 %v631, %v630
      %v841 = vpack.c.b16 %v633, %v632
      %v842 = vpack.c.b16 %v635, %v634
      %v843 = vpack.c.b16 %v637, %v636
      %v844 = vpack.c.b16 %v639, %v638
      %v845 = vpack.c.b16 %v654, %v640
      %v846 = vpack.c.b16 %v834, %v833
      %847 = vrot.lane.b32.xlu0 %v835, 24
      %v848 = vpop.permute.xlu0 %847
      %849 = vrot.lane.b32.xlu0 %v836, 24
      %v850 = vpop.permute.xlu0 %849
      %851 = vrot.lane.b32.xlu0 %v837, 24
      %v852 = vpop.permute.xlu0 %851
      %853 = vrot.lane.b32.xlu0 %v838, 24
      %v854 = vpop.permute.xlu0 %853
      %855 = vrot.lane.b32.xlu0 %v839, 24
      %v856 = vpop.permute.xlu0 %855
      %857 = vrot.lane.b32.xlu0 %v840, 24
      %v858 = vpop.permute.xlu0 %857
      %859 = vrot.lane.b32.xlu0 %v841, 24
      %v860 = vpop.permute.xlu0 %859
      %861 = vrot.lane.b32.xlu0 %v842, 24
      %v862 = vpop.permute.xlu0 %861
      %863 = vrot.lane.b32.xlu0 %v843, 24
      %v864 = vpop.permute.xlu0 %863
      %865 = vrot.lane.b32.xlu0 %v844, 24
      %v866 = vpop.permute.xlu0 %865
      %867 = vrot.lane.b32.xlu0 %v845, 24
      %v868 = vpop.permute.xlu0 %867
      %869 = vrot.lane.b32.xlu0 %v846, 24
      %v870 = vpop.permute.xlu0 %869
      %v872 = vunpack.c.l.b16 %v589
      %v873 = vpack.c.b16 %v872, %v872
      %v875 = vshrl.u32 %v835, 16
      %v877 = vshll.u32 %v835, 16
      %v879 = vrot.slane %v877, 1
      %v880 = vor.u32 %v875, %v879
      %v882 = vshll.u32 %v836, 16
      %v884 = vrot.slane %v882, 1
      %v885 = vsel %vm656, %v880, %v884
      %v886 = vshrl.u32 %v836, 16
      %v888 = vor.u32 %v886, %v884
      %v890 = vshll.u32 %v837, 16
      %v892 = vrot.slane %v890, 1
      %v893 = vsel %vm656, %v888, %v892
      %v894 = vshrl.u32 %v837, 16
      %v896 = vor.u32 %v894, %v892
      %v898 = vshll.u32 %v838, 16
      %v900 = vrot.slane %v898, 1
      %v901 = vsel %vm656, %v896, %v900
      %v902 = vshrl.u32 %v838, 16
      %v904 = vor.u32 %v902, %v900
      %v906 = vshll.u32 %v839, 16
      %v908 = vrot.slane %v906, 1
      %v909 = vsel %vm656, %v904, %v908
      %v910 = vshrl.u32 %v839, 16
      %v912 = vor.u32 %v910, %v908
      %v914 = vshll.u32 %v840, 16
      %v916 = vrot.slane %v914, 1
      %v917 = vsel %vm656, %v912, %v916
      %v918 = vshrl.u32 %v840, 16
      %v920 = vor.u32 %v918, %v916
      %v922 = vshll.u32 %v841, 16
      %v924 = vrot.slane %v922, 1
      %v925 = vsel %vm656, %v920, %v924
      %v926 = vshrl.u32 %v841, 16
      %v928 = vor.u32 %v926, %v924
      %v930 = vshll.u32 %v842, 16
      %v932 = vrot.slane %v930, 1
      %v933 = vsel %vm656, %v928, %v932
      %v934 = vshrl.u32 %v842, 16
      %v936 = vor.u32 %v934, %v932
      %v938 = vshll.u32 %v843, 16
      %v940 = vrot.slane %v938, 1
      %v941 = vsel %vm656, %v936, %v940
      %v942 = vshrl.u32 %v843, 16
      %v944 = vor.u32 %v942, %v940
      %v946 = vshll.u32 %v844, 16
      %v948 = vrot.slane %v946, 1
      %v949 = vsel %vm656, %v944, %v948
      %v950 = vshrl.u32 %v844, 16
      %v952 = vor.u32 %v950, %v948
      %v954 = vshll.u32 %v845, 16
      %v956 = vrot.slane %v954, 1
      %v957 = vsel %vm656, %v952, %v956
      %v958 = vshrl.u32 %v845, 16
      %v960 = vor.u32 %v958, %v956
      %v962 = vshll.u32 %v846, 16
      %v964 = vrot.slane %v962, 1
      %v965 = vsel %vm656, %v960, %v964
      %v966 = vshrl.u32 %v846, 16
      %v968 = vor.u32 %v966, %v964
      %v970 = vshll.u32 %v873, 16
      %v972 = vrot.slane %v970, 1
      %v973 = vsel %vm656, %v968, %v972
      %974 = vrot.lane.b32.xlu0 %v885, 32
      %v975 = vpop.permute.xlu0 %974
      %976 = vrot.lane.b32.xlu0 %v893, 32
      %v977 = vpop.permute.xlu0 %976
      %978 = vrot.lane.b32.xlu0 %v901, 32
      %v979 = vpop.permute.xlu0 %978
      %980 = vrot.lane.b32.xlu0 %v909, 32
      %v981 = vpop.permute.xlu0 %980
      %982 = vrot.lane.b32.xlu0 %v917, 32
      %v983 = vpop.permute.xlu0 %982
      %984 = vrot.lane.b32.xlu0 %v925, 32
      %v985 = vpop.permute.xlu0 %984
      %986 = vrot.lane.b32.xlu0 %v933, 32
      %v987 = vpop.permute.xlu0 %986
      %988 = vrot.lane.b32.xlu0 %v941, 32
      %v989 = vpop.permute.xlu0 %988
      %990 = vrot.lane.b32.xlu0 %v949, 32
      %v991 = vpop.permute.xlu0 %990
      %992 = vrot.lane.b32.xlu0 %v957, 32
      %v993 = vpop.permute.xlu0 %992
      %994 = vrot.lane.b32.xlu0 %v965, 32
      %v995 = vpop.permute.xlu0 %994
      %996 = vrot.lane.b32.xlu0 %v973, 32
      %v997 = vpop.permute.xlu0 %996
      %v998 = vrot.slane %v835, 1
      %v999 = vrot.slane %v836, 1
      %v1000 = vsel %vm781, %v998, %v999
      %v1001 = vrot.slane %v837, 1
      %v1002 = vsel %vm781, %v999, %v1001
      %v1003 = vrot.slane %v838, 1
      %v1004 = vsel %vm781, %v1001, %v1003
      %v1005 = vrot.slane %v839, 1
      %v1006 = vsel %vm781, %v1003, %v1005
      %v1007 = vrot.slane %v840, 1
      %v1008 = vsel %vm781, %v1005, %v1007
      %v1009 = vrot.slane %v841, 1
      %v1010 = vsel %vm781, %v1007, %v1009
      %v1011 = vrot.slane %v842, 1
      %v1012 = vsel %vm781, %v1009, %v1011
      %v1013 = vrot.slane %v843, 1
      %v1014 = vsel %vm781, %v1011, %v1013
      %v1015 = vrot.slane %v844, 1
      %v1016 = vsel %vm781, %v1013, %v1015
      %v1017 = vrot.slane %v845, 1
      %v1018 = vsel %vm781, %v1015, %v1017
      %v1019 = vrot.slane %v846, 1
      %v1020 = vsel %vm781, %v1017, %v1019
      %v1021 = vrot.slane %v873, 1
      %v1022 = vsel %vm781, %v1019, %v1021
      %1023 = vrot.lane.b32.xlu0 %v1000, 40
      %v1024 = vpop.permute.xlu0 %1023
      %1025 = vrot.lane.b32.xlu0 %v1002, 40
      %v1026 = vpop.permute.xlu0 %1025
      %1027 = vrot.lane.b32.xlu0 %v1004, 40
      %v1028 = vpop.permute.xlu0 %1027
      %1029 = vrot.lane.b32.xlu0 %v1006, 40
      %v1030 = vpop.permute.xlu0 %1029
      %1031 = vrot.lane.b32.xlu0 %v1008, 40
      %v1032 = vpop.permute.xlu0 %1031
      %1033 = vrot.lane.b32.xlu0 %v1010, 40
      %v1034 = vpop.permute.xlu0 %1033
      %1035 = vrot.lane.b32.xlu0 %v1012, 40
      %v1036 = vpop.permute.xlu0 %1035
      %1037 = vrot.lane.b32.xlu0 %v1014, 40
      %v1038 = vpop.permute.xlu0 %1037
      %1039 = vrot.lane.b32.xlu0 %v1016, 40
      %v1040 = vpop.permute.xlu0 %1039
      %1041 = vrot.lane.b32.xlu0 %v1018, 40
      %v1042 = vpop.permute.xlu0 %1041
      %1043 = vrot.lane.b32.xlu0 %v1020, 40
      %v1044 = vpop.permute.xlu0 %1043
      %1045 = vrot.lane.b32.xlu0 %v1022, 40
      %v1046 = vpop.permute.xlu0 %1045
      %v1049 = vunpack.c.l.b16 %v590
      %v1050 = vunpack.c.l.b16 %v591
      %v1051 = vpack.c.b16 %v833, %v654
      %v1052 = vpack.c.b16 %v872, %v834
      %v1053 = vpack.c.b16 %v1050, %v1049
      %1054 = vrot.lane.b32.xlu0 %v644, 48
      %v1055 = vpop.permute.xlu0 %1054
      %1056 = vrot.lane.b32.xlu0 %v645, 48
      %v1057 = vpop.permute.xlu0 %1056
      %1058 = vrot.lane.b32.xlu0 %v646, 48
      %v1059 = vpop.permute.xlu0 %1058
      %1060 = vrot.lane.b32.xlu0 %v647, 48
      %v1061 = vpop.permute.xlu0 %1060
      %1062 = vrot.lane.b32.xlu0 %v648, 48
      %v1063 = vpop.permute.xlu0 %1062
      %1064 = vrot.lane.b32.xlu0 %v649, 48
      %v1065 = vpop.permute.xlu0 %1064
      %1066 = vrot.lane.b32.xlu0 %v650, 48
      %v1067 = vpop.permute.xlu0 %1066
      %1068 = vrot.lane.b32.xlu0 %v651, 48
      %v1069 = vpop.permute.xlu0 %1068
      %1070 = vrot.lane.b32.xlu0 %v652, 48
      %v1071 = vpop.permute.xlu0 %1070
      %1072 = vrot.lane.b32.xlu0 %v1051, 48
      %v1073 = vpop.permute.xlu0 %1072
      %1074 = vrot.lane.b32.xlu0 %v1052, 48
      %v1075 = vpop.permute.xlu0 %1074
      %1076 = vrot.lane.b32.xlu0 %v1053, 48
      %v1077 = vpop.permute.xlu0 %1076
      %v1079 = vunpack.c.l.b16 %v592
      %v1080 = vpack.c.b16 %v1079, %v1079
      %v1082 = vshll.u32 %v1051, 16
      %v1084 = vrot.slane %v1082, 1
      %v1085 = vsel %vm656, %v751, %v1084
      %v1086 = vshrl.u32 %v1051, 16
      %v1088 = vor.u32 %v1086, %v1084
      %v1090 = vshll.u32 %v1052, 16
      %v1092 = vrot.slane %v1090, 1
      %v1093 = vsel %vm656, %v1088, %v1092
      %v1094 = vshrl.u32 %v1052, 16
      %v1096 = vor.u32 %v1094, %v1092
      %v1098 = vshll.u32 %v1053, 16
      %v1100 = vrot.slane %v1098, 1
      %v1101 = vsel %vm656, %v1096, %v1100
      %v1102 = vshrl.u32 %v1053, 16
      %v1104 = vor.u32 %v1102, %v1100
      %v1106 = vshll.u32 %v1080, 16
      %v1108 = vrot.slane %v1106, 1
      %v1109 = vsel %vm656, %v1104, %v1108
      %1110 = vrot.lane.b32.xlu0 %v692, 56
      %v1111 = vpop.permute.xlu0 %1110
      %1112 = vrot.lane.b32.xlu0 %v700, 56
      %v1113 = vpop.permute.xlu0 %1112
      %1114 = vrot.lane.b32.xlu0 %v708, 56
      %v1115 = vpop.permute.xlu0 %1114
      %1116 = vrot.lane.b32.xlu0 %v716, 56
      %v1117 = vpop.permute.xlu0 %1116
      %1118 = vrot.lane.b32.xlu0 %v724, 56
      %v1119 = vpop.permute.xlu0 %1118
      %1120 = vrot.lane.b32.xlu0 %v732, 56
      %v1121 = vpop.permute.xlu0 %1120
      %1122 = vrot.lane.b32.xlu0 %v740, 56
      %v1123 = vpop.permute.xlu0 %1122
      %1124 = vrot.lane.b32.xlu0 %v748, 56
      %v1125 = vpop.permute.xlu0 %1124
      %1126 = vrot.lane.b32.xlu0 %v1085, 56
      %v1127 = vpop.permute.xlu0 %1126
      %1128 = vrot.lane.b32.xlu0 %v1093, 56
      %v1129 = vpop.permute.xlu0 %1128
      %1130 = vrot.lane.b32.xlu0 %v1101, 56
      %v1131 = vpop.permute.xlu0 %1130
      %1132 = vrot.lane.b32.xlu0 %v1109, 56
      %v1133 = vpop.permute.xlu0 %1132
      %v1134 = vrot.slane %v1051, 1
      %v1135 = vsel %vm781, %v803, %v1134
      %v1136 = vrot.slane %v1052, 1
      %v1137 = vsel %vm781, %v1134, %v1136
      %v1138 = vrot.slane %v1053, 1
      %v1139 = vsel %vm781, %v1136, %v1138
      %v1140 = vrot.slane %v1080, 1
      %v1141 = vsel %vm781, %v1138, %v1140
      %1142 = vrot.lane.b32.xlu0 %v790, 64
      %v1143 = vpop.permute.xlu0 %1142
      %1144 = vrot.lane.b32.xlu0 %v792, 64
      %v1145 = vpop.permute.xlu0 %1144
      %1146 = vrot.lane.b32.xlu0 %v794, 64
      %v1147 = vpop.permute.xlu0 %1146
      %1148 = vrot.lane.b32.xlu0 %v796, 64
      %v1149 = vpop.permute.xlu0 %1148
      %1150 = vrot.lane.b32.xlu0 %v798, 64
      %v1151 = vpop.permute.xlu0 %1150
      %1152 = vrot.lane.b32.xlu0 %v800, 64
      %v1153 = vpop.permute.xlu0 %1152
      %1154 = vrot.lane.b32.xlu0 %v802, 64
      %v1155 = vpop.permute.xlu0 %1154
      %1156 = vrot.lane.b32.xlu0 %v804, 64
      %v1157 = vpop.permute.xlu0 %1156
      %1158 = vrot.lane.b32.xlu0 %v1135, 64
      %v1159 = vpop.permute.xlu0 %1158
      %1160 = vrot.lane.b32.xlu0 %v1137, 64
      %v1161 = vpop.permute.xlu0 %1160
      %1162 = vrot.lane.b32.xlu0 %v1139, 64
      %v1163 = vpop.permute.xlu0 %1162
      %1164 = vrot.lane.b32.xlu0 %v1141, 64
      %v1165 = vpop.permute.xlu0 %1164
      %vm1166 = vcmask 64512
      %v1168 = vsel %vm1166, %v641, %v758
      %v1170 = vsel %vm1166, %v642, %v760
      %v1172 = vsel %vm1166, %v643, %v762
      %v1174 = vsel %vm1166, %v644, %v764
      %v1176 = vsel %vm1166, %v645, %v766
      %v1178 = vsel %vm1166, %v646, %v768
      %v1180 = vsel %vm1166, %v647, %v770
      %v1182 = vsel %vm1166, %v648, %v772
      %v1184 = vsel %vm1166, %v649, %v774
      %v1186 = vsel %vm1166, %v650, %v776
      %v1188 = vsel %vm1166, %v651, %v778
      %v1190 = vsel %vm1166, %v652, %v780
      %vm1191 = vcmask 130048
      %v1193 = vsel %vm1191, %v1168, %v808
      %v1195 = vsel %vm1191, %v1170, %v810
      %v1197 = vsel %vm1191, %v1172, %v812
      %v1199 = vsel %vm1191, %v1174, %v814
      %v1201 = vsel %vm1191, %v1176, %v816
      %v1203 = vsel %vm1191, %v1178, %v818
      %v1205 = vsel %vm1191, %v1180, %v820
      %v1207 = vsel %vm1191, %v1182, %v822
      %v1209 = vsel %vm1191, %v1184, %v824
      %v1211 = vsel %vm1191, %v1186, %v826
      %v1213 = vsel %vm1191, %v1188, %v828
      %v1215 = vsel %vm1191, %v1190, %v830
      %vm1216 = vcmask 195584
      %v1218 = vsel %vm1216, %v1193, %v848
      %v1220 = vsel %vm1216, %v1195, %v850
      %v1222 = vsel %vm1216, %v1197, %v852
      %v1224 = vsel %vm1216, %v1199, %v854
      %v1226 = vsel %vm1216, %v1201, %v856
      %v1228 = vsel %vm1216, %v1203, %v858
      %v1230 = vsel %vm1216, %v1205, %v860
      %v1232 = vsel %vm1216, %v1207, %v862
      %v1234 = vsel %vm1216, %v1209, %v864
      %v1236 = vsel %vm1216, %v1211, %v866
      %v1238 = vsel %vm1216, %v1213, %v868
      %v1240 = vsel %vm1216, %v1215, %v870
      %vm1241 = vcmask 261120
      %v1243 = vsel %vm1241, %v1218, %v975
      %v1245 = vsel %vm1241, %v1220, %v977
      %v1247 = vsel %vm1241, %v1222, %v979
      %v1249 = vsel %vm1241, %v1224, %v981
      %v1251 = vsel %vm1241, %v1226, %v983
      %v1253 = vsel %vm1241, %v1228, %v985
      %v1255 = vsel %vm1241, %v1230, %v987
      %v1257 = vsel %vm1241, %v1232, %v989
      %v1259 = vsel %vm1241, %v1234, %v991
      %v1261 = vsel %vm1241, %v1236, %v993
      %v1263 = vsel %vm1241, %v1238, %v995
      %v1265 = vsel %vm1241, %v1240, %v997
      %vm1266 = vcmask 326656
      %v1268 = vsel %vm1266, %v1243, %v1024
      %v1270 = vsel %vm1266, %v1245, %v1026
      %v1272 = vsel %vm1266, %v1247, %v1028
      %v1274 = vsel %vm1266, %v1249, %v1030
      %v1276 = vsel %vm1266, %v1251, %v1032
      %v1278 = vsel %vm1266, %v1253, %v1034
      %v1280 = vsel %vm1266, %v1255, %v1036
      %v1282 = vsel %vm1266, %v1257, %v1038
      %v1284 = vsel %vm1266, %v1259, %v1040
      %v1286 = vsel %vm1266, %v1261, %v1042
      %v1288 = vsel %vm1266, %v1263, %v1044
      %v1290 = vsel %vm1266, %v1265, %v1046
      %vm1291 = vcmask 392192
      %v1293 = vsel %vm1291, %v1268, %v1055
      %v1295 = vsel %vm1291, %v1270, %v1057
      %v1297 = vsel %vm1291, %v1272, %v1059
      %v1299 = vsel %vm1291, %v1274, %v1061
      %v1301 = vsel %vm1291, %v1276, %v1063
      %v1303 = vsel %vm1291, %v1278, %v1065
      %v1305 = vsel %vm1291, %v1280, %v1067
      %v1307 = vsel %vm1291, %v1282, %v1069
      %v1309 = vsel %vm1291, %v1284, %v1071
      %v1311 = vsel %vm1291, %v1286, %v1073
      %v1313 = vsel %vm1291, %v1288, %v1075
      %v1315 = vsel %vm1291, %v1290, %v1077
      %vm1316 = vcmask 457728
      %v1318 = vsel %vm1316, %v1293, %v1111
      %v1320 = vsel %vm1316, %v1295, %v1113
      %v1322 = vsel %vm1316, %v1297, %v1115
      %v1324 = vsel %vm1316, %v1299, %v1117
      %v1326 = vsel %vm1316, %v1301, %v1119
      %v1328 = vsel %vm1316, %v1303, %v1121
      %v1330 = vsel %vm1316, %v1305, %v1123
      %v1332 = vsel %vm1316, %v1307, %v1125
      %v1334 = vsel %vm1316, %v1309, %v1127
      %v1336 = vsel %vm1316, %v1311, %v1129
      %v1338 = vsel %vm1316, %v1313, %v1131
      %v1340 = vsel %vm1316, %v1315, %v1133
      %vm1341 = vcmask 523264
      %v1343 = vsel %vm1341, %v1318, %v1143
      %v1345 = vsel %vm1341, %v1320, %v1145
      %v1347 = vsel %vm1341, %v1322, %v1147
      %v1349 = vsel %vm1341, %v1324, %v1149
      %v1351 = vsel %vm1341, %v1326, %v1151
      %v1353 = vsel %vm1341, %v1328, %v1153
      %v1355 = vsel %vm1341, %v1330, %v1155
      %v1357 = vsel %vm1341, %v1332, %v1157
      %v1359 = vsel %vm1341, %v1334, %v1159
      %v1361 = vsel %vm1341, %v1336, %v1161
      %v1363 = vsel %vm1341, %v1338, %v1163
      %v1365 = vsel %vm1341, %v1340, %v1165
      %v1366 = vld [vmem:[%s1] sm:$0xf]
      %v1367 = vld [vmem:[%s1 + $0x4] sm:$0xf]
      %v1368 = vld [vmem:[%s1 + $0x8] sm:$0xf]
      %v1369 = vld [vmem:[%s1 + $0xc] sm:$0xf]
      %v1370 = vld [vmem:[%s1 + $0x10] sm:$0xf]
      %v1371 = vld [vmem:[%s1 + $0x14] sm:$0xf]
      %v1372 = vld [vmem:[%s1 + $0x18] sm:$0xf]
      %v1373 = vld [vmem:[%s1 + $0x1c] sm:$0xf]
      %v1374 = vld [vmem:[%s1 + $0x20] sm:$0xf]
      %v1375 = vld [vmem:[%s2] sm:$0x1]
      %v1377 = vperm.slane %v1375, 0
      %v1388 = vunpack.c.l.b16 %v1366
      %v1389 = vunpack.c.l.b16 %v1367
      %v1390 = vunpack.c.l.b16 %v1368
      %v1391 = vunpack.c.l.b16 %v1369
      %v1392 = vunpack.c.l.b16 %v1370
      %v1393 = vunpack.c.l.b16 %v1371
      %v1394 = vunpack.c.l.b16 %v1372
      %v1395 = vunpack.c.l.b16 %v1373
      %v1396 = vunpack.c.l.b16 %v1374
      %v1397 = vpack.c.b16 %v1389, %v1388
      %v1398 = vpack.c.b16 %v1391, %v1390
      %v1399 = vpack.c.b16 %v1393, %v1392
      %v1400 = vpack.c.b16 %v1395, %v1394
      %v1401 = vpack.c.b16 %v1396, %v1396
      %vm1406 = vcmask 588800
      %v1407 = vsel %vm1406, %v1343, 0
      %v1409 = vsel %vm1406, %v1345, 0
      %v1411 = vsel %vm1406, %v1347, 0
      %v1413 = vsel %vm1406, %v1349, 0
      %v1415 = vsel %vm1406, %v1351, 0
      %v1417 = vsel %vm1406, %v1353, 0
      %v1419 = vsel %vm1406, %v1355, 0
      %v1421 = vsel %vm1406, %v1357, 0
      %v1423 = vsel %vm1406, %v1359, 0
      %v1425 = vsel %vm1406, %v1361, 0
      %v1427 = vsel %vm1406, %v1363, 0
      %v1429 = vsel %vm1406, %v1365, 0
      %vm1431 = vcmask 1043456
      %v1433 = vsel %vm1431, %v1401, 0
      %1435 = vmatpush.bf16.msra.mxu0 0
      %1436 = vmatpush.bf16.msra.mxu0 0
      %1437 = vmatpush.bf16.msra.mxu0 0
      %1438 = vmatpush.bf16.msra.mxu0 %v1433
      %1439 = vmatpush.bf16.msra.mxu0 %v1400
      %1440 = vmatpush.bf16.msra.mxu0 %v1399
      %1441 = vmatpush.bf16.msra.mxu0 %v1398
      %1442 = vmatpush.bf16.msra.mxu0 %v1397
      %1443 = vmatmul.bf16.gmra.mxu0 %v1407
      %v1444 = vpop.f32.mrf.mxu0
      %v1445 = vadd.f32 %v1377, %v1444
      %v1446 = vpop.f32.mrf.mxu0
      %v1447 = vadd.f32 %v1377, %v1446
      %1448 = vmatmul.bf16.gmra.mxu0 %v1409
      %v1449 = vpop.f32.mrf.mxu0
      %v1450 = vpop.f32.mrf.mxu0
      %v1451 = vadd.f32 %v1377, %v1450
      %1452 = vmatmul.bf16.gmra.mxu0 %v1411
      %v1453 = vpop.f32.mrf.mxu0
      %v1454 = vadd.f32 %v1377, %v1453
      %v1455 = vpop.f32.mrf.mxu0
      %1456 = vmatmul.bf16.gmra.mxu0 %v1413
      %v1457 = vpop.f32.mrf.mxu0
      %v1458 = vadd.f32 %v1377, %v1457
      %v1459 = vpop.f32.mrf.mxu0
      %v1460 = vadd.f32 %v1377, %v1459
      %1461 = vmatmul.bf16.gmra.mxu0 %v1415
      %v1462 = vpop.f32.mrf.mxu0
      %v1463 = vpop.f32.mrf.mxu0
      %v1464 = vadd.f32 %v1377, %v1463
      %1465 = vmatmul.bf16.gmra.mxu0 %v1417
      %v1466 = vpop.f32.mrf.mxu0
      %v1467 = vadd.f32 %v1377, %v1466
      %v1468 = vpop.f32.mrf.mxu0
      %1469 = vmatmul.bf16.gmra.mxu0 %v1419
      %v1470 = vpop.f32.mrf.mxu0
      %v1471 = vadd.f32 %v1377, %v1470
      %v1472 = vpop.f32.mrf.mxu0
      %v1473 = vadd.f32 %v1377, %v1472
      %1474 = vmatmul.bf16.gmra.mxu0 %v1421
      %v1475 = vpop.f32.mrf.mxu0
      %v1476 = vpop.f32.mrf.mxu0
      %v1477 = vadd.f32 %v1377, %v1476
      %1478 = vmatmul.bf16.gmra.mxu0 %v1423
      %v1479 = vpop.f32.mrf.mxu0
      %v1480 = vadd.f32 %v1377, %v1479
      %v1481 = vpop.f32.mrf.mxu0
      %1482 = vmatmul.bf16.gmra.mxu0 %v1425
      %v1483 = vpop.f32.mrf.mxu0
      %v1484 = vadd.f32 %v1377, %v1483
      %v1485 = vpop.f32.mrf.mxu0
      %v1486 = vadd.f32 %v1377, %v1485
      %1487 = vmatmul.bf16.gmra.mxu0 %v1427
      %v1488 = vpop.f32.mrf.mxu0
      %v1489 = vpop.f32.mrf.mxu0
      %v1490 = vadd.f32 %v1377, %v1489
      %1491 = vmatmul.bf16.gmra.mxu0 %v1429
      %v1492 = vpop.f32.mrf.mxu0
      %v1493 = vadd.f32 %v1377, %v1492
      %v1494 = vpop.f32.mrf.mxu0
      %1495 = vdwg.mxu0
      // Predicated region
      $region41: #{srgan_g_forward.46} parent=31 // pred_check
        %p1496 = pneg %p204
      $region42: #{srgan_g_forward.46} parent=31 // pred_check_branch
        %1498 = sbr.rel (%p1496) target = $region44
      $region43: #{srgan_g_forward.46} parent=31 // pred_region
        %v1499 = vmax.f32 %v1445, 0.0
        %v1500 = vmax.f32 %v1447, 0.0
        %v1501 = vmax.f32 %v1451, 0.0
        %v1502 = vmax.f32 %v1454, 0.0
        %v1503 = vmax.f32 %v1458, 0.0
        %v1504 = vmax.f32 %v1460, 0.0
        %v1505 = vmax.f32 %v1464, 0.0
        %v1506 = vmax.f32 %v1467, 0.0
        %v1507 = vmax.f32 %v1471, 0.0
        %v1508 = vmax.f32 %v1473, 0.0
        %v1509 = vmax.f32 %v1477, 0.0
        %v1510 = vmax.f32 %v1480, 0.0
        %v1511 = vmax.f32 %v1484, 0.0
        %v1512 = vmax.f32 %v1486, 0.0
        %v1513 = vmax.f32 %v1490, 0.0
        %v1514 = vmax.f32 %v1493, 0.0
        %v1515 = vpack.c.bf16 %v1499, %v1499
        %v1516 = vpack.c.bf16 %v1500, %v1500
        %v1517 = vpack.c.bf16 %v1501, %v1501
        %v1518 = vpack.c.bf16 %v1502, %v1502
        %v1519 = vpack.c.bf16 %v1503, %v1503
        %v1520 = vpack.c.bf16 %v1504, %v1504
        %v1521 = vpack.c.bf16 %v1505, %v1505
        %v1522 = vpack.c.bf16 %v1506, %v1506
        %v1523 = vpack.c.bf16 %v1507, %v1507
        %v1524 = vpack.c.bf16 %v1508, %v1508
        %v1525 = vpack.c.bf16 %v1509, %v1509
        %v1526 = vpack.c.bf16 %v1510, %v1510
        %v1527 = vpack.c.bf16 %v1511, %v1511
        %v1528 = vpack.c.bf16 %v1512, %v1512
        %v1529 = vpack.c.bf16 %v1513, %v1513
        %v1530 = vpack.c.bf16 %v1514, %v1514
        %vm1531 = vcmask 519168
        %1532 = vst.msk [vmem:[%s201] sm:$0xf] %vm1531, %v1515
        %1533 = vst.msk [vmem:[%s201 + $0x4] sm:$0xf] %vm1531, %v1516
        %1534 = vst.msk [vmem:[%s201 + $0x8] sm:$0xf] %vm1531, %v1517
        %1535 = vst.msk [vmem:[%s201 + $0xc] sm:$0xf] %vm1531, %v1518
        %1536 = vst.msk [vmem:[%s201 + $0x10] sm:$0xf] %vm1531, %v1519
        %1537 = vst.msk [vmem:[%s201 + $0x14] sm:$0xf] %vm1531, %v1520
        %1538 = vst.msk [vmem:[%s201 + $0x18] sm:$0xf] %vm1531, %v1521
        %1539 = vst.msk [vmem:[%s201 + $0x1c] sm:$0xf] %vm1531, %v1522
        %1540 = vst.msk [vmem:[%s201 + $0x20] sm:$0xf] %vm1531, %v1523
        %1541 = vst.msk [vmem:[%s201 + $0x24] sm:$0xf] %vm1531, %v1524
        %1542 = vst.msk [vmem:[%s201 + $0x28] sm:$0xf] %vm1531, %v1525
        %1543 = vst.msk [vmem:[%s201 + $0x2c] sm:$0xf] %vm1531, %v1526
        %1544 = vst.msk [vmem:[%s201 + $0x30] sm:$0xf] %vm1531, %v1527
        %1545 = vst.msk [vmem:[%s201 + $0x34] sm:$0xf] %vm1531, %v1528
        %1546 = vst.msk [vmem:[%s201 + $0x38] sm:$0xf] %vm1531, %v1529
        %1547 = vst.msk [vmem:[%s201 + $0x3c] sm:$0xf] %vm1531, %v1530
      $region44: #{srgan_g_forward.46} parent=31 // pred_fallthru
        _
      %s1548 = smul.u32 8, %s21
      %p1549 = scmp.lt.s32.totalorder %s20, 1
      %s1550 = scalar_select %p1549, %s20, 1
      %p1551 = scmp.lt.s32.totalorder %s1548, 15
      %s1552 = scalar_select %p1551, %s1548, 15
      %s1553 = smul.addr %s1552, 2
      %s1554 = smul.addr %s1550, 32
      %s1555 = sadd.s32 %s1553, %s1554
      %s1556 = smul.addr %s1555, 4
      %s1557 = scalar_lea.vmem %s3, %s1556
      // Predicated region
      $region45: #{srgan_g_forward.46} parent=31 // pred_check
        %p1558 = pneg %p121
      $region46: #{srgan_g_forward.46} parent=31 // pred_check_branch
        %1560 = sbr.rel (%p1558) target = $region48
      $region47: #{srgan_g_forward.46} parent=31 // pred_region
        %s1561 = smul.u32 8, %s21
      $region48: #{srgan_g_forward.46} parent=31 // pred_fallthru
        _
    $region32: #{srgan_g_forward.46} parent=5 // pred_fallthru
      _
    %p1562 = scmp.le.s32.totalorder 2, %s9
    // Predicated region
    $region49: #{srgan_g_forward.46} parent=5 // pred_check
      %p1563 = pneg %p1562
    $region50: #{srgan_g_forward.46} parent=5 // pred_check_branch
      %1565 = sbr.rel (%p1563) target = $region52
    $region51: #{srgan_g_forward.46} parent=5 // pred_region
      %s1566 = ssub.s32 %s9, 2
      // Predicated region
      $region53: #{srgan_g_forward.46} parent=51 // pred_check
        %p1567 = pneg %p127
      $region54: #{srgan_g_forward.46} parent=51 // pred_check_branch
        %1569 = sbr.rel (%p1567) target = $region56
      $region55: #{srgan_g_forward.46} parent=51 // pred_region
        %s1570 = smul.u32 8, %s24
        %p1571 = scmp.lt.s32.totalorder %s23, 1
        %s1572 = scalar_select %p1571, %s23, 1
        %p1573 = scmp.lt.s32.totalorder %s1570, 15
        %s1574 = scalar_select %p1573, %s1570, 15
        %s1575 = smul.addr %s1574, 2
        %s1576 = smul.addr %s1572, 32
        %s1577 = sadd.s32 %s1575, %s1576
        %s1578 = smul.addr %s1577, 4
        %s1579 = scalar_lea.vmem %s3, %s1578
      $region56: #{srgan_g_forward.46} parent=51 // pred_fallthru
        _
    $region52: #{srgan_g_forward.46} parent=5 // pred_fallthru
      _
  $region6: #{srgan_g_forward.46} parent=0 // loop_footer
    %s13 = sadd.s32 1, %s9
  $region7: #{srgan_g_forward.46} parent=0 // loop_footer_branch
    %8 = sbr.rel target = $region3
  $region8: #{srgan_g_forward.46} parent=0 // loop_exit
    _

// kernel: srgan_g_forward.63
$region0: #{srgan_g_forward.63}
  #allocation0 [shape = 'u32[]', space=smem, size = 0x4, offset = 0x4, fixed_abs, tag = 'smem constant byte address 0x4 - core index']
  #allocation1 [shape = 'u32[72,128]{1,0:T(1,128)}', space=vmem, size = 0x9000, scoped, tag = 'internal scratch']
  #allocation2 [shape = 'bf16[12,24,64]{2,1,0:T(8,128)(2,1)}', space=vmem, size = 0x12000, scoped, tag = 'scratch operand']
  #allocation3 [shape = 'f32[1,64]{1,0:T(1,128)}', space=vmem, size = 0x200, scoped, tag = 'scratch operand']
  #allocation4 [shape = 'f32[1,64]{1,0:T(1,128)}', space=vmem, size = 0x200, scoped, tag = 'scratch operand']
  %s0 = inlined_call_operand.vmem [shape: bf16[2,16,16,64], index: 0, kind: input, shape index: {}]
  %s1 = inlined_call_operand.vmem [shape: bf16[576,64], index: 1, kind: input, shape index: {}]
  %s2 = inlined_call_operand.vmem [shape: f32[1,64], index: 2, kind: input, shape index: {}]
  %s3 = inlined_call_operand.vmem [shape: f32[1,64], index: 3, kind: input, shape index: {}]
  %s4 = inlined_call_operand.vmem [shape: f32[1,64], index: 4, kind: input, shape index: {}]
  %s5 = inlined_call_operand.vmem [shape: bf16[2,16,16,64], index: 5, kind: output, shape index: {}]
  %s6 = sld [smem:[#allocation0]]
  $region73: #{srgan_g_forward.63} parent=0
    _
  %s8 = ssub.s32 1, %s6
  %s9 = scalar_select 0, %s8, %s6
  loop: start=0, step=1, limit=10
  $region2: #{srgan_g_forward.63} parent=0 // loop_pre_header
    _
  $region3: #{srgan_g_forward.63} parent=0 // loop_header
    %s11 = sphi 0, %s15
    %p12 = scmp.ge.s32.totalorder %s11, 10
    %s18 = sphi 0, %s37
    %s19 = sphi 0, %s33
    %s20 = sphi 0, %s29
    %s21 = sphi 0, %s18
    %s22 = sphi 0, %s19
    %s23 = sphi 0, %s20
    %s24 = sphi 0, %s21
    %s25 = sphi 0, %s22
    %s26 = sphi 0, %s23
    %s40 = sphi 0, %s42
    %s43 = sphi 0, %s40
    %s44 = sphi 0, %s43
    %s60 = sphi 0, %s44
    %s64 = sphi 0, %s64
    %s66 = sphi 0, %s64
    %s67 = sphi 0, %s66
    %s81 = sphi 0, %s67
    %s85 = sphi 0, %s85
    %s87 = sphi 0, %s85
    %s88 = sphi 0, %s87
    %s102 = sphi 0, %s88
    %s106 = sphi 0, %s106
    %s108 = sphi 0, %s106
    %s109 = sphi 0, %s108
    %s123 = sphi 0, %s109
    %s127 = sphi 0, %s127
    %s129 = sphi 0, %s127
    %s130 = sphi 0, %s129
    %s144 = sphi 0, %s130
    %s154 = sphi 0, %s156
    %s157 = sphi 0, %s154
    %s158 = sphi 0, %s157
    %s174 = sphi 0, %s158
  $region4: #{srgan_g_forward.63} parent=0 // loop_header_branch
    %14 = sbr.rel (%p12) target = $region8
  $region5: #{srgan_g_forward.63} parent=0 // loop_body
    %s16 = ssub.s32 %s11, 1
    %s17 = ssub.s32 %s11, 2
    %s27 = sadd.s32 1, %s20
    %p28 = scmp.ge.s32.totalorder %s27, 2
    %s29 = scalar_select %p28, 0, %s27
    %s30 = sadd.s32 1, %s19
    %s31 = scalar_select %p28, %s30, %s19
    %p32 = scmp.ge.s32.totalorder %s31, 2
    %s33 = scalar_select %p32, 0, %s31
    %s34 = sadd.s32 1, %s18
    %s35 = scalar_select %p32, %s34, %s18
    %p36 = scmp.ge.s32.totalorder %s35, 2
    %s37 = scalar_select %p36, 0, %s35
    %s38 = ssub.s32 %s19, %s33
    %p39 = scmp.eq.s32.totalorder %s38, 0
    %s41 = sadd.s32 %s40, 1
    %s42 = scalar_select %p39, %s40, %s41
    %p45 = pneg %p39
    %p46 = scmp.eq.s32.totalorder %s11, 7
    %p47 = por %p45, %p46
    %p48 = scmp.ne.s32.totalorder %s40, %s43
    %p49 = scmp.eq.s32.totalorder %s11, 0
    %p50 = por %p48, %p49
    %p51 = scmp.ne.s32.totalorder %s40, %s43
    %p52 = scmp.eq.s32.totalorder %s16, 7
    %p53 = por %p51, %p52
    %p54 = scmp.ne.s32.totalorder %s43, %s44
    %p55 = scmp.eq.s32.totalorder %s16, 0
    %p56 = por %p54, %p55
    %p57 = scmp.ne.s32.totalorder %s43, %s44
    %p58 = scmp.eq.s32.totalorder %s17, 7
    %p59 = por %p57, %p58
    %p61 = scmp.ne.s32.totalorder %s44, %s60
    %p62 = scmp.eq.s32.totalorder %s17, 0
    %p63 = por %p61, %p62
    %s65 = sadd.s32 %s64, 1
    %p68 = scmp.eq.s32.totalorder %s11, 7
    %p69 = scmp.ne.s32.totalorder %s64, %s66
    %p70 = scmp.eq.s32.totalorder %s11, 0
    %p71 = por %p69, %p70
    %p72 = scmp.ne.s32.totalorder %s64, %s66
    %p73 = scmp.eq.s32.totalorder %s16, 7
    %p74 = por %p72, %p73
    %p75 = scmp.ne.s32.totalorder %s66, %s67
    %p76 = scmp.eq.s32.totalorder %s16, 0
    %p77 = por %p75, %p76
    %p78 = scmp.ne.s32.totalorder %s66, %s67
    %p79 = scmp.eq.s32.totalorder %s17, 7
    %p80 = por %p78, %p79
    %p82 = scmp.ne.s32.totalorder %s67, %s81
    %p83 = scmp.eq.s32.totalorder %s17, 0
    %p84 = por %p82, %p83
    %s86 = sadd.s32 %s85, 1
    %p89 = scmp.eq.s32.totalorder %s11, 7
    %p90 = scmp.ne.s32.totalorder %s85, %s87
    %p91 = scmp.eq.s32.totalorder %s11, 0
    %p92 = por %p90, %p91
    %p93 = scmp.ne.s32.totalorder %s85, %s87
    %p94 = scmp.eq.s32.totalorder %s16, 7
    %p95 = por %p93, %p94
    %p96 = scmp.ne.s32.totalorder %s87, %s88
    %p97 = scmp.eq.s32.totalorder %s16, 0
    %p98 = por %p96, %p97
    %p99 = scmp.ne.s32.totalorder %s87, %s88
    %p100 = scmp.eq.s32.totalorder %s17, 7
    %p101 = por %p99, %p100
    %p103 = scmp.ne.s32.totalorder %s88, %s102
    %p104 = scmp.eq.s32.totalorder %s17, 0
    %p105 = por %p103, %p104
    %s107 = sadd.s32 %s106, 1
    %p110 = scmp.eq.s32.totalorder %s11, 7
    %p111 = scmp.ne.s32.totalorder %s106, %s108
    %p112 = scmp.eq.s32.totalorder %s11, 0
    %p113 = por %p111, %p112
    %p114 = scmp.ne.s32.totalorder %s106, %s108
    %p115 = scmp.eq.s32.totalorder %s16, 7
    %p116 = por %p114, %p115
    %p117 = scmp.ne.s32.totalorder %s108, %s109
    %p118 = scmp.eq.s32.totalorder %s16, 0
    %p119 = por %p117, %p118
    %p120 = scmp.ne.s32.totalorder %s108, %s109
    %p121 = scmp.eq.s32.totalorder %s17, 7
    %p122 = por %p120, %p121
    %p124 = scmp.ne.s32.totalorder %s109, %s123
    %p125 = scmp.eq.s32.totalorder %s17, 0
    %p126 = por %p124, %p125
    %s128 = sadd.s32 %s127, 1
    %p131 = scmp.eq.s32.totalorder %s11, 7
    %p132 = scmp.ne.s32.totalorder %s127, %s129
    %p133 = scmp.eq.s32.totalorder %s11, 0
    %p134 = por %p132, %p133
    %p135 = scmp.ne.s32.totalorder %s127, %s129
    %p136 = scmp.eq.s32.totalorder %s16, 7
    %p137 = por %p135, %p136
    %p138 = scmp.ne.s32.totalorder %s129, %s130
    %p139 = scmp.eq.s32.totalorder %s16, 0
    %p140 = por %p138, %p139
    %p141 = scmp.ne.s32.totalorder %s129, %s130
    %p142 = scmp.eq.s32.totalorder %s17, 7
    %p143 = por %p141, %p142
    %p145 = scmp.ne.s32.totalorder %s130, %s144
    %p146 = scmp.eq.s32.totalorder %s17, 0
    %p147 = por %p145, %p146
    %s148 = smul.u32 %s20, %s18
    %s149 = smul.u32 %s29, %s37
    %s150 = ssub.s32 %s19, %s33
    %s151 = ssub.s32 %s148, %s149
    %s152 = sor.u32 %s150, %s151
    %p153 = scmp.eq.s32.totalorder %s152, 0
    %s155 = sadd.s32 %s154, 1
    %s156 = scalar_select %p153, %s154, %s155
    %p159 = pneg %p153
    %p160 = scmp.eq.s32.totalorder %s11, 7
    %p161 = por %p159, %p160
    %p162 = scmp.ne.s32.totalorder %s154, %s157
    %p163 = scmp.eq.s32.totalorder %s11, 0
    %p164 = por %p162, %p163
    %p165 = scmp.ne.s32.totalorder %s154, %s157
    %p166 = scmp.eq.s32.totalorder %s16, 7
    %p167 = por %p165, %p166
    %p168 = scmp.ne.s32.totalorder %s157, %s158
    %p169 = scmp.eq.s32.totalorder %s16, 0
    %p170 = por %p168, %p169
    %p171 = scmp.ne.s32.totalorder %s157, %s158
    %p172 = scmp.eq.s32.totalorder %s17, 7
    %p173 = por %p171, %p172
    %p175 = scmp.ne.s32.totalorder %s158, %s174
    %p176 = scmp.eq.s32.totalorder %s17, 0
    %p177 = por %p175, %p176
    %p178 = scmp.le.s32.totalorder 1, %s11
    %p179 = scmp.lt.s32.totalorder %s11, 9
    %p180 = pnand %p178, %p179
    %p181 = pneg %p180
    // Predicated region
    $region9: #{srgan_g_forward.63} parent=5 // pred_check
      _
    $region10: #{srgan_g_forward.63} parent=5 // pred_check_branch
      %183 = sbr.rel (%p180) target = $region12
    $region11: #{srgan_g_forward.63} parent=5 // pred_region
      %s184 = ssub.s32 %s11, 1
      // Predicated region
      $region13: #{srgan_g_forward.63} parent=11 // pred_check
        %p185 = pneg %p77
      $region14: #{srgan_g_forward.63} parent=11 // pred_check_branch
        %187 = sbr.rel (%p185) target = $region16
      $region15: #{srgan_g_forward.63} parent=11 // pred_region
        _
      $region16: #{srgan_g_forward.63} parent=11 // pred_fallthru
        _
      // Predicated region
      $region17: #{srgan_g_forward.63} parent=11 // pred_check
        %p188 = pneg %p98
      $region18: #{srgan_g_forward.63} parent=11 // pred_check_branch
        %190 = sbr.rel (%p188) target = $region20
      $region19: #{srgan_g_forward.63} parent=11 // pred_region
        _
      $region20: #{srgan_g_forward.63} parent=11 // pred_fallthru
        _
      // Predicated region
      $region21: #{srgan_g_forward.63} parent=11 // pred_check
        %p191 = pneg %p119
      $region22: #{srgan_g_forward.63} parent=11 // pred_check_branch
        %193 = sbr.rel (%p191) target = $region24
      $region23: #{srgan_g_forward.63} parent=11 // pred_region
        _
      $region24: #{srgan_g_forward.63} parent=11 // pred_fallthru
        _
      // Predicated region
      $region25: #{srgan_g_forward.63} parent=11 // pred_check
        %p194 = pneg %p140
      $region26: #{srgan_g_forward.63} parent=11 // pred_check_branch
        %196 = sbr.rel (%p194) target = $region28
      $region27: #{srgan_g_forward.63} parent=11 // pred_region
        _
      $region28: #{srgan_g_forward.63} parent=11 // pred_fallthru
        _
    $region12: #{srgan_g_forward.63} parent=5 // pred_fallthru
      _
    %p197 = scmp.lt.s32.totalorder %s11, 8
    // Predicated region
    $region29: #{srgan_g_forward.63} parent=5 // pred_check
      %p198 = pneg %p197
    $region30: #{srgan_g_forward.63} parent=5 // pred_check_branch
      %200 = sbr.rel (%p198) target = $region32
    $region31: #{srgan_g_forward.63} parent=5 // pred_region
      // Predicated region
      $region33: #{srgan_g_forward.63} parent=31 // pred_check
        %p201 = pneg %p50
      $region34: #{srgan_g_forward.63} parent=31 // pred_check_branch
        %203 = sbr.rel (%p201) target = $region36
      $region35: #{srgan_g_forward.63} parent=31 // pred_region
        %p204 = scmp.lt.s32.totalorder %s19, 1
        %s205 = scalar_select %p204, %s19, 1
        %s206 = smul.addr %s205, 32
        %s207 = smul.addr %s206, 4
        %s208 = scalar_lea.vmem %s0, %s207
      $region36: #{srgan_g_forward.63} parent=31 // pred_fallthru
        _
    $region32: #{srgan_g_forward.63} parent=5 // pred_fallthru
      _
    %p209 = scmp.le.s32.totalorder 1, %s11
    %p210 = scmp.lt.s32.totalorder %s11, 9
    %p211 = pnand %p209, %p210
    %p212 = pneg %p211
    // Predicated region
    $region37: #{srgan_g_forward.63} parent=5 // pred_check
      _
    $region38: #{srgan_g_forward.63} parent=5 // pred_check_branch
      %214 = sbr.rel (%p211) target = $region40
    $region39: #{srgan_g_forward.63} parent=5 // pred_region
      %s215 = ssub.s32 %s11, 1
      %p216 = scmp.lt.s32.totalorder %s22, 1
      %s217 = scalar_select %p216, %s22, 1
      %s218 = smul.addr %s217, 32
      %s219 = smul.addr %s218, 4
      %s220 = scalar_lea.vmem %s0, %s219
      %p221 = pneg %p56
      %p222 = pneg %p53
      %p223 = pneg %p77
      %p224 = pneg %p74
      %p225 = pneg %p98
      %p226 = pneg %p95
      %p227 = pneg %p119
      %p228 = pneg %p116
      %p229 = pneg %p140
      %p230 = pneg %p137
      %p231 = pneg %p170
      %p232 = pneg %p167
      %s233 = smul.u32 %s23, %s21
      %s234 = smul.u32 8, %s233
      %p235 = scmp.lt.s32.totalorder %s22, 1
      %s236 = scalar_select %p235, %s22, 1
      %p237 = scmp.lt.s32.totalorder %s234, 15
      %s238 = scalar_select %p237, %s234, 15
      %s239 = smul.addr %s238, 2
      %s240 = smul.addr %s236, 32
      %s241 = sadd.s32 %s239, %s240
      %s242 = smul.addr %s241, 4
      %s243 = scalar_lea.vmem %s5, %s242
      %p244 = scmp.lt.s32.totalorder %s22, 1
      %s245 = scalar_select %p244, %s22, 1
      %s246 = smul.addr %s245, 32
      %s247 = smul.addr %s246, 4
      %s248 = scalar_lea.vmem %s0, %s247
      %s249 = smul.u32 %s23, %s21
      %s250 = smul.u32 8, %s249
      %p251 = scmp.lt.s32.totalorder %s22, 1
      %s252 = scalar_select %p251, %s22, 1
      %p253 = scmp.lt.s32.totalorder %s250, 15
      %s254 = scalar_select %p253, %s250, 15
      %s255 = smul.addr %s254, 2
      %s256 = smul.addr %s252, 32
      %s257 = sadd.s32 %s255, %s256
      %s258 = smul.addr %s257, 4
      %s259 = scalar_lea.vmem %s5, %s258
      %s260 = smul.u32 %s23, %s21
      %s261 = smul.u32 8, %s260
      %p263 = scmp.eq.s32.totalorder %s21, 1
      %vm264 = vcmask 519168
      %265 = vst.msk [vmem:[#allocation2] sm:$0xf] %vm264, 0
      %266 = vst.msk [vmem:[#allocation2 + $0x4] sm:$0xf] %vm264, 0
      %267 = vst.msk [vmem:[#allocation2 + $0x8] sm:$0xf] %vm264, 0
      %268 = vst.msk [vmem:[#allocation2 + $0xc] sm:$0xf] %vm264, 0
      %269 = vst.msk [vmem:[#allocation2 + $0x10] sm:$0xf] %vm264, 0
      %270 = vst.msk [vmem:[#allocation2 + $0x14] sm:$0xf] %vm264, 0
      %271 = vst.msk [vmem:[#allocation2 + $0x18] sm:$0xf] %vm264, 0
      %272 = vst.msk [vmem:[#allocation2 + $0x1c] sm:$0xf] %vm264, 0
      %273 = vst.msk [vmem:[#allocation2 + $0x20] sm:$0xf] %vm264, 0
      %274 = vst.msk [vmem:[#allocation2 + $0x24] sm:$0xf] %vm264, 0
      %275 = vst.msk [vmem:[#allocation2 + $0x28] sm:$0xf] %vm264, 0
      %276 = vst.msk [vmem:[#allocation2 + $0x2c] sm:$0xf] %vm264, 0
      %277 = vst.msk [vmem:[#allocation2 + $0x30] sm:$0xf] %vm264, 0
      %278 = vst.msk [vmem:[#allocation2 + $0x34] sm:$0xf] %vm264, 0
      %279 = vst.msk [vmem:[#allocation2 + $0x38] sm:$0xf] %vm264, 0
      %280 = vst.msk [vmem:[#allocation2 + $0x3c] sm:$0xf] %vm264, 0
      %281 = vst.msk [vmem:[#allocation2 + $0x40] sm:$0xf] %vm264, 0
      %282 = vst.msk [vmem:[#allocation2 + $0x44] sm:$0xf] %vm264, 0
      %283 = vst.msk [vmem:[#allocation2 + $0x48] sm:$0xf] %vm264, 0
      %284 = vst.msk [vmem:[#allocation2 + $0x4c] sm:$0xf] %vm264, 0
      %285 = vst.msk [vmem:[#allocation2 + $0x50] sm:$0xf] %vm264, 0
      %286 = vst.msk [vmem:[#allocation2 + $0x54] sm:$0xf] %vm264, 0
      %287 = vst.msk [vmem:[#allocation2 + $0x58] sm:$0xf] %vm264, 0
      %288 = vst.msk [vmem:[#allocation2 + $0x5c] sm:$0xf] %vm264, 0
      %289 = vst.msk [vmem:[#allocation2 + $0x60] sm:$0xf] %vm264, 0
      %290 = vst.msk [vmem:[#allocation2 + $0x64] sm:$0xf] %vm264, 0
      %291 = vst.msk [vmem:[#allocation2 + $0x68] sm:$0xf] %vm264, 0
      %292 = vst.msk [vmem:[#allocation2 + $0x6c] sm:$0xf] %vm264, 0
      %293 = vst.msk [vmem:[#allocation2 + $0x70] sm:$0xf] %vm264, 0
      %294 = vst.msk [vmem:[#allocation2 + $0x74] sm:$0xf] %vm264, 0
      %295 = vst.msk [vmem:[#allocation2 + $0x78] sm:$0xf] %vm264, 0
      %296 = vst.msk [vmem:[#allocation2 + $0x7c] sm:$0xf] %vm264, 0
      %297 = vst.msk [vmem:[#allocation2 + $0x80] sm:$0xf] %vm264, 0
      %298 = vst.msk [vmem:[#allocation2 + $0x84] sm:$0xf] %vm264, 0
      %299 = vst.msk [vmem:[#allocation2 + $0x88] sm:$0xf] %vm264, 0
      %300 = vst.msk [vmem:[#allocation2 + $0x8c] sm:$0xf] %vm264, 0
      %s301 = smul.u32 %s23, 8
      %s302 = smul.u32 %s301, 2
      %s303 = smul.addr %s302, 4
      %s304 = scalar_lea.vmem %s248, %s303
      %v305 = vld [vmem:[%s304] sm:$0xf]
      %v306 = vld [vmem:[%s304 + $0x4] sm:$0xf]
      %v307 = vld [vmem:[%s304 + $0x8] sm:$0xf]
      %v308 = vld [vmem:[%s304 + $0xc] sm:$0xf]
      %v309 = vld [vmem:[%s304 + $0x10] sm:$0xf]
      %v310 = vld [vmem:[%s304 + $0x14] sm:$0xf]
      %v311 = vld [vmem:[%s304 + $0x18] sm:$0xf]
      %v312 = vld [vmem:[%s304 + $0x1c] sm:$0xf]
      %v313 = vld [vmem:[%s304 + $0x20] sm:$0xf]
      %v314 = vld [vmem:[%s304 + $0x24] sm:$0xf]
      %v315 = vld [vmem:[%s304 + $0x28] sm:$0xf]
      %v316 = vld [vmem:[%s304 + $0x2c] sm:$0xf]
      %v317 = vld [vmem:[%s304 + $0x30] sm:$0xf]
      %v318 = vld [vmem:[%s304 + $0x34] sm:$0xf]
      %v319 = vld [vmem:[%s304 + $0x38] sm:$0xf]
      %v320 = vld [vmem:[%s304 + $0x3c] sm:$0xf]
      %vm321 = vsmask.f32 256
      %vm322 = vsmask.f32 4368
      %vm323 = vmor %vm321, %vm322
      %v325 = vshrl.u32 %v305, 16
      %v327 = vrot.slane %v325, 7
      %v328 = vshll.u32 %v305, 16
      %v330 = vor.u32 %v327, %v328
      %v331 = vrot.slane %v327, 4
      %v333 = vshrl.u32 %v306, 16
      %v335 = vrot.slane %v333, 7
      %v336 = vshll.u32 %v306, 16
      %v338 = vor.u32 %v335, %v336
      %v339 = vsel %vm323, %v331, %v338
      %v340 = vrot.slane %v335, 4
      %v342 = vshrl.u32 %v307, 16
      %v344 = vrot.slane %v342, 7
      %v345 = vshll.u32 %v307, 16
      %v347 = vor.u32 %v344, %v345
      %v348 = vrot.slane %v344, 4
      %v350 = vshrl.u32 %v308, 16
      %v352 = vrot.slane %v350, 7
      %v353 = vshll.u32 %v308, 16
      %v355 = vor.u32 %v352, %v353
      %v356 = vsel %vm323, %v348, %v355
      %v357 = vrot.slane %v352, 4
      %v359 = vshrl.u32 %v309, 16
      %v361 = vrot.slane %v359, 7
      %v362 = vshll.u32 %v309, 16
      %v364 = vor.u32 %v361, %v362
      %v365 = vrot.slane %v361, 4
      %v367 = vshrl.u32 %v310, 16
      %v369 = vrot.slane %v367, 7
      %v370 = vshll.u32 %v310, 16
      %v372 = vor.u32 %v369, %v370
      %v373 = vsel %vm323, %v365, %v372
      %v374 = vrot.slane %v369, 4
      %v376 = vshrl.u32 %v311, 16
      %v378 = vrot.slane %v376, 7
      %v379 = vshll.u32 %v311, 16
      %v381 = vor.u32 %v378, %v379
      %v382 = vrot.slane %v378, 4
      %v384 = vshrl.u32 %v312, 16
      %v386 = vrot.slane %v384, 7
      %v387 = vshll.u32 %v312, 16
      %v389 = vor.u32 %v386, %v387
      %v390 = vsel %vm323, %v382, %v389
      %v391 = vrot.slane %v386, 4
      %v393 = vshrl.u32 %v313, 16
      %v395 = vrot.slane %v393, 7
      %v396 = vshll.u32 %v313, 16
      %v398 = vor.u32 %v395, %v396
      %v399 = vrot.slane %v395, 4
      %v401 = vshrl.u32 %v314, 16
      %v403 = vrot.slane %v401, 7
      %v404 = vshll.u32 %v314, 16
      %v406 = vor.u32 %v403, %v404
      %v407 = vsel %vm323, %v399, %v406
      %v408 = vrot.slane %v403, 4
      %v410 = vshrl.u32 %v315, 16
      %v412 = vrot.slane %v410, 7
      %v413 = vshll.u32 %v315, 16
      %v415 = vor.u32 %v412, %v413
      %v416 = vrot.slane %v412, 4
      %v418 = vshrl.u32 %v316, 16
      %v420 = vrot.slane %v418, 7
      %v421 = vshll.u32 %v316, 16
      %v423 = vor.u32 %v420, %v421
      %v424 = vsel %vm323, %v416, %v423
      %v425 = vrot.slane %v420, 4
      %v427 = vshrl.u32 %v317, 16
      %v429 = vrot.slane %v427, 7
      %v430 = vshll.u32 %v317, 16
      %v432 = vor.u32 %v429, %v430
      %v433 = vrot.slane %v429, 4
      %v435 = vshrl.u32 %v318, 16
      %v437 = vrot.slane %v435, 7
      %v438 = vshll.u32 %v318, 16
      %v440 = vor.u32 %v437, %v438
      %v441 = vsel %vm323, %v433, %v440
      %v442 = vrot.slane %v437, 4
      %v444 = vshrl.u32 %v319, 16
      %v446 = vrot.slane %v444, 7
      %v447 = vshll.u32 %v319, 16
      %v449 = vor.u32 %v446, %v447
      %v450 = vrot.slane %v446, 4
      %v452 = vshrl.u32 %v320, 16
      %v454 = vrot.slane %v452, 7
      %v455 = vshll.u32 %v320, 16
      %v457 = vor.u32 %v454, %v455
      %v458 = vsel %vm323, %v450, %v457
      %v459 = vrot.slane %v454, 4
      %s484 = scalar_lea.vmem [#allocation2], 12
      %vm485 = vcmask 519168
      %vm486 = vsmask.f32 7938
      %vm487 = vmand %vm485, %vm486
      %v488 = vld [vmem:[%s484] sm:$0xf]
      %v489 = vsel %vm487, %v330, %v488
      %490 = vst [vmem:[%s484] sm:$0xf] %v489
      %491 = vst.msk [vmem:[%s484 + $0x4] sm:$0xf] %vm264, %v339
      %vm492 = vcmask 516096
      %vm493 = vmand %vm492, %vm321
      %v494 = vld [vmem:[%s484 + $0x8] sm:$0x1]
      %v495 = vsel %vm493, %v340, %v494
      %496 = vst [vmem:[%s484 + $0x8] sm:$0x1] %v495
      %v497 = vld [vmem:[%s484 + $0xc] sm:$0xf]
      %v498 = vsel %vm487, %v347, %v497
      %499 = vst [vmem:[%s484 + $0xc] sm:$0xf] %v498
      %500 = vst.msk [vmem:[%s484 + $0x10] sm:$0xf] %vm264, %v356
      %v501 = vld [vmem:[%s484 + $0x14] sm:$0x1]
      %v502 = vsel %vm493, %v357, %v501
      %503 = vst [vmem:[%s484 + $0x14] sm:$0x1] %v502
      %v504 = vld [vmem:[%s484 + $0x18] sm:$0xf]
      %v505 = vsel %vm487, %v364, %v504
      %506 = vst [vmem:[%s484 + $0x18] sm:$0xf] %v505
      %507 = vst.msk [vmem:[%s484 + $0x1c] sm:$0xf] %vm264, %v373
      %v508 = vld [vmem:[%s484 + $0x20] sm:$0x1]
      %v509 = vsel %vm493, %v374, %v508
      %510 = vst [vmem:[%s484 + $0x20] sm:$0x1] %v509
      %v511 = vld [vmem:[%s484 + $0x24] sm:$0xf]
      %v512 = vsel %vm487, %v381, %v511
      %513 = vst [vmem:[%s484 + $0x24] sm:$0xf] %v512
      %514 = vst.msk [vmem:[%s484 + $0x28] sm:$0xf] %vm264, %v390
      %v515 = vld [vmem:[%s484 + $0x2c] sm:$0x1]
      %v516 = vsel %vm493, %v391, %v515
      %517 = vst [vmem:[%s484 + $0x2c] sm:$0x1] %v516
      %v518 = vld [vmem:[%s484 + $0x30] sm:$0xf]
      %v519 = vsel %vm487, %v398, %v518
      %520 = vst [vmem:[%s484 + $0x30] sm:$0xf] %v519
      %521 = vst.msk [vmem:[%s484 + $0x34] sm:$0xf] %vm264, %v407
      %v522 = vld [vmem:[%s484 + $0x38] sm:$0x1]
      %v523 = vsel %vm493, %v408, %v522
      %524 = vst [vmem:[%s484 + $0x38] sm:$0x1] %v523
      %v525 = vld [vmem:[%s484 + $0x3c] sm:$0xf]
      %v526 = vsel %vm487, %v415, %v525
      %527 = vst [vmem:[%s484 + $0x3c] sm:$0xf] %v526
      %528 = vst.msk [vmem:[%s484 + $0x40] sm:$0xf] %vm264, %v424
      %v529 = vld [vmem:[%s484 + $0x44] sm:$0x1]
      %v530 = vsel %vm493, %v425, %v529
      %531 = vst [vmem:[%s484 + $0x44] sm:$0x1] %v530
      %v532 = vld [vmem:[%s484 + $0x48] sm:$0xf]
      %v533 = vsel %vm487, %v432, %v532
      %534 = vst [vmem:[%s484 + $0x48] sm:$0xf] %v533
      %535 = vst.msk [vmem:[%s484 + $0x4c] sm:$0xf] %vm264, %v441
      %v536 = vld [vmem:[%s484 + $0x50] sm:$0x1]
      %v537 = vsel %vm493, %v442, %v536
      %538 = vst [vmem:[%s484 + $0x50] sm:$0x1] %v537
      %v539 = vld [vmem:[%s484 + $0x54] sm:$0xf]
      %v540 = vsel %vm487, %v449, %v539
      %541 = vst [vmem:[%s484 + $0x54] sm:$0xf] %v540
      %542 = vst.msk [vmem:[%s484 + $0x58] sm:$0xf] %vm264, %v458
      %v543 = vld [vmem:[%s484 + $0x5c] sm:$0x1]
      %v544 = vsel %vm493, %v459, %v543
      %545 = vst [vmem:[%s484 + $0x5c] sm:$0x1] %v544
      %p546 = scmp.gt.s32.totalorder %s23, 0
      // Predicated region
      $region41: #{srgan_g_forward.63} parent=39 // pred_check
        %p547 = pneg %p546
      $region42: #{srgan_g_forward.63} parent=39 // pred_check_branch
        %549 = sbr.rel (%p547) target = $region44
      $region43: #{srgan_g_forward.63} parent=39 // pred_region
        %s550 = ssub.s32 %s301, 1
        %s551 = smul.u32 %s550, 2
        %s552 = smul.addr %s551, 4
        %s553 = scalar_lea.vmem %s248, %s552
        %v554 = vld [vmem:[%s553] sm:$0xf]
        %v555 = vld [vmem:[%s553 + $0x4] sm:$0xf]
        %v557 = vshrl.u32 %v554, 16
        %v559 = vrot.slane %v557, 7
        %v560 = vshll.u32 %v554, 16
        %v562 = vor.u32 %v559, %v560
        %v563 = vrot.slane %v559, 4
        %v565 = vshrl.u32 %v555, 16
        %v567 = vrot.slane %v565, 7
        %v568 = vshll.u32 %v555, 16
        %v570 = vor.u32 %v567, %v568
        %v571 = vsel %vm323, %v563, %v570
        %v572 = vrot.slane %v567, 4
        %v576 = vld [vmem:[#allocation2] sm:$0xf]
        %v577 = vsel %vm487, %v562, %v576
        %578 = vst [vmem:[#allocation2] sm:$0xf] %v577
        %579 = vst.msk [vmem:[#allocation2 + $0x4] sm:$0xf] %vm264, %v571
        %v580 = vld [vmem:[#allocation2 + $0x8] sm:$0x1]
        %v581 = vsel %vm493, %v572, %v580
        %582 = vst [vmem:[#allocation2 + $0x8] sm:$0x1] %v581
      $region44: #{srgan_g_forward.63} parent=39 // pred_fallthru
        _
      %p583 = scmp.lt.s32.totalorder %s23, 1
      // Predicated region
      $region45: #{srgan_g_forward.63} parent=39 // pred_check
        %p584 = pneg %p583
      $region46: #{srgan_g_forward.63} parent=39 // pred_check_branch
        %586 = sbr.rel (%p584) target = $region48
      $region47: #{srgan_g_forward.63} parent=39 // pred_region
        %s587 = sadd.s32 %s301, 8
        %s588 = smul.u32 %s587, 2
        %s589 = smul.addr %s588, 4
        %s590 = scalar_lea.vmem %s248, %s589
        %v591 = vld [vmem:[%s590] sm:$0xf]
        %v592 = vld [vmem:[%s590 + $0x4] sm:$0xf]
        %v594 = vshrl.u32 %v591, 16
        %v596 = vrot.slane %v594, 7
        %v597 = vshll.u32 %v591, 16
        %v599 = vor.u32 %v596, %v597
        %v600 = vrot.slane %v596, 4
        %v602 = vshrl.u32 %v592, 16
        %v604 = vrot.slane %v602, 7
        %v605 = vshll.u32 %v592, 16
        %v607 = vor.u32 %v604, %v605
        %v608 = vsel %vm323, %v600, %v607
        %v609 = vrot.slane %v604, 4
        %s613 = scalar_lea.vmem [#allocation2], 108
        %v614 = vld [vmem:[%s613] sm:$0xf]
        %v615 = vsel %vm487, %v599, %v614
        %616 = vst [vmem:[%s613] sm:$0xf] %v615
        %617 = vst.msk [vmem:[%s613 + $0x4] sm:$0xf] %vm264, %v608
        %v618 = vld [vmem:[%s613 + $0x8] sm:$0x1]
        %v619 = vsel %vm493, %v609, %v618
        %620 = vst [vmem:[%s613 + $0x8] sm:$0x1] %v619
      $region48: #{srgan_g_forward.63} parent=39 // pred_fallthru
        _
      %v621 = vld [vmem:[#allocation2] sm:$0xf]
      %v622 = vld [vmem:[#allocation2 + $0x4] sm:$0xf]
      %v623 = vld [vmem:[#allocation2 + $0x8] sm:$0xf]
      %v624 = vld [vmem:[#allocation2 + $0xc] sm:$0xf]
      %v625 = vld [vmem:[#allocation2 + $0x10] sm:$0xf]
      %v626 = vld [vmem:[#allocation2 + $0x14] sm:$0xf]
      %v627 = vld [vmem:[#allocation2 + $0x18] sm:$0xf]
      %v628 = vld [vmem:[#allocation2 + $0x1c] sm:$0xf]
      %v629 = vld [vmem:[#allocation2 + $0x20] sm:$0xf]
      %v630 = vld [vmem:[#allocation2 + $0x24] sm:$0xf]
      %v631 = vld [vmem:[#allocation2 + $0x28] sm:$0xf]
      %v632 = vld [vmem:[#allocation2 + $0x2c] sm:$0xf]
      %v633 = vld [vmem:[#allocation2 + $0x30] sm:$0xf]
      %v634 = vld [vmem:[#allocation2 + $0x34] sm:$0xf]
      %v635 = vld [vmem:[#allocation2 + $0x38] sm:$0xf]
      %v636 = vld [vmem:[#allocation2 + $0x3c] sm:$0xf]
      %v637 = vld [vmem:[#allocation2 + $0x40] sm:$0xf]
      %v638 = vld [vmem:[#allocation2 + $0x44] sm:$0xf]
      %v639 = vld [vmem:[#allocation2 + $0x48] sm:$0xf]
      %v640 = vld [vmem:[#allocation2 + $0x4c] sm:$0xf]
      %v641 = vld [vmem:[#allocation2 + $0x50] sm:$0xf]
      %v642 = vld [vmem:[#allocation2 + $0x54] sm:$0xf]
      %v643 = vld [vmem:[#allocation2 + $0x58] sm:$0xf]
      %v644 = vld [vmem:[#allocation2 + $0x5c] sm:$0xf]
      %v645 = vld [vmem:[#allocation2 + $0x60] sm:$0xf]
      %v646 = vld [vmem:[#allocation2 + $0x64] sm:$0xf]
      %v647 = vld [vmem:[#allocation2 + $0x68] sm:$0xf]
      %v648 = vld [vmem:[#allocation2 + $0x6c] sm:$0xf]
      %v649 = vld [vmem:[#allocation2 + $0x70] sm:$0xf]
      %v650 = vld [vmem:[#allocation2 + $0x74] sm:$0xf]
      %v651 = vld [vmem:[#allocation2 + $0x78] sm:$0xf]
      %v676 = vunpack.c.l.b16 %v621
      %v677 = vunpack.c.l.b16 %v622
      %v678 = vunpack.c.l.b16 %v623
      %v679 = vunpack.c.l.b16 %v624
      %v680 = vunpack.c.l.b16 %v625
      %v681 = vunpack.c.l.b16 %v626
      %v682 = vunpack.c.l.b16 %v627
      %v683 = vunpack.c.l.b16 %v628
      %v684 = vunpack.c.l.b16 %v629
      %v685 = vunpack.c.l.b16 %v630
      %v686 = vunpack.c.l.b16 %v631
      %v687 = vunpack.c.l.b16 %v632
      %v688 = vunpack.c.l.b16 %v633
      %v689 = vunpack.c.l.b16 %v634
      %v690 = vunpack.c.l.b16 %v635
      %v691 = vunpack.c.l.b16 %v636
      %v692 = vunpack.c.l.b16 %v637
      %v693 = vunpack.c.l.b16 %v638
      %v694 = vunpack.c.l.b16 %v639
      %v695 = vunpack.c.l.b16 %v640
      %v696 = vunpack.c.l.b16 %v641
      %v697 = vunpack.c.l.b16 %v642
      %v698 = vunpack.c.l.b16 %v643
      %v699 = vunpack.c.l.b16 %v644
      %v700 = vpack.c.b16 %v677, %v676
      %v701 = vpack.c.b16 %v679, %v678
      %v702 = vpack.c.b16 %v681, %v680
      %v703 = vpack.c.b16 %v683, %v682
      %v704 = vpack.c.b16 %v685, %v684
      %v705 = vpack.c.b16 %v687, %v686
      %v706 = vpack.c.b16 %v689, %v688
      %v707 = vpack.c.b16 %v691, %v690
      %v708 = vpack.c.b16 %v693, %v692
      %v709 = vpack.c.b16 %v695, %v694
      %v710 = vpack.c.b16 %v697, %v696
      %v711 = vpack.c.b16 %v699, %v698
      %v713 = vunpack.c.l.b16 %v645
      %v714 = vpack.c.b16 %v713, %v713
      %vm715 = vsmask.f32 7424
      %v717 = vshrl.u32 %v700, 16
      %v719 = vshll.u32 %v700, 16
      %v721 = vrot.slane %v719, 1
      %v722 = vor.u32 %v717, %v721
      %v724 = vshll.u32 %v701, 16
      %v726 = vrot.slane %v724, 1
      %v727 = vsel %vm715, %v722, %v726
      %v728 = vshrl.u32 %v701, 16
      %v730 = vor.u32 %v728, %v726
      %v732 = vshll.u32 %v702, 16
      %v734 = vrot.slane %v732, 1
      %v735 = vsel %vm715, %v730, %v734
      %v736 = vshrl.u32 %v702, 16
      %v738 = vor.u32 %v736, %v734
      %v740 = vshll.u32 %v703, 16
      %v742 = vrot.slane %v740, 1
      %v743 = vsel %vm715, %v738, %v742
      %v744 = vshrl.u32 %v703, 16
      %v746 = vor.u32 %v744, %v742
      %v748 = vshll.u32 %v704, 16
      %v750 = vrot.slane %v748, 1
      %v751 = vsel %vm715, %v746, %v750
      %v752 = vshrl.u32 %v704, 16
      %v754 = vor.u32 %v752, %v750
      %v756 = vshll.u32 %v705, 16
      %v758 = vrot.slane %v756, 1
      %v759 = vsel %vm715, %v754, %v758
      %v760 = vshrl.u32 %v705, 16
      %v762 = vor.u32 %v760, %v758
      %v764 = vshll.u32 %v706, 16
      %v766 = vrot.slane %v764, 1
      %v767 = vsel %vm715, %v762, %v766
      %v768 = vshrl.u32 %v706, 16
      %v770 = vor.u32 %v768, %v766
      %v772 = vshll.u32 %v707, 16
      %v774 = vrot.slane %v772, 1
      %v775 = vsel %vm715, %v770, %v774
      %v776 = vshrl.u32 %v707, 16
      %v778 = vor.u32 %v776, %v774
      %v780 = vshll.u32 %v708, 16
      %v782 = vrot.slane %v780, 1
      %v783 = vsel %vm715, %v778, %v782
      %v784 = vshrl.u32 %v708, 16
      %v786 = vor.u32 %v784, %v782
      %v788 = vshll.u32 %v709, 16
      %v790 = vrot.slane %v788, 1
      %v791 = vsel %vm715, %v786, %v790
      %v792 = vshrl.u32 %v709, 16
      %v794 = vor.u32 %v792, %v790
      %v796 = vshll.u32 %v710, 16
      %v798 = vrot.slane %v796, 1
      %v799 = vsel %vm715, %v794, %v798
      %v800 = vshrl.u32 %v710, 16
      %v802 = vor.u32 %v800, %v798
      %v804 = vshll.u32 %v711, 16
      %v806 = vrot.slane %v804, 1
      %v807 = vsel %vm715, %v802, %v806
      %v808 = vshrl.u32 %v711, 16
      %v810 = vor.u32 %v808, %v806
      %v812 = vshll.u32 %v714, 16
      %v814 = vrot.slane %v812, 1
      %v815 = vsel %vm715, %v810, %v814
      %816 = vrot.lane.b32.xlu0 %v727, 64
      %v817 = vpop.permute.xlu0 %816
      %818 = vrot.lane.b32.xlu0 %v735, 64
      %v819 = vpop.permute.xlu0 %818
      %820 = vrot.lane.b32.xlu0 %v743, 64
      %v821 = vpop.permute.xlu0 %820
      %822 = vrot.lane.b32.xlu0 %v751, 64
      %v823 = vpop.permute.xlu0 %822
      %824 = vrot.lane.b32.xlu0 %v759, 64
      %v825 = vpop.permute.xlu0 %824
      %826 = vrot.lane.b32.xlu0 %v767, 64
      %v827 = vpop.permute.xlu0 %826
      %828 = vrot.lane.b32.xlu0 %v775, 64
      %v829 = vpop.permute.xlu0 %828
      %830 = vrot.lane.b32.xlu0 %v783, 64
      %v831 = vpop.permute.xlu0 %830
      %832 = vrot.lane.b32.xlu0 %v791, 64
      %v833 = vpop.permute.xlu0 %832
      %834 = vrot.lane.b32.xlu0 %v799, 64
      %v835 = vpop.permute.xlu0 %834
      %836 = vrot.lane.b32.xlu0 %v807, 64
      %v837 = vpop.permute.xlu0 %836
      %838 = vrot.lane.b32.xlu0 %v815, 64
      %v839 = vpop.permute.xlu0 %838
      %vm840 = vcmask 1046528
      %v841 = vrot.slane %v700, 1
      %v842 = vrot.slane %v701, 1
      %v843 = vsel %vm840, %v841, %v842
      %v844 = vrot.slane %v702, 1
      %v845 = vsel %vm840, %v842, %v844
      %v846 = vrot.slane %v703, 1
      %v847 = vsel %vm840, %v844, %v846
      %v848 = vrot.slane %v704, 1
      %v849 = vsel %vm840, %v846, %v848
      %v850 = vrot.slane %v705, 1
      %v851 = vsel %vm840, %v848, %v850
      %v852 = vrot.slane %v706, 1
      %v853 = vsel %vm840, %v850, %v852
      %v854 = vrot.slane %v707, 1
      %v855 = vsel %vm840, %v852, %v854
      %v856 = vrot.slane %v708, 1
      %v857 = vsel %vm840, %v854, %v856
      %v858 = vrot.slane %v709, 1
      %v859 = vsel %vm840, %v856, %v858
      %v860 = vrot.slane %v710, 1
      %v861 = vsel %vm840, %v858, %v860
      %v862 = vrot.slane %v711, 1
      %v863 = vsel %vm840, %v860, %v862
      %v864 = vrot.slane %v714, 1
      %v865 = vsel %vm840, %v862, %v864
      %v868 = vunpack.c.l.b16 %v646
      %v869 = vunpack.c.l.b16 %v647
      %v870 = vpack.c.b16 %v680, %v679
      %v871 = vpack.c.b16 %v682, %v681
      %v872 = vpack.c.b16 %v684, %v683
      %v873 = vpack.c.b16 %v686, %v685
      %v874 = vpack.c.b16 %v688, %v687
      %v875 = vpack.c.b16 %v690, %v689
      %v876 = vpack.c.b16 %v692, %v691
      %v877 = vpack.c.b16 %v694, %v693
      %v878 = vpack.c.b16 %v696, %v695
      %v879 = vpack.c.b16 %v698, %v697
      %v880 = vpack.c.b16 %v713, %v699
      %v881 = vpack.c.b16 %v869, %v868
      %882 = vrot.lane.b32.xlu0 %v870, 64
      %v883 = vpop.permute.xlu0 %882
      %884 = vrot.lane.b32.xlu0 %v871, 64
      %v885 = vpop.permute.xlu0 %884
      %886 = vrot.lane.b32.xlu0 %v872, 64
      %v887 = vpop.permute.xlu0 %886
      %888 = vrot.lane.b32.xlu0 %v873, 64
      %v889 = vpop.permute.xlu0 %888
      %890 = vrot.lane.b32.xlu0 %v874, 64
      %v891 = vpop.permute.xlu0 %890
      %892 = vrot.lane.b32.xlu0 %v875, 64
      %v893 = vpop.permute.xlu0 %892
      %894 = vrot.lane.b32.xlu0 %v876, 64
      %v895 = vpop.permute.xlu0 %894
      %896 = vrot.lane.b32.xlu0 %v877, 64
      %v897 = vpop.permute.xlu0 %896
      %898 = vrot.lane.b32.xlu0 %v878, 64
      %v899 = vpop.permute.xlu0 %898
      %900 = vrot.lane.b32.xlu0 %v879, 64
      %v901 = vpop.permute.xlu0 %900
      %902 = vrot.lane.b32.xlu0 %v880, 64
      %v903 = vpop.permute.xlu0 %902
      %904 = vrot.lane.b32.xlu0 %v881, 64
      %v905 = vpop.permute.xlu0 %904
      %v907 = vunpack.c.l.b16 %v648
      %v908 = vpack.c.b16 %v907, %v907
      %v910 = vshrl.u32 %v870, 16
      %v912 = vshll.u32 %v870, 16
      %v914 = vrot.slane %v912, 1
      %v915 = vor.u32 %v910, %v914
      %v917 = vshll.u32 %v871, 16
      %v919 = vrot.slane %v917, 1
      %v920 = vsel %vm715, %v915, %v919
      %v921 = vshrl.u32 %v871, 16
      %v923 = vor.u32 %v921, %v919
      %v925 = vshll.u32 %v872, 16
      %v927 = vrot.slane %v925, 1
      %v928 = vsel %vm715, %v923, %v927
      %v929 = vshrl.u32 %v872, 16
      %v931 = vor.u32 %v929, %v927
      %v933 = vshll.u32 %v873, 16
      %v935 = vrot.slane %v933, 1
      %v936 = vsel %vm715, %v931, %v935
      %v937 = vshrl.u32 %v873, 16
      %v939 = vor.u32 %v937, %v935
      %v941 = vshll.u32 %v874, 16
      %v943 = vrot.slane %v941, 1
      %v944 = vsel %vm715, %v939, %v943
      %v945 = vshrl.u32 %v874, 16
      %v947 = vor.u32 %v945, %v943
      %v949 = vshll.u32 %v875, 16
      %v951 = vrot.slane %v949, 1
      %v952 = vsel %vm715, %v947, %v951
      %v953 = vshrl.u32 %v875, 16
      %v955 = vor.u32 %v953, %v951
      %v957 = vshll.u32 %v876, 16
      %v959 = vrot.slane %v957, 1
      %v960 = vsel %vm715, %v955, %v959
      %v961 = vshrl.u32 %v876, 16
      %v963 = vor.u32 %v961, %v959
      %v965 = vshll.u32 %v877, 16
      %v967 = vrot.slane %v965, 1
      %v968 = vsel %vm715, %v963, %v967
      %v969 = vshrl.u32 %v877, 16
      %v971 = vor.u32 %v969, %v967
      %v973 = vshll.u32 %v878, 16
      %v975 = vrot.slane %v973, 1
      %v976 = vsel %vm715, %v971, %v975
      %v977 = vshrl.u32 %v878, 16
      %v979 = vor.u32 %v977, %v975
      %v981 = vshll.u32 %v879, 16
      %v983 = vrot.slane %v981, 1
      %v984 = vsel %vm715, %v979, %v983
      %v985 = vshrl.u32 %v879, 16
      %v987 = vor.u32 %v985, %v983
      %v989 = vshll.u32 %v880, 16
      %v991 = vrot.slane %v989, 1
      %v992 = vsel %vm715, %v987, %v991
      %v993 = vshrl.u32 %v880, 16
      %v995 = vor.u32 %v993, %v991
      %v997 = vshll.u32 %v881, 16
      %v999 = vrot.slane %v997, 1
      %v1000 = vsel %vm715, %v995, %v999
      %v1001 = vshrl.u32 %v881, 16
      %v1003 = vor.u32 %v1001, %v999
      %v1005 = vshll.u32 %v908, 16
      %v1007 = vrot.slane %v1005, 1
      %v1008 = vsel %vm715, %v1003, %v1007
      %v1009 = vrot.slane %v870, 1
      %v1010 = vrot.slane %v871, 1
      %v1011 = vsel %vm840, %v1009, %v1010
      %v1012 = vrot.slane %v872, 1
      %v1013 = vsel %vm840, %v1010, %v1012
      %v1014 = vrot.slane %v873, 1
      %v1015 = vsel %vm840, %v1012, %v1014
      %v1016 = vrot.slane %v874, 1
      %v1017 = vsel %vm840, %v1014, %v1016
      %v1018 = vrot.slane %v875, 1
      %v1019 = vsel %vm840, %v1016, %v1018
      %v1020 = vrot.slane %v876, 1
      %v1021 = vsel %vm840, %v1018, %v1020
      %v1022 = vrot.slane %v877, 1
      %v1023 = vsel %vm840, %v1020, %v1022
      %v1024 = vrot.slane %v878, 1
      %v1025 = vsel %vm840, %v1022, %v1024
      %v1026 = vrot.slane %v879, 1
      %v1027 = vsel %vm840, %v1024, %v1026
      %v1028 = vrot.slane %v880, 1
      %v1029 = vsel %vm840, %v1026, %v1028
      %v1030 = vrot.slane %v881, 1
      %v1031 = vsel %vm840, %v1028, %v1030
      %v1032 = vrot.slane %v908, 1
      %v1033 = vsel %vm840, %v1030, %v1032
      %1034 = vrot.lane.b32.xlu0 %v1011, 64
      %v1035 = vpop.permute.xlu0 %1034
      %1036 = vrot.lane.b32.xlu0 %v1013, 64
      %v1037 = vpop.permute.xlu0 %1036
      %1038 = vrot.lane.b32.xlu0 %v1015, 64
      %v1039 = vpop.permute.xlu0 %1038
      %1040 = vrot.lane.b32.xlu0 %v1017, 64
      %v1041 = vpop.permute.xlu0 %1040
      %1042 = vrot.lane.b32.xlu0 %v1019, 64
      %v1043 = vpop.permute.xlu0 %1042
      %1044 = vrot.lane.b32.xlu0 %v1021, 64
      %v1045 = vpop.permute.xlu0 %1044
      %1046 = vrot.lane.b32.xlu0 %v1023, 64
      %v1047 = vpop.permute.xlu0 %1046
      %1048 = vrot.lane.b32.xlu0 %v1025, 64
      %v1049 = vpop.permute.xlu0 %1048
      %1050 = vrot.lane.b32.xlu0 %v1027, 64
      %v1051 = vpop.permute.xlu0 %1050
      %1052 = vrot.lane.b32.xlu0 %v1029, 64
      %v1053 = vpop.permute.xlu0 %1052
      %1054 = vrot.lane.b32.xlu0 %v1031, 64
      %v1055 = vpop.permute.xlu0 %1054
      %1056 = vrot.lane.b32.xlu0 %v1033, 64
      %v1057 = vpop.permute.xlu0 %1056
      %v1060 = vunpack.c.l.b16 %v649
      %v1061 = vunpack.c.l.b16 %v650
      %v1062 = vpack.c.b16 %v868, %v713
      %v1063 = vpack.c.b16 %v907, %v869
      %v1064 = vpack.c.b16 %v1061, %v1060
      %v1066 = vunpack.c.l.b16 %v651
      %v1067 = vpack.c.b16 %v1066, %v1066
      %v1069 = vshll.u32 %v1062, 16
      %v1071 = vrot.slane %v1069, 1
      %v1072 = vsel %vm715, %v810, %v1071
      %v1073 = vshrl.u32 %v1062, 16
      %v1075 = vor.u32 %v1073, %v1071
      %v1077 = vshll.u32 %v1063, 16
      %v1079 = vrot.slane %v1077, 1
      %v1080 = vsel %vm715, %v1075, %v1079
      %v1081 = vshrl.u32 %v1063, 16
      %v1083 = vor.u32 %v1081, %v1079
      %v1085 = vshll.u32 %v1064, 16
      %v1087 = vrot.slane %v1085, 1
      %v1088 = vsel %vm715, %v1083, %v1087
      %v1089 = vshrl.u32 %v1064, 16
      %v1091 = vor.u32 %v1089, %v1087
      %v1093 = vshll.u32 %v1067, 16
      %v1095 = vrot.slane %v1093, 1
      %v1096 = vsel %vm715, %v1091, %v1095
      %1097 = vrot.lane.b32.xlu0 %v1072, 64
      %v1098 = vpop.permute.xlu0 %1097
      %1099 = vrot.lane.b32.xlu0 %v1080, 64
      %v1100 = vpop.permute.xlu0 %1099
      %1101 = vrot.lane.b32.xlu0 %v1088, 64
      %v1102 = vpop.permute.xlu0 %1101
      %1103 = vrot.lane.b32.xlu0 %v1096, 64
      %v1104 = vpop.permute.xlu0 %1103
      %v1105 = vrot.slane %v1062, 1
      %v1106 = vsel %vm840, %v862, %v1105
      %v1107 = vrot.slane %v1063, 1
      %v1108 = vsel %vm840, %v1105, %v1107
      %v1109 = vrot.slane %v1064, 1
      %v1110 = vsel %vm840, %v1107, %v1109
      %v1111 = vrot.slane %v1067, 1
      %v1112 = vsel %vm840, %v1109, %v1111
      %vm1113 = vcmask 523264
      %v1115 = vsel %vm1113, %v700, %v817
      %v1118 = vsel %vm1113, %v701, %v819
      %v1121 = vsel %vm1113, %v702, %v821
      %v1124 = vsel %vm1113, %v703, %v823
      %v1127 = vsel %vm1113, %v704, %v825
      %v1130 = vsel %vm1113, %v705, %v827
      %v1133 = vsel %vm1113, %v706, %v829
      %v1136 = vsel %vm1113, %v707, %v831
      %v1139 = vsel %vm1113, %v708, %v833
      %v1142 = vsel %vm1113, %v709, %v835
      %v1145 = vsel %vm1113, %v710, %v837
      %v1148 = vsel %vm1113, %v711, %v839
      %v1152 = vsel %vm1113, %v843, %v883
      %v1156 = vsel %vm1113, %v845, %v885
      %v1160 = vsel %vm1113, %v847, %v887
      %v1164 = vsel %vm1113, %v849, %v889
      %v1168 = vsel %vm1113, %v851, %v891
      %v1172 = vsel %vm1113, %v853, %v893
      %v1176 = vsel %vm1113, %v855, %v895
      %v1180 = vsel %vm1113, %v857, %v897
      %v1184 = vsel %vm1113, %v859, %v899
      %v1188 = vsel %vm1113, %v861, %v901
      %v1192 = vsel %vm1113, %v863, %v903
      %v1196 = vsel %vm1113, %v865, %v905
      %v1200 = vsel %vm1113, %v920, %v1035
      %v1204 = vsel %vm1113, %v928, %v1037
      %v1208 = vsel %vm1113, %v936, %v1039
      %v1212 = vsel %vm1113, %v944, %v1041
      %v1216 = vsel %vm1113, %v952, %v1043
      %v1220 = vsel %vm1113, %v960, %v1045
      %v1224 = vsel %vm1113, %v968, %v1047
      %v1228 = vsel %vm1113, %v976, %v1049
      %v1232 = vsel %vm1113, %v984, %v1051
      %v1236 = vsel %vm1113, %v992, %v1053
      %v1240 = vsel %vm1113, %v1000, %v1055
      %v1244 = vsel %vm1113, %v1008, %v1057
      %v1247 = vsel %vm1113, %v711, %v1098
      %v1250 = vsel %vm1113, %v1062, %v1100
      %v1253 = vsel %vm1113, %v1063, %v1102
      %v1256 = vsel %vm1113, %v1064, %v1104
      %v1258 = vld [vmem:[%s1] sm:$0xf]
      %v1259 = vld [vmem:[%s1 + $0x4] sm:$0xf]
      %v1260 = vld [vmem:[%s1 + $0x8] sm:$0xf]
      %v1261 = vld [vmem:[%s1 + $0xc] sm:$0xf]
      %v1262 = vld [vmem:[%s1 + $0x10] sm:$0xf]
      %v1263 = vld [vmem:[%s1 + $0x14] sm:$0xf]
      %v1264 = vld [vmem:[%s1 + $0x18] sm:$0xf]
      %v1265 = vld [vmem:[%s1 + $0x1c] sm:$0xf]
      %v1266 = vld [vmem:[%s1 + $0x20] sm:$0xf]
      %v1267 = vld [vmem:[%s1 + $0x24] sm:$0xf]
      %v1268 = vld [vmem:[%s1 + $0x28] sm:$0xf]
      %v1269 = vld [vmem:[%s1 + $0x2c] sm:$0xf]
      %v1270 = vld [vmem:[%s1 + $0x30] sm:$0xf]
      %v1271 = vld [vmem:[%s1 + $0x34] sm:$0xf]
      %v1272 = vld [vmem:[%s1 + $0x38] sm:$0xf]
      %v1273 = vld [vmem:[%s1 + $0x3c] sm:$0xf]
      %v1274 = vld [vmem:[%s1 + $0x40] sm:$0xf]
      %v1275 = vld [vmem:[%s1 + $0x44] sm:$0xf]
      %v1276 = vld [vmem:[%s1 + $0x48] sm:$0xf]
      %v1277 = vld [vmem:[%s1 + $0x4c] sm:$0xf]
      %v1278 = vld [vmem:[%s1 + $0x50] sm:$0xf]
      %v1279 = vld [vmem:[%s1 + $0x54] sm:$0xf]
      %v1280 = vld [vmem:[%s1 + $0x58] sm:$0xf]
      %v1281 = vld [vmem:[%s1 + $0x5c] sm:$0xf]
      %v1282 = vld [vmem:[%s1 + $0x60] sm:$0xf]
      %v1283 = vld [vmem:[%s1 + $0x64] sm:$0xf]
      %v1284 = vld [vmem:[%s1 + $0x68] sm:$0xf]
      %v1285 = vld [vmem:[%s1 + $0x6c] sm:$0xf]
      %v1286 = vld [vmem:[%s1 + $0x70] sm:$0xf]
      %v1287 = vld [vmem:[%s1 + $0x74] sm:$0xf]
      %v1288 = vld [vmem:[%s1 + $0x78] sm:$0xf]
      %v1289 = vld [vmem:[%s1 + $0x7c] sm:$0xf]
      %v1290 = vld [vmem:[%s1 + $0x80] sm:$0xf]
      %v1291 = vld [vmem:[%s1 + $0x84] sm:$0xf]
      %v1292 = vld [vmem:[%s1 + $0x88] sm:$0xf]
      %v1293 = vld [vmem:[%s1 + $0x8c] sm:$0xf]
      %v1294 = vld [vmem:[%s1 + $0x90] sm:$0xf]
      %v1295 = vld [vmem:[%s1 + $0x94] sm:$0xf]
      %v1296 = vld [vmem:[%s1 + $0x98] sm:$0xf]
      %v1297 = vld [vmem:[%s1 + $0x9c] sm:$0xf]
      %v1298 = vld [vmem:[%s1 + $0xa0] sm:$0xf]
      %v1299 = vld [vmem:[%s1 + $0xa4] sm:$0xf]
      %v1300 = vld [vmem:[%s1 + $0xa8] sm:$0xf]
      %v1301 = vld [vmem:[%s1 + $0xac] sm:$0xf]
      %v1302 = vld [vmem:[%s1 + $0xb0] sm:$0xf]
      %v1303 = vld [vmem:[%s1 + $0xb4] sm:$0xf]
      %v1304 = vld [vmem:[%s1 + $0xb8] sm:$0xf]
      %v1305 = vld [vmem:[%s1 + $0xbc] sm:$0xf]
      %v1306 = vld [vmem:[%s1 + $0xc0] sm:$0xf]
      %v1307 = vld [vmem:[%s1 + $0xc4] sm:$0xf]
      %v1308 = vld [vmem:[%s1 + $0xc8] sm:$0xf]
      %v1309 = vld [vmem:[%s1 + $0xcc] sm:$0xf]
      %v1310 = vld [vmem:[%s1 + $0xd0] sm:$0xf]
      %v1311 = vld [vmem:[%s1 + $0xd4] sm:$0xf]
      %v1312 = vld [vmem:[%s1 + $0xd8] sm:$0xf]
      %v1313 = vld [vmem:[%s1 + $0xdc] sm:$0xf]
      %v1314 = vld [vmem:[%s1 + $0xe0] sm:$0xf]
      %v1315 = vld [vmem:[%s1 + $0xe4] sm:$0xf]
      %v1316 = vld [vmem:[%s1 + $0xe8] sm:$0xf]
      %v1317 = vld [vmem:[%s1 + $0xec] sm:$0xf]
      %v1318 = vld [vmem:[%s1 + $0xf0] sm:$0xf]
      %v1319 = vld [vmem:[%s1 + $0xf4] sm:$0xf]
      %v1320 = vld [vmem:[%s1 + $0xf8] sm:$0xf]
      %v1321 = vld [vmem:[%s1 + $0xfc] sm:$0xf]
      %v1322 = vld [vmem:[%s1 + $0x100] sm:$0xf]
      %v1323 = vld [vmem:[%s1 + $0x104] sm:$0xf]
      %v1324 = vld [vmem:[%s1 + $0x108] sm:$0xf]
      %v1325 = vld [vmem:[%s1 + $0x10c] sm:$0xf]
      %v1326 = vld [vmem:[%s1 + $0x110] sm:$0xf]
      %v1327 = vld [vmem:[%s1 + $0x114] sm:$0xf]
      %v1328 = vld [vmem:[%s1 + $0x118] sm:$0xf]
      %v1329 = vld [vmem:[%s1 + $0x11c] sm:$0xf]
      %v1330 = vld [vmem:[%s2] sm:$0x1]
      %v1332 = vperm.slane %v1330, 0
      %v1406 = vunpack.c.l.b16 %v1258
      %v1407 = vunpack.c.l.b16 %v1259
      %v1408 = vunpack.c.l.b16 %v1260
      %v1409 = vunpack.c.l.b16 %v1261
      %v1410 = vunpack.c.l.b16 %v1262
      %v1411 = vunpack.c.l.b16 %v1263
      %v1412 = vunpack.c.l.b16 %v1264
      %v1413 = vunpack.c.l.b16 %v1265
      %v1414 = vunpack.c.l.b16 %v1266
      %v1415 = vunpack.c.l.b16 %v1267
      %v1416 = vunpack.c.l.b16 %v1268
      %v1417 = vunpack.c.l.b16 %v1269
      %v1418 = vunpack.c.l.b16 %v1270
      %v1419 = vunpack.c.l.b16 %v1271
      %v1420 = vunpack.c.l.b16 %v1272
      %v1421 = vunpack.c.l.b16 %v1273
      %v1422 = vunpack.c.l.b16 %v1274
      %v1423 = vunpack.c.l.b16 %v1275
      %v1424 = vunpack.c.l.b16 %v1276
      %v1425 = vunpack.c.l.b16 %v1277
      %v1426 = vunpack.c.l.b16 %v1278
      %v1427 = vunpack.c.l.b16 %v1279
      %v1428 = vunpack.c.l.b16 %v1280
      %v1429 = vunpack.c.l.b16 %v1281
      %v1430 = vunpack.c.l.b16 %v1282
      %v1431 = vunpack.c.l.b16 %v1283
      %v1432 = vunpack.c.l.b16 %v1284
      %v1433 = vunpack.c.l.b16 %v1285
      %v1434 = vunpack.c.l.b16 %v1286
      %v1435 = vunpack.c.l.b16 %v1287
      %v1436 = vunpack.c.l.b16 %v1288
      %v1437 = vunpack.c.l.b16 %v1289
      %v1438 = vunpack.c.l.b16 %v1290
      %v1439 = vunpack.c.l.b16 %v1291
      %v1440 = vunpack.c.l.b16 %v1292
      %v1441 = vunpack.c.l.b16 %v1293
      %v1442 = vunpack.c.l.b16 %v1294
      %v1443 = vunpack.c.l.b16 %v1295
      %v1444 = vunpack.c.l.b16 %v1296
      %v1445 = vunpack.c.l.b16 %v1297
      %v1446 = vunpack.c.l.b16 %v1298
      %v1447 = vunpack.c.l.b16 %v1299
      %v1448 = vunpack.c.l.b16 %v1300
      %v1449 = vunpack.c.l.b16 %v1301
      %v1450 = vunpack.c.l.b16 %v1302
      %v1451 = vunpack.c.l.b16 %v1303
      %v1452 = vunpack.c.l.b16 %v1304
      %v1453 = vunpack.c.l.b16 %v1305
      %v1454 = vunpack.c.l.b16 %v1306
      %v1455 = vunpack.c.l.b16 %v1307
      %v1456 = vunpack.c.l.b16 %v1308
      %v1457 = vunpack.c.l.b16 %v1309
      %v1458 = vunpack.c.l.b16 %v1310
      %v1459 = vunpack.c.l.b16 %v1311
      %v1460 = vunpack.c.l.b16 %v1312
      %v1461 = vunpack.c.l.b16 %v1313
      %v1462 = vunpack.c.l.b16 %v1314
      %v1463 = vunpack.c.l.b16 %v1315
      %v1464 = vunpack.c.l.b16 %v1316
      %v1465 = vunpack.c.l.b16 %v1317
      %v1466 = vunpack.c.l.b16 %v1318
      %v1467 = vunpack.c.l.b16 %v1319
      %v1468 = vunpack.c.l.b16 %v1320
      %v1469 = vunpack.c.l.b16 %v1321
      %v1470 = vunpack.c.l.b16 %v1322
      %v1471 = vunpack.c.l.b16 %v1323
      %v1472 = vunpack.c.l.b16 %v1324
      %v1473 = vunpack.c.l.b16 %v1325
      %v1474 = vunpack.c.l.b16 %v1326
      %v1475 = vunpack.c.l.b16 %v1327
      %v1476 = vunpack.c.l.b16 %v1328
      %v1477 = vunpack.c.l.b16 %v1329
      %v1478 = vpack.c.b16 %v1407, %v1406
      %v1479 = vpack.c.b16 %v1409, %v1408
      %v1480 = vpack.c.b16 %v1411, %v1410
      %v1481 = vpack.c.b16 %v1413, %v1412
      %v1482 = vpack.c.b16 %v1415, %v1414
      %v1483 = vpack.c.b16 %v1417, %v1416
      %v1484 = vpack.c.b16 %v1419, %v1418
      %v1485 = vpack.c.b16 %v1421, %v1420
      %v1486 = vpack.c.b16 %v1423, %v1422
      %v1487 = vpack.c.b16 %v1425, %v1424
      %v1488 = vpack.c.b16 %v1427, %v1426
      %v1489 = vpack.c.b16 %v1429, %v1428
      %v1490 = vpack.c.b16 %v1431, %v1430
      %v1491 = vpack.c.b16 %v1433, %v1432
      %v1492 = vpack.c.b16 %v1435, %v1434
      %v1493 = vpack.c.b16 %v1437, %v1436
      %v1494 = vpack.c.b16 %v1439, %v1438
      %v1495 = vpack.c.b16 %v1441, %v1440
      %v1496 = vpack.c.b16 %v1443, %v1442
      %v1497 = vpack.c.b16 %v1445, %v1444
      %v1498 = vpack.c.b16 %v1447, %v1446
      %v1499 = vpack.c.b16 %v1449, %v1448
      %v1500 = vpack.c.b16 %v1451, %v1450
      %v1501 = vpack.c.b16 %v1453, %v1452
      %v1502 = vpack.c.b16 %v1455, %v1454
      %v1503 = vpack.c.b16 %v1457, %v1456
      %v1504 = vpack.c.b16 %v1459, %v1458
      %v1505 = vpack.c.b16 %v1461, %v1460
      %v1506 = vpack.c.b16 %v1463, %v1462
      %v1507 = vpack.c.b16 %v1465, %v1464
      %v1508 = vpack.c.b16 %v1467, %v1466
      %v1509 = vpack.c.b16 %v1469, %v1468
      %v1510 = vpack.c.b16 %v1471, %v1470
      %v1511 = vpack.c.b16 %v1473, %v1472
      %v1512 = vpack.c.b16 %v1475, %v1474
      %v1513 = vpack.c.b16 %v1477, %v1476
      %v1550 = vsel %vm1113, %v849, 0
      %v1552 = vsel %vm1113, %v851, 0
      %v1554 = vsel %vm1113, %v853, 0
      %v1556 = vsel %vm1113, %v855, 0
      %v1558 = vsel %vm1113, %v857, 0
      %v1560 = vsel %vm1113, %v859, 0
      %v1562 = vsel %vm1113, %v861, 0
      %v1564 = vsel %vm1113, %v863, 0
      %v1567 = vsel %vm1113, %v1106, 0
      %v1570 = vsel %vm1113, %v1108, 0
      %v1573 = vsel %vm1113, %v1110, 0
      %v1576 = vsel %vm1113, %v1112, 0
      %1578 = vmatpush.bf16.msra.mxu0 %v1485
      %1579 = vmatpush.bf16.msra.mxu0 %v1484
      %1580 = vmatpush.bf16.msra.mxu0 %v1483
      %1581 = vmatpush.bf16.msra.mxu0 %v1482
      %1582 = vmatpush.bf16.msra.mxu0 %v1481
      %1583 = vmatpush.bf16.msra.mxu0 %v1480
      %1584 = vmatpush.bf16.msra.mxu0 %v1479
      %1585 = vmatpush.bf16.msra.mxu0 %v1478
      %1586 = vmatmul.bf16.gmra.mxu0 %v1115
      %v1587 = vpop.f32.mrf.mxu0
      %v1588 = vadd.f32 %v1332, %v1587
      %v1589 = vpop.f32.mrf.mxu0
      %v1590 = vadd.f32 %v1332, %v1589
      %1591 = vmatmul.bf16.gmra.mxu0 %v1118
      %v1592 = vpop.f32.mrf.mxu0
      %v1593 = vpop.f32.mrf.mxu0
      %v1594 = vadd.f32 %v1332, %v1593
      %1595 = vmatmul.bf16.gmra.mxu0 %v1121
      %v1596 = vpop.f32.mrf.mxu0
      %v1597 = vadd.f32 %v1332, %v1596
      %v1598 = vpop.f32.mrf.mxu0
      %1599 = vmatmul.bf16.gmra.mxu0 %v1124
      %v1600 = vpop.f32.mrf.mxu0
      %v1601 = vadd.f32 %v1332, %v1600
      %v1602 = vpop.f32.mrf.mxu0
      %v1603 = vadd.f32 %v1332, %v1602
      %1604 = vmatmul.bf16.gmra.mxu0 %v1127
      %v1605 = vpop.f32.mrf.mxu0
      %v1606 = vpop.f32.mrf.mxu0
      %v1607 = vadd.f32 %v1332, %v1606
      %1608 = vmatmul.bf16.gmra.mxu0 %v1130
      %v1609 = vpop.f32.mrf.mxu0
      %v1610 = vadd.f32 %v1332, %v1609
      %v1611 = vpop.f32.mrf.mxu0
      %1612 = vmatmul.bf16.gmra.mxu0 %v1133
      %v1613 = vpop.f32.mrf.mxu0
      %v1614 = vadd.f32 %v1332, %v1613
      %v1615 = vpop.f32.mrf.mxu0
      %v1616 = vadd.f32 %v1332, %v1615
      %1617 = vmatmul.bf16.gmra.mxu0 %v1136
      %v1618 = vpop.f32.mrf.mxu0
      %v1619 = vpop.f32.mrf.mxu0
      %v1620 = vadd.f32 %v1332, %v1619
      %1621 = vmatmul.bf16.gmra.mxu0 %v1139
      %v1622 = vpop.f32.mrf.mxu0
      %v1623 = vadd.f32 %v1332, %v1622
      %v1624 = vpop.f32.mrf.mxu0
      %1625 = vmatmul.bf16.gmra.mxu0 %v1142
      %v1626 = vpop.f32.mrf.mxu0
      %v1627 = vadd.f32 %v1332, %v1626
      %v1628 = vpop.f32.mrf.mxu0
      %v1629 = vadd.f32 %v1332, %v1628
      %1630 = vmatmul.bf16.gmra.mxu0 %v1145
      %v1631 = vpop.f32.mrf.mxu0
      %v1632 = vpop.f32.mrf.mxu0
      %v1633 = vadd.f32 %v1332, %v1632
      %1634 = vmatmul.bf16.gmra.mxu0 %v1148
      %v1635 = vpop.f32.mrf.mxu0
      %v1636 = vadd.f32 %v1332, %v1635
      %v1637 = vpop.f32.mrf.mxu0
      %1638 = vdwg.mxu0
      %1639 = vmatpush.bf16.msra.mxu0 %v1493
      %1640 = vmatpush.bf16.msra.mxu0 %v1492
      %1641 = vmatpush.bf16.msra.mxu0 %v1491
      %1642 = vmatpush.bf16.msra.mxu0 %v1490
      %1643 = vmatpush.bf16.msra.mxu0 %v1489
      %1644 = vmatpush.bf16.msra.mxu0 %v1488
      %1645 = vmatpush.bf16.msra.mxu0 %v1487
      %1646 = vmatpush.bf16.msra.mxu0 %v1486
      %1647 = vmatmul.bf16.gmra.mxu0 %v1152
      %v1648 = vpop.f32.mrf.mxu0
      %v1649 = vadd.f32 %v1588, %v1648
      %v1650 = vpop.f32.mrf.mxu0
      %v1651 = vadd.f32 %v1590, %v1650
      %1652 = vmatmul.bf16.gmra.mxu0 %v1156
      %v1653 = vpop.f32.mrf.mxu0
      %v1654 = vpop.f32.mrf.mxu0
      %v1655 = vadd.f32 %v1594, %v1654
      %1656 = vmatmul.bf16.gmra.mxu0 %v1160
      %v1657 = vpop.f32.mrf.mxu0
      %v1658 = vadd.f32 %v1597, %v1657
      %v1659 = vpop.f32.mrf.mxu0
      %1660 = vmatmul.bf16.gmra.mxu0 %v1164
      %v1661 = vpop.f32.mrf.mxu0
      %v1662 = vadd.f32 %v1601, %v1661
      %v1663 = vpop.f32.mrf.mxu0
      %v1664 = vadd.f32 %v1603, %v1663
      %1665 = vmatmul.bf16.gmra.mxu0 %v1168
      %v1666 = vpop.f32.mrf.mxu0
      %v1667 = vpop.f32.mrf.mxu0
      %v1668 = vadd.f32 %v1607, %v1667
      %1669 = vmatmul.bf16.gmra.mxu0 %v1172
      %v1670 = vpop.f32.mrf.mxu0
      %v1671 = vadd.f32 %v1610, %v1670
      %v1672 = vpop.f32.mrf.mxu0
      %1673 = vmatmul.bf16.gmra.mxu0 %v1176
      %v1674 = vpop.f32.mrf.mxu0
      %v1675 = vadd.f32 %v1614, %v1674
      %v1676 = vpop.f32.mrf.mxu0
      %v1677 = vadd.f32 %v1616, %v1676
      %1678 = vmatmul.bf16.gmra.mxu0 %v1180
      %v1679 = vpop.f32.mrf.mxu0
      %v1680 = vpop.f32.mrf.mxu0
      %v1681 = vadd.f32 %v1620, %v1680
      %1682 = vmatmul.bf16.gmra.mxu0 %v1184
      %v1683 = vpop.f32.mrf.mxu0
      %v1684 = vadd.f32 %v1623, %v1683
      %v1685 = vpop.f32.mrf.mxu0
      %1686 = vmatmul.bf16.gmra.mxu0 %v1188
      %v1687 = vpop.f32.mrf.mxu0
      %v1688 = vadd.f32 %v1627, %v1687
      %v1689 = vpop.f32.mrf.mxu0
      %v1690 = vadd.f32 %v1629, %v1689
      %1691 = vmatmul.bf16.gmra.mxu0 %v1192
      %v1692 = vpop.f32.mrf.mxu0
      %v1693 = vpop.f32.mrf.mxu0
      %v1694 = vadd.f32 %v1633, %v1693
      %1695 = vmatmul.bf16.gmra.mxu0 %v1196
      %v1696 = vpop.f32.mrf.mxu0
      %v1697 = vadd.f32 %v1636, %v1696
      %v1698 = vpop.f32.mrf.mxu0
      %1699 = vdwg.mxu0
      %1700 = vmatpush.bf16.msra.mxu0 %v1501
      %1701 = vmatpush.bf16.msra.mxu0 %v1500
      %1702 = vmatpush.bf16.msra.mxu0 %v1499
      %1703 = vmatpush.bf16.msra.mxu0 %v1498
      %1704 = vmatpush.bf16.msra.mxu0 %v1497
      %1705 = vmatpush.bf16.msra.mxu0 %v1496
      %1706 = vmatpush.bf16.msra.mxu0 %v1495
      %1707 = vmatpush.bf16.msra.mxu0 %v1494
      %1708 = vmatmul.bf16.gmra.mxu0 %v1200
      %v1709 = vpop.f32.mrf.mxu0
      %v1710 = vadd.f32 %v1649, %v1709
      %v1711 = vpop.f32.mrf.mxu0
      %v1712 = vadd.f32 %v1651, %v1711
      %1713 = vmatmul.bf16.gmra.mxu0 %v1204
      %v1714 = vpop.f32.mrf.mxu0
      %v1715 = vpop.f32.mrf.mxu0
      %v1716 = vadd.f32 %v1655, %v1715
      %1717 = vmatmul.bf16.gmra.mxu0 %v1208
      %v1718 = vpop.f32.mrf.mxu0
      %v1719 = vadd.f32 %v1658, %v1718
      %v1720 = vpop.f32.mrf.mxu0
      %1721 = vmatmul.bf16.gmra.mxu0 %v1212
      %v1722 = vpop.f32.mrf.mxu0
      %v1723 = vadd.f32 %v1662, %v1722
      %v1724 = vpop.f32.mrf.mxu0
      %v1725 = vadd.f32 %v1664, %v1724
      %1726 = vmatmul.bf16.gmra.mxu0 %v1216
      %v1727 = vpop.f32.mrf.mxu0
      %v1728 = vpop.f32.mrf.mxu0
      %v1729 = vadd.f32 %v1668, %v1728
      %1730 = vmatmul.bf16.gmra.mxu0 %v1220
      %v1731 = vpop.f32.mrf.mxu0
      %v1732 = vadd.f32 %v1671, %v1731
      %v1733 = vpop.f32.mrf.mxu0
      %1734 = vmatmul.bf16.gmra.mxu0 %v1224
      %v1735 = vpop.f32.mrf.mxu0
      %v1736 = vadd.f32 %v1675, %v1735
      %v1737 = vpop.f32.mrf.mxu0
      %v1738 = vadd.f32 %v1677, %v1737
      %1739 = vmatmul.bf16.gmra.mxu0 %v1228
      %v1740 = vpop.f32.mrf.mxu0
      %v1741 = vpop.f32.mrf.mxu0
      %v1742 = vadd.f32 %v1681, %v1741
      %1743 = vmatmul.bf16.gmra.mxu0 %v1232
      %v1744 = vpop.f32.mrf.mxu0
      %v1745 = vadd.f32 %v1684, %v1744
      %v1746 = vpop.f32.mrf.mxu0
      %1747 = vmatmul.bf16.gmra.mxu0 %v1236
      %v1748 = vpop.f32.mrf.mxu0
      %v1749 = vadd.f32 %v1688, %v1748
      %v1750 = vpop.f32.mrf.mxu0
      %v1751 = vadd.f32 %v1690, %v1750
      %1752 = vmatmul.bf16.gmra.mxu0 %v1240
      %v1753 = vpop.f32.mrf.mxu0
      %v1754 = vpop.f32.mrf.mxu0
      %v1755 = vadd.f32 %v1694, %v1754
      %1756 = vmatmul.bf16.gmra.mxu0 %v1244
      %v1757 = vpop.f32.mrf.mxu0
      %v1758 = vadd.f32 %v1697, %v1757
      %v1759 = vpop.f32.mrf.mxu0
      %1760 = vdwg.mxu0
      %1761 = vmatpush.bf16.msra.mxu0 %v1509
      %1762 = vmatpush.bf16.msra.mxu0 %v1508
      %1763 = vmatpush.bf16.msra.mxu0 %v1507
      %1764 = vmatpush.bf16.msra.mxu0 %v1506
      %1765 = vmatpush.bf16.msra.mxu0 %v1505
      %1766 = vmatpush.bf16.msra.mxu0 %v1504
      %1767 = vmatpush.bf16.msra.mxu0 %v1503
      %1768 = vmatpush.bf16.msra.mxu0 %v1502
      %1769 = vmatmul.bf16.gmra.mxu0 %v1124
      %v1770 = vpop.f32.mrf.mxu0
      %v1771 = vadd.f32 %v1710, %v1770
      %v1772 = vpop.f32.mrf.mxu0
      %v1773 = vadd.f32 %v1712, %v1772
      %1774 = vmatmul.bf16.gmra.mxu0 %v1127
      %v1775 = vpop.f32.mrf.mxu0
      %v1776 = vpop.f32.mrf.mxu0
      %v1777 = vadd.f32 %v1716, %v1776
      %1778 = vmatmul.bf16.gmra.mxu0 %v1130
      %v1779 = vpop.f32.mrf.mxu0
      %v1780 = vadd.f32 %v1719, %v1779
      %v1781 = vpop.f32.mrf.mxu0
      %1782 = vmatmul.bf16.gmra.mxu0 %v1133
      %v1783 = vpop.f32.mrf.mxu0
      %v1784 = vadd.f32 %v1723, %v1783
      %v1785 = vpop.f32.mrf.mxu0
      %v1786 = vadd.f32 %v1725, %v1785
      %1787 = vmatmul.bf16.gmra.mxu0 %v1136
      %v1788 = vpop.f32.mrf.mxu0
      %v1789 = vpop.f32.mrf.mxu0
      %v1790 = vadd.f32 %v1729, %v1789
      %1791 = vmatmul.bf16.gmra.mxu0 %v1139
      %v1792 = vpop.f32.mrf.mxu0
      %v1793 = vadd.f32 %v1732, %v1792
      %v1794 = vpop.f32.mrf.mxu0
      %1795 = vmatmul.bf16.gmra.mxu0 %v1142
      %v1796 = vpop.f32.mrf.mxu0
      %v1797 = vadd.f32 %v1736, %v1796
      %v1798 = vpop.f32.mrf.mxu0
      %v1799 = vadd.f32 %v1738, %v1798
      %1800 = vmatmul.bf16.gmra.mxu0 %v1145
      %v1801 = vpop.f32.mrf.mxu0
      %v1802 = vpop.f32.mrf.mxu0
      %v1803 = vadd.f32 %v1742, %v1802
      %1804 = vmatmul.bf16.gmra.mxu0 %v1247
      %v1805 = vpop.f32.mrf.mxu0
      %v1806 = vadd.f32 %v1745, %v1805
      %v1807 = vpop.f32.mrf.mxu0
      %1808 = vmatmul.bf16.gmra.mxu0 %v1250
      %v1809 = vpop.f32.mrf.mxu0
      %v1810 = vadd.f32 %v1749, %v1809
      %v1811 = vpop.f32.mrf.mxu0
      %v1812 = vadd.f32 %v1751, %v1811
      %1813 = vmatmul.bf16.gmra.mxu0 %v1253
      %v1814 = vpop.f32.mrf.mxu0
      %v1815 = vpop.f32.mrf.mxu0
      %v1816 = vadd.f32 %v1755, %v1815
      %1817 = vmatmul.bf16.gmra.mxu0 %v1256
      %v1818 = vpop.f32.mrf.mxu0
      %v1819 = vadd.f32 %v1758, %v1818
      %v1820 = vpop.f32.mrf.mxu0
      %1821 = vdwg.mxu0
      %1822 = vmatpush.bf16.msra.mxu0 0
      %1823 = vmatpush.bf16.msra.mxu0 0
      %1824 = vmatpush.bf16.msra.mxu0 0
      %1825 = vmatpush.bf16.msra.mxu0 0
      %1826 = vmatpush.bf16.msra.mxu0 %v1513
      %1827 = vmatpush.bf16.msra.mxu0 %v1512
      %1828 = vmatpush.bf16.msra.mxu0 %v1511
      %1829 = vmatpush.bf16.msra.mxu0 %v1510
      %1830 = vmatmul.bf16.gmra.mxu0 %v1550
      %v1831 = vpop.f32.mrf.mxu0
      %v1832 = vadd.f32 %v1771, %v1831
      %v1833 = vpop.f32.mrf.mxu0
      %v1834 = vadd.f32 %v1773, %v1833
      %1835 = vmatmul.bf16.gmra.mxu0 %v1552
      %v1836 = vpop.f32.mrf.mxu0
      %v1837 = vpop.f32.mrf.mxu0
      %v1838 = vadd.f32 %v1777, %v1837
      %1839 = vmatmul.bf16.gmra.mxu0 %v1554
      %v1840 = vpop.f32.mrf.mxu0
      %v1841 = vadd.f32 %v1780, %v1840
      %v1842 = vpop.f32.mrf.mxu0
      %1843 = vmatmul.bf16.gmra.mxu0 %v1556
      %v1844 = vpop.f32.mrf.mxu0
      %v1845 = vadd.f32 %v1784, %v1844
      %v1846 = vpop.f32.mrf.mxu0
      %v1847 = vadd.f32 %v1786, %v1846
      %1848 = vmatmul.bf16.gmra.mxu0 %v1558
      %v1849 = vpop.f32.mrf.mxu0
      %v1850 = vpop.f32.mrf.mxu0
      %v1851 = vadd.f32 %v1790, %v1850
      %1852 = vmatmul.bf16.gmra.mxu0 %v1560
      %v1853 = vpop.f32.mrf.mxu0
      %v1854 = vadd.f32 %v1793, %v1853
      %v1855 = vpop.f32.mrf.mxu0
      %1856 = vmatmul.bf16.gmra.mxu0 %v1562
      %v1857 = vpop.f32.mrf.mxu0
      %v1858 = vadd.f32 %v1797, %v1857
      %v1859 = vpop.f32.mrf.mxu0
      %v1860 = vadd.f32 %v1799, %v1859
      %1861 = vmatmul.bf16.gmra.mxu0 %v1564
      %v1862 = vpop.f32.mrf.mxu0
      %v1863 = vpop.f32.mrf.mxu0
      %v1864 = vadd.f32 %v1803, %v1863
      %1865 = vmatmul.bf16.gmra.mxu0 %v1567
      %v1866 = vpop.f32.mrf.mxu0
      %v1867 = vadd.f32 %v1806, %v1866
      %v1868 = vpop.f32.mrf.mxu0
      %1869 = vmatmul.bf16.gmra.mxu0 %v1570
      %v1870 = vpop.f32.mrf.mxu0
      %v1871 = vadd.f32 %v1810, %v1870
      %v1872 = vpop.f32.mrf.mxu0
      %v1873 = vadd.f32 %v1812, %v1872
      %1874 = vmatmul.bf16.gmra.mxu0 %v1573
      %v1875 = vpop.f32.mrf.mxu0
      %v1876 = vpop.f32.mrf.mxu0
      %v1877 = vadd.f32 %v1816, %v1876
      %1878 = vmatmul.bf16.gmra.mxu0 %v1576
      %v1879 = vpop.f32.mrf.mxu0
      %v1880 = vadd.f32 %v1819, %v1879
      %v1881 = vpop.f32.mrf.mxu0
      %1882 = vdwg.mxu0
      %p1883 = scmp.eq.s32.totalorder %s21, 0
      %p1884 = scmp.eq.s32.totalorder %s22, 0
      %p1885 = pnand %p1883, %p1884
      %p1886 = pneg %p1885
      %p1887 = scmp.eq.s32.totalorder %s23, 0
      %p1888 = pnand %p1886, %p1887
      %p1889 = pneg %p1888
      // Predicated region
      $region49: #{srgan_g_forward.63} parent=39 // pred_check
        _
      $region50: #{srgan_g_forward.63} parent=39 // pred_check_branch
        %1891 = sbr.rel (%p1888) target = $region52
      $region51: #{srgan_g_forward.63} parent=39 // pred_region
        %vm1892 = vcmask 516096
        %1893 = vst.msk [vmem:[#allocation3] sm:$0x1] %vm1892, 0.0
        %1894 = vst.msk [vmem:[#allocation4] sm:$0x1] %vm1892, 0.0
      $region52: #{srgan_g_forward.63} parent=39 // pred_fallthru
        _
      // Predicated region
      $region53: #{srgan_g_forward.63} parent=39 // pred_check
        %p1895 = pneg %p1883
      $region54: #{srgan_g_forward.63} parent=39 // pred_check_branch
        %1897 = sbr.rel (%p1895) target = $region56
      $region55: #{srgan_g_forward.63} parent=39 // pred_region
        %v1898 = vsel %vm1113, %v1832, 0.0
        %v1899 = vsel %vm1113, %v1834, 0.0
        %v1900 = vadd.f32 %v1898, %v1899
        %v1901 = vsel %vm1113, %v1838, 0.0
        %v1902 = vadd.f32 %v1900, %v1901
        %v1903 = vsel %vm1113, %v1841, 0.0
        %v1904 = vadd.f32 %v1902, %v1903
        %v1905 = vsel %vm1113, %v1845, 0.0
        %v1906 = vadd.f32 %v1904, %v1905
        %v1907 = vsel %vm1113, %v1847, 0.0
        %v1908 = vadd.f32 %v1906, %v1907
        %v1909 = vsel %vm1113, %v1851, 0.0
        %v1910 = vadd.f32 %v1908, %v1909
        %v1911 = vsel %vm1113, %v1854, 0.0
        %v1912 = vadd.f32 %v1910, %v1911
        %v1913 = vsel %vm1113, %v1858, 0.0
        %v1914 = vadd.f32 %v1912, %v1913
        %v1915 = vsel %vm1113, %v1860, 0.0
        %v1916 = vadd.f32 %v1914, %v1915
        %v1917 = vsel %vm1113, %v1864, 0.0
        %v1918 = vadd.f32 %v1916, %v1917
        %v1919 = vsel %vm1113, %v1867, 0.0
        %v1920 = vadd.f32 %v1918, %v1919
        %v1921 = vsel %vm1113, %v1871, 0.0
        %v1922 = vadd.f32 %v1920, %v1921
        %v1923 = vsel %vm1113, %v1873, 0.0
        %v1924 = vadd.f32 %v1922, %v1923
        %v1925 = vsel %vm1113, %v1877, 0.0
        %v1926 = vadd.f32 %v1924, %v1925
        %v1927 = vsel %vm1113, %v1880, 0.0
        %v1928 = vadd.f32 %v1926, %v1927
        %v1929 = vrot.slane %v1928, 4
        %v1930 = vadd.f32 %v1928, %v1929
        %v1931 = vrot.slane %v1930, 2
        %v1932 = vadd.f32 %v1930, %v1931
        %v1933 = vrot.slane %v1932, 1
        %v1934 = vadd.f32 %v1932, %v1933
        %v1935 = vmul.f32 %v1832, %v1832
        %v1936 = vmul.f32 %v1834, %v1834
        %v1937 = vmul.f32 %v1838, %v1838
        %v1938 = vmul.f32 %v1841, %v1841
        %v1939 = vmul.f32 %v1845, %v1845
        %v1940 = vmul.f32 %v1847, %v1847
        %v1941 = vmul.f32 %v1851, %v1851
        %v1942 = vmul.f32 %v1854, %v1854
        %v1943 = vmul.f32 %v1858, %v1858
        %v1944 = vmul.f32 %v1860, %v1860
        %v1945 = vmul.f32 %v1864, %v1864
        %v1946 = vmul.f32 %v1867, %v1867
        %v1947 = vmul.f32 %v1871, %v1871
        %v1948 = vmul.f32 %v1873, %v1873
        %v1949 = vmul.f32 %v1877, %v1877
        %v1950 = vmul.f32 %v1880, %v1880
        %v1951 = vsel %vm1113, %v1935, 0.0
        %v1952 = vsel %vm1113, %v1936, 0.0
        %v1953 = vadd.f32 %v1951, %v1952
        %v1954 = vsel %vm1113, %v1937, 0.0
        %v1955 = vadd.f32 %v1953, %v1954
        %v1956 = vsel %vm1113, %v1938, 0.0
        %v1957 = vadd.f32 %v1955, %v1956
        %v1958 = vsel %vm1113, %v1939, 0.0
        %v1959 = vadd.f32 %v1957, %v1958
        %v1960 = vsel %vm1113, %v1940, 0.0
        %v1961 = vadd.f32 %v1959, %v1960
        %v1962 = vsel %vm1113, %v1941, 0.0
        %v1963 = vadd.f32 %v1961, %v1962
        %v1964 = vsel %vm1113, %v1942, 0.0
        %v1965 = vadd.f32 %v1963, %v1964
        %v1966 = vsel %vm1113, %v1943, 0.0
        %v1967 = vadd.f32 %v1965, %v1966
        %v1968 = vsel %vm1113, %v1944, 0.0
        %v1969 = vadd.f32 %v1967, %v1968
        %v1970 = vsel %vm1113, %v1945, 0.0
        %v1971 = vadd.f32 %v1969, %v1970
        %v1972 = vsel %vm1113, %v1946, 0.0
        %v1973 = vadd.f32 %v1971, %v1972
        %v1974 = vsel %vm1113, %v1947, 0.0
        %v1975 = vadd.f32 %v1973, %v1974
        %v1976 = vsel %vm1113, %v1948, 0.0
        %v1977 = vadd.f32 %v1975, %v1976
        %v1978 = vsel %vm1113, %v1949, 0.0
        %v1979 = vadd.f32 %v1977, %v1978
        %v1980 = vsel %vm1113, %v1950, 0.0
        %v1981 = vadd.f32 %v1979, %v1980
        %v1982 = vrot.slane %v1981, 4
        %v1983 = vadd.f32 %v1981, %v1982
        %v1984 = vrot.slane %v1983, 2
        %v1985 = vadd.f32 %v1983, %v1984
        %v1986 = vrot.slane %v1985, 1
        %v1987 = vadd.f32 %v1985, %v1986
        %v1988 = vld [vmem:[#allocation3] sm:$0x1]
        %v1989 = vadd.f32 %v1988, %v1934
        %vm1990 = vcmask 516096
        %1991 = vst.msk [vmem:[#allocation3] sm:$0x1] %vm1990, %v1989
        %v1992 = vld [vmem:[#allocation4] sm:$0x1]
        %v1993 = vadd.f32 %v1992, %v1987
        %1994 = vst.msk [vmem:[#allocation4] sm:$0x1] %vm1990, %v1993
      $region56: #{srgan_g_forward.63} parent=39 // pred_fallthru
        _
      // Predicated region
      $region57: #{srgan_g_forward.63} parent=39 // pred_check
        %p1995 = pneg %p263
      $region58: #{srgan_g_forward.63} parent=39 // pred_check_branch
        %1997 = sbr.rel (%p1995) target = $region60
      $region59: #{srgan_g_forward.63} parent=39 // pred_region
        %v1998 = vld [vmem:[#allocation3] sm:$0x1]
        %v1999 = vmul.f32 %v1998, 0.001953125
        %v2000 = vld [vmem:[#allocation4] sm:$0x1]
        %v2001 = vmul.f32 %v2000, 0.001953125
        %v2002 = vmul.f32 %v1999, %v1999
        %v2003 = vsub.f32 %v2001, %v2002
        %v2004 = vmax.f32 %v2003, 0.0
        %v2005 = vld [vmem:[%s3] sm:$0x1]
        %v2006 = vadd.f32 %v2004, 1e-05
        %v2007 = vrsqrt.pop %v2006
        %v2008 = vmul.f32 %v2007, %v2006
        %v2009 = vmul.f32 %v2008, %v2007
        %v2010 = vmul.f32 0.5, %v2009
        %v2011 = vsub.f32 1.5, %v2010
        %v2012 = vmul.f32 %v2007, %v2011
        %vm2013 = vweird.f32 %v2006
        %vm2014 = vweird.f32 %v2007
        %vm2015 = vmor %vm2013, %vm2014
        %v2016 = vsel %vm2015, %v2007, %v2012
        %v2017 = vmul.f32 %v2005, %v2016
        %v2018 = vld [vmem:[%s4] sm:$0x1]
        %v2019 = vmul.f32 %v1999, %v2017
        %v2020 = vsub.f32 %v2018, %v2019
        %v2022 = vperm.slane %v2017, 0
        %v2024 = vmul.f32 %v1832, %v2022
        %v2025 = vmul.f32 %v1834, %v2022
        %v2026 = vmul.f32 %v1838, %v2022
        %v2027 = vmul.f32 %v1841, %v2022
        %v2028 = vmul.f32 %v1845, %v2022
        %v2029 = vmul.f32 %v1847, %v2022
        %v2030 = vmul.f32 %v1851, %v2022
        %v2031 = vmul.f32 %v1854, %v2022
        %v2032 = vmul.f32 %v1858, %v2022
        %v2033 = vmul.f32 %v1860, %v2022
        %v2034 = vmul.f32 %v1864, %v2022
        %v2035 = vmul.f32 %v1867, %v2022
        %v2036 = vmul.f32 %v1871, %v2022
        %v2037 = vmul.f32 %v1873, %v2022
        %v2038 = vmul.f32 %v1877, %v2022
        %v2039 = vmul.f32 %v1880, %v2022
        %v2041 = vperm.slane %v2020, 0
        %v2043 = vadd.f32 %v2024, %v2041
        %v2044 = vadd.f32 %v2025, %v2041
        %v2045 = vadd.f32 %v2026, %v2041
        %v2046 = vadd.f32 %v2027, %v2041
        %v2047 = vadd.f32 %v2028, %v2041
        %v2048 = vadd.f32 %v2029, %v2041
        %v2049 = vadd.f32 %v2030, %v2041
        %v2050 = vadd.f32 %v2031, %v2041
        %v2051 = vadd.f32 %v2032, %v2041
        %v2052 = vadd.f32 %v2033, %v2041
        %v2053 = vadd.f32 %v2034, %v2041
        %v2054 = vadd.f32 %v2035, %v2041
        %v2055 = vadd.f32 %v2036, %v2041
        %v2056 = vadd.f32 %v2037, %v2041
        %v2057 = vadd.f32 %v2038, %v2041
        %v2058 = vadd.f32 %v2039, %v2041
        %v2059 = vmax.f32 %v2043, 0.0
        %v2060 = vmax.f32 %v2044, 0.0
        %v2061 = vmax.f32 %v2045, 0.0
        %v2062 = vmax.f32 %v2046, 0.0
        %v2063 = vmax.f32 %v2047, 0.0
        %v2064 = vmax.f32 %v2048, 0.0
        %v2065 = vmax.f32 %v2049, 0.0
        %v2066 = vmax.f32 %v2050, 0.0
        %v2067 = vmax.f32 %v2051, 0.0
        %v2068 = vmax.f32 %v2052, 0.0
        %v2069 = vmax.f32 %v2053, 0.0
        %v2070 = vmax.f32 %v2054, 0.0
        %v2071 = vmax.f32 %v2055, 0.0
        %v2072 = vmax.f32 %v2056, 0.0
        %v2073 = vmax.f32 %v2057, 0.0
        %v2074 = vmax.f32 %v2058, 0.0
        %v2075 = vpack.c.bf16 %v2059, %v2059
        %v2076 = vpack.c.bf16 %v2060, %v2060
        %v2077 = vpack.c.bf16 %v2061, %v2061
        %v2078 = vpack.c.bf16 %v2062, %v2062
        %v2079 = vpack.c.bf16 %v2063, %v2063
        %v2080 = vpack.c.bf16 %v2064, %v2064
        %v2081 = vpack.c.bf16 %v2065, %v2065
        %v2082 = vpack.c.bf16 %v2066, %v2066
        %v2083 = vpack.c.bf16 %v2067, %v2067
        %v2084 = vpack.c.bf16 %v2068, %v2068
        %v2085 = vpack.c.bf16 %v2069, %v2069
        %v2086 = vpack.c.bf16 %v2070, %v2070
        %v2087 = vpack.c.bf16 %v2071, %v2071
        %v2088 = vpack.c.bf16 %v2072, %v2072
        %v2089 = vpack.c.bf16 %v2073, %v2073
        %v2090 = vpack.c.bf16 %v2074, %v2074
        %2091 = vst.msk [vmem:[%s259] sm:$0xf] %vm264, %v2075
        %2092 = vst.msk [vmem:[%s259 + $0x4] sm:$0xf] %vm264, %v2076
        %2093 = vst.msk [vmem:[%s259 + $0x8] sm:$0xf] %vm264, %v2077
        %2094 = vst.msk [vmem:[%s259 + $0xc] sm:$0xf] %vm264, %v2078
        %2095 = vst.msk [vmem:[%s259 + $0x10] sm:$0xf] %vm264, %v2079
        %2096 = vst.msk [vmem:[%s259 + $0x14] sm:$0xf] %vm264, %v2080
        %2097 = vst.msk [vmem:[%s259 + $0x18] sm:$0xf] %vm264, %v2081
        %2098 = vst.msk [vmem:[%s259 + $0x1c] sm:$0xf] %vm264, %v2082
        %2099 = vst.msk [vmem:[%s259 + $0x20] sm:$0xf] %vm264, %v2083
        %2100 = vst.msk [vmem:[%s259 + $0x24] sm:$0xf] %vm264, %v2084
        %2101 = vst.msk [vmem:[%s259 + $0x28] sm:$0xf] %vm264, %v2085
        %2102 = vst.msk [vmem:[%s259 + $0x2c] sm:$0xf] %vm264, %v2086
        %2103 = vst.msk [vmem:[%s259 + $0x30] sm:$0xf] %vm264, %v2087
        %2104 = vst.msk [vmem:[%s259 + $0x34] sm:$0xf] %vm264, %v2088
        %2105 = vst.msk [vmem:[%s259 + $0x38] sm:$0xf] %vm264, %v2089
        %2106 = vst.msk [vmem:[%s259 + $0x3c] sm:$0xf] %vm264, %v2090
      $region60: #{srgan_g_forward.63} parent=39 // pred_fallthru
        _
      %s2107 = smul.u32 %s23, %s21
      %s2108 = smul.u32 8, %s2107
      %p2109 = scmp.lt.s32.totalorder %s22, 1
      %s2110 = scalar_select %p2109, %s22, 1
      %p2111 = scmp.lt.s32.totalorder %s2108, 15
      %s2112 = scalar_select %p2111, %s2108, 15
      %s2113 = smul.addr %s2112, 2
      %s2114 = smul.addr %s2110, 32
      %s2115 = sadd.s32 %s2113, %s2114
      %s2116 = smul.addr %s2115, 4
      %s2117 = scalar_lea.vmem %s5, %s2116
      // Predicated region
      $region61: #{srgan_g_forward.63} parent=39 // pred_check
        %p2118 = pneg %p167
      $region62: #{srgan_g_forward.63} parent=39 // pred_check_branch
        %2120 = sbr.rel (%p2118) target = $region64
      $region63: #{srgan_g_forward.63} parent=39 // pred_region
        %s2121 = smul.u32 %s23, %s21
        %s2122 = smul.u32 8, %s2121
      $region64: #{srgan_g_forward.63} parent=39 // pred_fallthru
        _
    $region40: #{srgan_g_forward.63} parent=5 // pred_fallthru
      _
    %p2123 = scmp.le.s32.totalorder 2, %s11
    // Predicated region
    $region65: #{srgan_g_forward.63} parent=5 // pred_check
      %p2124 = pneg %p2123
    $region66: #{srgan_g_forward.63} parent=5 // pred_check_branch
      %2126 = sbr.rel (%p2124) target = $region68
    $region67: #{srgan_g_forward.63} parent=5 // pred_region
      %s2127 = ssub.s32 %s11, 2
      // Predicated region
      $region69: #{srgan_g_forward.63} parent=67 // pred_check
        %p2128 = pneg %p173
      $region70: #{srgan_g_forward.63} parent=67 // pred_check_branch
        %2130 = sbr.rel (%p2128) target = $region72
      $region71: #{srgan_g_forward.63} parent=67 // pred_region
        %s2131 = smul.u32 %s26, %s24
        %s2132 = smul.u32 8, %s2131
        %p2133 = scmp.lt.s32.totalorder %s25, 1
        %s2134 = scalar_select %p2133, %s25, 1
        %p2135 = scmp.lt.s32.totalorder %s2132, 15
        %s2136 = scalar_select %p2135, %s2132, 15
        %s2137 = smul.addr %s2136, 2
        %s2138 = smul.addr %s2134, 32
        %s2139 = sadd.s32 %s2137, %s2138
        %s2140 = smul.addr %s2139, 4
        %s2141 = scalar_lea.vmem %s5, %s2140
      $region72: #{srgan_g_forward.63} parent=67 // pred_fallthru
        _
    $region68: #{srgan_g_forward.63} parent=5 // pred_fallthru
      _
  $region6: #{srgan_g_forward.63} parent=0 // loop_footer
    %s15 = sadd.s32 1, %s11
  $region7: #{srgan_g_forward.63} parent=0 // loop_footer_branch
    %10 = sbr.rel target = $region3
  $region8: #{srgan_g_forward.63} parent=0 // loop_exit
    _

// kernel: srgan_g_forward.64
$region0: #{srgan_g_forward.64}
  #allocation0 [shape = 'u32[]', space=smem, size = 0x4, offset = 0x4, fixed_abs, tag = 'smem constant byte address 0x4 - core index']
  #allocation1 [shape = 'u32[72,128]{1,0:T(1,128)}', space=vmem, size = 0x9000, scoped, tag = 'internal scratch']
  #allocation2 [shape = 'bf16[12,24,64]{2,1,0:T(8,128)(2,1)}', space=vmem, size = 0x12000, scoped, tag = 'scratch operand']
  #allocation3 [shape = 'f32[1,64]{1,0:T(1,128)}', space=vmem, size = 0x200, scoped, tag = 'scratch operand']
  #allocation4 [shape = 'f32[1,64]{1,0:T(1,128)}', space=vmem, size = 0x200, scoped, tag = 'scratch operand']
  %s0 = inlined_call_operand.vmem [shape: bf16[2,16,16,64], index: 0, kind: input, shape index: {}]
  %s1 = inlined_call_operand.vmem [shape: bf16[576,64], index: 1, kind: input, shape index: {}]
  %s2 = inlined_call_operand.vmem [shape: f32[1,64], index: 2, kind: input, shape index: {}]
  %s3 = inlined_call_operand.vmem [shape: f32[1,64], index: 3, kind: input, shape index: {}]
  %s4 = inlined_call_operand.vmem [shape: f32[1,64], index: 4, kind: input, shape index: {}]
  %s5 = inlined_call_operand.vmem [shape: bf16[2,16,16,64], index: 5, kind: input, shape index: {}]
  %s6 = inlined_call_operand.vmem [shape: bf16[2,16,16,64], index: 6, kind: output, shape index: {}]
  %s7 = sld [smem:[#allocation0]]
  $region77: #{srgan_g_forward.64} parent=0
    _
  %s9 = ssub.s32 1, %s7
  %s10 = scalar_select 0, %s9, %s7
  loop: start=0, step=1, limit=10
  $region2: #{srgan_g_forward.64} parent=0 // loop_pre_header
    _
  $region3: #{srgan_g_forward.64} parent=0 // loop_header
    %s12 = sphi 0, %s16
    %p13 = scmp.ge.s32.totalorder %s12, 10
    %s19 = sphi 0, %s38
    %s20 = sphi 0, %s34
    %s21 = sphi 0, %s30
    %s22 = sphi 0, %s19
    %s23 = sphi 0, %s20
    %s24 = sphi 0, %s21
    %s25 = sphi 0, %s22
    %s26 = sphi 0, %s23
    %s27 = sphi 0, %s24
    %s41 = sphi 0, %s43
    %s44 = sphi 0, %s41
    %s45 = sphi 0, %s44
    %s61 = sphi 0, %s45
    %s65 = sphi 0, %s65
    %s67 = sphi 0, %s65
    %s68 = sphi 0, %s67
    %s82 = sphi 0, %s68
    %s86 = sphi 0, %s86
    %s88 = sphi 0, %s86
    %s89 = sphi 0, %s88
    %s103 = sphi 0, %s89
    %s107 = sphi 0, %s107
    %s109 = sphi 0, %s107
    %s110 = sphi 0, %s109
    %s124 = sphi 0, %s110
    %s128 = sphi 0, %s128
    %s130 = sphi 0, %s128
    %s131 = sphi 0, %s130
    %s145 = sphi 0, %s131
    %s155 = sphi 0, %s157
    %s158 = sphi 0, %s155
    %s159 = sphi 0, %s158
    %s175 = sphi 0, %s159
    %s185 = sphi 0, %s187
    %s188 = sphi 0, %s185
    %s189 = sphi 0, %s188
    %s205 = sphi 0, %s189
  $region4: #{srgan_g_forward.64} parent=0 // loop_header_branch
    %15 = sbr.rel (%p13) target = $region8
  $region5: #{srgan_g_forward.64} parent=0 // loop_body
    %s17 = ssub.s32 %s12, 1
    %s18 = ssub.s32 %s12, 2
    %s28 = sadd.s32 1, %s21
    %p29 = scmp.ge.s32.totalorder %s28, 2
    %s30 = scalar_select %p29, 0, %s28
    %s31 = sadd.s32 1, %s20
    %s32 = scalar_select %p29, %s31, %s20
    %p33 = scmp.ge.s32.totalorder %s32, 2
    %s34 = scalar_select %p33, 0, %s32
    %s35 = sadd.s32 1, %s19
    %s36 = scalar_select %p33, %s35, %s19
    %p37 = scmp.ge.s32.totalorder %s36, 2
    %s38 = scalar_select %p37, 0, %s36
    %s39 = ssub.s32 %s20, %s34
    %p40 = scmp.eq.s32.totalorder %s39, 0
    %s42 = sadd.s32 %s41, 1
    %s43 = scalar_select %p40, %s41, %s42
    %p46 = pneg %p40
    %p47 = scmp.eq.s32.totalorder %s12, 7
    %p48 = por %p46, %p47
    %p49 = scmp.ne.s32.totalorder %s41, %s44
    %p50 = scmp.eq.s32.totalorder %s12, 0
    %p51 = por %p49, %p50
    %p52 = scmp.ne.s32.totalorder %s41, %s44
    %p53 = scmp.eq.s32.totalorder %s17, 7
    %p54 = por %p52, %p53
    %p55 = scmp.ne.s32.totalorder %s44, %s45
    %p56 = scmp.eq.s32.totalorder %s17, 0
    %p57 = por %p55, %p56
    %p58 = scmp.ne.s32.totalorder %s44, %s45
    %p59 = scmp.eq.s32.totalorder %s18, 7
    %p60 = por %p58, %p59
    %p62 = scmp.ne.s32.totalorder %s45, %s61
    %p63 = scmp.eq.s32.totalorder %s18, 0
    %p64 = por %p62, %p63
    %s66 = sadd.s32 %s65, 1
    %p69 = scmp.eq.s32.totalorder %s12, 7
    %p70 = scmp.ne.s32.totalorder %s65, %s67
    %p71 = scmp.eq.s32.totalorder %s12, 0
    %p72 = por %p70, %p71
    %p73 = scmp.ne.s32.totalorder %s65, %s67
    %p74 = scmp.eq.s32.totalorder %s17, 7
    %p75 = por %p73, %p74
    %p76 = scmp.ne.s32.totalorder %s67, %s68
    %p77 = scmp.eq.s32.totalorder %s17, 0
    %p78 = por %p76, %p77
    %p79 = scmp.ne.s32.totalorder %s67, %s68
    %p80 = scmp.eq.s32.totalorder %s18, 7
    %p81 = por %p79, %p80
    %p83 = scmp.ne.s32.totalorder %s68, %s82
    %p84 = scmp.eq.s32.totalorder %s18, 0
    %p85 = por %p83, %p84
    %s87 = sadd.s32 %s86, 1
    %p90 = scmp.eq.s32.totalorder %s12, 7
    %p91 = scmp.ne.s32.totalorder %s86, %s88
    %p92 = scmp.eq.s32.totalorder %s12, 0
    %p93 = por %p91, %p92
    %p94 = scmp.ne.s32.totalorder %s86, %s88
    %p95 = scmp.eq.s32.totalorder %s17, 7
    %p96 = por %p94, %p95
    %p97 = scmp.ne.s32.totalorder %s88, %s89
    %p98 = scmp.eq.s32.totalorder %s17, 0
    %p99 = por %p97, %p98
    %p100 = scmp.ne.s32.totalorder %s88, %s89
    %p101 = scmp.eq.s32.totalorder %s18, 7
    %p102 = por %p100, %p101
    %p104 = scmp.ne.s32.totalorder %s89, %s103
    %p105 = scmp.eq.s32.totalorder %s18, 0
    %p106 = por %p104, %p105
    %s108 = sadd.s32 %s107, 1
    %p111 = scmp.eq.s32.totalorder %s12, 7
    %p112 = scmp.ne.s32.totalorder %s107, %s109
    %p113 = scmp.eq.s32.totalorder %s12, 0
    %p114 = por %p112, %p113
    %p115 = scmp.ne.s32.totalorder %s107, %s109
    %p116 = scmp.eq.s32.totalorder %s17, 7
    %p117 = por %p115, %p116
    %p118 = scmp.ne.s32.totalorder %s109, %s110
    %p119 = scmp.eq.s32.totalorder %s17, 0
    %p120 = por %p118, %p119
    %p121 = scmp.ne.s32.totalorder %s109, %s110
    %p122 = scmp.eq.s32.totalorder %s18, 7
    %p123 = por %p121, %p122
    %p125 = scmp.ne.s32.totalorder %s110, %s124
    %p126 = scmp.eq.s32.totalorder %s18, 0
    %p127 = por %p125, %p126
    %s129 = sadd.s32 %s128, 1
    %p132 = scmp.eq.s32.totalorder %s12, 7
    %p133 = scmp.ne.s32.totalorder %s128, %s130
    %p134 = scmp.eq.s32.totalorder %s12, 0
    %p135 = por %p133, %p134
    %p136 = scmp.ne.s32.totalorder %s128, %s130
    %p137 = scmp.eq.s32.totalorder %s17, 7
    %p138 = por %p136, %p137
    %p139 = scmp.ne.s32.totalorder %s130, %s131
    %p140 = scmp.eq.s32.totalorder %s17, 0
    %p141 = por %p139, %p140
    %p142 = scmp.ne.s32.totalorder %s130, %s131
    %p143 = scmp.eq.s32.totalorder %s18, 7
    %p144 = por %p142, %p143
    %p146 = scmp.ne.s32.totalorder %s131, %s145
    %p147 = scmp.eq.s32.totalorder %s18, 0
    %p148 = por %p146, %p147
    %s149 = smul.u32 %s21, %s19
    %s150 = smul.u32 %s30, %s38
    %s151 = ssub.s32 %s20, %s34
    %s152 = ssub.s32 %s149, %s150
    %s153 = sor.u32 %s151, %s152
    %p154 = scmp.eq.s32.totalorder %s153, 0
    %s156 = sadd.s32 %s155, 1
    %s157 = scalar_select %p154, %s155, %s156
    %p160 = pneg %p154
    %p161 = scmp.eq.s32.totalorder %s12, 7
    %p162 = por %p160, %p161
    %p163 = scmp.ne.s32.totalorder %s155, %s158
    %p164 = scmp.eq.s32.totalorder %s12, 0
    %p165 = por %p163, %p164
    %p166 = scmp.ne.s32.totalorder %s155, %s158
    %p167 = scmp.eq.s32.totalorder %s17, 7
    %p168 = por %p166, %p167
    %p169 = scmp.ne.s32.totalorder %s158, %s159
    %p170 = scmp.eq.s32.totalorder %s17, 0
    %p171 = por %p169, %p170
    %p172 = scmp.ne.s32.totalorder %s158, %s159
    %p173 = scmp.eq.s32.totalorder %s18, 7
    %p174 = por %p172, %p173
    %p176 = scmp.ne.s32.totalorder %s159, %s175
    %p177 = scmp.eq.s32.totalorder %s18, 0
    %p178 = por %p176, %p177
    %s179 = smul.u32 %s21, %s19
    %s180 = smul.u32 %s30, %s38
    %s181 = ssub.s32 %s20, %s34
    %s182 = ssub.s32 %s179, %s180
    %s183 = sor.u32 %s181, %s182
    %p184 = scmp.eq.s32.totalorder %s183, 0
    %s186 = sadd.s32 %s185, 1
    %s187 = scalar_select %p184, %s185, %s186
    %p190 = pneg %p184
    %p191 = scmp.eq.s32.totalorder %s12, 7
    %p192 = por %p190, %p191
    %p193 = scmp.ne.s32.totalorder %s185, %s188
    %p194 = scmp.eq.s32.totalorder %s12, 0
    %p195 = por %p193, %p194
    %p196 = scmp.ne.s32.totalorder %s185, %s188
    %p197 = scmp.eq.s32.totalorder %s17, 7
    %p198 = por %p196, %p197
    %p199 = scmp.ne.s32.totalorder %s188, %s189
    %p200 = scmp.eq.s32.totalorder %s17, 0
    %p201 = por %p199, %p200
    %p202 = scmp.ne.s32.totalorder %s188, %s189
    %p203 = scmp.eq.s32.totalorder %s18, 7
    %p204 = por %p202, %p203
    %p206 = scmp.ne.s32.totalorder %s189, %s205
    %p207 = scmp.eq.s32.totalorder %s18, 0
    %p208 = por %p206, %p207
    %p209 = scmp.le.s32.totalorder 1, %s12
    %p210 = scmp.lt.s32.totalorder %s12, 9
    %p211 = pnand %p209, %p210
    %p212 = pneg %p211
    // Predicated region
    $region9: #{srgan_g_forward.64} parent=5 // pred_check
      _
    $region10: #{srgan_g_forward.64} parent=5 // pred_check_branch
      %214 = sbr.rel (%p211) target = $region12
    $region11: #{srgan_g_forward.64} parent=5 // pred_region
      %s215 = ssub.s32 %s12, 1
      // Predicated region
      $region13: #{srgan_g_forward.64} parent=11 // pred_check
        %p216 = pneg %p78
      $region14: #{srgan_g_forward.64} parent=11 // pred_check_branch
        %218 = sbr.rel (%p216) target = $region16
      $region15: #{srgan_g_forward.64} parent=11 // pred_region
        _
      $region16: #{srgan_g_forward.64} parent=11 // pred_fallthru
        _
      // Predicated region
      $region17: #{srgan_g_forward.64} parent=11 // pred_check
        %p219 = pneg %p99
      $region18: #{srgan_g_forward.64} parent=11 // pred_check_branch
        %221 = sbr.rel (%p219) target = $region20
      $region19: #{srgan_g_forward.64} parent=11 // pred_region
        _
      $region20: #{srgan_g_forward.64} parent=11 // pred_fallthru
        _
      // Predicated region
      $region21: #{srgan_g_forward.64} parent=11 // pred_check
        %p222 = pneg %p120
      $region22: #{srgan_g_forward.64} parent=11 // pred_check_branch
        %224 = sbr.rel (%p222) target = $region24
      $region23: #{srgan_g_forward.64} parent=11 // pred_region
        _
      $region24: #{srgan_g_forward.64} parent=11 // pred_fallthru
        _
      // Predicated region
      $region25: #{srgan_g_forward.64} parent=11 // pred_check
        %p225 = pneg %p141
      $region26: #{srgan_g_forward.64} parent=11 // pred_check_branch
        %227 = sbr.rel (%p225) target = $region28
      $region27: #{srgan_g_forward.64} parent=11 // pred_region
        _
      $region28: #{srgan_g_forward.64} parent=11 // pred_fallthru
        _
    $region12: #{srgan_g_forward.64} parent=5 // pred_fallthru
      _
    %p228 = scmp.lt.s32.totalorder %s12, 8
    // Predicated region
    $region29: #{srgan_g_forward.64} parent=5 // pred_check
      %p229 = pneg %p228
    $region30: #{srgan_g_forward.64} parent=5 // pred_check_branch
      %231 = sbr.rel (%p229) target = $region32
    $region31: #{srgan_g_forward.64} parent=5 // pred_region
      // Predicated region
      $region33: #{srgan_g_forward.64} parent=31 // pred_check
        %p232 = pneg %p51
      $region34: #{srgan_g_forward.64} parent=31 // pred_check_branch
        %234 = sbr.rel (%p232) target = $region36
      $region35: #{srgan_g_forward.64} parent=31 // pred_region
        %p235 = scmp.lt.s32.totalorder %s20, 1
        %s236 = scalar_select %p235, %s20, 1
        %s237 = smul.addr %s236, 32
        %s238 = smul.addr %s237, 4
        %s239 = scalar_lea.vmem %s0, %s238
      $region36: #{srgan_g_forward.64} parent=31 // pred_fallthru
        _
      // Predicated region
      $region37: #{srgan_g_forward.64} parent=31 // pred_check
        %p240 = pneg %p165
      $region38: #{srgan_g_forward.64} parent=31 // pred_check_branch
        %242 = sbr.rel (%p240) target = $region40
      $region39: #{srgan_g_forward.64} parent=31 // pred_region
        %s243 = smul.u32 %s21, %s19
        %s244 = smul.u32 8, %s243
        %p245 = scmp.lt.s32.totalorder %s20, 1
        %s246 = scalar_select %p245, %s20, 1
        %p247 = scmp.lt.s32.totalorder %s244, 15
        %s248 = scalar_select %p247, %s244, 15
        %s249 = smul.addr %s248, 2
        %s250 = smul.addr %s246, 32
        %s251 = sadd.s32 %s249, %s250
        %s252 = smul.addr %s251, 4
        %s253 = scalar_lea.vmem %s5, %s252
        %s254 = smul.u32 %s21, %s19
        %s255 = smul.u32 8, %s254
      $region40: #{srgan_g_forward.64} parent=31 // pred_fallthru
        _
    $region32: #{srgan_g_forward.64} parent=5 // pred_fallthru
      _
    %p256 = scmp.le.s32.totalorder 1, %s12
    %p257 = scmp.lt.s32.totalorder %s12, 9
    %p258 = pnand %p256, %p257
    %p259 = pneg %p258
    // Predicated region
    $region41: #{srgan_g_forward.64} parent=5 // pred_check
      _
    $region42: #{srgan_g_forward.64} parent=5 // pred_check_branch
      %261 = sbr.rel (%p258) target = $region44
    $region43: #{srgan_g_forward.64} parent=5 // pred_region
      %s262 = ssub.s32 %s12, 1
      %p263 = scmp.lt.s32.totalorder %s23, 1
      %s264 = scalar_select %p263, %s23, 1
      %s265 = smul.addr %s264, 32
      %s266 = smul.addr %s265, 4
      %s267 = scalar_lea.vmem %s0, %s266
      %p268 = pneg %p57
      %p269 = pneg %p54
      %p270 = pneg %p78
      %p271 = pneg %p75
      %p272 = pneg %p99
      %p273 = pneg %p96
      %p274 = pneg %p120
      %p275 = pneg %p117
      %p276 = pneg %p141
      %p277 = pneg %p138
      %s278 = smul.u32 %s24, %s22
      %s279 = smul.u32 8, %s278
      %p280 = scmp.lt.s32.totalorder %s23, 1
      %s281 = scalar_select %p280, %s23, 1
      %p282 = scmp.lt.s32.totalorder %s279, 15
      %s283 = scalar_select %p282, %s279, 15
      %s284 = smul.addr %s283, 2
      %s285 = smul.addr %s281, 32
      %s286 = sadd.s32 %s284, %s285
      %s287 = smul.addr %s286, 4
      %s288 = scalar_lea.vmem %s5, %s287
      %p289 = pneg %p171
      %p290 = pneg %p168
      %p291 = pneg %p201
      %p292 = pneg %p198
      %s293 = smul.u32 %s24, %s22
      %s294 = smul.u32 8, %s293
      %p295 = scmp.lt.s32.totalorder %s23, 1
      %s296 = scalar_select %p295, %s23, 1
      %p297 = scmp.lt.s32.totalorder %s294, 15
      %s298 = scalar_select %p297, %s294, 15
      %s299 = smul.addr %s298, 2
      %s300 = smul.addr %s296, 32
      %s301 = sadd.s32 %s299, %s300
      %s302 = smul.addr %s301, 4
      %s303 = scalar_lea.vmem %s6, %s302
      %p304 = scmp.lt.s32.totalorder %s23, 1
      %s305 = scalar_select %p304, %s23, 1
      %s306 = smul.addr %s305, 32
      %s307 = smul.addr %s306, 4
      %s308 = scalar_lea.vmem %s0, %s307
      %s309 = smul.u32 %s24, %s22
      %s310 = smul.u32 8, %s309
      %p311 = scmp.lt.s32.totalorder %s23, 1
      %s312 = scalar_select %p311, %s23, 1
      %p313 = scmp.lt.s32.totalorder %s310, 15
      %s314 = scalar_select %p313, %s310, 15
      %s315 = smul.addr %s314, 2
      %s316 = smul.addr %s312, 32
      %s317 = sadd.s32 %s315, %s316
      %s318 = smul.addr %s317, 4
      %s319 = scalar_lea.vmem %s5, %s318
      %s320 = smul.u32 %s24, %s22
      %s321 = smul.u32 8, %s320
      %s322 = smul.u32 %s24, %s22
      %s323 = smul.u32 8, %s322
      %p324 = scmp.lt.s32.totalorder %s23, 1
      %s325 = scalar_select %p324, %s23, 1
      %p326 = scmp.lt.s32.totalorder %s323, 15
      %s327 = scalar_select %p326, %s323, 15
      %s328 = smul.addr %s327, 2
      %s329 = smul.addr %s325, 32
      %s330 = sadd.s32 %s328, %s329
      %s331 = smul.addr %s330, 4
      %s332 = scalar_lea.vmem %s6, %s331
      %s333 = smul.u32 %s24, %s22
      %s334 = smul.u32 8, %s333
      %p336 = scmp.eq.s32.totalorder %s22, 1
      %vm337 = vcmask 519168
      %338 = vst.msk [vmem:[#allocation2] sm:$0xf] %vm337, 0
      %339 = vst.msk [vmem:[#allocation2 + $0x4] sm:$0xf] %vm337, 0
      %340 = vst.msk [vmem:[#allocation2 + $0x8] sm:$0xf] %vm337, 0
      %341 = vst.msk [vmem:[#allocation2 + $0xc] sm:$0xf] %vm337, 0
      %342 = vst.msk [vmem:[#allocation2 + $0x10] sm:$0xf] %vm337, 0
      %343 = vst.msk [vmem:[#allocation2 + $0x14] sm:$0xf] %vm337, 0
      %344 = vst.msk [vmem:[#allocation2 + $0x18] sm:$0xf] %vm337, 0
      %345 = vst.msk [vmem:[#allocation2 + $0x1c] sm:$0xf] %vm337, 0
      %346 = vst.msk [vmem:[#allocation2 + $0x20] sm:$0xf] %vm337, 0
      %347 = vst.msk [vmem:[#allocation2 + $0x24] sm:$0xf] %vm337, 0
      %348 = vst.msk [vmem:[#allocation2 + $0x28] sm:$0xf] %vm337, 0
      %349 = vst.msk [vmem:[#allocation2 + $0x2c] sm:$0xf] %vm337, 0
      %350 = vst.msk [vmem:[#allocation2 + $0x30] sm:$0xf] %vm337, 0
      %351 = vst.msk [vmem:[#allocation2 + $0x34] sm:$0xf] %vm337, 0
      %352 = vst.msk [vmem:[#allocation2 + $0x38] sm:$0xf] %vm337, 0
      %353 = vst.msk [vmem:[#allocation2 + $0x3c] sm:$0xf] %vm337, 0
      %354 = vst.msk [vmem:[#allocation2 + $0x40] sm:$0xf] %vm337, 0
      %355 = vst.msk [vmem:[#allocation2 + $0x44] sm:$0xf] %vm337, 0
      %356 = vst.msk [vmem:[#allocation2 + $0x48] sm:$0xf] %vm337, 0
      %357 = vst.msk [vmem:[#allocation2 + $0x4c] sm:$0xf] %vm337, 0
      %358 = vst.msk [vmem:[#allocation2 + $0x50] sm:$0xf] %vm337, 0
      %359 = vst.msk [vmem:[#allocation2 + $0x54] sm:$0xf] %vm337, 0
      %360 = vst.msk [vmem:[#allocation2 + $0x58] sm:$0xf] %vm337, 0
      %361 = vst.msk [vmem:[#allocation2 + $0x5c] sm:$0xf] %vm337, 0
      %362 = vst.msk [vmem:[#allocation2 + $0x60] sm:$0xf] %vm337, 0
      %363 = vst.msk [vmem:[#allocation2 + $0x64] sm:$0xf] %vm337, 0
      %364 = vst.msk [vmem:[#allocation2 + $0x68] sm:$0xf] %vm337, 0
      %365 = vst.msk [vmem:[#allocation2 + $0x6c] sm:$0xf] %vm337, 0
      %366 = vst.msk [vmem:[#allocation2 + $0x70] sm:$0xf] %vm337, 0
      %367 = vst.msk [vmem:[#allocation2 + $0x74] sm:$0xf] %vm337, 0
      %368 = vst.msk [vmem:[#allocation2 + $0x78] sm:$0xf] %vm337, 0
      %369 = vst.msk [vmem:[#allocation2 + $0x7c] sm:$0xf] %vm337, 0
      %370 = vst.msk [vmem:[#allocation2 + $0x80] sm:$0xf] %vm337, 0
      %371 = vst.msk [vmem:[#allocation2 + $0x84] sm:$0xf] %vm337, 0
      %372 = vst.msk [vmem:[#allocation2 + $0x88] sm:$0xf] %vm337, 0
      %373 = vst.msk [vmem:[#allocation2 + $0x8c] sm:$0xf] %vm337, 0
      %s374 = smul.u32 %s24, 8
      %s375 = smul.u32 %s374, 2
      %s376 = smul.addr %s375, 4
      %s377 = scalar_lea.vmem %s308, %s376
      %v378 = vld [vmem:[%s377] sm:$0xf]
      %v379 = vld [vmem:[%s377 + $0x4] sm:$0xf]
      %v380 = vld [vmem:[%s377 + $0x8] sm:$0xf]
      %v381 = vld [vmem:[%s377 + $0xc] sm:$0xf]
      %v382 = vld [vmem:[%s377 + $0x10] sm:$0xf]
      %v383 = vld [vmem:[%s377 + $0x14] sm:$0xf]
      %v384 = vld [vmem:[%s377 + $0x18] sm:$0xf]
      %v385 = vld [vmem:[%s377 + $0x1c] sm:$0xf]
      %v386 = vld [vmem:[%s377 + $0x20] sm:$0xf]
      %v387 = vld [vmem:[%s377 + $0x24] sm:$0xf]
      %v388 = vld [vmem:[%s377 + $0x28] sm:$0xf]
      %v389 = vld [vmem:[%s377 + $0x2c] sm:$0xf]
      %v390 = vld [vmem:[%s377 + $0x30] sm:$0xf]
      %v391 = vld [vmem:[%s377 + $0x34] sm:$0xf]
      %v392 = vld [vmem:[%s377 + $0x38] sm:$0xf]
      %v393 = vld [vmem:[%s377 + $0x3c] sm:$0xf]
      %vm394 = vsmask.f32 256
      %vm395 = vsmask.f32 4368
      %vm396 = vmor %vm394, %vm395
      %v398 = vshrl.u32 %v378, 16
      %v400 = vrot.slane %v398, 7
      %v401 = vshll.u32 %v378, 16
      %v403 = vor.u32 %v400, %v401
      %v404 = vrot.slane %v400, 4
      %v406 = vshrl.u32 %v379, 16
      %v408 = vrot.slane %v406, 7
      %v409 = vshll.u32 %v379, 16
      %v411 = vor.u32 %v408, %v409
      %v412 = vsel %vm396, %v404, %v411
      %v413 = vrot.slane %v408, 4
      %v415 = vshrl.u32 %v380, 16
      %v417 = vrot.slane %v415, 7
      %v418 = vshll.u32 %v380, 16
      %v420 = vor.u32 %v417, %v418
      %v421 = vrot.slane %v417, 4
      %v423 = vshrl.u32 %v381, 16
      %v425 = vrot.slane %v423, 7
      %v426 = vshll.u32 %v381, 16
      %v428 = vor.u32 %v425, %v426
      %v429 = vsel %vm396, %v421, %v428
      %v430 = vrot.slane %v425, 4
      %v432 = vshrl.u32 %v382, 16
      %v434 = vrot.slane %v432, 7
      %v435 = vshll.u32 %v382, 16
      %v437 = vor.u32 %v434, %v435
      %v438 = vrot.slane %v434, 4
      %v440 = vshrl.u32 %v383, 16
      %v442 = vrot.slane %v440, 7
      %v443 = vshll.u32 %v383, 16
      %v445 = vor.u32 %v442, %v443
      %v446 = vsel %vm396, %v438, %v445
      %v447 = vrot.slane %v442, 4
      %v449 = vshrl.u32 %v384, 16
      %v451 = vrot.slane %v449, 7
      %v452 = vshll.u32 %v384, 16
      %v454 = vor.u32 %v451, %v452
      %v455 = vrot.slane %v451, 4
      %v457 = vshrl.u32 %v385, 16
      %v459 = vrot.slane %v457, 7
      %v460 = vshll.u32 %v385, 16
      %v462 = vor.u32 %v459, %v460
      %v463 = vsel %vm396, %v455, %v462
      %v464 = vrot.slane %v459, 4
      %v466 = vshrl.u32 %v386, 16
      %v468 = vrot.slane %v466, 7
      %v469 = vshll.u32 %v386, 16
      %v471 = vor.u32 %v468, %v469
      %v472 = vrot.slane %v468, 4
      %v474 = vshrl.u32 %v387, 16
      %v476 = vrot.slane %v474, 7
      %v477 = vshll.u32 %v387, 16
      %v479 = vor.u32 %v476, %v477
      %v480 = vsel %vm396, %v472, %v479
      %v481 = vrot.slane %v476, 4
      %v483 = vshrl.u32 %v388, 16
      %v485 = vrot.slane %v483, 7
      %v486 = vshll.u32 %v388, 16
      %v488 = vor.u32 %v485, %v486
      %v489 = vrot.slane %v485, 4
      %v491 = vshrl.u32 %v389, 16
      %v493 = vrot.slane %v491, 7
      %v494 = vshll.u32 %v389, 16
      %v496 = vor.u32 %v493, %v494
      %v497 = vsel %vm396, %v489, %v496
      %v498 = vrot.slane %v493, 4
      %v500 = vshrl.u32 %v390, 16
      %v502 = vrot.slane %v500, 7
      %v503 = vshll.u32 %v390, 16
      %v505 = vor.u32 %v502, %v503
      %v506 = vrot.slane %v502, 4
      %v508 = vshrl.u32 %v391, 16
      %v510 = vrot.slane %v508, 7
      %v511 = vshll.u32 %v391, 16
      %v513 = vor.u32 %v510, %v511
      %v514 = vsel %vm396, %v506, %v513
      %v515 = vrot.slane %v510, 4
      %v517 = vshrl.u32 %v392, 16
      %v519 = vrot.slane %v517, 7
      %v520 = vshll.u32 %v392, 16
      %v522 = vor.u32 %v519, %v520
      %v523 = vrot.slane %v519, 4
      %v525 = vshrl.u32 %v393, 16
      %v527 = vrot.slane %v525, 7
      %v528 = vshll.u32 %v393, 16
      %v530 = vor.u32 %v527, %v528
      %v531 = vsel %vm396, %v523, %v530
      %v532 = vrot.slane %v527, 4
      %s557 = scalar_lea.vmem [#allocation2], 12
      %vm558 = vcmask 519168
      %vm559 = vsmask.f32 7938
      %vm560 = vmand %vm558, %vm559
      %v561 = vld [vmem:[%s557] sm:$0xf]
      %v562 = vsel %vm560, %v403, %v561
      %563 = vst [vmem:[%s557] sm:$0xf] %v562
      %564 = vst.msk [vmem:[%s557 + $0x4] sm:$0xf] %vm337, %v412
      %vm565 = vcmask 516096
      %vm566 = vmand %vm565, %vm394
      %v567 = vld [vmem:[%s557 + $0x8] sm:$0x1]
      %v568 = vsel %vm566, %v413, %v567
      %569 = vst [vmem:[%s557 + $0x8] sm:$0x1] %v568
      %v570 = vld [vmem:[%s557 + $0xc] sm:$0xf]
      %v571 = vsel %vm560, %v420, %v570
      %572 = vst [vmem:[%s557 + $0xc] sm:$0xf] %v571
      %573 = vst.msk [vmem:[%s557 + $0x10] sm:$0xf] %vm337, %v429
      %v574 = vld [vmem:[%s557 + $0x14] sm:$0x1]
      %v575 = vsel %vm566, %v430, %v574
      %576 = vst [vmem:[%s557 + $0x14] sm:$0x1] %v575
      %v577 = vld [vmem:[%s557 + $0x18] sm:$0xf]
      %v578 = vsel %vm560, %v437, %v577
      %579 = vst [vmem:[%s557 + $0x18] sm:$0xf] %v578
      %580 = vst.msk [vmem:[%s557 + $0x1c] sm:$0xf] %vm337, %v446
      %v581 = vld [vmem:[%s557 + $0x20] sm:$0x1]
      %v582 = vsel %vm566, %v447, %v581
      %583 = vst [vmem:[%s557 + $0x20] sm:$0x1] %v582
      %v584 = vld [vmem:[%s557 + $0x24] sm:$0xf]
      %v585 = vsel %vm560, %v454, %v584
      %586 = vst [vmem:[%s557 + $0x24] sm:$0xf] %v585
      %587 = vst.msk [vmem:[%s557 + $0x28] sm:$0xf] %vm337, %v463
      %v588 = vld [vmem:[%s557 + $0x2c] sm:$0x1]
      %v589 = vsel %vm566, %v464, %v588
      %590 = vst [vmem:[%s557 + $0x2c] sm:$0x1] %v589
      %v591 = vld [vmem:[%s557 + $0x30] sm:$0xf]
      %v592 = vsel %vm560, %v471, %v591
      %593 = vst [vmem:[%s557 + $0x30] sm:$0xf] %v592
      %594 = vst.msk [vmem:[%s557 + $0x34] sm:$0xf] %vm337, %v480
      %v595 = vld [vmem:[%s557 + $0x38] sm:$0x1]
      %v596 = vsel %vm566, %v481, %v595
      %597 = vst [vmem:[%s557 + $0x38] sm:$0x1] %v596
      %v598 = vld [vmem:[%s557 + $0x3c] sm:$0xf]
      %v599 = vsel %vm560, %v488, %v598
      %600 = vst [vmem:[%s557 + $0x3c] sm:$0xf] %v599
      %601 = vst.msk [vmem:[%s557 + $0x40] sm:$0xf] %vm337, %v497
      %v602 = vld [vmem:[%s557 + $0x44] sm:$0x1]
      %v603 = vsel %vm566, %v498, %v602
      %604 = vst [vmem:[%s557 + $0x44] sm:$0x1] %v603
      %v605 = vld [vmem:[%s557 + $0x48] sm:$0xf]
      %v606 = vsel %vm560, %v505, %v605
      %607 = vst [vmem:[%s557 + $0x48] sm:$0xf] %v606
      %608 = vst.msk [vmem:[%s557 + $0x4c] sm:$0xf] %vm337, %v514
      %v609 = vld [vmem:[%s557 + $0x50] sm:$0x1]
      %v610 = vsel %vm566, %v515, %v609
      %611 = vst [vmem:[%s557 + $0x50] sm:$0x1] %v610
      %v612 = vld [vmem:[%s557 + $0x54] sm:$0xf]
      %v613 = vsel %vm560, %v522, %v612
      %614 = vst [vmem:[%s557 + $0x54] sm:$0xf] %v613
      %615 = vst.msk [vmem:[%s557 + $0x58] sm:$0xf] %vm337, %v531
      %v616 = vld [vmem:[%s557 + $0x5c] sm:$0x1]
      %v617 = vsel %vm566, %v532, %v616
      %618 = vst [vmem:[%s557 + $0x5c] sm:$0x1] %v617
      %p619 = scmp.gt.s32.totalorder %s24, 0
      // Predicated region
      $region45: #{srgan_g_forward.64} parent=43 // pred_check
        %p620 = pneg %p619
      $region46: #{srgan_g_forward.64} parent=43 // pred_check_branch
        %622 = sbr.rel (%p620) target = $region48
      $region47: #{srgan_g_forward.64} parent=43 // pred_region
        %s623 = ssub.s32 %s374, 1
        %s624 = smul.u32 %s623, 2
        %s625 = smul.addr %s624, 4
        %s626 = scalar_lea.vmem %s308, %s625
        %v627 = vld [vmem:[%s626] sm:$0xf]
        %v628 = vld [vmem:[%s626 + $0x4] sm:$0xf]
        %v630 = vshrl.u32 %v627, 16
        %v632 = vrot.slane %v630, 7
        %v633 = vshll.u32 %v627, 16
        %v635 = vor.u32 %v632, %v633
        %v636 = vrot.slane %v632, 4
        %v638 = vshrl.u32 %v628, 16
        %v640 = vrot.slane %v638, 7
        %v641 = vshll.u32 %v628, 16
        %v643 = vor.u32 %v640, %v641
        %v644 = vsel %vm396, %v636, %v643
        %v645 = vrot.slane %v640, 4
        %v649 = vld [vmem:[#allocation2] sm:$0xf]
        %v650 = vsel %vm560, %v635, %v649
        %651 = vst [vmem:[#allocation2] sm:$0xf] %v650
        %652 = vst.msk [vmem:[#allocation2 + $0x4] sm:$0xf] %vm337, %v644
        %v653 = vld [vmem:[#allocation2 + $0x8] sm:$0x1]
        %v654 = vsel %vm566, %v645, %v653
        %655 = vst [vmem:[#allocation2 + $0x8] sm:$0x1] %v654
      $region48: #{srgan_g_forward.64} parent=43 // pred_fallthru
        _
      %p656 = scmp.lt.s32.totalorder %s24, 1
      // Predicated region
      $region49: #{srgan_g_forward.64} parent=43 // pred_check
        %p657 = pneg %p656
      $region50: #{srgan_g_forward.64} parent=43 // pred_check_branch
        %659 = sbr.rel (%p657) target = $region52
      $region51: #{srgan_g_forward.64} parent=43 // pred_region
        %s660 = sadd.s32 %s374, 8
        %s661 = smul.u32 %s660, 2
        %s662 = smul.addr %s661, 4
        %s663 = scalar_lea.vmem %s308, %s662
        %v664 = vld [vmem:[%s663] sm:$0xf]
        %v665 = vld [vmem:[%s663 + $0x4] sm:$0xf]
        %v667 = vshrl.u32 %v664, 16
        %v669 = vrot.slane %v667, 7
        %v670 = vshll.u32 %v664, 16
        %v672 = vor.u32 %v669, %v670
        %v673 = vrot.slane %v669, 4
        %v675 = vshrl.u32 %v665, 16
        %v677 = vrot.slane %v675, 7
        %v678 = vshll.u32 %v665, 16
        %v680 = vor.u32 %v677, %v678
        %v681 = vsel %vm396, %v673, %v680
        %v682 = vrot.slane %v677, 4
        %s686 = scalar_lea.vmem [#allocation2], 108
        %v687 = vld [vmem:[%s686] sm:$0xf]
        %v688 = vsel %vm560, %v672, %v687
        %689 = vst [vmem:[%s686] sm:$0xf] %v688
        %690 = vst.msk [vmem:[%s686 + $0x4] sm:$0xf] %vm337, %v681
        %v691 = vld [vmem:[%s686 + $0x8] sm:$0x1]
        %v692 = vsel %vm566, %v682, %v691
        %693 = vst [vmem:[%s686 + $0x8] sm:$0x1] %v692
      $region52: #{srgan_g_forward.64} parent=43 // pred_fallthru
        _
      %v694 = vld [vmem:[#allocation2] sm:$0xf]
      %v695 = vld [vmem:[#allocation2 + $0x4] sm:$0xf]
      %v696 = vld [vmem:[#allocation2 + $0x8] sm:$0xf]
      %v697 = vld [vmem:[#allocation2 + $0xc] sm:$0xf]
      %v698 = vld [vmem:[#allocation2 + $0x10] sm:$0xf]
      %v699 = vld [vmem:[#allocation2 + $0x14] sm:$0xf]
      %v700 = vld [vmem:[#allocation2 + $0x18] sm:$0xf]
      %v701 = vld [vmem:[#allocation2 + $0x1c] sm:$0xf]
      %v702 = vld [vmem:[#allocation2 + $0x20] sm:$0xf]
      %v703 = vld [vmem:[#allocation2 + $0x24] sm:$0xf]
      %v704 = vld [vmem:[#allocation2 + $0x28] sm:$0xf]
      %v705 = vld [vmem:[#allocation2 + $0x2c] sm:$0xf]
      %v706 = vld [vmem:[#allocation2 + $0x30] sm:$0xf]
      %v707 = vld [vmem:[#allocation2 + $0x34] sm:$0xf]
      %v708 = vld [vmem:[#allocation2 + $0x38] sm:$0xf]
      %v709 = vld [vmem:[#allocation2 + $0x3c] sm:$0xf]
      %v710 = vld [vmem:[#allocation2 + $0x40] sm:$0xf]
      %v711 = vld [vmem:[#allocation2 + $0x44] sm:$0xf]
      %v712 = vld [vmem:[#allocation2 + $0x48] sm:$0xf]
      %v713 = vld [vmem:[#allocation2 + $0x4c] sm:$0xf]
      %v714 = vld [vmem:[#allocation2 + $0x50] sm:$0xf]
      %v715 = vld [vmem:[#allocation2 + $0x54] sm:$0xf]
      %v716 = vld [vmem:[#allocation2 + $0x58] sm:$0xf]
      %v717 = vld [vmem:[#allocation2 + $0x5c] sm:$0xf]
      %v718 = vld [vmem:[#allocation2 + $0x60] sm:$0xf]
      %v719 = vld [vmem:[#allocation2 + $0x64] sm:$0xf]
      %v720 = vld [vmem:[#allocation2 + $0x68] sm:$0xf]
      %v721 = vld [vmem:[#allocation2 + $0x6c] sm:$0xf]
      %v722 = vld [vmem:[#allocation2 + $0x70] sm:$0xf]
      %v723 = vld [vmem:[#allocation2 + $0x74] sm:$0xf]
      %v724 = vld [vmem:[#allocation2 + $0x78] sm:$0xf]
      %v749 = vunpack.c.l.b16 %v694
      %v750 = vunpack.c.l.b16 %v695
      %v751 = vunpack.c.l.b16 %v696
      %v752 = vunpack.c.l.b16 %v697
      %v753 = vunpack.c.l.b16 %v698
      %v754 = vunpack.c.l.b16 %v699
      %v755 = vunpack.c.l.b16 %v700
      %v756 = vunpack.c.l.b16 %v701
      %v757 = vunpack.c.l.b16 %v702
      %v758 = vunpack.c.l.b16 %v703
      %v759 = vunpack.c.l.b16 %v704
      %v760 = vunpack.c.l.b16 %v705
      %v761 = vunpack.c.l.b16 %v706
      %v762 = vunpack.c.l.b16 %v707
      %v763 = vunpack.c.l.b16 %v708
      %v764 = vunpack.c.l.b16 %v709
      %v765 = vunpack.c.l.b16 %v710
      %v766 = vunpack.c.l.b16 %v711
      %v767 = vunpack.c.l.b16 %v712
      %v768 = vunpack.c.l.b16 %v713
      %v769 = vunpack.c.l.b16 %v714
      %v770 = vunpack.c.l.b16 %v715
      %v771 = vunpack.c.l.b16 %v716
      %v772 = vunpack.c.l.b16 %v717
      %v773 = vpack.c.b16 %v750, %v749
      %v774 = vpack.c.b16 %v752, %v751
      %v775 = vpack.c.b16 %v754, %v753
      %v776 = vpack.c.b16 %v756, %v755
      %v777 = vpack.c.b16 %v758, %v757
      %v778 = vpack.c.b16 %v760, %v759
      %v779 = vpack.c.b16 %v762, %v761
      %v780 = vpack.c.b16 %v764, %v763
      %v781 = vpack.c.b16 %v766, %v765
      %v782 = vpack.c.b16 %v768, %v767
      %v783 = vpack.c.b16 %v770, %v769
      %v784 = vpack.c.b16 %v772, %v771
      %v786 = vunpack.c.l.b16 %v718
      %v787 = vpack.c.b16 %v786, %v786
      %vm788 = vsmask.f32 7424
      %v790 = vshrl.u32 %v773, 16
      %v792 = vshll.u32 %v773, 16
      %v794 = vrot.slane %v792, 1
      %v795 = vor.u32 %v790, %v794
      %v797 = vshll.u32 %v774, 16
      %v799 = vrot.slane %v797, 1
      %v800 = vsel %vm788, %v795, %v799
      %v801 = vshrl.u32 %v774, 16
      %v803 = vor.u32 %v801, %v799
      %v805 = vshll.u32 %v775, 16
      %v807 = vrot.slane %v805, 1
      %v808 = vsel %vm788, %v803, %v807
      %v809 = vshrl.u32 %v775, 16
      %v811 = vor.u32 %v809, %v807
      %v813 = vshll.u32 %v776, 16
      %v815 = vrot.slane %v813, 1
      %v816 = vsel %vm788, %v811, %v815
      %v817 = vshrl.u32 %v776, 16
      %v819 = vor.u32 %v817, %v815
      %v821 = vshll.u32 %v777, 16
      %v823 = vrot.slane %v821, 1
      %v824 = vsel %vm788, %v819, %v823
      %v825 = vshrl.u32 %v777, 16
      %v827 = vor.u32 %v825, %v823
      %v829 = vshll.u32 %v778, 16
      %v831 = vrot.slane %v829, 1
      %v832 = vsel %vm788, %v827, %v831
      %v833 = vshrl.u32 %v778, 16
      %v835 = vor.u32 %v833, %v831
      %v837 = vshll.u32 %v779, 16
      %v839 = vrot.slane %v837, 1
      %v840 = vsel %vm788, %v835, %v839
      %v841 = vshrl.u32 %v779, 16
      %v843 = vor.u32 %v841, %v839
      %v845 = vshll.u32 %v780, 16
      %v847 = vrot.slane %v845, 1
      %v848 = vsel %vm788, %v843, %v847
      %v849 = vshrl.u32 %v780, 16
      %v851 = vor.u32 %v849, %v847
      %v853 = vshll.u32 %v781, 16
      %v855 = vrot.slane %v853, 1
      %v856 = vsel %vm788, %v851, %v855
      %v857 = vshrl.u32 %v781, 16
      %v859 = vor.u32 %v857, %v855
      %v861 = vshll.u32 %v782, 16
      %v863 = vrot.slane %v861, 1
      %v864 = vsel %vm788, %v859, %v863
      %v865 = vshrl.u32 %v782, 16
      %v867 = vor.u32 %v865, %v863
      %v869 = vshll.u32 %v783, 16
      %v871 = vrot.slane %v869, 1
      %v872 = vsel %vm788, %v867, %v871
      %v873 = vshrl.u32 %v783, 16
      %v875 = vor.u32 %v873, %v871
      %v877 = vshll.u32 %v784, 16
      %v879 = vrot.slane %v877, 1
      %v880 = vsel %vm788, %v875, %v879
      %v881 = vshrl.u32 %v784, 16
      %v883 = vor.u32 %v881, %v879
      %v885 = vshll.u32 %v787, 16
      %v887 = vrot.slane %v885, 1
      %v888 = vsel %vm788, %v883, %v887
      %889 = vrot.lane.b32.xlu0 %v800, 64
      %v890 = vpop.permute.xlu0 %889
      %891 = vrot.lane.b32.xlu0 %v808, 64
      %v892 = vpop.permute.xlu0 %891
      %893 = vrot.lane.b32.xlu0 %v816, 64
      %v894 = vpop.permute.xlu0 %893
      %895 = vrot.lane.b32.xlu0 %v824, 64
      %v896 = vpop.permute.xlu0 %895
      %897 = vrot.lane.b32.xlu0 %v832, 64
      %v898 = vpop.permute.xlu0 %897
      %899 = vrot.lane.b32.xlu0 %v840, 64
      %v900 = vpop.permute.xlu0 %899
      %901 = vrot.lane.b32.xlu0 %v848, 64
      %v902 = vpop.permute.xlu0 %901
      %903 = vrot.lane.b32.xlu0 %v856, 64
      %v904 = vpop.permute.xlu0 %903
      %905 = vrot.lane.b32.xlu0 %v864, 64
      %v906 = vpop.permute.xlu0 %905
      %907 = vrot.lane.b32.xlu0 %v872, 64
      %v908 = vpop.permute.xlu0 %907
      %909 = vrot.lane.b32.xlu0 %v880, 64
      %v910 = vpop.permute.xlu0 %909
      %911 = vrot.lane.b32.xlu0 %v888, 64
      %v912 = vpop.permute.xlu0 %911
      %vm913 = vcmask 1046528
      %v914 = vrot.slane %v773, 1
      %v915 = vrot.slane %v774, 1
      %v916 = vsel %vm913, %v914, %v915
      %v917 = vrot.slane %v775, 1
      %v918 = vsel %vm913, %v915, %v917
      %v919 = vrot.slane %v776, 1
      %v920 = vsel %vm913, %v917, %v919
      %v921 = vrot.slane %v777, 1
      %v922 = vsel %vm913, %v919, %v921
      %v923 = vrot.slane %v778, 1
      %v924 = vsel %vm913, %v921, %v923
      %v925 = vrot.slane %v779, 1
      %v926 = vsel %vm913, %v923, %v925
      %v927 = vrot.slane %v780, 1
      %v928 = vsel %vm913, %v925, %v927
      %v929 = vrot.slane %v781, 1
      %v930 = vsel %vm913, %v927, %v929
      %v931 = vrot.slane %v782, 1
      %v932 = vsel %vm913, %v929, %v931
      %v933 = vrot.slane %v783, 1
      %v934 = vsel %vm913, %v931, %v933
      %v935 = vrot.slane %v784, 1
      %v936 = vsel %vm913, %v933, %v935
      %v937 = vrot.slane %v787, 1
      %v938 = vsel %vm913, %v935, %v937
      %v941 = vunpack.c.l.b16 %v719
      %v942 = vunpack.c.l.b16 %v720
      %v943 = vpack.c.b16 %v753, %v752
      %v944 = vpack.c.b16 %v755, %v754
      %v945 = vpack.c.b16 %v757, %v756
      %v946 = vpack.c.b16 %v759, %v758
      %v947 = vpack.c.b16 %v761, %v760
      %v948 = vpack.c.b16 %v763, %v762
      %v949 = vpack.c.b16 %v765, %v764
      %v950 = vpack.c.b16 %v767, %v766
      %v951 = vpack.c.b16 %v769, %v768
      %v952 = vpack.c.b16 %v771, %v770
      %v953 = vpack.c.b16 %v786, %v772
      %v954 = vpack.c.b16 %v942, %v941
      %955 = vrot.lane.b32.xlu0 %v943, 64
      %v956 = vpop.permute.xlu0 %955
      %957 = vrot.lane.b32.xlu0 %v944, 64
      %v958 = vpop.permute.xlu0 %957
      %959 = vrot.lane.b32.xlu0 %v945, 64
      %v960 = vpop.permute.xlu0 %959
      %961 = vrot.lane.b32.xlu0 %v946, 64
      %v962 = vpop.permute.xlu0 %961
      %963 = vrot.lane.b32.xlu0 %v947, 64
      %v964 = vpop.permute.xlu0 %963
      %965 = vrot.lane.b32.xlu0 %v948, 64
      %v966 = vpop.permute.xlu0 %965
      %967 = vrot.lane.b32.xlu0 %v949, 64
      %v968 = vpop.permute.xlu0 %967
      %969 = vrot.lane.b32.xlu0 %v950, 64
      %v970 = vpop.permute.xlu0 %969
      %971 = vrot.lane.b32.xlu0 %v951, 64
      %v972 = vpop.permute.xlu0 %971
      %973 = vrot.lane.b32.xlu0 %v952, 64
      %v974 = vpop.permute.xlu0 %973
      %975 = vrot.lane.b32.xlu0 %v953, 64
      %v976 = vpop.permute.xlu0 %975
      %977 = vrot.lane.b32.xlu0 %v954, 64
      %v978 = vpop.permute.xlu0 %977
      %v980 = vunpack.c.l.b16 %v721
      %v981 = vpack.c.b16 %v980, %v980
      %v983 = vshrl.u32 %v943, 16
      %v985 = vshll.u32 %v943, 16
      %v987 = vrot.slane %v985, 1
      %v988 = vor.u32 %v983, %v987
      %v990 = vshll.u32 %v944, 16
      %v992 = vrot.slane %v990, 1
      %v993 = vsel %vm788, %v988, %v992
      %v994 = vshrl.u32 %v944, 16
      %v996 = vor.u32 %v994, %v992
      %v998 = vshll.u32 %v945, 16
      %v1000 = vrot.slane %v998, 1
      %v1001 = vsel %vm788, %v996, %v1000
      %v1002 = vshrl.u32 %v945, 16
      %v1004 = vor.u32 %v1002, %v1000
      %v1006 = vshll.u32 %v946, 16
      %v1008 = vrot.slane %v1006, 1
      %v1009 = vsel %vm788, %v1004, %v1008
      %v1010 = vshrl.u32 %v946, 16
      %v1012 = vor.u32 %v1010, %v1008
      %v1014 = vshll.u32 %v947, 16
      %v1016 = vrot.slane %v1014, 1
      %v1017 = vsel %vm788, %v1012, %v1016
      %v1018 = vshrl.u32 %v947, 16
      %v1020 = vor.u32 %v1018, %v1016
      %v1022 = vshll.u32 %v948, 16
      %v1024 = vrot.slane %v1022, 1
      %v1025 = vsel %vm788, %v1020, %v1024
      %v1026 = vshrl.u32 %v948, 16
      %v1028 = vor.u32 %v1026, %v1024
      %v1030 = vshll.u32 %v949, 16
      %v1032 = vrot.slane %v1030, 1
      %v1033 = vsel %vm788, %v1028, %v1032
      %v1034 = vshrl.u32 %v949, 16
      %v1036 = vor.u32 %v1034, %v1032
      %v1038 = vshll.u32 %v950, 16
      %v1040 = vrot.slane %v1038, 1
      %v1041 = vsel %vm788, %v1036, %v1040
      %v1042 = vshrl.u32 %v950, 16
      %v1044 = vor.u32 %v1042, %v1040
      %v1046 = vshll.u32 %v951, 16
      %v1048 = vrot.slane %v1046, 1
      %v1049 = vsel %vm788, %v1044, %v1048
      %v1050 = vshrl.u32 %v951, 16
      %v1052 = vor.u32 %v1050, %v1048
      %v1054 = vshll.u32 %v952, 16
      %v1056 = vrot.slane %v1054, 1
      %v1057 = vsel %vm788, %v1052, %v1056
      %v1058 = vshrl.u32 %v952, 16
      %v1060 = vor.u32 %v1058, %v1056
      %v1062 = vshll.u32 %v953, 16
      %v1064 = vrot.slane %v1062, 1
      %v1065 = vsel %vm788, %v1060, %v1064
      %v1066 = vshrl.u32 %v953, 16
      %v1068 = vor.u32 %v1066, %v1064
      %v1070 = vshll.u32 %v954, 16
      %v1072 = vrot.slane %v1070, 1
      %v1073 = vsel %vm788, %v1068, %v1072
      %v1074 = vshrl.u32 %v954, 16
      %v1076 = vor.u32 %v1074, %v1072
      %v1078 = vshll.u32 %v981, 16
      %v1080 = vrot.slane %v1078, 1
      %v1081 = vsel %vm788, %v1076, %v1080
      %v1082 = vrot.slane %v943, 1
      %v1083 = vrot.slane %v944, 1
      %v1084 = vsel %vm913, %v1082, %v1083
      %v1085 = vrot.slane %v945, 1
      %v1086 = vsel %vm913, %v1083, %v1085
      %v1087 = vrot.slane %v946, 1
      %v1088 = vsel %vm913, %v1085, %v1087
      %v1089 = vrot.slane %v947, 1
      %v1090 = vsel %vm913, %v1087, %v1089
      %v1091 = vrot.slane %v948, 1
      %v1092 = vsel %vm913, %v1089, %v1091
      %v1093 = vrot.slane %v949, 1
      %v1094 = vsel %vm913, %v1091, %v1093
      %v1095 = vrot.slane %v950, 1
      %v1096 = vsel %vm913, %v1093, %v1095
      %v1097 = vrot.slane %v951, 1
      %v1098 = vsel %vm913, %v1095, %v1097
      %v1099 = vrot.slane %v952, 1
      %v1100 = vsel %vm913, %v1097, %v1099
      %v1101 = vrot.slane %v953, 1
      %v1102 = vsel %vm913, %v1099, %v1101
      %v1103 = vrot.slane %v954, 1
      %v1104 = vsel %vm913, %v1101, %v1103
      %v1105 = vrot.slane %v981, 1
      %v1106 = vsel %vm913, %v1103, %v1105
      %1107 = vrot.lane.b32.xlu0 %v1084, 64
      %v1108 = vpop.permute.xlu0 %1107
      %1109 = vrot.lane.b32.xlu0 %v1086, 64
      %v1110 = vpop.permute.xlu0 %1109
      %1111 = vrot.lane.b32.xlu0 %v1088, 64
      %v1112 = vpop.permute.xlu0 %1111
      %1113 = vrot.lane.b32.xlu0 %v1090, 64
      %v1114 = vpop.permute.xlu0 %1113
      %1115 = vrot.lane.b32.xlu0 %v1092, 64
      %v1116 = vpop.permute.xlu0 %1115
      %1117 = vrot.lane.b32.xlu0 %v1094, 64
      %v1118 = vpop.permute.xlu0 %1117
      %1119 = vrot.lane.b32.xlu0 %v1096, 64
      %v1120 = vpop.permute.xlu0 %1119
      %1121 = vrot.lane.b32.xlu0 %v1098, 64
      %v1122 = vpop.permute.xlu0 %1121
      %1123 = vrot.lane.b32.xlu0 %v1100, 64
      %v1124 = vpop.permute.xlu0 %1123
      %1125 = vrot.lane.b32.xlu0 %v1102, 64
      %v1126 = vpop.permute.xlu0 %1125
      %1127 = vrot.lane.b32.xlu0 %v1104, 64
      %v1128 = vpop.permute.xlu0 %1127
      %1129 = vrot.lane.b32.xlu0 %v1106, 64
      %v1130 = vpop.permute.xlu0 %1129
      %v1133 = vunpack.c.l.b16 %v722
      %v1134 = vunpack.c.l.b16 %v723
      %v1135 = vpack.c.b16 %v941, %v786
      %v1136 = vpack.c.b16 %v980, %v942
      %v1137 = vpack.c.b16 %v1134, %v1133
      %v1139 = vunpack.c.l.b16 %v724
      %v1140 = vpack.c.b16 %v1139, %v1139
      %v1142 = vshll.u32 %v1135, 16
      %v1144 = vrot.slane %v1142, 1
      %v1145 = vsel %vm788, %v883, %v1144
      %v1146 = vshrl.u32 %v1135, 16
      %v1148 = vor.u32 %v1146, %v1144
      %v1150 = vshll.u32 %v1136, 16
      %v1152 = vrot.slane %v1150, 1
      %v1153 = vsel %vm788, %v1148, %v1152
      %v1154 = vshrl.u32 %v1136, 16
      %v1156 = vor.u32 %v1154, %v1152
      %v1158 = vshll.u32 %v1137, 16
      %v1160 = vrot.slane %v1158, 1
      %v1161 = vsel %vm788, %v1156, %v1160
      %v1162 = vshrl.u32 %v1137, 16
      %v1164 = vor.u32 %v1162, %v1160
      %v1166 = vshll.u32 %v1140, 16
      %v1168 = vrot.slane %v1166, 1
      %v1169 = vsel %vm788, %v1164, %v1168
      %1170 = vrot.lane.b32.xlu0 %v1145, 64
      %v1171 = vpop.permute.xlu0 %1170
      %1172 = vrot.lane.b32.xlu0 %v1153, 64
      %v1173 = vpop.permute.xlu0 %1172
      %1174 = vrot.lane.b32.xlu0 %v1161, 64
      %v1175 = vpop.permute.xlu0 %1174
      %1176 = vrot.lane.b32.xlu0 %v1169, 64
      %v1177 = vpop.permute.xlu0 %1176
      %v1178 = vrot.slane %v1135, 1
      %v1179 = vsel %vm913, %v935, %v1178
      %v1180 = vrot.slane %v1136, 1
      %v1181 = vsel %vm913, %v1178, %v1180
      %v1182 = vrot.slane %v1137, 1
      %v1183 = vsel %vm913, %v1180, %v1182
      %v1184 = vrot.slane %v1140, 1
      %v1185 = vsel %vm913, %v1182, %v1184
      %vm1186 = vcmask 523264
      %v1188 = vsel %vm1186, %v773, %v890
      %v1191 = vsel %vm1186, %v774, %v892
      %v1194 = vsel %vm1186, %v775, %v894
      %v1197 = vsel %vm1186, %v776, %v896
      %v1200 = vsel %vm1186, %v777, %v898
      %v1203 = vsel %vm1186, %v778, %v900
      %v1206 = vsel %vm1186, %v779, %v902
      %v1209 = vsel %vm1186, %v780, %v904
      %v1212 = vsel %vm1186, %v781, %v906
      %v1215 = vsel %vm1186, %v782, %v908
      %v1218 = vsel %vm1186, %v783, %v910
      %v1221 = vsel %vm1186, %v784, %v912
      %v1225 = vsel %vm1186, %v916, %v956
      %v1229 = vsel %vm1186, %v918, %v958
      %v1233 = vsel %vm1186, %v920, %v960
      %v1237 = vsel %vm1186, %v922, %v962
      %v1241 = vsel %vm1186, %v924, %v964
      %v1245 = vsel %vm1186, %v926, %v966
      %v1249 = vsel %vm1186, %v928, %v968
      %v1253 = vsel %vm1186, %v930, %v970
      %v1257 = vsel %vm1186, %v932, %v972
      %v1261 = vsel %vm1186, %v934, %v974
      %v1265 = vsel %vm1186, %v936, %v976
      %v1269 = vsel %vm1186, %v938, %v978
      %v1273 = vsel %vm1186, %v993, %v1108
      %v1277 = vsel %vm1186, %v1001, %v1110
      %v1281 = vsel %vm1186, %v1009, %v1112
      %v1285 = vsel %vm1186, %v1017, %v1114
      %v1289 = vsel %vm1186, %v1025, %v1116
      %v1293 = vsel %vm1186, %v1033, %v1118
      %v1297 = vsel %vm1186, %v1041, %v1120
      %v1301 = vsel %vm1186, %v1049, %v1122
      %v1305 = vsel %vm1186, %v1057, %v1124
      %v1309 = vsel %vm1186, %v1065, %v1126
      %v1313 = vsel %vm1186, %v1073, %v1128
      %v1317 = vsel %vm1186, %v1081, %v1130
      %v1320 = vsel %vm1186, %v784, %v1171
      %v1323 = vsel %vm1186, %v1135, %v1173
      %v1326 = vsel %vm1186, %v1136, %v1175
      %v1329 = vsel %vm1186, %v1137, %v1177
      %v1331 = vld [vmem:[%s1] sm:$0xf]
      %v1332 = vld [vmem:[%s1 + $0x4] sm:$0xf]
      %v1333 = vld [vmem:[%s1 + $0x8] sm:$0xf]
      %v1334 = vld [vmem:[%s1 + $0xc] sm:$0xf]
      %v1335 = vld [vmem:[%s1 + $0x10] sm:$0xf]
      %v1336 = vld [vmem:[%s1 + $0x14] sm:$0xf]
      %v1337 = vld [vmem:[%s1 + $0x18] sm:$0xf]
      %v1338 = vld [vmem:[%s1 + $0x1c] sm:$0xf]
      %v1339 = vld [vmem:[%s1 + $0x20] sm:$0xf]
      %v1340 = vld [vmem:[%s1 + $0x24] sm:$0xf]
      %v1341 = vld [vmem:[%s1 + $0x28] sm:$0xf]
      %v1342 = vld [vmem:[%s1 + $0x2c] sm:$0xf]
      %v1343 = vld [vmem:[%s1 + $0x30] sm:$0xf]
      %v1344 = vld [vmem:[%s1 + $0x34] sm:$0xf]
      %v1345 = vld [vmem:[%s1 + $0x38] sm:$0xf]
      %v1346 = vld [vmem:[%s1 + $0x3c] sm:$0xf]
      %v1347 = vld [vmem:[%s1 + $0x40] sm:$0xf]
      %v1348 = vld [vmem:[%s1 + $0x44] sm:$0xf]
      %v1349 = vld [vmem:[%s1 + $0x48] sm:$0xf]
      %v1350 = vld [vmem:[%s1 + $0x4c] sm:$0xf]
      %v1351 = vld [vmem:[%s1 + $0x50] sm:$0xf]
      %v1352 = vld [vmem:[%s1 + $0x54] sm:$0xf]
      %v1353 = vld [vmem:[%s1 + $0x58] sm:$0xf]
      %v1354 = vld [vmem:[%s1 + $0x5c] sm:$0xf]
      %v1355 = vld [vmem:[%s1 + $0x60] sm:$0xf]
      %v1356 = vld [vmem:[%s1 + $0x64] sm:$0xf]
      %v1357 = vld [vmem:[%s1 + $0x68] sm:$0xf]
      %v1358 = vld [vmem:[%s1 + $0x6c] sm:$0xf]
      %v1359 = vld [vmem:[%s1 + $0x70] sm:$0xf]
      %v1360 = vld [vmem:[%s1 + $0x74] sm:$0xf]
      %v1361 = vld [vmem:[%s1 + $0x78] sm:$0xf]
      %v1362 = vld [vmem:[%s1 + $0x7c] sm:$0xf]
      %v1363 = vld [vmem:[%s1 + $0x80] sm:$0xf]
      %v1364 = vld [vmem:[%s1 + $0x84] sm:$0xf]
      %v1365 = vld [vmem:[%s1 + $0x88] sm:$0xf]
      %v1366 = vld [vmem:[%s1 + $0x8c] sm:$0xf]
      %v1367 = vld [vmem:[%s1 + $0x90] sm:$0xf]
      %v1368 = vld [vmem:[%s1 + $0x94] sm:$0xf]
      %v1369 = vld [vmem:[%s1 + $0x98] sm:$0xf]
      %v1370 = vld [vmem:[%s1 + $0x9c] sm:$0xf]
      %v1371 = vld [vmem:[%s1 + $0xa0] sm:$0xf]
      %v1372 = vld [vmem:[%s1 + $0xa4] sm:$0xf]
      %v1373 = vld [vmem:[%s1 + $0xa8] sm:$0xf]
      %v1374 = vld [vmem:[%s1 + $0xac] sm:$0xf]
      %v1375 = vld [vmem:[%s1 + $0xb0] sm:$0xf]
      %v1376 = vld [vmem:[%s1 + $0xb4] sm:$0xf]
      %v1377 = vld [vmem:[%s1 + $0xb8] sm:$0xf]
      %v1378 = vld [vmem:[%s1 + $0xbc] sm:$0xf]
      %v1379 = vld [vmem:[%s1 + $0xc0] sm:$0xf]
      %v1380 = vld [vmem:[%s1 + $0xc4] sm:$0xf]
      %v1381 = vld [vmem:[%s1 + $0xc8] sm:$0xf]
      %v1382 = vld [vmem:[%s1 + $0xcc] sm:$0xf]
      %v1383 = vld [vmem:[%s1 + $0xd0] sm:$0xf]
      %v1384 = vld [vmem:[%s1 + $0xd4] sm:$0xf]
      %v1385 = vld [vmem:[%s1 + $0xd8] sm:$0xf]
      %v1386 = vld [vmem:[%s1 + $0xdc] sm:$0xf]
      %v1387 = vld [vmem:[%s1 + $0xe0] sm:$0xf]
      %v1388 = vld [vmem:[%s1 + $0xe4] sm:$0xf]
      %v1389 = vld [vmem:[%s1 + $0xe8] sm:$0xf]
      %v1390 = vld [vmem:[%s1 + $0xec] sm:$0xf]
      %v1391 = vld [vmem:[%s1 + $0xf0] sm:$0xf]
      %v1392 = vld [vmem:[%s1 + $0xf4] sm:$0xf]
      %v1393 = vld [vmem:[%s1 + $0xf8] sm:$0xf]
      %v1394 = vld [vmem:[%s1 + $0xfc] sm:$0xf]
      %v1395 = vld [vmem:[%s1 + $0x100] sm:$0xf]
      %v1396 = vld [vmem:[%s1 + $0x104] sm:$0xf]
      %v1397 = vld [vmem:[%s1 + $0x108] sm:$0xf]
      %v1398 = vld [vmem:[%s1 + $0x10c] sm:$0xf]
      %v1399 = vld [vmem:[%s1 + $0x110] sm:$0xf]
      %v1400 = vld [vmem:[%s1 + $0x114] sm:$0xf]
      %v1401 = vld [vmem:[%s1 + $0x118] sm:$0xf]
      %v1402 = vld [vmem:[%s1 + $0x11c] sm:$0xf]
      %v1403 = vld [vmem:[%s2] sm:$0x1]
      %v1405 = vperm.slane %v1403, 0
      %v1479 = vunpack.c.l.b16 %v1331
      %v1480 = vunpack.c.l.b16 %v1332
      %v1481 = vunpack.c.l.b16 %v1333
      %v1482 = vunpack.c.l.b16 %v1334
      %v1483 = vunpack.c.l.b16 %v1335
      %v1484 = vunpack.c.l.b16 %v1336
      %v1485 = vunpack.c.l.b16 %v1337
      %v1486 = vunpack.c.l.b16 %v1338
      %v1487 = vunpack.c.l.b16 %v1339
      %v1488 = vunpack.c.l.b16 %v1340
      %v1489 = vunpack.c.l.b16 %v1341
      %v1490 = vunpack.c.l.b16 %v1342
      %v1491 = vunpack.c.l.b16 %v1343
      %v1492 = vunpack.c.l.b16 %v1344
      %v1493 = vunpack.c.l.b16 %v1345
      %v1494 = vunpack.c.l.b16 %v1346
      %v1495 = vunpack.c.l.b16 %v1347
      %v1496 = vunpack.c.l.b16 %v1348
      %v1497 = vunpack.c.l.b16 %v1349
      %v1498 = vunpack.c.l.b16 %v1350
      %v1499 = vunpack.c.l.b16 %v1351
      %v1500 = vunpack.c.l.b16 %v1352
      %v1501 = vunpack.c.l.b16 %v1353
      %v1502 = vunpack.c.l.b16 %v1354
      %v1503 = vunpack.c.l.b16 %v1355
      %v1504 = vunpack.c.l.b16 %v1356
      %v1505 = vunpack.c.l.b16 %v1357
      %v1506 = vunpack.c.l.b16 %v1358
      %v1507 = vunpack.c.l.b16 %v1359
      %v1508 = vunpack.c.l.b16 %v1360
      %v1509 = vunpack.c.l.b16 %v1361
      %v1510 = vunpack.c.l.b16 %v1362
      %v1511 = vunpack.c.l.b16 %v1363
      %v1512 = vunpack.c.l.b16 %v1364
      %v1513 = vunpack.c.l.b16 %v1365
      %v1514 = vunpack.c.l.b16 %v1366
      %v1515 = vunpack.c.l.b16 %v1367
      %v1516 = vunpack.c.l.b16 %v1368
      %v1517 = vunpack.c.l.b16 %v1369
      %v1518 = vunpack.c.l.b16 %v1370
      %v1519 = vunpack.c.l.b16 %v1371
      %v1520 = vunpack.c.l.b16 %v1372
      %v1521 = vunpack.c.l.b16 %v1373
      %v1522 = vunpack.c.l.b16 %v1374
      %v1523 = vunpack.c.l.b16 %v1375
      %v1524 = vunpack.c.l.b16 %v1376
      %v1525 = vunpack.c.l.b16 %v1377
      %v1526 = vunpack.c.l.b16 %v1378
      %v1527 = vunpack.c.l.b16 %v1379
      %v1528 = vunpack.c.l.b16 %v1380
      %v1529 = vunpack.c.l.b16 %v1381
      %v1530 = vunpack.c.l.b16 %v1382
      %v1531 = vunpack.c.l.b16 %v1383
      %v1532 = vunpack.c.l.b16 %v1384
      %v1533 = vunpack.c.l.b16 %v1385
      %v1534 = vunpack.c.l.b16 %v1386
      %v1535 = vunpack.c.l.b16 %v1387
      %v1536 = vunpack.c.l.b16 %v1388
      %v1537 = vunpack.c.l.b16 %v1389
      %v1538 = vunpack.c.l.b16 %v1390
      %v1539 = vunpack.c.l.b16 %v1391
      %v1540 = vunpack.c.l.b16 %v1392
      %v1541 = vunpack.c.l.b16 %v1393
      %v1542 = vunpack.c.l.b16 %v1394
      %v1543 = vunpack.c.l.b16 %v1395
      %v1544 = vunpack.c.l.b16 %v1396
      %v1545 = vunpack.c.l.b16 %v1397
      %v1546 = vunpack.c.l.b16 %v1398
      %v1547 = vunpack.c.l.b16 %v1399
      %v1548 = vunpack.c.l.b16 %v1400
      %v1549 = vunpack.c.l.b16 %v1401
      %v1550 = vunpack.c.l.b16 %v1402
      %v1551 = vpack.c.b16 %v1480, %v1479
      %v1552 = vpack.c.b16 %v1482, %v1481
      %v1553 = vpack.c.b16 %v1484, %v1483
      %v1554 = vpack.c.b16 %v1486, %v1485
      %v1555 = vpack.c.b16 %v1488, %v1487
      %v1556 = vpack.c.b16 %v1490, %v1489
      %v1557 = vpack.c.b16 %v1492, %v1491
      %v1558 = vpack.c.b16 %v1494, %v1493
      %v1559 = vpack.c.b16 %v1496, %v1495
      %v1560 = vpack.c.b16 %v1498, %v1497
      %v1561 = vpack.c.b16 %v1500, %v1499
      %v1562 = vpack.c.b16 %v1502, %v1501
      %v1563 = vpack.c.b16 %v1504, %v1503
      %v1564 = vpack.c.b16 %v1506, %v1505
      %v1565 = vpack.c.b16 %v1508, %v1507
      %v1566 = vpack.c.b16 %v1510, %v1509
      %v1567 = vpack.c.b16 %v1512, %v1511
      %v1568 = vpack.c.b16 %v1514, %v1513
      %v1569 = vpack.c.b16 %v1516, %v1515
      %v1570 = vpack.c.b16 %v1518, %v1517
      %v1571 = vpack.c.b16 %v1520, %v1519
      %v1572 = vpack.c.b16 %v1522, %v1521
      %v1573 = vpack.c.b16 %v1524, %v1523
      %v1574 = vpack.c.b16 %v1526, %v1525
      %v1575 = vpack.c.b16 %v1528, %v1527
      %v1576 = vpack.c.b16 %v1530, %v1529
      %v1577 = vpack.c.b16 %v1532, %v1531
      %v1578 = vpack.c.b16 %v1534, %v1533
      %v1579 = vpack.c.b16 %v1536, %v1535
      %v1580 = vpack.c.b16 %v1538, %v1537
      %v1581 = vpack.c.b16 %v1540, %v1539
      %v1582 = vpack.c.b16 %v1542, %v1541
      %v1583 = vpack.c.b16 %v1544, %v1543
      %v1584 = vpack.c.b16 %v1546, %v1545
      %v1585 = vpack.c.b16 %v1548, %v1547
      %v1586 = vpack.c.b16 %v1550, %v1549
      %v1623 = vsel %vm1186, %v922, 0
      %v1625 = vsel %vm1186, %v924, 0
      %v1627 = vsel %vm1186, %v926, 0
      %v1629 = vsel %vm1186, %v928, 0
      %v1631 = vsel %vm1186, %v930, 0
      %v1633 = vsel %vm1186, %v932, 0
      %v1635 = vsel %vm1186, %v934, 0
      %v1637 = vsel %vm1186, %v936, 0
      %v1640 = vsel %vm1186, %v1179, 0
      %v1643 = vsel %vm1186, %v1181, 0
      %v1646 = vsel %vm1186, %v1183, 0
      %v1649 = vsel %vm1186, %v1185, 0
      %1651 = vmatpush.bf16.msra.mxu0 %v1558
      %1652 = vmatpush.bf16.msra.mxu0 %v1557
      %1653 = vmatpush.bf16.msra.mxu0 %v1556
      %1654 = vmatpush.bf16.msra.mxu0 %v1555
      %1655 = vmatpush.bf16.msra.mxu0 %v1554
      %1656 = vmatpush.bf16.msra.mxu0 %v1553
      %1657 = vmatpush.bf16.msra.mxu0 %v1552
      %1658 = vmatpush.bf16.msra.mxu0 %v1551
      %1659 = vmatmul.bf16.gmra.mxu0 %v1188
      %v1660 = vpop.f32.mrf.mxu0
      %v1661 = vadd.f32 %v1405, %v1660
      %v1662 = vpop.f32.mrf.mxu0
      %v1663 = vadd.f32 %v1405, %v1662
      %1664 = vmatmul.bf16.gmra.mxu0 %v1191
      %v1665 = vpop.f32.mrf.mxu0
      %v1666 = vpop.f32.mrf.mxu0
      %v1667 = vadd.f32 %v1405, %v1666
      %1668 = vmatmul.bf16.gmra.mxu0 %v1194
      %v1669 = vpop.f32.mrf.mxu0
      %v1670 = vadd.f32 %v1405, %v1669
      %v1671 = vpop.f32.mrf.mxu0
      %1672 = vmatmul.bf16.gmra.mxu0 %v1197
      %v1673 = vpop.f32.mrf.mxu0
      %v1674 = vadd.f32 %v1405, %v1673
      %v1675 = vpop.f32.mrf.mxu0
      %v1676 = vadd.f32 %v1405, %v1675
      %1677 = vmatmul.bf16.gmra.mxu0 %v1200
      %v1678 = vpop.f32.mrf.mxu0
      %v1679 = vpop.f32.mrf.mxu0
      %v1680 = vadd.f32 %v1405, %v1679
      %1681 = vmatmul.bf16.gmra.mxu0 %v1203
      %v1682 = vpop.f32.mrf.mxu0
      %v1683 = vadd.f32 %v1405, %v1682
      %v1684 = vpop.f32.mrf.mxu0
      %1685 = vmatmul.bf16.gmra.mxu0 %v1206
      %v1686 = vpop.f32.mrf.mxu0
      %v1687 = vadd.f32 %v1405, %v1686
      %v1688 = vpop.f32.mrf.mxu0
      %v1689 = vadd.f32 %v1405, %v1688
      %1690 = vmatmul.bf16.gmra.mxu0 %v1209
      %v1691 = vpop.f32.mrf.mxu0
      %v1692 = vpop.f32.mrf.mxu0
      %v1693 = vadd.f32 %v1405, %v1692
      %1694 = vmatmul.bf16.gmra.mxu0 %v1212
      %v1695 = vpop.f32.mrf.mxu0
      %v1696 = vadd.f32 %v1405, %v1695
      %v1697 = vpop.f32.mrf.mxu0
      %1698 = vmatmul.bf16.gmra.mxu0 %v1215
      %v1699 = vpop.f32.mrf.mxu0
      %v1700 = vadd.f32 %v1405, %v1699
      %v1701 = vpop.f32.mrf.mxu0
      %v1702 = vadd.f32 %v1405, %v1701
      %1703 = vmatmul.bf16.gmra.mxu0 %v1218
      %v1704 = vpop.f32.mrf.mxu0
      %v1705 = vpop.f32.mrf.mxu0
      %v1706 = vadd.f32 %v1405, %v1705
      %1707 = vmatmul.bf16.gmra.mxu0 %v1221
      %v1708 = vpop.f32.mrf.mxu0
      %v1709 = vadd.f32 %v1405, %v1708
      %v1710 = vpop.f32.mrf.mxu0
      %1711 = vdwg.mxu0
      %1712 = vmatpush.bf16.msra.mxu0 %v1566
      %1713 = vmatpush.bf16.msra.mxu0 %v1565
      %1714 = vmatpush.bf16.msra.mxu0 %v1564
      %1715 = vmatpush.bf16.msra.mxu0 %v1563
      %1716 = vmatpush.bf16.msra.mxu0 %v1562
      %1717 = vmatpush.bf16.msra.mxu0 %v1561
      %1718 = vmatpush.bf16.msra.mxu0 %v1560
      %1719 = vmatpush.bf16.msra.mxu0 %v1559
      %1720 = vmatmul.bf16.gmra.mxu0 %v1225
      %v1721 = vpop.f32.mrf.mxu0
      %v1722 = vadd.f32 %v1661, %v1721
      %v1723 = vpop.f32.mrf.mxu0
      %v1724 = vadd.f32 %v1663, %v1723
      %1725 = vmatmul.bf16.gmra.mxu0 %v1229
      %v1726 = vpop.f32.mrf.mxu0
      %v1727 = vpop.f32.mrf.mxu0
      %v1728 = vadd.f32 %v1667, %v1727
      %1729 = vmatmul.bf16.gmra.mxu0 %v1233
      %v1730 = vpop.f32.mrf.mxu0
      %v1731 = vadd.f32 %v1670, %v1730
      %v1732 = vpop.f32.mrf.mxu0
      %1733 = vmatmul.bf16.gmra.mxu0 %v1237
      %v1734 = vpop.f32.mrf.mxu0
      %v1735 = vadd.f32 %v1674, %v1734
      %v1736 = vpop.f32.mrf.mxu0
      %v1737 = vadd.f32 %v1676, %v1736
      %1738 = vmatmul.bf16.gmra.mxu0 %v1241
      %v1739 = vpop.f32.mrf.mxu0
      %v1740 = vpop.f32.mrf.mxu0
      %v1741 = vadd.f32 %v1680, %v1740
      %1742 = vmatmul.bf16.gmra.mxu0 %v1245
      %v1743 = vpop.f32.mrf.mxu0
      %v1744 = vadd.f32 %v1683, %v1743
      %v1745 = vpop.f32.mrf.mxu0
      %1746 = vmatmul.bf16.gmra.mxu0 %v1249
      %v1747 = vpop.f32.mrf.mxu0
      %v1748 = vadd.f32 %v1687, %v1747
      %v1749 = vpop.f32.mrf.mxu0
      %v1750 = vadd.f32 %v1689, %v1749
      %1751 = vmatmul.bf16.gmra.mxu0 %v1253
      %v1752 = vpop.f32.mrf.mxu0
      %v1753 = vpop.f32.mrf.mxu0
      %v1754 = vadd.f32 %v1693, %v1753
      %1755 = vmatmul.bf16.gmra.mxu0 %v1257
      %v1756 = vpop.f32.mrf.mxu0
      %v1757 = vadd.f32 %v1696, %v1756
      %v1758 = vpop.f32.mrf.mxu0
      %1759 = vmatmul.bf16.gmra.mxu0 %v1261
      %v1760 = vpop.f32.mrf.mxu0
      %v1761 = vadd.f32 %v1700, %v1760
      %v1762 = vpop.f32.mrf.mxu0
      %v1763 = vadd.f32 %v1702, %v1762
      %1764 = vmatmul.bf16.gmra.mxu0 %v1265
      %v1765 = vpop.f32.mrf.mxu0
      %v1766 = vpop.f32.mrf.mxu0
      %v1767 = vadd.f32 %v1706, %v1766
      %1768 = vmatmul.bf16.gmra.mxu0 %v1269
      %v1769 = vpop.f32.mrf.mxu0
      %v1770 = vadd.f32 %v1709, %v1769
      %v1771 = vpop.f32.mrf.mxu0
      %1772 = vdwg.mxu0
      %1773 = vmatpush.bf16.msra.mxu0 %v1574
      %1774 = vmatpush.bf16.msra.mxu0 %v1573
      %1775 = vmatpush.bf16.msra.mxu0 %v1572
      %1776 = vmatpush.bf16.msra.mxu0 %v1571
      %1777 = vmatpush.bf16.msra.mxu0 %v1570
      %1778 = vmatpush.bf16.msra.mxu0 %v1569
      %1779 = vmatpush.bf16.msra.mxu0 %v1568
      %1780 = vmatpush.bf16.msra.mxu0 %v1567
      %1781 = vmatmul.bf16.gmra.mxu0 %v1273
      %v1782 = vpop.f32.mrf.mxu0
      %v1783 = vadd.f32 %v1722, %v1782
      %v1784 = vpop.f32.mrf.mxu0
      %v1785 = vadd.f32 %v1724, %v1784
      %1786 = vmatmul.bf16.gmra.mxu0 %v1277
      %v1787 = vpop.f32.mrf.mxu0
      %v1788 = vpop.f32.mrf.mxu0
      %v1789 = vadd.f32 %v1728, %v1788
      %1790 = vmatmul.bf16.gmra.mxu0 %v1281
      %v1791 = vpop.f32.mrf.mxu0
      %v1792 = vadd.f32 %v1731, %v1791
      %v1793 = vpop.f32.mrf.mxu0
      %1794 = vmatmul.bf16.gmra.mxu0 %v1285
      %v1795 = vpop.f32.mrf.mxu0
      %v1796 = vadd.f32 %v1735, %v1795
      %v1797 = vpop.f32.mrf.mxu0
      %v1798 = vadd.f32 %v1737, %v1797
      %1799 = vmatmul.bf16.gmra.mxu0 %v1289
      %v1800 = vpop.f32.mrf.mxu0
      %v1801 = vpop.f32.mrf.mxu0
      %v1802 = vadd.f32 %v1741, %v1801
      %1803 = vmatmul.bf16.gmra.mxu0 %v1293
      %v1804 = vpop.f32.mrf.mxu0
      %v1805 = vadd.f32 %v1744, %v1804
      %v1806 = vpop.f32.mrf.mxu0
      %1807 = vmatmul.bf16.gmra.mxu0 %v1297
      %v1808 = vpop.f32.mrf.mxu0
      %v1809 = vadd.f32 %v1748, %v1808
      %v1810 = vpop.f32.mrf.mxu0
      %v1811 = vadd.f32 %v1750, %v1810
      %1812 = vmatmul.bf16.gmra.mxu0 %v1301
      %v1813 = vpop.f32.mrf.mxu0
      %v1814 = vpop.f32.mrf.mxu0
      %v1815 = vadd.f32 %v1754, %v1814
      %1816 = vmatmul.bf16.gmra.mxu0 %v1305
      %v1817 = vpop.f32.mrf.mxu0
      %v1818 = vadd.f32 %v1757, %v1817
      %v1819 = vpop.f32.mrf.mxu0
      %1820 = vmatmul.bf16.gmra.mxu0 %v1309
      %v1821 = vpop.f32.mrf.mxu0
      %v1822 = vadd.f32 %v1761, %v1821
      %v1823 = vpop.f32.mrf.mxu0
      %v1824 = vadd.f32 %v1763, %v1823
      %1825 = vmatmul.bf16.gmra.mxu0 %v1313
      %v1826 = vpop.f32.mrf.mxu0
      %v1827 = vpop.f32.mrf.mxu0
      %v1828 = vadd.f32 %v1767, %v1827
      %1829 = vmatmul.bf16.gmra.mxu0 %v1317
      %v1830 = vpop.f32.mrf.mxu0
      %v1831 = vadd.f32 %v1770, %v1830
      %v1832 = vpop.f32.mrf.mxu0
      %1833 = vdwg.mxu0
      %1834 = vmatpush.bf16.msra.mxu0 %v1582
      %1835 = vmatpush.bf16.msra.mxu0 %v1581
      %1836 = vmatpush.bf16.msra.mxu0 %v1580
      %1837 = vmatpush.bf16.msra.mxu0 %v1579
      %1838 = vmatpush.bf16.msra.mxu0 %v1578
      %1839 = vmatpush.bf16.msra.mxu0 %v1577
      %1840 = vmatpush.bf16.msra.mxu0 %v1576
      %1841 = vmatpush.bf16.msra.mxu0 %v1575
      %1842 = vmatmul.bf16.gmra.mxu0 %v1197
      %v1843 = vpop.f32.mrf.mxu0
      %v1844 = vadd.f32 %v1783, %v1843
      %v1845 = vpop.f32.mrf.mxu0
      %v1846 = vadd.f32 %v1785, %v1845
      %1847 = vmatmul.bf16.gmra.mxu0 %v1200
      %v1848 = vpop.f32.mrf.mxu0
      %v1849 = vpop.f32.mrf.mxu0
      %v1850 = vadd.f32 %v1789, %v1849
      %1851 = vmatmul.bf16.gmra.mxu0 %v1203
      %v1852 = vpop.f32.mrf.mxu0
      %v1853 = vadd.f32 %v1792, %v1852
      %v1854 = vpop.f32.mrf.mxu0
      %1855 = vmatmul.bf16.gmra.mxu0 %v1206
      %v1856 = vpop.f32.mrf.mxu0
      %v1857 = vadd.f32 %v1796, %v1856
      %v1858 = vpop.f32.mrf.mxu0
      %v1859 = vadd.f32 %v1798, %v1858
      %1860 = vmatmul.bf16.gmra.mxu0 %v1209
      %v1861 = vpop.f32.mrf.mxu0
      %v1862 = vpop.f32.mrf.mxu0
      %v1863 = vadd.f32 %v1802, %v1862
      %1864 = vmatmul.bf16.gmra.mxu0 %v1212
      %v1865 = vpop.f32.mrf.mxu0
      %v1866 = vadd.f32 %v1805, %v1865
      %v1867 = vpop.f32.mrf.mxu0
      %1868 = vmatmul.bf16.gmra.mxu0 %v1215
      %v1869 = vpop.f32.mrf.mxu0
      %v1870 = vadd.f32 %v1809, %v1869
      %v1871 = vpop.f32.mrf.mxu0
      %v1872 = vadd.f32 %v1811, %v1871
      %1873 = vmatmul.bf16.gmra.mxu0 %v1218
      %v1874 = vpop.f32.mrf.mxu0
      %v1875 = vpop.f32.mrf.mxu0
      %v1876 = vadd.f32 %v1815, %v1875
      %1877 = vmatmul.bf16.gmra.mxu0 %v1320
      %v1878 = vpop.f32.mrf.mxu0
      %v1879 = vadd.f32 %v1818, %v1878
      %v1880 = vpop.f32.mrf.mxu0
      %1881 = vmatmul.bf16.gmra.mxu0 %v1323
      %v1882 = vpop.f32.mrf.mxu0
      %v1883 = vadd.f32 %v1822, %v1882
      %v1884 = vpop.f32.mrf.mxu0
      %v1885 = vadd.f32 %v1824, %v1884
      %1886 = vmatmul.bf16.gmra.mxu0 %v1326
      %v1887 = vpop.f32.mrf.mxu0
      %v1888 = vpop.f32.mrf.mxu0
      %v1889 = vadd.f32 %v1828, %v1888
      %1890 = vmatmul.bf16.gmra.mxu0 %v1329
      %v1891 = vpop.f32.mrf.mxu0
      %v1892 = vadd.f32 %v1831, %v1891
      %v1893 = vpop.f32.mrf.mxu0
      %1894 = vdwg.mxu0
      %1895 = vmatpush.bf16.msra.mxu0 0
      %1896 = vmatpush.bf16.msra.mxu0 0
      %1897 = vmatpush.bf16.msra.mxu0 0
      %1898 = vmatpush.bf16.msra.mxu0 0
      %1899 = vmatpush.bf16.msra.mxu0 %v1586
      %1900 = vmatpush.bf16.msra.mxu0 %v1585
      %1901 = vmatpush.bf16.msra.mxu0 %v1584
      %1902 = vmatpush.bf16.msra.mxu0 %v1583
      %1903 = vmatmul.bf16.gmra.mxu0 %v1623
      %v1904 = vpop.f32.mrf.mxu0
      %v1905 = vadd.f32 %v1844, %v1904
      %v1906 = vpop.f32.mrf.mxu0
      %v1907 = vadd.f32 %v1846, %v1906
      %1908 = vmatmul.bf16.gmra.mxu0 %v1625
      %v1909 = vpop.f32.mrf.mxu0
      %v1910 = vpop.f32.mrf.mxu0
      %v1911 = vadd.f32 %v1850, %v1910
      %1912 = vmatmul.bf16.gmra.mxu0 %v1627
      %v1913 = vpop.f32.mrf.mxu0
      %v1914 = vadd.f32 %v1853, %v1913
      %v1915 = vpop.f32.mrf.mxu0
      %1916 = vmatmul.bf16.gmra.mxu0 %v1629
      %v1917 = vpop.f32.mrf.mxu0
      %v1918 = vadd.f32 %v1857, %v1917
      %v1919 = vpop.f32.mrf.mxu0
      %v1920 = vadd.f32 %v1859, %v1919
      %1921 = vmatmul.bf16.gmra.mxu0 %v1631
      %v1922 = vpop.f32.mrf.mxu0
      %v1923 = vpop.f32.mrf.mxu0
      %v1924 = vadd.f32 %v1863, %v1923
      %1925 = vmatmul.bf16.gmra.mxu0 %v1633
      %v1926 = vpop.f32.mrf.mxu0
      %v1927 = vadd.f32 %v1866, %v1926
      %v1928 = vpop.f32.mrf.mxu0
      %1929 = vmatmul.bf16.gmra.mxu0 %v1635
      %v1930 = vpop.f32.mrf.mxu0
      %v1931 = vadd.f32 %v1870, %v1930
      %v1932 = vpop.f32.mrf.mxu0
      %v1933 = vadd.f32 %v1872, %v1932
      %1934 = vmatmul.bf16.gmra.mxu0 %v1637
      %v1935 = vpop.f32.mrf.mxu0
      %v1936 = vpop.f32.mrf.mxu0
      %v1937 = vadd.f32 %v1876, %v1936
      %1938 = vmatmul.bf16.gmra.mxu0 %v1640
      %v1939 = vpop.f32.mrf.mxu0
      %v1940 = vadd.f32 %v1879, %v1939
      %v1941 = vpop.f32.mrf.mxu0
      %1942 = vmatmul.bf16.gmra.mxu0 %v1643
      %v1943 = vpop.f32.mrf.mxu0
      %v1944 = vadd.f32 %v1883, %v1943
      %v1945 = vpop.f32.mrf.mxu0
      %v1946 = vadd.f32 %v1885, %v1945
      %1947 = vmatmul.bf16.gmra.mxu0 %v1646
      %v1948 = vpop.f32.mrf.mxu0
      %v1949 = vpop.f32.mrf.mxu0
      %v1950 = vadd.f32 %v1889, %v1949
      %1951 = vmatmul.bf16.gmra.mxu0 %v1649
      %v1952 = vpop.f32.mrf.mxu0
      %v1953 = vadd.f32 %v1892, %v1952
      %v1954 = vpop.f32.mrf.mxu0
      %1955 = vdwg.mxu0
      %p1956 = scmp.eq.s32.totalorder %s22, 0
      %p1957 = scmp.eq.s32.totalorder %s23, 0
      %p1958 = pnand %p1956, %p1957
      %p1959 = pneg %p1958
      %p1960 = scmp.eq.s32.totalorder %s24, 0
      %p1961 = pnand %p1959, %p1960
      %p1962 = pneg %p1961
      // Predicated region
      $region53: #{srgan_g_forward.64} parent=43 // pred_check
        _
      $region54: #{srgan_g_forward.64} parent=43 // pred_check_branch
        %1964 = sbr.rel (%p1961) target = $region56
      $region55: #{srgan_g_forward.64} parent=43 // pred_region
        %vm1965 = vcmask 516096
        %1966 = vst.msk [vmem:[#allocation3] sm:$0x1] %vm1965, 0.0
        %1967 = vst.msk [vmem:[#allocation4] sm:$0x1] %vm1965, 0.0
      $region56: #{srgan_g_forward.64} parent=43 // pred_fallthru
        _
      // Predicated region
      $region57: #{srgan_g_forward.64} parent=43 // pred_check
        %p1968 = pneg %p1956
      $region58: #{srgan_g_forward.64} parent=43 // pred_check_branch
        %1970 = sbr.rel (%p1968) target = $region60
      $region59: #{srgan_g_forward.64} parent=43 // pred_region
        %v1971 = vsel %vm1186, %v1905, 0.0
        %v1972 = vsel %vm1186, %v1907, 0.0
        %v1973 = vadd.f32 %v1971, %v1972
        %v1974 = vsel %vm1186, %v1911, 0.0
        %v1975 = vadd.f32 %v1973, %v1974
        %v1976 = vsel %vm1186, %v1914, 0.0
        %v1977 = vadd.f32 %v1975, %v1976
        %v1978 = vsel %vm1186, %v1918, 0.0
        %v1979 = vadd.f32 %v1977, %v1978
        %v1980 = vsel %vm1186, %v1920, 0.0
        %v1981 = vadd.f32 %v1979, %v1980
        %v1982 = vsel %vm1186, %v1924, 0.0
        %v1983 = vadd.f32 %v1981, %v1982
        %v1984 = vsel %vm1186, %v1927, 0.0
        %v1985 = vadd.f32 %v1983, %v1984
        %v1986 = vsel %vm1186, %v1931, 0.0
        %v1987 = vadd.f32 %v1985, %v1986
        %v1988 = vsel %vm1186, %v1933, 0.0
        %v1989 = vadd.f32 %v1987, %v1988
        %v1990 = vsel %vm1186, %v1937, 0.0
        %v1991 = vadd.f32 %v1989, %v1990
        %v1992 = vsel %vm1186, %v1940, 0.0
        %v1993 = vadd.f32 %v1991, %v1992
        %v1994 = vsel %vm1186, %v1944, 0.0
        %v1995 = vadd.f32 %v1993, %v1994
        %v1996 = vsel %vm1186, %v1946, 0.0
        %v1997 = vadd.f32 %v1995, %v1996
        %v1998 = vsel %vm1186, %v1950, 0.0
        %v1999 = vadd.f32 %v1997, %v1998
        %v2000 = vsel %vm1186, %v1953, 0.0
        %v2001 = vadd.f32 %v1999, %v2000
        %v2002 = vrot.slane %v2001, 4
        %v2003 = vadd.f32 %v2001, %v2002
        %v2004 = vrot.slane %v2003, 2
        %v2005 = vadd.f32 %v2003, %v2004
        %v2006 = vrot.slane %v2005, 1
        %v2007 = vadd.f32 %v2005, %v2006
        %v2008 = vmul.f32 %v1905, %v1905
        %v2009 = vmul.f32 %v1907, %v1907
        %v2010 = vmul.f32 %v1911, %v1911
        %v2011 = vmul.f32 %v1914, %v1914
        %v2012 = vmul.f32 %v1918, %v1918
        %v2013 = vmul.f32 %v1920, %v1920
        %v2014 = vmul.f32 %v1924, %v1924
        %v2015 = vmul.f32 %v1927, %v1927
        %v2016 = vmul.f32 %v1931, %v1931
        %v2017 = vmul.f32 %v1933, %v1933
        %v2018 = vmul.f32 %v1937, %v1937
        %v2019 = vmul.f32 %v1940, %v1940
        %v2020 = vmul.f32 %v1944, %v1944
        %v2021 = vmul.f32 %v1946, %v1946
        %v2022 = vmul.f32 %v1950, %v1950
        %v2023 = vmul.f32 %v1953, %v1953
        %v2024 = vsel %vm1186, %v2008, 0.0
        %v2025 = vsel %vm1186, %v2009, 0.0
        %v2026 = vadd.f32 %v2024, %v2025
        %v2027 = vsel %vm1186, %v2010, 0.0
        %v2028 = vadd.f32 %v2026, %v2027
        %v2029 = vsel %vm1186, %v2011, 0.0
        %v2030 = vadd.f32 %v2028, %v2029
        %v2031 = vsel %vm1186, %v2012, 0.0
        %v2032 = vadd.f32 %v2030, %v2031
        %v2033 = vsel %vm1186, %v2013, 0.0
        %v2034 = vadd.f32 %v2032, %v2033
        %v2035 = vsel %vm1186, %v2014, 0.0
        %v2036 = vadd.f32 %v2034, %v2035
        %v2037 = vsel %vm1186, %v2015, 0.0
        %v2038 = vadd.f32 %v2036, %v2037
        %v2039 = vsel %vm1186, %v2016, 0.0
        %v2040 = vadd.f32 %v2038, %v2039
        %v2041 = vsel %vm1186, %v2017, 0.0
        %v2042 = vadd.f32 %v2040, %v2041
        %v2043 = vsel %vm1186, %v2018, 0.0
        %v2044 = vadd.f32 %v2042, %v2043
        %v2045 = vsel %vm1186, %v2019, 0.0
        %v2046 = vadd.f32 %v2044, %v2045
        %v2047 = vsel %vm1186, %v2020, 0.0
        %v2048 = vadd.f32 %v2046, %v2047
        %v2049 = vsel %vm1186, %v2021, 0.0
        %v2050 = vadd.f32 %v2048, %v2049
        %v2051 = vsel %vm1186, %v2022, 0.0
        %v2052 = vadd.f32 %v2050, %v2051
        %v2053 = vsel %vm1186, %v2023, 0.0
        %v2054 = vadd.f32 %v2052, %v2053
        %v2055 = vrot.slane %v2054, 4
        %v2056 = vadd.f32 %v2054, %v2055
        %v2057 = vrot.slane %v2056, 2
        %v2058 = vadd.f32 %v2056, %v2057
        %v2059 = vrot.slane %v2058, 1
        %v2060 = vadd.f32 %v2058, %v2059
        %v2061 = vld [vmem:[#allocation3] sm:$0x1]
        %v2062 = vadd.f32 %v2061, %v2007
        %vm2063 = vcmask 516096
        %2064 = vst.msk [vmem:[#allocation3] sm:$0x1] %vm2063, %v2062
        %v2065 = vld [vmem:[#allocation4] sm:$0x1]
        %v2066 = vadd.f32 %v2065, %v2060
        %2067 = vst.msk [vmem:[#allocation4] sm:$0x1] %vm2063, %v2066
      $region60: #{srgan_g_forward.64} parent=43 // pred_fallthru
        _
      // Predicated region
      $region61: #{srgan_g_forward.64} parent=43 // pred_check
        %p2068 = pneg %p336
      $region62: #{srgan_g_forward.64} parent=43 // pred_check_branch
        %2070 = sbr.rel (%p2068) target = $region64
      $region63: #{srgan_g_forward.64} parent=43 // pred_region
        %v2071 = vld [vmem:[#allocation3] sm:$0x1]
        %v2072 = vmul.f32 %v2071, 0.001953125
        %v2073 = vld [vmem:[#allocation4] sm:$0x1]
        %v2074 = vmul.f32 %v2073, 0.001953125
        %v2075 = vmul.f32 %v2072, %v2072
        %v2076 = vsub.f32 %v2074, %v2075
        %v2077 = vmax.f32 %v2076, 0.0
        %v2078 = vld [vmem:[%s3] sm:$0x1]
        %v2079 = vadd.f32 %v2077, 1e-05
        %v2080 = vrsqrt.pop %v2079
        %v2081 = vmul.f32 %v2080, %v2079
        %v2082 = vmul.f32 %v2081, %v2080
        %v2083 = vmul.f32 0.5, %v2082
        %v2084 = vsub.f32 1.5, %v2083
        %v2085 = vmul.f32 %v2080, %v2084
        %vm2086 = vweird.f32 %v2079
        %vm2087 = vweird.f32 %v2080
        %vm2088 = vmor %vm2086, %vm2087
        %v2089 = vsel %vm2088, %v2080, %v2085
        %v2090 = vmul.f32 %v2078, %v2089
        %v2091 = vld [vmem:[%s4] sm:$0x1]
        %v2092 = vmul.f32 %v2072, %v2090
        %v2093 = vsub.f32 %v2091, %v2092
        %v2095 = vperm.slane %v2090, 0
        %v2097 = vmul.f32 %v1905, %v2095
        %v2098 = vmul.f32 %v1907, %v2095
        %v2099 = vmul.f32 %v1911, %v2095
        %v2100 = vmul.f32 %v1914, %v2095
        %v2101 = vmul.f32 %v1918, %v2095
        %v2102 = vmul.f32 %v1920, %v2095
        %v2103 = vmul.f32 %v1924, %v2095
        %v2104 = vmul.f32 %v1927, %v2095
        %v2105 = vmul.f32 %v1931, %v2095
        %v2106 = vmul.f32 %v1933, %v2095
        %v2107 = vmul.f32 %v1937, %v2095
        %v2108 = vmul.f32 %v1940, %v2095
        %v2109 = vmul.f32 %v1944, %v2095
        %v2110 = vmul.f32 %v1946, %v2095
        %v2111 = vmul.f32 %v1950, %v2095
        %v2112 = vmul.f32 %v1953, %v2095
        %v2114 = vperm.slane %v2093, 0
        %v2116 = vadd.f32 %v2097, %v2114
        %v2117 = vadd.f32 %v2098, %v2114
        %v2118 = vadd.f32 %v2099, %v2114
        %v2119 = vadd.f32 %v2100, %v2114
        %v2120 = vadd.f32 %v2101, %v2114
        %v2121 = vadd.f32 %v2102, %v2114
        %v2122 = vadd.f32 %v2103, %v2114
        %v2123 = vadd.f32 %v2104, %v2114
        %v2124 = vadd.f32 %v2105, %v2114
        %v2125 = vadd.f32 %v2106, %v2114
        %v2126 = vadd.f32 %v2107, %v2114
        %v2127 = vadd.f32 %v2108, %v2114
        %v2128 = vadd.f32 %v2109, %v2114
        %v2129 = vadd.f32 %v2110, %v2114
        %v2130 = vadd.f32 %v2111, %v2114
        %v2131 = vadd.f32 %v2112, %v2114
        %v2132 = vmax.f32 %v2116, 0.0
        %v2133 = vmax.f32 %v2117, 0.0
        %v2134 = vmax.f32 %v2118, 0.0
        %v2135 = vmax.f32 %v2119, 0.0
        %v2136 = vmax.f32 %v2120, 0.0
        %v2137 = vmax.f32 %v2121, 0.0
        %v2138 = vmax.f32 %v2122, 0.0
        %v2139 = vmax.f32 %v2123, 0.0
        %v2140 = vmax.f32 %v2124, 0.0
        %v2141 = vmax.f32 %v2125, 0.0
        %v2142 = vmax.f32 %v2126, 0.0
        %v2143 = vmax.f32 %v2127, 0.0
        %v2144 = vmax.f32 %v2128, 0.0
        %v2145 = vmax.f32 %v2129, 0.0
        %v2146 = vmax.f32 %v2130, 0.0
        %v2147 = vmax.f32 %v2131, 0.0
        %v2148 = vld [vmem:[%s319] sm:$0xf]
        %v2149 = vld [vmem:[%s319 + $0x4] sm:$0xf]
        %v2150 = vld [vmem:[%s319 + $0x8] sm:$0xf]
        %v2151 = vld [vmem:[%s319 + $0xc] sm:$0xf]
        %v2152 = vld [vmem:[%s319 + $0x10] sm:$0xf]
        %v2153 = vld [vmem:[%s319 + $0x14] sm:$0xf]
        %v2154 = vld [vmem:[%s319 + $0x18] sm:$0xf]
        %v2155 = vld [vmem:[%s319 + $0x1c] sm:$0xf]
        %v2156 = vld [vmem:[%s319 + $0x20] sm:$0xf]
        %v2157 = vld [vmem:[%s319 + $0x24] sm:$0xf]
        %v2158 = vld [vmem:[%s319 + $0x28] sm:$0xf]
        %v2159 = vld [vmem:[%s319 + $0x2c] sm:$0xf]
        %v2160 = vld [vmem:[%s319 + $0x30] sm:$0xf]
        %v2161 = vld [vmem:[%s319 + $0x34] sm:$0xf]
        %v2162 = vld [vmem:[%s319 + $0x38] sm:$0xf]
        %v2163 = vld [vmem:[%s319 + $0x3c] sm:$0xf]
        %v2164 = vunpack.c.l.bf16 %v2148
        %v2165 = vunpack.c.l.bf16 %v2149
        %v2166 = vunpack.c.l.bf16 %v2150
        %v2167 = vunpack.c.l.bf16 %v2151
        %v2168 = vunpack.c.l.bf16 %v2152
        %v2169 = vunpack.c.l.bf16 %v2153
        %v2170 = vunpack.c.l.bf16 %v2154
        %v2171 = vunpack.c.l.bf16 %v2155
        %v2172 = vunpack.c.l.bf16 %v2156
        %v2173 = vunpack.c.l.bf16 %v2157
        %v2174 = vunpack.c.l.bf16 %v2158
        %v2175 = vunpack.c.l.bf16 %v2159
        %v2176 = vunpack.c.l.bf16 %v2160
        %v2177 = vunpack.c.l.bf16 %v2161
        %v2178 = vunpack.c.l.bf16 %v2162
        %v2179 = vunpack.c.l.bf16 %v2163
        %v2180 = vadd.f32 %v2132, %v2164
        %v2181 = vadd.f32 %v2133, %v2165
        %v2182 = vadd.f32 %v2134, %v2166
        %v2183 = vadd.f32 %v2135, %v2167
        %v2184 = vadd.f32 %v2136, %v2168
        %v2185 = vadd.f32 %v2137, %v2169
        %v2186 = vadd.f32 %v2138, %v2170
        %v2187 = vadd.f32 %v2139, %v2171
        %v2188 = vadd.f32 %v2140, %v2172
        %v2189 = vadd.f32 %v2141, %v2173
        %v2190 = vadd.f32 %v2142, %v2174
        %v2191 = vadd.f32 %v2143, %v2175
        %v2192 = vadd.f32 %v2144, %v2176
        %v2193 = vadd.f32 %v2145, %v2177
        %v2194 = vadd.f32 %v2146, %v2178
        %v2195 = vadd.f32 %v2147, %v2179
        %v2196 = vpack.c.bf16 %v2180, %v2180
        %v2197 = vpack.c.bf16 %v2181, %v2181
        %v2198 = vpack.c.bf16 %v2182, %v2182
        %v2199 = vpack.c.bf16 %v2183, %v2183
        %v2200 = vpack.c.bf16 %v2184, %v2184
        %v2201 = vpack.c.bf16 %v2185, %v2185
        %v2202 = vpack.c.bf16 %v2186, %v2186
        %v2203 = vpack.c.bf16 %v2187, %v2187
        %v2204 = vpack.c.bf16 %v2188, %v2188
        %v2205 = vpack.c.bf16 %v2189, %v2189
        %v2206 = vpack.c.bf16 %v2190, %v2190
        %v2207 = vpack.c.bf16 %v2191, %v2191
        %v2208 = vpack.c.bf16 %v2192, %v2192
        %v2209 = vpack.c.bf16 %v2193, %v2193
        %v2210 = vpack.c.bf16 %v2194, %v2194
        %v2211 = vpack.c.bf16 %v2195, %v2195
        %2212 = vst.msk [vmem:[%s332] sm:$0xf] %vm337, %v2196
        %2213 = vst.msk [vmem:[%s332 + $0x4] sm:$0xf] %vm337, %v2197
        %2214 = vst.msk [vmem:[%s332 + $0x8] sm:$0xf] %vm337, %v2198
        %2215 = vst.msk [vmem:[%s332 + $0xc] sm:$0xf] %vm337, %v2199
        %2216 = vst.msk [vmem:[%s332 + $0x10] sm:$0xf] %vm337, %v2200
        %2217 = vst.msk [vmem:[%s332 + $0x14] sm:$0xf] %vm337, %v2201
        %2218 = vst.msk [vmem:[%s332 + $0x18] sm:$0xf] %vm337, %v2202
        %2219 = vst.msk [vmem:[%s332 + $0x1c] sm:$0xf] %vm337, %v2203
        %2220 = vst.msk [vmem:[%s332 + $0x20] sm:$0xf] %vm337, %v2204
        %2221 = vst.msk [vmem:[%s332 + $0x24] sm:$0xf] %vm337, %v2205
        %2222 = vst.msk [vmem:[%s332 + $0x28] sm:$0xf] %vm337, %v2206
        %2223 = vst.msk [vmem:[%s332 + $0x2c] sm:$0xf] %vm337, %v2207
        %2224 = vst.msk [vmem:[%s332 + $0x30] sm:$0xf] %vm337, %v2208
        %2225 = vst.msk [vmem:[%s332 + $0x34] sm:$0xf] %vm337, %v2209
        %2226 = vst.msk [vmem:[%s332 + $0x38] sm:$0xf] %vm337, %v2210
        %2227 = vst.msk [vmem:[%s332 + $0x3c] sm:$0xf] %vm337, %v2211
      $region64: #{srgan_g_forward.64} parent=43 // pred_fallthru
        _
      %s2228 = smul.u32 %s24, %s22
      %s2229 = smul.u32 8, %s2228
      %p2230 = scmp.lt.s32.totalorder %s23, 1
      %s2231 = scalar_select %p2230, %s23, 1
      %p2232 = scmp.lt.s32.totalorder %s2229, 15
      %s2233 = scalar_select %p2232, %s2229, 15
      %s2234 = smul.addr %s2233, 2
      %s2235 = smul.addr %s2231, 32
      %s2236 = sadd.s32 %s2234, %s2235
      %s2237 = smul.addr %s2236, 4
      %s2238 = scalar_lea.vmem %s6, %s2237
      // Predicated region
      $region65: #{srgan_g_forward.64} parent=43 // pred_check
        %p2239 = pneg %p198
      $region66: #{srgan_g_forward.64} parent=43 // pred_check_branch
        %2241 = sbr.rel (%p2239) target = $region68
      $region67: #{srgan_g_forward.64} parent=43 // pred_region
        %s2242 = smul.u32 %s24, %s22
        %s2243 = smul.u32 8, %s2242
      $region68: #{srgan_g_forward.64} parent=43 // pred_fallthru
        _
    $region44: #{srgan_g_forward.64} parent=5 // pred_fallthru
      _
    %p2244 = scmp.le.s32.totalorder 2, %s12
    // Predicated region
    $region69: #{srgan_g_forward.64} parent=5 // pred_check
      %p2245 = pneg %p2244
    $region70: #{srgan_g_forward.64} parent=5 // pred_check_branch
      %2247 = sbr.rel (%p2245) target = $region72
    $region71: #{srgan_g_forward.64} parent=5 // pred_region
      %s2248 = ssub.s32 %s12, 2
      // Predicated region
      $region73: #{srgan_g_forward.64} parent=71 // pred_check
        %p2249 = pneg %p204
      $region74: #{srgan_g_forward.64} parent=71 // pred_check_branch
        %2251 = sbr.rel (%p2249) target = $region76
      $region75: #{srgan_g_forward.64} parent=71 // pred_region
        %s2252 = smul.u32 %s27, %s25
        %s2253 = smul.u32 8, %s2252
        %p2254 = scmp.lt.s32.totalorder %s26, 1
        %s2255 = scalar_select %p2254, %s26, 1
        %p2256 = scmp.lt.s32.totalorder %s2253, 15
        %s2257 = scalar_select %p2256, %s2253, 15
        %s2258 = smul.addr %s2257, 2
        %s2259 = smul.addr %s2255, 32
        %s2260 = sadd.s32 %s2258, %s2259
        %s2261 = smul.addr %s2260, 4
        %s2262 = scalar_lea.vmem %s6, %s2261
      $region76: #{srgan_g_forward.64} parent=71 // pred_fallthru
        _
    $region72: #{srgan_g_forward.64} parent=5 // pred_fallthru
      _
  $region6: #{srgan_g_forward.64} parent=0 // loop_footer
    %s16 = sadd.s32 1, %s12
  $region7: #{srgan_g_forward.64} parent=0 // loop_footer_branch
    %11 = sbr.rel target = $region3
  $region8: #{srgan_g_forward.64} parent=0 // loop_exit
    _

// kernel: srgan_g_forward.89
$region0: #{srgan_g_forward.89}
  #allocation0 [shape = 'u32[]', space=smem, size = 0x4, offset = 0x4, fixed_abs, tag = 'smem constant byte address 0x4 - core index']
  #allocation1 [shape = 'u32[72,128]{1,0:T(1,128)}', space=vmem, size = 0x9000, scoped, tag = 'internal scratch']
  #allocation2 [shape = 'bf16[12,24,64]{2,1,0:T(8,128)(2,1)}', space=vmem, size = 0x12000, scoped, tag = 'scratch operand']
  #allocation3 [shape = 'f32[1,64]{1,0:T(1,128)}', space=vmem, size = 0x200, scoped, tag = 'scratch operand']
  #allocation4 [shape = 'f32[1,64]{1,0:T(1,128)}', space=vmem, size = 0x200, scoped, tag = 'scratch operand']
  #allocation5 [shape = 'f32[1,1]{1,0:T(1,128)S(1)}', space=vmem, size = 0x200, scoped, tag = 'scoped memory for srgan_g_forward.89']
  %s0 = inlined_call_operand.vmem [shape: bf16[2,16,16,64], index: 0, kind: input, shape index: {}]
  %s1 = inlined_call_operand.vmem [shape: bf16[576,64], index: 1, kind: input, shape index: {}]
  %s2 = inlined_call_operand.vmem [shape: f32[1,64], index: 2, kind: input, shape index: {}]
  %s3 = inlined_call_operand.vmem [shape: f32[1,64], index: 3, kind: input, shape index: {}]
  %s4 = inlined_call_operand.vmem [shape: f32[1,64], index: 4, kind: input, shape index: {}]
  %s5 = inlined_call_operand.vmem [shape: bf16[2,16,16,64], index: 5, kind: input, shape index: {}]
  %s6 = inlined_call_operand.vmem [shape: f32[1,1,64], index: 6, kind: input, shape index: {}]
  %s7 = inlined_call_operand.<no memory space> [shape: f32[1,1], index: 7, kind: input, shape index: {}]
  %s8 = inlined_call_operand.hbm [shape: f32[2,16,16], index: 8, kind: output, shape index: {}]
  %s9 = sld [smem:[#allocation0]]
  $region85: #{srgan_g_forward.89} parent=0
    _
  %s11 = ssub.s32 1, %s9
  %s12 = scalar_select 0, %s11, %s9
  %v13 = vstv %s7
  %14 = vst [vmem:[#allocation5] sm:$0x1] %v13
  $region1: #{srgan_g_forward.89} parent=0
    #allocation6 [shape = 'u8[8192]{0}', space=vmem, size = 0x2000, scoped, tag = 'output window, operand 0']
    #allocation7 [shape = 's32[2]{0}', space=sflag, size = 0x8, scoped, tag = 'scoped memory for srgan_g_forward.89']
    %15 = vsyncpa [#allocation7], 0
    %s16 = scalar_lea.sflag [#allocation7], 1
    %17 = vsyncpa %s16, 0
    loop: start=0, step=1, limit=10
    $region2: #{srgan_g_forward.89} parent=1 // loop_pre_header
      _
    $region3: #{srgan_g_forward.89} parent=1 // loop_header
      %s19 = sphi 0, %s23
      %p20 = scmp.ge.s32.totalorder %s19, 10
      %s26 = sphi 0, %s45
      %s27 = sphi 0, %s41
      %s28 = sphi 0, %s37
      %s29 = sphi 0, %s26
      %s30 = sphi 0, %s27
      %s31 = sphi 0, %s28
      %s32 = sphi 0, %s29
      %s33 = sphi 0, %s30
      %s34 = sphi 0, %s31
      %s48 = sphi 0, %s50
      %s51 = sphi 0, %s48
      %s52 = sphi 0, %s51
      %s68 = sphi 0, %s52
      %s72 = sphi 0, %s72
      %s74 = sphi 0, %s72
      %s75 = sphi 0, %s74
      %s89 = sphi 0, %s75
      %s93 = sphi 0, %s93
      %s95 = sphi 0, %s93
      %s96 = sphi 0, %s95
      %s110 = sphi 0, %s96
      %s114 = sphi 0, %s114
      %s116 = sphi 0, %s114
      %s117 = sphi 0, %s116
      %s131 = sphi 0, %s117
      %s135 = sphi 0, %s135
      %s137 = sphi 0, %s135
      %s138 = sphi 0, %s137
      %s152 = sphi 0, %s138
      %s162 = sphi 0, %s164
      %s165 = sphi 0, %s162
      %s166 = sphi 0, %s165
      %s182 = sphi 0, %s166
      %s186 = sphi 0, %s186
      %s188 = sphi 0, %s186
      %s189 = sphi 0, %s188
      %s203 = sphi 0, %s189
      %s207 = sphi 0, %s207
      %s209 = sphi 0, %s207
      %s210 = sphi 0, %s209
      %s224 = sphi 0, %s210
      %s234 = sphi 0, %s236
      %s237 = sphi 0, %s234
      %s238 = sphi 0, %s237
      %s254 = sphi 0, %s238
    $region4: #{srgan_g_forward.89} parent=1 // loop_header_branch
      %22 = sbr.rel (%p20) target = $region8
    $region5: #{srgan_g_forward.89} parent=1 // loop_body
      %s24 = ssub.s32 %s19, 1
      %s25 = ssub.s32 %s19, 2
      %s35 = sadd.s32 1, %s28
      %p36 = scmp.ge.s32.totalorder %s35, 2
      %s37 = scalar_select %p36, 0, %s35
      %s38 = sadd.s32 1, %s27
      %s39 = scalar_select %p36, %s38, %s27
      %p40 = scmp.ge.s32.totalorder %s39, 2
      %s41 = scalar_select %p40, 0, %s39
      %s42 = sadd.s32 1, %s26
      %s43 = scalar_select %p40, %s42, %s26
      %p44 = scmp.ge.s32.totalorder %s43, 2
      %s45 = scalar_select %p44, 0, %s43
      %s46 = ssub.s32 %s27, %s41
      %p47 = scmp.eq.s32.totalorder %s46, 0
      %s49 = sadd.s32 %s48, 1
      %s50 = scalar_select %p47, %s48, %s49
      %p53 = pneg %p47
      %p54 = scmp.eq.s32.totalorder %s19, 7
      %p55 = por %p53, %p54
      %p56 = scmp.ne.s32.totalorder %s48, %s51
      %p57 = scmp.eq.s32.totalorder %s19, 0
      %p58 = por %p56, %p57
      %p59 = scmp.ne.s32.totalorder %s48, %s51
      %p60 = scmp.eq.s32.totalorder %s24, 7
      %p61 = por %p59, %p60
      %p62 = scmp.ne.s32.totalorder %s51, %s52
      %p63 = scmp.eq.s32.totalorder %s24, 0
      %p64 = por %p62, %p63
      %p65 = scmp.ne.s32.totalorder %s51, %s52
      %p66 = scmp.eq.s32.totalorder %s25, 7
      %p67 = por %p65, %p66
      %p69 = scmp.ne.s32.totalorder %s52, %s68
      %p70 = scmp.eq.s32.totalorder %s25, 0
      %p71 = por %p69, %p70
      %s73 = sadd.s32 %s72, 1
      %p76 = scmp.eq.s32.totalorder %s19, 7
      %p77 = scmp.ne.s32.totalorder %s72, %s74
      %p78 = scmp.eq.s32.totalorder %s19, 0
      %p79 = por %p77, %p78
      %p80 = scmp.ne.s32.totalorder %s72, %s74
      %p81 = scmp.eq.s32.totalorder %s24, 7
      %p82 = por %p80, %p81
      %p83 = scmp.ne.s32.totalorder %s74, %s75
      %p84 = scmp.eq.s32.totalorder %s24, 0
      %p85 = por %p83, %p84
      %p86 = scmp.ne.s32.totalorder %s74, %s75
      %p87 = scmp.eq.s32.totalorder %s25, 7
      %p88 = por %p86, %p87
      %p90 = scmp.ne.s32.totalorder %s75, %s89
      %p91 = scmp.eq.s32.totalorder %s25, 0
      %p92 = por %p90, %p91
      %s94 = sadd.s32 %s93, 1
      %p97 = scmp.eq.s32.totalorder %s19, 7
      %p98 = scmp.ne.s32.totalorder %s93, %s95
      %p99 = scmp.eq.s32.totalorder %s19, 0
      %p100 = por %p98, %p99
      %p101 = scmp.ne.s32.totalorder %s93, %s95
      %p102 = scmp.eq.s32.totalorder %s24, 7
      %p103 = por %p101, %p102
      %p104 = scmp.ne.s32.totalorder %s95, %s96
      %p105 = scmp.eq.s32.totalorder %s24, 0
      %p106 = por %p104, %p105
      %p107 = scmp.ne.s32.totalorder %s95, %s96
      %p108 = scmp.eq.s32.totalorder %s25, 7
      %p109 = por %p107, %p108
      %p111 = scmp.ne.s32.totalorder %s96, %s110
      %p112 = scmp.eq.s32.totalorder %s25, 0
      %p113 = por %p111, %p112
      %s115 = sadd.s32 %s114, 1
      %p118 = scmp.eq.s32.totalorder %s19, 7
      %p119 = scmp.ne.s32.totalorder %s114, %s116
      %p120 = scmp.eq.s32.totalorder %s19, 0
      %p121 = por %p119, %p120
      %p122 = scmp.ne.s32.totalorder %s114, %s116
      %p123 = scmp.eq.s32.totalorder %s24, 7
      %p124 = por %p122, %p123
      %p125 = scmp.ne.s32.totalorder %s116, %s117
      %p126 = scmp.eq.s32.totalorder %s24, 0
      %p127 = por %p125, %p126
      %p128 = scmp.ne.s32.totalorder %s116, %s117
      %p129 = scmp.eq.s32.totalorder %s25, 7
      %p130 = por %p128, %p129
      %p132 = scmp.ne.s32.totalorder %s117, %s131
      %p133 = scmp.eq.s32.totalorder %s25, 0
      %p134 = por %p132, %p133
      %s136 = sadd.s32 %s135, 1
      %p139 = scmp.eq.s32.totalorder %s19, 7
      %p140 = scmp.ne.s32.totalorder %s135, %s137
      %p141 = scmp.eq.s32.totalorder %s19, 0
      %p142 = por %p140, %p141
      %p143 = scmp.ne.s32.totalorder %s135, %s137
      %p144 = scmp.eq.s32.totalorder %s24, 7
      %p145 = por %p143, %p144
      %p146 = scmp.ne.s32.totalorder %s137, %s138
      %p147 = scmp.eq.s32.totalorder %s24, 0
      %p148 = por %p146, %p147
      %p149 = scmp.ne.s32.totalorder %s137, %s138
      %p150 = scmp.eq.s32.totalorder %s25, 7
      %p151 = por %p149, %p150
      %p153 = scmp.ne.s32.totalorder %s138, %s152
      %p154 = scmp.eq.s32.totalorder %s25, 0
      %p155 = por %p153, %p154
      %s156 = smul.u32 %s28, %s26
      %s157 = smul.u32 %s37, %s45
      %s158 = ssub.s32 %s27, %s41
      %s159 = ssub.s32 %s156, %s157
      %s160 = sor.u32 %s158, %s159
      %p161 = scmp.eq.s32.totalorder %s160, 0
      %s163 = sadd.s32 %s162, 1
      %s164 = scalar_select %p161, %s162, %s163
      %p167 = pneg %p161
      %p168 = scmp.eq.s32.totalorder %s19, 7
      %p169 = por %p167, %p168
      %p170 = scmp.ne.s32.totalorder %s162, %s165
      %p171 = scmp.eq.s32.totalorder %s19, 0
      %p172 = por %p170, %p171
      %p173 = scmp.ne.s32.totalorder %s162, %s165
      %p174 = scmp.eq.s32.totalorder %s24, 7
      %p175 = por %p173, %p174
      %p176 = scmp.ne.s32.totalorder %s165, %s166
      %p177 = scmp.eq.s32.totalorder %s24, 0
      %p178 = por %p176, %p177
      %p179 = scmp.ne.s32.totalorder %s165, %s166
      %p180 = scmp.eq.s32.totalorder %s25, 7
      %p181 = por %p179, %p180
      %p183 = scmp.ne.s32.totalorder %s166, %s182
      %p184 = scmp.eq.s32.totalorder %s25, 0
      %p185 = por %p183, %p184
      %s187 = sadd.s32 %s186, 1
      %p190 = scmp.eq.s32.totalorder %s19, 7
      %p191 = scmp.ne.s32.totalorder %s186, %s188
      %p192 = scmp.eq.s32.totalorder %s19, 0
      %p193 = por %p191, %p192
      %p194 = scmp.ne.s32.totalorder %s186, %s188
      %p195 = scmp.eq.s32.totalorder %s24, 7
      %p196 = por %p194, %p195
      %p197 = scmp.ne.s32.totalorder %s188, %s189
      %p198 = scmp.eq.s32.totalorder %s24, 0
      %p199 = por %p197, %p198
      %p200 = scmp.ne.s32.totalorder %s188, %s189
      %p201 = scmp.eq.s32.totalorder %s25, 7
      %p202 = por %p200, %p201
      %p204 = scmp.ne.s32.totalorder %s189, %s203
      %p205 = scmp.eq.s32.totalorder %s25, 0
      %p206 = por %p204, %p205
      %s208 = sadd.s32 %s207, 1
      %p211 = scmp.eq.s32.totalorder %s19, 7
      %p212 = scmp.ne.s32.totalorder %s207, %s209
      %p213 = scmp.eq.s32.totalorder %s19, 0
      %p214 = por %p212, %p213
      %p215 = scmp.ne.s32.totalorder %s207, %s209
      %p216 = scmp.eq.s32.totalorder %s24, 7
      %p217 = por %p215, %p216
      %p218 = scmp.ne.s32.totalorder %s209, %s210
      %p219 = scmp.eq.s32.totalorder %s24, 0
      %p220 = por %p218, %p219
      %p221 = scmp.ne.s32.totalorder %s209, %s210
      %p222 = scmp.eq.s32.totalorder %s25, 7
      %p223 = por %p221, %p222
      %p225 = scmp.ne.s32.totalorder %s210, %s224
      %p226 = scmp.eq.s32.totalorder %s25, 0
      %p227 = por %p225, %p226
      %s228 = smul.u32 %s28, %s26
      %s229 = smul.u32 %s37, %s45
      %s230 = ssub.s32 %s27, %s41
      %s231 = ssub.s32 %s228, %s229
      %s232 = sor.u32 %s230, %s231
      %p233 = scmp.eq.s32.totalorder %s232, 0
      %s235 = sadd.s32 %s234, 1
      %s236 = scalar_select %p233, %s234, %s235
      %p239 = pneg %p233
      %p240 = scmp.eq.s32.totalorder %s19, 7
      %p241 = por %p239, %p240
      %p242 = scmp.ne.s32.totalorder %s234, %s237
      %p243 = scmp.eq.s32.totalorder %s19, 0
      %p244 = por %p242, %p243
      %p245 = scmp.ne.s32.totalorder %s234, %s237
      %p246 = scmp.eq.s32.totalorder %s24, 7
      %p247 = por %p245, %p246
      %p248 = scmp.ne.s32.totalorder %s237, %s238
      %p249 = scmp.eq.s32.totalorder %s24, 0
      %p250 = por %p248, %p249
      %p251 = scmp.ne.s32.totalorder %s237, %s238
      %p252 = scmp.eq.s32.totalorder %s25, 7
      %p253 = por %p251, %p252
      %p255 = scmp.ne.s32.totalorder %s238, %s254
      %p256 = scmp.eq.s32.totalorder %s25, 0
      %p257 = por %p255, %p256
      %p258 = scmp.le.s32.totalorder 1, %s19
      %p259 = scmp.lt.s32.totalorder %s19, 9
      %p260 = pnand %p258, %p259
      %p261 = pneg %p260
      // Predicated region
      $region9: #{srgan_g_forward.89} parent=5 // pred_check
        _
      $region10: #{srgan_g_forward.89} parent=5 // pred_check_branch
        %263 = sbr.rel (%p260) target = $region12
      $region11: #{srgan_g_forward.89} parent=5 // pred_region
        %s264 = ssub.s32 %s19, 1
        // Predicated region
        $region13: #{srgan_g_forward.89} parent=11 // pred_check
          %p265 = pneg %p85
        $region14: #{srgan_g_forward.89} parent=11 // pred_check_branch
          %267 = sbr.rel (%p265) target = $region16
        $region15: #{srgan_g_forward.89} parent=11 // pred_region
          _
        $region16: #{srgan_g_forward.89} parent=11 // pred_fallthru
          _
        // Predicated region
        $region17: #{srgan_g_forward.89} parent=11 // pred_check
          %p268 = pneg %p106
        $region18: #{srgan_g_forward.89} parent=11 // pred_check_branch
          %270 = sbr.rel (%p268) target = $region20
        $region19: #{srgan_g_forward.89} parent=11 // pred_region
          _
        $region20: #{srgan_g_forward.89} parent=11 // pred_fallthru
          _
        // Predicated region
        $region21: #{srgan_g_forward.89} parent=11 // pred_check
          %p271 = pneg %p127
        $region22: #{srgan_g_forward.89} parent=11 // pred_check_branch
          %273 = sbr.rel (%p271) target = $region24
        $region23: #{srgan_g_forward.89} parent=11 // pred_region
          _
        $region24: #{srgan_g_forward.89} parent=11 // pred_fallthru
          _
        // Predicated region
        $region25: #{srgan_g_forward.89} parent=11 // pred_check
          %p274 = pneg %p148
        $region26: #{srgan_g_forward.89} parent=11 // pred_check_branch
          %276 = sbr.rel (%p274) target = $region28
        $region27: #{srgan_g_forward.89} parent=11 // pred_region
          _
        $region28: #{srgan_g_forward.89} parent=11 // pred_fallthru
          _
        // Predicated region
        $region29: #{srgan_g_forward.89} parent=11 // pred_check
          %p277 = pneg %p199
        $region30: #{srgan_g_forward.89} parent=11 // pred_check_branch
          %279 = sbr.rel (%p277) target = $region32
        $region31: #{srgan_g_forward.89} parent=11 // pred_region
          _
        $region32: #{srgan_g_forward.89} parent=11 // pred_fallthru
          _
        // Predicated region
        $region33: #{srgan_g_forward.89} parent=11 // pred_check
          %p280 = pneg %p220
        $region34: #{srgan_g_forward.89} parent=11 // pred_check_branch
          %282 = sbr.rel (%p280) target = $region36
        $region35: #{srgan_g_forward.89} parent=11 // pred_region
          _
        $region36: #{srgan_g_forward.89} parent=11 // pred_fallthru
          _
      $region12: #{srgan_g_forward.89} parent=5 // pred_fallthru
        _
      %p283 = scmp.lt.s32.totalorder %s19, 8
      // Predicated region
      $region37: #{srgan_g_forward.89} parent=5 // pred_check
        %p284 = pneg %p283
      $region38: #{srgan_g_forward.89} parent=5 // pred_check_branch
        %286 = sbr.rel (%p284) target = $region40
      $region39: #{srgan_g_forward.89} parent=5 // pred_region
        // Predicated region
        $region41: #{srgan_g_forward.89} parent=39 // pred_check
          %p287 = pneg %p58
        $region42: #{srgan_g_forward.89} parent=39 // pred_check_branch
          %289 = sbr.rel (%p287) target = $region44
        $region43: #{srgan_g_forward.89} parent=39 // pred_region
          %p290 = scmp.lt.s32.totalorder %s27, 1
          %s291 = scalar_select %p290, %s27, 1
          %s292 = smul.addr %s291, 32
          %s293 = smul.addr %s292, 4
          %s294 = scalar_lea.vmem %s0, %s293
        $region44: #{srgan_g_forward.89} parent=39 // pred_fallthru
          _
        // Predicated region
        $region45: #{srgan_g_forward.89} parent=39 // pred_check
          %p295 = pneg %p172
        $region46: #{srgan_g_forward.89} parent=39 // pred_check_branch
          %297 = sbr.rel (%p295) target = $region48
        $region47: #{srgan_g_forward.89} parent=39 // pred_region
          %s298 = smul.u32 %s28, %s26
          %s299 = smul.u32 8, %s298
          %p300 = scmp.lt.s32.totalorder %s27, 1
          %s301 = scalar_select %p300, %s27, 1
          %p302 = scmp.lt.s32.totalorder %s299, 15
          %s303 = scalar_select %p302, %s299, 15
          %s304 = smul.addr %s303, 2
          %s305 = smul.addr %s301, 32
          %s306 = sadd.s32 %s304, %s305
          %s307 = smul.addr %s306, 4
          %s308 = scalar_lea.vmem %s5, %s307
          %s309 = smul.u32 %s28, %s26
          %s310 = smul.u32 8, %s309
        $region48: #{srgan_g_forward.89} parent=39 // pred_fallthru
          _
      $region40: #{srgan_g_forward.89} parent=5 // pred_fallthru
        _
      %p311 = scmp.le.s32.totalorder 1, %s19
      %p312 = scmp.lt.s32.totalorder %s19, 9
      %p313 = pnand %p311, %p312
      %p314 = pneg %p313
      // Predicated region
      $region49: #{srgan_g_forward.89} parent=5 // pred_check
        _
      $region50: #{srgan_g_forward.89} parent=5 // pred_check_branch
        %316 = sbr.rel (%p313) target = $region52
      $region51: #{srgan_g_forward.89} parent=5 // pred_region
        %s317 = ssub.s32 %s19, 1
        %p318 = scmp.lt.s32.totalorder %s30, 1
        %s319 = scalar_select %p318, %s30, 1
        %s320 = smul.addr %s319, 32
        %s321 = smul.addr %s320, 4
        %s322 = scalar_lea.vmem %s0, %s321
        %p323 = pneg %p64
        %p324 = pneg %p61
        %p325 = pneg %p85
        %p326 = pneg %p82
        %p327 = pneg %p106
        %p328 = pneg %p103
        %p329 = pneg %p127
        %p330 = pneg %p124
        %p331 = pneg %p148
        %p332 = pneg %p145
        %s333 = smul.u32 %s31, %s29
        %s334 = smul.u32 8, %s333
        %p335 = scmp.lt.s32.totalorder %s30, 1
        %s336 = scalar_select %p335, %s30, 1
        %p337 = scmp.lt.s32.totalorder %s334, 15
        %s338 = scalar_select %p337, %s334, 15
        %s339 = smul.addr %s338, 2
        %s340 = smul.addr %s336, 32
        %s341 = sadd.s32 %s339, %s340
        %s342 = smul.addr %s341, 4
        %s343 = scalar_lea.vmem %s5, %s342
        %p344 = pneg %p178
        %p345 = pneg %p175
        %p346 = pneg %p199
        %p347 = pneg %p196
        %p348 = pneg %p220
        %p349 = pneg %p217
        %p350 = pneg %p250
        %p351 = pneg %p247
        %s352 = sand.u32 %s237, 1
        %s353 = scalar_lea.sflag [#allocation7], %s352
        %s354 = sand.u32 %s237, 1
        %s355 = smul.addr %s354, 8
        %s356 = scalar_lea.vmem [#allocation6], %s355
        %p357 = scmp.lt.s32.totalorder %s30, 1
        %s358 = scalar_select %p357, %s30, 1
        %s359 = smul.addr %s358, 32
        %s360 = smul.addr %s359, 4
        %s361 = scalar_lea.vmem %s0, %s360
        %s362 = smul.u32 %s31, %s29
        %s363 = smul.u32 8, %s362
        %p364 = scmp.lt.s32.totalorder %s30, 1
        %s365 = scalar_select %p364, %s30, 1
        %p366 = scmp.lt.s32.totalorder %s363, 15
        %s367 = scalar_select %p366, %s363, 15
        %s368 = smul.addr %s367, 2
        %s369 = smul.addr %s365, 32
        %s370 = sadd.s32 %s368, %s369
        %s371 = smul.addr %s370, 4
        %s372 = scalar_lea.vmem %s5, %s371
        %s373 = smul.u32 %s31, %s29
        %s374 = smul.u32 8, %s373
        %s375 = smul.u32 %s31, %s29
        %p377 = scmp.eq.s32.totalorder %s29, 1
        %vm378 = vcmask 519168
        %379 = vst.msk [vmem:[#allocation2] sm:$0xf] %vm378, 0
        %380 = vst.msk [vmem:[#allocation2 + $0x4] sm:$0xf] %vm378, 0
        %381 = vst.msk [vmem:[#allocation2 + $0x8] sm:$0xf] %vm378, 0
        %382 = vst.msk [vmem:[#allocation2 + $0xc] sm:$0xf] %vm378, 0
        %383 = vst.msk [vmem:[#allocation2 + $0x10] sm:$0xf] %vm378, 0
        %384 = vst.msk [vmem:[#allocation2 + $0x14] sm:$0xf] %vm378, 0
        %385 = vst.msk [vmem:[#allocation2 + $0x18] sm:$0xf] %vm378, 0
        %386 = vst.msk [vmem:[#allocation2 + $0x1c] sm:$0xf] %vm378, 0
        %387 = vst.msk [vmem:[#allocation2 + $0x20] sm:$0xf] %vm378, 0
        %388 = vst.msk [vmem:[#allocation2 + $0x24] sm:$0xf] %vm378, 0
        %389 = vst.msk [vmem:[#allocation2 + $0x28] sm:$0xf] %vm378, 0
        %390 = vst.msk [vmem:[#allocation2 + $0x2c] sm:$0xf] %vm378, 0
        %391 = vst.msk [vmem:[#allocation2 + $0x30] sm:$0xf] %vm378, 0
        %392 = vst.msk [vmem:[#allocation2 + $0x34] sm:$0xf] %vm378, 0
        %393 = vst.msk [vmem:[#allocation2 + $0x38] sm:$0xf] %vm378, 0
        %394 = vst.msk [vmem:[#allocation2 + $0x3c] sm:$0xf] %vm378, 0
        %395 = vst.msk [vmem:[#allocation2 + $0x40] sm:$0xf] %vm378, 0
        %396 = vst.msk [vmem:[#allocation2 + $0x44] sm:$0xf] %vm378, 0
        %397 = vst.msk [vmem:[#allocation2 + $0x48] sm:$0xf] %vm378, 0
        %398 = vst.msk [vmem:[#allocation2 + $0x4c] sm:$0xf] %vm378, 0
        %399 = vst.msk [vmem:[#allocation2 + $0x50] sm:$0xf] %vm378, 0
        %400 = vst.msk [vmem:[#allocation2 + $0x54] sm:$0xf] %vm378, 0
        %401 = vst.msk [vmem:[#allocation2 + $0x58] sm:$0xf] %vm378, 0
        %402 = vst.msk [vmem:[#allocation2 + $0x5c] sm:$0xf] %vm378, 0
        %403 = vst.msk [vmem:[#allocation2 + $0x60] sm:$0xf] %vm378, 0
        %404 = vst.msk [vmem:[#allocation2 + $0x64] sm:$0xf] %vm378, 0
        %405 = vst.msk [vmem:[#allocation2 + $0x68] sm:$0xf] %vm378, 0
        %406 = vst.msk [vmem:[#allocation2 + $0x6c] sm:$0xf] %vm378, 0
        %407 = vst.msk [vmem:[#allocation2 + $0x70] sm:$0xf] %vm378, 0
        %408 = vst.msk [vmem:[#allocation2 + $0x74] sm:$0xf] %vm378, 0
        %409 = vst.msk [vmem:[#allocation2 + $0x78] sm:$0xf] %vm378, 0
        %410 = vst.msk [vmem:[#allocation2 + $0x7c] sm:$0xf] %vm378, 0
        %411 = vst.msk [vmem:[#allocation2 + $0x80] sm:$0xf] %vm378, 0
        %412 = vst.msk [vmem:[#allocation2 + $0x84] sm:$0xf] %vm378, 0
        %413 = vst.msk [vmem:[#allocation2 + $0x88] sm:$0xf] %vm378, 0
        %414 = vst.msk [vmem:[#allocation2 + $0x8c] sm:$0xf] %vm378, 0
        %s415 = smul.u32 %s31, 8
        %s416 = smul.u32 %s415, 2
        %s417 = smul.addr %s416, 4
        %s418 = scalar_lea.vmem %s361, %s417
        %v419 = vld [vmem:[%s418] sm:$0xf]
        %v420 = vld [vmem:[%s418 + $0x4] sm:$0xf]
        %v421 = vld [vmem:[%s418 + $0x8] sm:$0xf]
        %v422 = vld [vmem:[%s418 + $0xc] sm:$0xf]
        %v423 = vld [vmem:[%s418 + $0x10] sm:$0xf]
        %v424 = vld [vmem:[%s418 + $0x14] sm:$0xf]
        %v425 = vld [vmem:[%s418 + $0x18] sm:$0xf]
        %v426 = vld [vmem:[%s418 + $0x1c] sm:$0xf]
        %v427 = vld [vmem:[%s418 + $0x20] sm:$0xf]
        %v428 = vld [vmem:[%s418 + $0x24] sm:$0xf]
        %v429 = vld [vmem:[%s418 + $0x28] sm:$0xf]
        %v430 = vld [vmem:[%s418 + $0x2c] sm:$0xf]
        %v431 = vld [vmem:[%s418 + $0x30] sm:$0xf]
        %v432 = vld [vmem:[%s418 + $0x34] sm:$0xf]
        %v433 = vld [vmem:[%s418 + $0x38] sm:$0xf]
        %v434 = vld [vmem:[%s418 + $0x3c] sm:$0xf]
        %vm435 = vsmask.f32 256
        %vm436 = vsmask.f32 4368
        %vm437 = vmor %vm435, %vm436
        %v439 = vshrl.u32 %v419, 16
        %v441 = vrot.slane %v439, 7
        %v442 = vshll.u32 %v419, 16
        %v444 = vor.u32 %v441, %v442
        %v445 = vrot.slane %v441, 4
        %v447 = vshrl.u32 %v420, 16
        %v449 = vrot.slane %v447, 7
        %v450 = vshll.u32 %v420, 16
        %v452 = vor.u32 %v449, %v450
        %v453 = vsel %vm437, %v445, %v452
        %v454 = vrot.slane %v449, 4
        %v456 = vshrl.u32 %v421, 16
        %v458 = vrot.slane %v456, 7
        %v459 = vshll.u32 %v421, 16
        %v461 = vor.u32 %v458, %v459
        %v462 = vrot.slane %v458, 4
        %v464 = vshrl.u32 %v422, 16
        %v466 = vrot.slane %v464, 7
        %v467 = vshll.u32 %v422, 16
        %v469 = vor.u32 %v466, %v467
        %v470 = vsel %vm437, %v462, %v469
        %v471 = vrot.slane %v466, 4
        %v473 = vshrl.u32 %v423, 16
        %v475 = vrot.slane %v473, 7
        %v476 = vshll.u32 %v423, 16
        %v478 = vor.u32 %v475, %v476
        %v479 = vrot.slane %v475, 4
        %v481 = vshrl.u32 %v424, 16
        %v483 = vrot.slane %v481, 7
        %v484 = vshll.u32 %v424, 16
        %v486 = vor.u32 %v483, %v484
        %v487 = vsel %vm437, %v479, %v486
        %v488 = vrot.slane %v483, 4
        %v490 = vshrl.u32 %v425, 16
        %v492 = vrot.slane %v490, 7
        %v493 = vshll.u32 %v425, 16
        %v495 = vor.u32 %v492, %v493
        %v496 = vrot.slane %v492, 4
        %v498 = vshrl.u32 %v426, 16
        %v500 = vrot.slane %v498, 7
        %v501 = vshll.u32 %v426, 16
        %v503 = vor.u32 %v500, %v501
        %v504 = vsel %vm437, %v496, %v503
        %v505 = vrot.slane %v500, 4
        %v507 = vshrl.u32 %v427, 16
        %v509 = vrot.slane %v507, 7
        %v510 = vshll.u32 %v427, 16
        %v512 = vor.u32 %v509, %v510
        %v513 = vrot.slane %v509, 4
        %v515 = vshrl.u32 %v428, 16
        %v517 = vrot.slane %v515, 7
        %v518 = vshll.u32 %v428, 16
        %v520 = vor.u32 %v517, %v518
        %v521 = vsel %vm437, %v513, %v520
        %v522 = vrot.slane %v517, 4
        %v524 = vshrl.u32 %v429, 16
        %v526 = vrot.slane %v524, 7
        %v527 = vshll.u32 %v429, 16
        %v529 = vor.u32 %v526, %v527
        %v530 = vrot.slane %v526, 4
        %v532 = vshrl.u32 %v430, 16
        %v534 = vrot.slane %v532, 7
        %v535 = vshll.u32 %v430, 16
        %v537 = vor.u32 %v534, %v535
        %v538 = vsel %vm437, %v530, %v537
        %v539 = vrot.slane %v534, 4
        %v541 = vshrl.u32 %v431, 16
        %v543 = vrot.slane %v541, 7
        %v544 = vshll.u32 %v431, 16
        %v546 = vor.u32 %v543, %v544
        %v547 = vrot.slane %v543, 4
        %v549 = vshrl.u32 %v432, 16
        %v551 = vrot.slane %v549, 7
        %v552 = vshll.u32 %v432, 16
        %v554 = vor.u32 %v551, %v552
        %v555 = vsel %vm437, %v547, %v554
        %v556 = vrot.slane %v551, 4
        %v558 = vshrl.u32 %v433, 16
        %v560 = vrot.slane %v558, 7
        %v561 = vshll.u32 %v433, 16
        %v563 = vor.u32 %v560, %v561
        %v564 = vrot.slane %v560, 4
        %v566 = vshrl.u32 %v434, 16
        %v568 = vrot.slane %v566, 7
        %v569 = vshll.u32 %v434, 16
        %v571 = vor.u32 %v568, %v569
        %v572 = vsel %vm437, %v564, %v571
        %v573 = vrot.slane %v568, 4
        %s598 = scalar_lea.vmem [#allocation2], 12
        %vm599 = vcmask 519168
        %vm600 = vsmask.f32 7938
        %vm601 = vmand %vm599, %vm600
        %v602 = vld [vmem:[%s598] sm:$0xf]
        %v603 = vsel %vm601, %v444, %v602
        %604 = vst [vmem:[%s598] sm:$0xf] %v603
        %605 = vst.msk [vmem:[%s598 + $0x4] sm:$0xf] %vm378, %v453
        %vm606 = vcmask 516096
        %vm607 = vmand %vm606, %vm435
        %v608 = vld [vmem:[%s598 + $0x8] sm:$0x1]
        %v609 = vsel %vm607, %v454, %v608
        %610 = vst [vmem:[%s598 + $0x8] sm:$0x1] %v609
        %v611 = vld [vmem:[%s598 + $0xc] sm:$0xf]
        %v612 = vsel %vm601, %v461, %v611
        %613 = vst [vmem:[%s598 + $0xc] sm:$0xf] %v612
        %614 = vst.msk [vmem:[%s598 + $0x10] sm:$0xf] %vm378, %v470
        %v615 = vld [vmem:[%s598 + $0x14] sm:$0x1]
        %v616 = vsel %vm607, %v471, %v615
        %617 = vst [vmem:[%s598 + $0x14] sm:$0x1] %v616
        %v618 = vld [vmem:[%s598 + $0x18] sm:$0xf]
        %v619 = vsel %vm601, %v478, %v618
        %620 = vst [vmem:[%s598 + $0x18] sm:$0xf] %v619
        %621 = vst.msk [vmem:[%s598 + $0x1c] sm:$0xf] %vm378, %v487
        %v622 = vld [vmem:[%s598 + $0x20] sm:$0x1]
        %v623 = vsel %vm607, %v488, %v622
        %624 = vst [vmem:[%s598 + $0x20] sm:$0x1] %v623
        %v625 = vld [vmem:[%s598 + $0x24] sm:$0xf]
        %v626 = vsel %vm601, %v495, %v625
        %627 = vst [vmem:[%s598 + $0x24] sm:$0xf] %v626
        %628 = vst.msk [vmem:[%s598 + $0x28] sm:$0xf] %vm378, %v504
        %v629 = vld [vmem:[%s598 + $0x2c] sm:$0x1]
        %v630 = vsel %vm607, %v505, %v629
        %631 = vst [vmem:[%s598 + $0x2c] sm:$0x1] %v630
        %v632 = vld [vmem:[%s598 + $0x30] sm:$0xf]
        %v633 = vsel %vm601, %v512, %v632
        %634 = vst [vmem:[%s598 + $0x30] sm:$0xf] %v633
        %635 = vst.msk [vmem:[%s598 + $0x34] sm:$0xf] %vm378, %v521
        %v636 = vld [vmem:[%s598 + $0x38] sm:$0x1]
        %v637 = vsel %vm607, %v522, %v636
        %638 = vst [vmem:[%s598 + $0x38] sm:$0x1] %v637
        %v639 = vld [vmem:[%s598 + $0x3c] sm:$0xf]
        %v640 = vsel %vm601, %v529, %v639
        %641 = vst [vmem:[%s598 + $0x3c] sm:$0xf] %v640
        %642 = vst.msk [vmem:[%s598 + $0x40] sm:$0xf] %vm378, %v538
        %v643 = vld [vmem:[%s598 + $0x44] sm:$0x1]
        %v644 = vsel %vm607, %v539, %v643
        %645 = vst [vmem:[%s598 + $0x44] sm:$0x1] %v644
        %v646 = vld [vmem:[%s598 + $0x48] sm:$0xf]
        %v647 = vsel %vm601, %v546, %v646
        %648 = vst [vmem:[%s598 + $0x48] sm:$0xf] %v647
        %649 = vst.msk [vmem:[%s598 + $0x4c] sm:$0xf] %vm378, %v555
        %v650 = vld [vmem:[%s598 + $0x50] sm:$0x1]
        %v651 = vsel %vm607, %v556, %v650
        %652 = vst [vmem:[%s598 + $0x50] sm:$0x1] %v651
        %v653 = vld [vmem:[%s598 + $0x54] sm:$0xf]
        %v654 = vsel %vm601, %v563, %v653
        %655 = vst [vmem:[%s598 + $0x54] sm:$0xf] %v654
        %656 = vst.msk [vmem:[%s598 + $0x58] sm:$0xf] %vm378, %v572
        %v657 = vld [vmem:[%s598 + $0x5c] sm:$0x1]
        %v658 = vsel %vm607, %v573, %v657
        %659 = vst [vmem:[%s598 + $0x5c] sm:$0x1] %v658
        %p660 = scmp.gt.s32.totalorder %s31, 0
        // Predicated region
        $region53: #{srgan_g_forward.89} parent=51 // pred_check
          %p661 = pneg %p660
        $region54: #{srgan_g_forward.89} parent=51 // pred_check_branch
          %663 = sbr.rel (%p661) target = $region56
        $region55: #{srgan_g_forward.89} parent=51 // pred_region
          %s664 = ssub.s32 %s415, 1
          %s665 = smul.u32 %s664, 2
          %s666 = smul.addr %s665, 4
          %s667 = scalar_lea.vmem %s361, %s666
          %v668 = vld [vmem:[%s667] sm:$0xf]
          %v669 = vld [vmem:[%s667 + $0x4] sm:$0xf]
          %v671 = vshrl.u32 %v668, 16
          %v673 = vrot.slane %v671, 7
          %v674 = vshll.u32 %v668, 16
          %v676 = vor.u32 %v673, %v674
          %v677 = vrot.slane %v673, 4
          %v679 = vshrl.u32 %v669, 16
          %v681 = vrot.slane %v679, 7
          %v682 = vshll.u32 %v669, 16
          %v684 = vor.u32 %v681, %v682
          %v685 = vsel %vm437, %v677, %v684
          %v686 = vrot.slane %v681, 4
          %v690 = vld [vmem:[#allocation2] sm:$0xf]
          %v691 = vsel %vm601, %v676, %v690
          %692 = vst [vmem:[#allocation2] sm:$0xf] %v691
          %693 = vst.msk [vmem:[#allocation2 + $0x4] sm:$0xf] %vm378, %v685
          %v694 = vld [vmem:[#allocation2 + $0x8] sm:$0x1]
          %v695 = vsel %vm607, %v686, %v694
          %696 = vst [vmem:[#allocation2 + $0x8] sm:$0x1] %v695
        $region56: #{srgan_g_forward.89} parent=51 // pred_fallthru
          _
        %p697 = scmp.lt.s32.totalorder %s31, 1
        // Predicated region
        $region57: #{srgan_g_forward.89} parent=51 // pred_check
          %p698 = pneg %p697
        $region58: #{srgan_g_forward.89} parent=51 // pred_check_branch
          %700 = sbr.rel (%p698) target = $region60
        $region59: #{srgan_g_forward.89} parent=51 // pred_region
          %s701 = sadd.s32 %s415, 8
          %s702 = smul.u32 %s701, 2
          %s703 = smul.addr %s702, 4
          %s704 = scalar_lea.vmem %s361, %s703
          %v705 = vld [vmem:[%s704] sm:$0xf]
          %v706 = vld [vmem:[%s704 + $0x4] sm:$0xf]
          %v708 = vshrl.u32 %v705, 16
          %v710 = vrot.slane %v708, 7
          %v711 = vshll.u32 %v705, 16
          %v713 = vor.u32 %v710, %v711
          %v714 = vrot.slane %v710, 4
          %v716 = vshrl.u32 %v706, 16
          %v718 = vrot.slane %v716, 7
          %v719 = vshll.u32 %v706, 16
          %v721 = vor.u32 %v718, %v719
          %v722 = vsel %vm437, %v714, %v721
          %v723 = vrot.slane %v718, 4
          %s727 = scalar_lea.vmem [#allocation2], 108
          %v728 = vld [vmem:[%s727] sm:$0xf]
          %v729 = vsel %vm601, %v713, %v728
          %730 = vst [vmem:[%s727] sm:$0xf] %v729
          %731 = vst.msk [vmem:[%s727 + $0x4] sm:$0xf] %vm378, %v722
          %v732 = vld [vmem:[%s727 + $0x8] sm:$0x1]
          %v733 = vsel %vm607, %v723, %v732
          %734 = vst [vmem:[%s727 + $0x8] sm:$0x1] %v733
        $region60: #{srgan_g_forward.89} parent=51 // pred_fallthru
          _
        %v735 = vld [vmem:[#allocation2] sm:$0xf]
        %v736 = vld [vmem:[#allocation2 + $0x4] sm:$0xf]
        %v737 = vld [vmem:[#allocation2 + $0x8] sm:$0xf]
        %v738 = vld [vmem:[#allocation2 + $0xc] sm:$0xf]
        %v739 = vld [vmem:[#allocation2 + $0x10] sm:$0xf]
        %v740 = vld [vmem:[#allocation2 + $0x14] sm:$0xf]
        %v741 = vld [vmem:[#allocation2 + $0x18] sm:$0xf]
        %v742 = vld [vmem:[#allocation2 + $0x1c] sm:$0xf]
        %v743 = vld [vmem:[#allocation2 + $0x20] sm:$0xf]
        %v744 = vld [vmem:[#allocation2 + $0x24] sm:$0xf]
        %v745 = vld [vmem:[#allocation2 + $0x28] sm:$0xf]
        %v746 = vld [vmem:[#allocation2 + $0x2c] sm:$0xf]
        %v747 = vld [vmem:[#allocation2 + $0x30] sm:$0xf]
        %v748 = vld [vmem:[#allocation2 + $0x34] sm:$0xf]
        %v749 = vld [vmem:[#allocation2 + $0x38] sm:$0xf]
        %v750 = vld [vmem:[#allocation2 + $0x3c] sm:$0xf]
        %v751 = vld [vmem:[#allocation2 + $0x40] sm:$0xf]
        %v752 = vld [vmem:[#allocation2 + $0x44] sm:$0xf]
        %v753 = vld [vmem:[#allocation2 + $0x48] sm:$0xf]
        %v754 = vld [vmem:[#allocation2 + $0x4c] sm:$0xf]
        %v755 = vld [vmem:[#allocation2 + $0x50] sm:$0xf]
        %v756 = vld [vmem:[#allocation2 + $0x54] sm:$0xf]
        %v757 = vld [vmem:[#allocation2 + $0x58] sm:$0xf]
        %v758 = vld [vmem:[#allocation2 + $0x5c] sm:$0xf]
        %v759 = vld [vmem:[#allocation2 + $0x60] sm:$0xf]
        %v760 = vld [vmem:[#allocation2 + $0x64] sm:$0xf]
        %v761 = vld [vmem:[#allocation2 + $0x68] sm:$0xf]
        %v762 = vld [vmem:[#allocation2 + $0x6c] sm:$0xf]
        %v763 = vld [vmem:[#allocation2 + $0x70] sm:$0xf]
        %v764 = vld [vmem:[#allocation2 + $0x74] sm:$0xf]
        %v765 = vld [vmem:[#allocation2 + $0x78] sm:$0xf]
        %v790 = vunpack.c.l.b16 %v735
        %v791 = vunpack.c.l.b16 %v736
        %v792 = vunpack.c.l.b16 %v737
        %v793 = vunpack.c.l.b16 %v738
        %v794 = vunpack.c.l.b16 %v739
        %v795 = vunpack.c.l.b16 %v740
        %v796 = vunpack.c.l.b16 %v741
        %v797 = vunpack.c.l.b16 %v742
        %v798 = vunpack.c.l.b16 %v743
        %v799 = vunpack.c.l.b16 %v744
        %v800 = vunpack.c.l.b16 %v745
        %v801 = vunpack.c.l.b16 %v746
        %v802 = vunpack.c.l.b16 %v747
        %v803 = vunpack.c.l.b16 %v748
        %v804 = vunpack.c.l.b16 %v749
        %v805 = vunpack.c.l.b16 %v750
        %v806 = vunpack.c.l.b16 %v751
        %v807 = vunpack.c.l.b16 %v752
        %v808 = vunpack.c.l.b16 %v753
        %v809 = vunpack.c.l.b16 %v754
        %v810 = vunpack.c.l.b16 %v755
        %v811 = vunpack.c.l.b16 %v756
        %v812 = vunpack.c.l.b16 %v757
        %v813 = vunpack.c.l.b16 %v758
        %v814 = vpack.c.b16 %v791, %v790
        %v815 = vpack.c.b16 %v793, %v792
        %v816 = vpack.c.b16 %v795, %v794
        %v817 = vpack.c.b16 %v797, %v796
        %v818 = vpack.c.b16 %v799, %v798
        %v819 = vpack.c.b16 %v801, %v800
        %v820 = vpack.c.b16 %v803, %v802
        %v821 = vpack.c.b16 %v805, %v804
        %v822 = vpack.c.b16 %v807, %v806
        %v823 = vpack.c.b16 %v809, %v808
        %v824 = vpack.c.b16 %v811, %v810
        %v825 = vpack.c.b16 %v813, %v812
        %v827 = vunpack.c.l.b16 %v759
        %v828 = vpack.c.b16 %v827, %v827
        %vm829 = vsmask.f32 7424
        %v831 = vshrl.u32 %v814, 16
        %v833 = vshll.u32 %v814, 16
        %v835 = vrot.slane %v833, 1
        %v836 = vor.u32 %v831, %v835
        %v838 = vshll.u32 %v815, 16
        %v840 = vrot.slane %v838, 1
        %v841 = vsel %vm829, %v836, %v840
        %v842 = vshrl.u32 %v815, 16
        %v844 = vor.u32 %v842, %v840
        %v846 = vshll.u32 %v816, 16
        %v848 = vrot.slane %v846, 1
        %v849 = vsel %vm829, %v844, %v848
        %v850 = vshrl.u32 %v816, 16
        %v852 = vor.u32 %v850, %v848
        %v854 = vshll.u32 %v817, 16
        %v856 = vrot.slane %v854, 1
        %v857 = vsel %vm829, %v852, %v856
        %v858 = vshrl.u32 %v817, 16
        %v860 = vor.u32 %v858, %v856
        %v862 = vshll.u32 %v818, 16
        %v864 = vrot.slane %v862, 1
        %v865 = vsel %vm829, %v860, %v864
        %v866 = vshrl.u32 %v818, 16
        %v868 = vor.u32 %v866, %v864
        %v870 = vshll.u32 %v819, 16
        %v872 = vrot.slane %v870, 1
        %v873 = vsel %vm829, %v868, %v872
        %v874 = vshrl.u32 %v819, 16
        %v876 = vor.u32 %v874, %v872
        %v878 = vshll.u32 %v820, 16
        %v880 = vrot.slane %v878, 1
        %v881 = vsel %vm829, %v876, %v880
        %v882 = vshrl.u32 %v820, 16
        %v884 = vor.u32 %v882, %v880
        %v886 = vshll.u32 %v821, 16
        %v888 = vrot.slane %v886, 1
        %v889 = vsel %vm829, %v884, %v888
        %v890 = vshrl.u32 %v821, 16
        %v892 = vor.u32 %v890, %v888
        %v894 = vshll.u32 %v822, 16
        %v896 = vrot.slane %v894, 1
        %v897 = vsel %vm829, %v892, %v896
        %v898 = vshrl.u32 %v822, 16
        %v900 = vor.u32 %v898, %v896
        %v902 = vshll.u32 %v823, 16
        %v904 = vrot.slane %v902, 1
        %v905 = vsel %vm829, %v900, %v904
        %v906 = vshrl.u32 %v823, 16
        %v908 = vor.u32 %v906, %v904
        %v910 = vshll.u32 %v824, 16
        %v912 = vrot.slane %v910, 1
        %v913 = vsel %vm829, %v908, %v912
        %v914 = vshrl.u32 %v824, 16
        %v916 = vor.u32 %v914, %v912
        %v918 = vshll.u32 %v825, 16
        %v920 = vrot.slane %v918, 1
        %v921 = vsel %vm829, %v916, %v920
        %v922 = vshrl.u32 %v825, 16
        %v924 = vor.u32 %v922, %v920
        %v926 = vshll.u32 %v828, 16
        %v928 = vrot.slane %v926, 1
        %v929 = vsel %vm829, %v924, %v928
        %930 = vrot.lane.b32.xlu0 %v841, 64
        %v931 = vpop.permute.xlu0 %930
        %932 = vrot.lane.b32.xlu0 %v849, 64
        %v933 = vpop.permute.xlu0 %932
        %934 = vrot.lane.b32.xlu0 %v857, 64
        %v935 = vpop.permute.xlu0 %934
        %936 = vrot.lane.b32.xlu0 %v865, 64
        %v937 = vpop.permute.xlu0 %936
        %938 = vrot.lane.b32.xlu0 %v873, 64
        %v939 = vpop.permute.xlu0 %938
        %940 = vrot.lane.b32.xlu0 %v881, 64
        %v941 = vpop.permute.xlu0 %940
        %942 = vrot.lane.b32.xlu0 %v889, 64
        %v943 = vpop.permute.xlu0 %942
        %944 = vrot.lane.b32.xlu0 %v897, 64
        %v945 = vpop.permute.xlu0 %944
        %946 = vrot.lane.b32.xlu0 %v905, 64
        %v947 = vpop.permute.xlu0 %946
        %948 = vrot.lane.b32.xlu0 %v913, 64
        %v949 = vpop.permute.xlu0 %948
        %950 = vrot.lane.b32.xlu0 %v921, 64
        %v951 = vpop.permute.xlu0 %950
        %952 = vrot.lane.b32.xlu0 %v929, 64
        %v953 = vpop.permute.xlu0 %952
        %vm954 = vcmask 1046528
        %v955 = vrot.slane %v814, 1
        %v956 = vrot.slane %v815, 1
        %v957 = vsel %vm954, %v955, %v956
        %v958 = vrot.slane %v816, 1
        %v959 = vsel %vm954, %v956, %v958
        %v960 = vrot.slane %v817, 1
        %v961 = vsel %vm954, %v958, %v960
        %v962 = vrot.slane %v818, 1
        %v963 = vsel %vm954, %v960, %v962
        %v964 = vrot.slane %v819, 1
        %v965 = vsel %vm954, %v962, %v964
        %v966 = vrot.slane %v820, 1
        %v967 = vsel %vm954, %v964, %v966
        %v968 = vrot.slane %v821, 1
        %v969 = vsel %vm954, %v966, %v968
        %v970 = vrot.slane %v822, 1
        %v971 = vsel %vm954, %v968, %v970
        %v972 = vrot.slane %v823, 1
        %v973 = vsel %vm954, %v970, %v972
        %v974 = vrot.slane %v824, 1
        %v975 = vsel %vm954, %v972, %v974
        %v976 = vrot.slane %v825, 1
        %v977 = vsel %vm954, %v974, %v976
        %v978 = vrot.slane %v828, 1
        %v979 = vsel %vm954, %v976, %v978
        %v982 = vunpack.c.l.b16 %v760
        %v983 = vunpack.c.l.b16 %v761
        %v984 = vpack.c.b16 %v794, %v793
        %v985 = vpack.c.b16 %v796, %v795
        %v986 = vpack.c.b16 %v798, %v797
        %v987 = vpack.c.b16 %v800, %v799
        %v988 = vpack.c.b16 %v802, %v801
        %v989 = vpack.c.b16 %v804, %v803
        %v990 = vpack.c.b16 %v806, %v805
        %v991 = vpack.c.b16 %v808, %v807
        %v992 = vpack.c.b16 %v810, %v809
        %v993 = vpack.c.b16 %v812, %v811
        %v994 = vpack.c.b16 %v827, %v813
        %v995 = vpack.c.b16 %v983, %v982
        %996 = vrot.lane.b32.xlu0 %v984, 64
        %v997 = vpop.permute.xlu0 %996
        %998 = vrot.lane.b32.xlu0 %v985, 64
        %v999 = vpop.permute.xlu0 %998
        %1000 = vrot.lane.b32.xlu0 %v986, 64
        %v1001 = vpop.permute.xlu0 %1000
        %1002 = vrot.lane.b32.xlu0 %v987, 64
        %v1003 = vpop.permute.xlu0 %1002
        %1004 = vrot.lane.b32.xlu0 %v988, 64
        %v1005 = vpop.permute.xlu0 %1004
        %1006 = vrot.lane.b32.xlu0 %v989, 64
        %v1007 = vpop.permute.xlu0 %1006
        %1008 = vrot.lane.b32.xlu0 %v990, 64
        %v1009 = vpop.permute.xlu0 %1008
        %1010 = vrot.lane.b32.xlu0 %v991, 64
        %v1011 = vpop.permute.xlu0 %1010
        %1012 = vrot.lane.b32.xlu0 %v992, 64
        %v1013 = vpop.permute.xlu0 %1012
        %1014 = vrot.lane.b32.xlu0 %v993, 64
        %v1015 = vpop.permute.xlu0 %1014
        %1016 = vrot.lane.b32.xlu0 %v994, 64
        %v1017 = vpop.permute.xlu0 %1016
        %1018 = vrot.lane.b32.xlu0 %v995, 64
        %v1019 = vpop.permute.xlu0 %1018
        %v1021 = vunpack.c.l.b16 %v762
        %v1022 = vpack.c.b16 %v1021, %v1021
        %v1024 = vshrl.u32 %v984, 16
        %v1026 = vshll.u32 %v984, 16
        %v1028 = vrot.slane %v1026, 1
        %v1029 = vor.u32 %v1024, %v1028
        %v1031 = vshll.u32 %v985, 16
        %v1033 = vrot.slane %v1031, 1
        %v1034 = vsel %vm829, %v1029, %v1033
        %v1035 = vshrl.u32 %v985, 16
        %v1037 = vor.u32 %v1035, %v1033
        %v1039 = vshll.u32 %v986, 16
        %v1041 = vrot.slane %v1039, 1
        %v1042 = vsel %vm829, %v1037, %v1041
        %v1043 = vshrl.u32 %v986, 16
        %v1045 = vor.u32 %v1043, %v1041
        %v1047 = vshll.u32 %v987, 16
        %v1049 = vrot.slane %v1047, 1
        %v1050 = vsel %vm829, %v1045, %v1049
        %v1051 = vshrl.u32 %v987, 16
        %v1053 = vor.u32 %v1051, %v1049
        %v1055 = vshll.u32 %v988, 16
        %v1057 = vrot.slane %v1055, 1
        %v1058 = vsel %vm829, %v1053, %v1057
        %v1059 = vshrl.u32 %v988, 16
        %v1061 = vor.u32 %v1059, %v1057
        %v1063 = vshll.u32 %v989, 16
        %v1065 = vrot.slane %v1063, 1
        %v1066 = vsel %vm829, %v1061, %v1065
        %v1067 = vshrl.u32 %v989, 16
        %v1069 = vor.u32 %v1067, %v1065
        %v1071 = vshll.u32 %v990, 16
        %v1073 = vrot.slane %v1071, 1
        %v1074 = vsel %vm829, %v1069, %v1073
        %v1075 = vshrl.u32 %v990, 16
        %v1077 = vor.u32 %v1075, %v1073
        %v1079 = vshll.u32 %v991, 16
        %v1081 = vrot.slane %v1079, 1
        %v1082 = vsel %vm829, %v1077, %v1081
        %v1083 = vshrl.u32 %v991, 16
        %v1085 = vor.u32 %v1083, %v1081
        %v1087 = vshll.u32 %v992, 16
        %v1089 = vrot.slane %v1087, 1
        %v1090 = vsel %vm829, %v1085, %v1089
        %v1091 = vshrl.u32 %v992, 16
        %v1093 = vor.u32 %v1091, %v1089
        %v1095 = vshll.u32 %v993, 16
        %v1097 = vrot.slane %v1095, 1
        %v1098 = vsel %vm829, %v1093, %v1097
        %v1099 = vshrl.u32 %v993, 16
        %v1101 = vor.u32 %v1099, %v1097
        %v1103 = vshll.u32 %v994, 16
        %v1105 = vrot.slane %v1103, 1
        %v1106 = vsel %vm829, %v1101, %v1105
        %v1107 = vshrl.u32 %v994, 16
        %v1109 = vor.u32 %v1107, %v1105
        %v1111 = vshll.u32 %v995, 16
        %v1113 = vrot.slane %v1111, 1
        %v1114 = vsel %vm829, %v1109, %v1113
        %v1115 = vshrl.u32 %v995, 16
        %v1117 = vor.u32 %v1115, %v1113
        %v1119 = vshll.u32 %v1022, 16
        %v1121 = vrot.slane %v1119, 1
        %v1122 = vsel %vm829, %v1117, %v1121
        %v1123 = vrot.slane %v984, 1
        %v1124 = vrot.slane %v985, 1
        %v1125 = vsel %vm954, %v1123, %v1124
        %v1126 = vrot.slane %v986, 1
        %v1127 = vsel %vm954, %v1124, %v1126
        %v1128 = vrot.slane %v987, 1
        %v1129 = vsel %vm954, %v1126, %v1128
        %v1130 = vrot.slane %v988, 1
        %v1131 = vsel %vm954, %v1128, %v1130
        %v1132 = vrot.slane %v989, 1
        %v1133 = vsel %vm954, %v1130, %v1132
        %v1134 = vrot.slane %v990, 1
        %v1135 = vsel %vm954, %v1132, %v1134
        %v1136 = vrot.slane %v991, 1
        %v1137 = vsel %vm954, %v1134, %v1136
        %v1138 = vrot.slane %v992, 1
        %v1139 = vsel %vm954, %v1136, %v1138
        %v1140 = vrot.slane %v993, 1
        %v1141 = vsel %vm954, %v1138, %v1140
        %v1142 = vrot.slane %v994, 1
        %v1143 = vsel %vm954, %v1140, %v1142
        %v1144 = vrot.slane %v995, 1
        %v1145 = vsel %vm954, %v1142, %v1144
        %v1146 = vrot.slane %v1022, 1
        %v1147 = vsel %vm954, %v1144, %v1146
        %1148 = vrot.lane.b32.xlu0 %v1125, 64
        %v1149 = vpop.permute.xlu0 %1148
        %1150 = vrot.lane.b32.xlu0 %v1127, 64
        %v1151 = vpop.permute.xlu0 %1150
        %1152 = vrot.lane.b32.xlu0 %v1129, 64
        %v1153 = vpop.permute.xlu0 %1152
        %1154 = vrot.lane.b32.xlu0 %v1131, 64
        %v1155 = vpop.permute.xlu0 %1154
        %1156 = vrot.lane.b32.xlu0 %v1133, 64
        %v1157 = vpop.permute.xlu0 %1156
        %1158 = vrot.lane.b32.xlu0 %v1135, 64
        %v1159 = vpop.permute.xlu0 %1158
        %1160 = vrot.lane.b32.xlu0 %v1137, 64
        %v1161 = vpop.permute.xlu0 %1160
        %1162 = vrot.lane.b32.xlu0 %v1139, 64
        %v1163 = vpop.permute.xlu0 %1162
        %1164 = vrot.lane.b32.xlu0 %v1141, 64
        %v1165 = vpop.permute.xlu0 %1164
        %1166 = vrot.lane.b32.xlu0 %v1143, 64
        %v1167 = vpop.permute.xlu0 %1166
        %1168 = vrot.lane.b32.xlu0 %v1145, 64
        %v1169 = vpop.permute.xlu0 %1168
        %1170 = vrot.lane.b32.xlu0 %v1147, 64
        %v1171 = vpop.permute.xlu0 %1170
        %v1174 = vunpack.c.l.b16 %v763
        %v1175 = vunpack.c.l.b16 %v764
        %v1176 = vpack.c.b16 %v982, %v827
        %v1177 = vpack.c.b16 %v1021, %v983
        %v1178 = vpack.c.b16 %v1175, %v1174
        %v1180 = vunpack.c.l.b16 %v765
        %v1181 = vpack.c.b16 %v1180, %v1180
        %v1183 = vshll.u32 %v1176, 16
        %v1185 = vrot.slane %v1183, 1
        %v1186 = vsel %vm829, %v924, %v1185
        %v1187 = vshrl.u32 %v1176, 16
        %v1189 = vor.u32 %v1187, %v1185
        %v1191 = vshll.u32 %v1177, 16
        %v1193 = vrot.slane %v1191, 1
        %v1194 = vsel %vm829, %v1189, %v1193
        %v1195 = vshrl.u32 %v1177, 16
        %v1197 = vor.u32 %v1195, %v1193
        %v1199 = vshll.u32 %v1178, 16
        %v1201 = vrot.slane %v1199, 1
        %v1202 = vsel %vm829, %v1197, %v1201
        %v1203 = vshrl.u32 %v1178, 16
        %v1205 = vor.u32 %v1203, %v1201
        %v1207 = vshll.u32 %v1181, 16
        %v1209 = vrot.slane %v1207, 1
        %v1210 = vsel %vm829, %v1205, %v1209
        %1211 = vrot.lane.b32.xlu0 %v1186, 64
        %v1212 = vpop.permute.xlu0 %1211
        %1213 = vrot.lane.b32.xlu0 %v1194, 64
        %v1214 = vpop.permute.xlu0 %1213
        %1215 = vrot.lane.b32.xlu0 %v1202, 64
        %v1216 = vpop.permute.xlu0 %1215
        %1217 = vrot.lane.b32.xlu0 %v1210, 64
        %v1218 = vpop.permute.xlu0 %1217
        %v1219 = vrot.slane %v1176, 1
        %v1220 = vsel %vm954, %v976, %v1219
        %v1221 = vrot.slane %v1177, 1
        %v1222 = vsel %vm954, %v1219, %v1221
        %v1223 = vrot.slane %v1178, 1
        %v1224 = vsel %vm954, %v1221, %v1223
        %v1225 = vrot.slane %v1181, 1
        %v1226 = vsel %vm954, %v1223, %v1225
        %vm1227 = vcmask 523264
        %v1229 = vsel %vm1227, %v814, %v931
        %v1232 = vsel %vm1227, %v815, %v933
        %v1235 = vsel %vm1227, %v816, %v935
        %v1238 = vsel %vm1227, %v817, %v937
        %v1241 = vsel %vm1227, %v818, %v939
        %v1244 = vsel %vm1227, %v819, %v941
        %v1247 = vsel %vm1227, %v820, %v943
        %v1250 = vsel %vm1227, %v821, %v945
        %v1253 = vsel %vm1227, %v822, %v947
        %v1256 = vsel %vm1227, %v823, %v949
        %v1259 = vsel %vm1227, %v824, %v951
        %v1262 = vsel %vm1227, %v825, %v953
        %v1266 = vsel %vm1227, %v957, %v997
        %v1270 = vsel %vm1227, %v959, %v999
        %v1274 = vsel %vm1227, %v961, %v1001
        %v1278 = vsel %vm1227, %v963, %v1003
        %v1282 = vsel %vm1227, %v965, %v1005
        %v1286 = vsel %vm1227, %v967, %v1007
        %v1290 = vsel %vm1227, %v969, %v1009
        %v1294 = vsel %vm1227, %v971, %v1011
        %v1298 = vsel %vm1227, %v973, %v1013
        %v1302 = vsel %vm1227, %v975, %v1015
        %v1306 = vsel %vm1227, %v977, %v1017
        %v1310 = vsel %vm1227, %v979, %v1019
        %v1314 = vsel %vm1227, %v1034, %v1149
        %v1318 = vsel %vm1227, %v1042, %v1151
        %v1322 = vsel %vm1227, %v1050, %v1153
        %v1326 = vsel %vm1227, %v1058, %v1155
        %v1330 = vsel %vm1227, %v1066, %v1157
        %v1334 = vsel %vm1227, %v1074, %v1159
        %v1338 = vsel %vm1227, %v1082, %v1161
        %v1342 = vsel %vm1227, %v1090, %v1163
        %v1346 = vsel %vm1227, %v1098, %v1165
        %v1350 = vsel %vm1227, %v1106, %v1167
        %v1354 = vsel %vm1227, %v1114, %v1169
        %v1358 = vsel %vm1227, %v1122, %v1171
        %v1361 = vsel %vm1227, %v825, %v1212
        %v1364 = vsel %vm1227, %v1176, %v1214
        %v1367 = vsel %vm1227, %v1177, %v1216
        %v1370 = vsel %vm1227, %v1178, %v1218
        %v1372 = vld [vmem:[%s1] sm:$0xf]
        %v1373 = vld [vmem:[%s1 + $0x4] sm:$0xf]
        %v1374 = vld [vmem:[%s1 + $0x8] sm:$0xf]
        %v1375 = vld [vmem:[%s1 + $0xc] sm:$0xf]
        %v1376 = vld [vmem:[%s1 + $0x10] sm:$0xf]
        %v1377 = vld [vmem:[%s1 + $0x14] sm:$0xf]
        %v1378 = vld [vmem:[%s1 + $0x18] sm:$0xf]
        %v1379 = vld [vmem:[%s1 + $0x1c] sm:$0xf]
        %v1380 = vld [vmem:[%s1 + $0x20] sm:$0xf]
        %v1381 = vld [vmem:[%s1 + $0x24] sm:$0xf]
        %v1382 = vld [vmem:[%s1 + $0x28] sm:$0xf]
        %v1383 = vld [vmem:[%s1 + $0x2c] sm:$0xf]
        %v1384 = vld [vmem:[%s1 + $0x30] sm:$0xf]
        %v1385 = vld [vmem:[%s1 + $0x34] sm:$0xf]
        %v1386 = vld [vmem:[%s1 + $0x38] sm:$0xf]
        %v1387 = vld [vmem:[%s1 + $0x3c] sm:$0xf]
        %v1388 = vld [vmem:[%s1 + $0x40] sm:$0xf]
        %v1389 = vld [vmem:[%s1 + $0x44] sm:$0xf]
        %v1390 = vld [vmem:[%s1 + $0x48] sm:$0xf]
        %v1391 = vld [vmem:[%s1 + $0x4c] sm:$0xf]
        %v1392 = vld [vmem:[%s1 + $0x50] sm:$0xf]
        %v1393 = vld [vmem:[%s1 + $0x54] sm:$0xf]
        %v1394 = vld [vmem:[%s1 + $0x58] sm:$0xf]
        %v1395 = vld [vmem:[%s1 + $0x5c] sm:$0xf]
        %v1396 = vld [vmem:[%s1 + $0x60] sm:$0xf]
        %v1397 = vld [vmem:[%s1 + $0x64] sm:$0xf]
        %v1398 = vld [vmem:[%s1 + $0x68] sm:$0xf]
        %v1399 = vld [vmem:[%s1 + $0x6c] sm:$0xf]
        %v1400 = vld [vmem:[%s1 + $0x70] sm:$0xf]
        %v1401 = vld [vmem:[%s1 + $0x74] sm:$0xf]
        %v1402 = vld [vmem:[%s1 + $0x78] sm:$0xf]
        %v1403 = vld [vmem:[%s1 + $0x7c] sm:$0xf]
        %v1404 = vld [vmem:[%s1 + $0x80] sm:$0xf]
        %v1405 = vld [vmem:[%s1 + $0x84] sm:$0xf]
        %v1406 = vld [vmem:[%s1 + $0x88] sm:$0xf]
        %v1407 = vld [vmem:[%s1 + $0x8c] sm:$0xf]
        %v1408 = vld [vmem:[%s1 + $0x90] sm:$0xf]
        %v1409 = vld [vmem:[%s1 + $0x94] sm:$0xf]
        %v1410 = vld [vmem:[%s1 + $0x98] sm:$0xf]
        %v1411 = vld [vmem:[%s1 + $0x9c] sm:$0xf]
        %v1412 = vld [vmem:[%s1 + $0xa0] sm:$0xf]
        %v1413 = vld [vmem:[%s1 + $0xa4] sm:$0xf]
        %v1414 = vld [vmem:[%s1 + $0xa8] sm:$0xf]
        %v1415 = vld [vmem:[%s1 + $0xac] sm:$0xf]
        %v1416 = vld [vmem:[%s1 + $0xb0] sm:$0xf]
        %v1417 = vld [vmem:[%s1 + $0xb4] sm:$0xf]
        %v1418 = vld [vmem:[%s1 + $0xb8] sm:$0xf]
        %v1419 = vld [vmem:[%s1 + $0xbc] sm:$0xf]
        %v1420 = vld [vmem:[%s1 + $0xc0] sm:$0xf]
        %v1421 = vld [vmem:[%s1 + $0xc4] sm:$0xf]
        %v1422 = vld [vmem:[%s1 + $0xc8] sm:$0xf]
        %v1423 = vld [vmem:[%s1 + $0xcc] sm:$0xf]
        %v1424 = vld [vmem:[%s1 + $0xd0] sm:$0xf]
        %v1425 = vld [vmem:[%s1 + $0xd4] sm:$0xf]
        %v1426 = vld [vmem:[%s1 + $0xd8] sm:$0xf]
        %v1427 = vld [vmem:[%s1 + $0xdc] sm:$0xf]
        %v1428 = vld [vmem:[%s1 + $0xe0] sm:$0xf]
        %v1429 = vld [vmem:[%s1 + $0xe4] sm:$0xf]
        %v1430 = vld [vmem:[%s1 + $0xe8] sm:$0xf]
        %v1431 = vld [vmem:[%s1 + $0xec] sm:$0xf]
        %v1432 = vld [vmem:[%s1 + $0xf0] sm:$0xf]
        %v1433 = vld [vmem:[%s1 + $0xf4] sm:$0xf]
        %v1434 = vld [vmem:[%s1 + $0xf8] sm:$0xf]
        %v1435 = vld [vmem:[%s1 + $0xfc] sm:$0xf]
        %v1436 = vld [vmem:[%s1 + $0x100] sm:$0xf]
        %v1437 = vld [vmem:[%s1 + $0x104] sm:$0xf]
        %v1438 = vld [vmem:[%s1 + $0x108] sm:$0xf]
        %v1439 = vld [vmem:[%s1 + $0x10c] sm:$0xf]
        %v1440 = vld [vmem:[%s1 + $0x110] sm:$0xf]
        %v1441 = vld [vmem:[%s1 + $0x114] sm:$0xf]
        %v1442 = vld [vmem:[%s1 + $0x118] sm:$0xf]
        %v1443 = vld [vmem:[%s1 + $0x11c] sm:$0xf]
        %v1444 = vld [vmem:[%s2] sm:$0x1]
        %v1446 = vperm.slane %v1444, 0
        %v1520 = vunpack.c.l.b16 %v1372
        %v1521 = vunpack.c.l.b16 %v1373
        %v1522 = vunpack.c.l.b16 %v1374
        %v1523 = vunpack.c.l.b16 %v1375
        %v1524 = vunpack.c.l.b16 %v1376
        %v1525 = vunpack.c.l.b16 %v1377
        %v1526 = vunpack.c.l.b16 %v1378
        %v1527 = vunpack.c.l.b16 %v1379
        %v1528 = vunpack.c.l.b16 %v1380
        %v1529 = vunpack.c.l.b16 %v1381
        %v1530 = vunpack.c.l.b16 %v1382
        %v1531 = vunpack.c.l.b16 %v1383
        %v1532 = vunpack.c.l.b16 %v1384
        %v1533 = vunpack.c.l.b16 %v1385
        %v1534 = vunpack.c.l.b16 %v1386
        %v1535 = vunpack.c.l.b16 %v1387
        %v1536 = vunpack.c.l.b16 %v1388
        %v1537 = vunpack.c.l.b16 %v1389
        %v1538 = vunpack.c.l.b16 %v1390
        %v1539 = vunpack.c.l.b16 %v1391
        %v1540 = vunpack.c.l.b16 %v1392
        %v1541 = vunpack.c.l.b16 %v1393
        %v1542 = vunpack.c.l.b16 %v1394
        %v1543 = vunpack.c.l.b16 %v1395
        %v1544 = vunpack.c.l.b16 %v1396
        %v1545 = vunpack.c.l.b16 %v1397
        %v1546 = vunpack.c.l.b16 %v1398
        %v1547 = vunpack.c.l.b16 %v1399
        %v1548 = vunpack.c.l.b16 %v1400
        %v1549 = vunpack.c.l.b16 %v1401
        %v1550 = vunpack.c.l.b16 %v1402
        %v1551 = vunpack.c.l.b16 %v1403
        %v1552 = vunpack.c.l.b16 %v1404
        %v1553 = vunpack.c.l.b16 %v1405
        %v1554 = vunpack.c.l.b16 %v1406
        %v1555 = vunpack.c.l.b16 %v1407
        %v1556 = vunpack.c.l.b16 %v1408
        %v1557 = vunpack.c.l.b16 %v1409
        %v1558 = vunpack.c.l.b16 %v1410
        %v1559 = vunpack.c.l.b16 %v1411
        %v1560 = vunpack.c.l.b16 %v1412
        %v1561 = vunpack.c.l.b16 %v1413
        %v1562 = vunpack.c.l.b16 %v1414
        %v1563 = vunpack.c.l.b16 %v1415
        %v1564 = vunpack.c.l.b16 %v1416
        %v1565 = vunpack.c.l.b16 %v1417
        %v1566 = vunpack.c.l.b16 %v1418
        %v1567 = vunpack.c.l.b16 %v1419
        %v1568 = vunpack.c.l.b16 %v1420
        %v1569 = vunpack.c.l.b16 %v1421
        %v1570 = vunpack.c.l.b16 %v1422
        %v1571 = vunpack.c.l.b16 %v1423
        %v1572 = vunpack.c.l.b16 %v1424
        %v1573 = vunpack.c.l.b16 %v1425
        %v1574 = vunpack.c.l.b16 %v1426
        %v1575 = vunpack.c.l.b16 %v1427
        %v1576 = vunpack.c.l.b16 %v1428
        %v1577 = vunpack.c.l.b16 %v1429
        %v1578 = vunpack.c.l.b16 %v1430
        %v1579 = vunpack.c.l.b16 %v1431
        %v1580 = vunpack.c.l.b16 %v1432
        %v1581 = vunpack.c.l.b16 %v1433
        %v1582 = vunpack.c.l.b16 %v1434
        %v1583 = vunpack.c.l.b16 %v1435
        %v1584 = vunpack.c.l.b16 %v1436
        %v1585 = vunpack.c.l.b16 %v1437
        %v1586 = vunpack.c.l.b16 %v1438
        %v1587 = vunpack.c.l.b16 %v1439
        %v1588 = vunpack.c.l.b16 %v1440
        %v1589 = vunpack.c.l.b16 %v1441
        %v1590 = vunpack.c.l.b16 %v1442
        %v1591 = vunpack.c.l.b16 %v1443
        %v1592 = vpack.c.b16 %v1521, %v1520
        %v1593 = vpack.c.b16 %v1523, %v1522
        %v1594 = vpack.c.b16 %v1525, %v1524
        %v1595 = vpack.c.b16 %v1527, %v1526
        %v1596 = vpack.c.b16 %v1529, %v1528
        %v1597 = vpack.c.b16 %v1531, %v1530
        %v1598 = vpack.c.b16 %v1533, %v1532
        %v1599 = vpack.c.b16 %v1535, %v1534
        %v1600 = vpack.c.b16 %v1537, %v1536
        %v1601 = vpack.c.b16 %v1539, %v1538
        %v1602 = vpack.c.b16 %v1541, %v1540
        %v1603 = vpack.c.b16 %v1543, %v1542
        %v1604 = vpack.c.b16 %v1545, %v1544
        %v1605 = vpack.c.b16 %v1547, %v1546
        %v1606 = vpack.c.b16 %v1549, %v1548
        %v1607 = vpack.c.b16 %v1551, %v1550
        %v1608 = vpack.c.b16 %v1553, %v1552
        %v1609 = vpack.c.b16 %v1555, %v1554
        %v1610 = vpack.c.b16 %v1557, %v1556
        %v1611 = vpack.c.b16 %v1559, %v1558
        %v1612 = vpack.c.b16 %v1561, %v1560
        %v1613 = vpack.c.b16 %v1563, %v1562
        %v1614 = vpack.c.b16 %v1565, %v1564
        %v1615 = vpack.c.b16 %v1567, %v1566
        %v1616 = vpack.c.b16 %v1569, %v1568
        %v1617 = vpack.c.b16 %v1571, %v1570
        %v1618 = vpack.c.b16 %v1573, %v1572
        %v1619 = vpack.c.b16 %v1575, %v1574
        %v1620 = vpack.c.b16 %v1577, %v1576
        %v1621 = vpack.c.b16 %v1579, %v1578
        %v1622 = vpack.c.b16 %v1581, %v1580
        %v1623 = vpack.c.b16 %v1583, %v1582
        %v1624 = vpack.c.b16 %v1585, %v1584
        %v1625 = vpack.c.b16 %v1587, %v1586
        %v1626 = vpack.c.b16 %v1589, %v1588
        %v1627 = vpack.c.b16 %v1591, %v1590
        %v1664 = vsel %vm1227, %v963, 0
        %v1666 = vsel %vm1227, %v965, 0
        %v1668 = vsel %vm1227, %v967, 0
        %v1670 = vsel %vm1227, %v969, 0
        %v1672 = vsel %vm1227, %v971, 0
        %v1674 = vsel %vm1227, %v973, 0
        %v1676 = vsel %vm1227, %v975, 0
        %v1678 = vsel %vm1227, %v977, 0
        %v1681 = vsel %vm1227, %v1220, 0
        %v1684 = vsel %vm1227, %v1222, 0
        %v1687 = vsel %vm1227, %v1224, 0
        %v1690 = vsel %vm1227, %v1226, 0
        %1692 = vmatpush.bf16.msra.mxu0 %v1599
        %1693 = vmatpush.bf16.msra.mxu0 %v1598
        %1694 = vmatpush.bf16.msra.mxu0 %v1597
        %1695 = vmatpush.bf16.msra.mxu0 %v1596
        %1696 = vmatpush.bf16.msra.mxu0 %v1595
        %1697 = vmatpush.bf16.msra.mxu0 %v1594
        %1698 = vmatpush.bf16.msra.mxu0 %v1593
        %1699 = vmatpush.bf16.msra.mxu0 %v1592
        %1700 = vmatmul.bf16.gmra.mxu0 %v1229
        %v1701 = vpop.f32.mrf.mxu0
        %v1702 = vadd.f32 %v1446, %v1701
        %v1703 = vpop.f32.mrf.mxu0
        %v1704 = vadd.f32 %v1446, %v1703
        %1705 = vmatmul.bf16.gmra.mxu0 %v1232
        %v1706 = vpop.f32.mrf.mxu0
        %v1707 = vpop.f32.mrf.mxu0
        %v1708 = vadd.f32 %v1446, %v1707
        %1709 = vmatmul.bf16.gmra.mxu0 %v1235
        %v1710 = vpop.f32.mrf.mxu0
        %v1711 = vadd.f32 %v1446, %v1710
        %v1712 = vpop.f32.mrf.mxu0
        %1713 = vmatmul.bf16.gmra.mxu0 %v1238
        %v1714 = vpop.f32.mrf.mxu0
        %v1715 = vadd.f32 %v1446, %v1714
        %v1716 = vpop.f32.mrf.mxu0
        %v1717 = vadd.f32 %v1446, %v1716
        %1718 = vmatmul.bf16.gmra.mxu0 %v1241
        %v1719 = vpop.f32.mrf.mxu0
        %v1720 = vpop.f32.mrf.mxu0
        %v1721 = vadd.f32 %v1446, %v1720
        %1722 = vmatmul.bf16.gmra.mxu0 %v1244
        %v1723 = vpop.f32.mrf.mxu0
        %v1724 = vadd.f32 %v1446, %v1723
        %v1725 = vpop.f32.mrf.mxu0
        %1726 = vmatmul.bf16.gmra.mxu0 %v1247
        %v1727 = vpop.f32.mrf.mxu0
        %v1728 = vadd.f32 %v1446, %v1727
        %v1729 = vpop.f32.mrf.mxu0
        %v1730 = vadd.f32 %v1446, %v1729
        %1731 = vmatmul.bf16.gmra.mxu0 %v1250
        %v1732 = vpop.f32.mrf.mxu0
        %v1733 = vpop.f32.mrf.mxu0
        %v1734 = vadd.f32 %v1446, %v1733
        %1735 = vmatmul.bf16.gmra.mxu0 %v1253
        %v1736 = vpop.f32.mrf.mxu0
        %v1737 = vadd.f32 %v1446, %v1736
        %v1738 = vpop.f32.mrf.mxu0
        %1739 = vmatmul.bf16.gmra.mxu0 %v1256
        %v1740 = vpop.f32.mrf.mxu0
        %v1741 = vadd.f32 %v1446, %v1740
        %v1742 = vpop.f32.mrf.mxu0
        %v1743 = vadd.f32 %v1446, %v1742
        %1744 = vmatmul.bf16.gmra.mxu0 %v1259
        %v1745 = vpop.f32.mrf.mxu0
        %v1746 = vpop.f32.mrf.mxu0
        %v1747 = vadd.f32 %v1446, %v1746
        %1748 = vmatmul.bf16.gmra.mxu0 %v1262
        %v1749 = vpop.f32.mrf.mxu0
        %v1750 = vadd.f32 %v1446, %v1749
        %v1751 = vpop.f32.mrf.mxu0
        %1752 = vdwg.mxu0
        %1753 = vmatpush.bf16.msra.mxu0 %v1607
        %1754 = vmatpush.bf16.msra.mxu0 %v1606
        %1755 = vmatpush.bf16.msra.mxu0 %v1605
        %1756 = vmatpush.bf16.msra.mxu0 %v1604
        %1757 = vmatpush.bf16.msra.mxu0 %v1603
        %1758 = vmatpush.bf16.msra.mxu0 %v1602
        %1759 = vmatpush.bf16.msra.mxu0 %v1601
        %1760 = vmatpush.bf16.msra.mxu0 %v1600
        %1761 = vmatmul.bf16.gmra.mxu0 %v1266
        %v1762 = vpop.f32.mrf.mxu0
        %v1763 = vadd.f32 %v1702, %v1762
        %v1764 = vpop.f32.mrf.mxu0
        %v1765 = vadd.f32 %v1704, %v1764
        %1766 = vmatmul.bf16.gmra.mxu0 %v1270
        %v1767 = vpop.f32.mrf.mxu0
        %v1768 = vpop.f32.mrf.mxu0
        %v1769 = vadd.f32 %v1708, %v1768
        %1770 = vmatmul.bf16.gmra.mxu0 %v1274
        %v1771 = vpop.f32.mrf.mxu0
        %v1772 = vadd.f32 %v1711, %v1771
        %v1773 = vpop.f32.mrf.mxu0
        %1774 = vmatmul.bf16.gmra.mxu0 %v1278
        %v1775 = vpop.f32.mrf.mxu0
        %v1776 = vadd.f32 %v1715, %v1775
        %v1777 = vpop.f32.mrf.mxu0
        %v1778 = vadd.f32 %v1717, %v1777
        %1779 = vmatmul.bf16.gmra.mxu0 %v1282
        %v1780 = vpop.f32.mrf.mxu0
        %v1781 = vpop.f32.mrf.mxu0
        %v1782 = vadd.f32 %v1721, %v1781
        %1783 = vmatmul.bf16.gmra.mxu0 %v1286
        %v1784 = vpop.f32.mrf.mxu0
        %v1785 = vadd.f32 %v1724, %v1784
        %v1786 = vpop.f32.mrf.mxu0
        %1787 = vmatmul.bf16.gmra.mxu0 %v1290
        %v1788 = vpop.f32.mrf.mxu0
        %v1789 = vadd.f32 %v1728, %v1788
        %v1790 = vpop.f32.mrf.mxu0
        %v1791 = vadd.f32 %v1730, %v1790
        %1792 = vmatmul.bf16.gmra.mxu0 %v1294
        %v1793 = vpop.f32.mrf.mxu0
        %v1794 = vpop.f32.mrf.mxu0
        %v1795 = vadd.f32 %v1734, %v1794
        %1796 = vmatmul.bf16.gmra.mxu0 %v1298
        %v1797 = vpop.f32.mrf.mxu0
        %v1798 = vadd.f32 %v1737, %v1797
        %v1799 = vpop.f32.mrf.mxu0
        %1800 = vmatmul.bf16.gmra.mxu0 %v1302
        %v1801 = vpop.f32.mrf.mxu0
        %v1802 = vadd.f32 %v1741, %v1801
        %v1803 = vpop.f32.mrf.mxu0
        %v1804 = vadd.f32 %v1743, %v1803
        %1805 = vmatmul.bf16.gmra.mxu0 %v1306
        %v1806 = vpop.f32.mrf.mxu0
        %v1807 = vpop.f32.mrf.mxu0
        %v1808 = vadd.f32 %v1747, %v1807
        %1809 = vmatmul.bf16.gmra.mxu0 %v1310
        %v1810 = vpop.f32.mrf.mxu0
        %v1811 = vadd.f32 %v1750, %v1810
        %v1812 = vpop.f32.mrf.mxu0
        %1813 = vdwg.mxu0
        %1814 = vmatpush.bf16.msra.mxu0 %v1615
        %1815 = vmatpush.bf16.msra.mxu0 %v1614
        %1816 = vmatpush.bf16.msra.mxu0 %v1613
        %1817 = vmatpush.bf16.msra.mxu0 %v1612
        %1818 = vmatpush.bf16.msra.mxu0 %v1611
        %1819 = vmatpush.bf16.msra.mxu0 %v1610
        %1820 = vmatpush.bf16.msra.mxu0 %v1609
        %1821 = vmatpush.bf16.msra.mxu0 %v1608
        %1822 = vmatmul.bf16.gmra.mxu0 %v1314
        %v1823 = vpop.f32.mrf.mxu0
        %v1824 = vadd.f32 %v1763, %v1823
        %v1825 = vpop.f32.mrf.mxu0
        %v1826 = vadd.f32 %v1765, %v1825
        %1827 = vmatmul.bf16.gmra.mxu0 %v1318
        %v1828 = vpop.f32.mrf.mxu0
        %v1829 = vpop.f32.mrf.mxu0
        %v1830 = vadd.f32 %v1769, %v1829
        %1831 = vmatmul.bf16.gmra.mxu0 %v1322
        %v1832 = vpop.f32.mrf.mxu0
        %v1833 = vadd.f32 %v1772, %v1832
        %v1834 = vpop.f32.mrf.mxu0
        %1835 = vmatmul.bf16.gmra.mxu0 %v1326
        %v1836 = vpop.f32.mrf.mxu0
        %v1837 = vadd.f32 %v1776, %v1836
        %v1838 = vpop.f32.mrf.mxu0
        %v1839 = vadd.f32 %v1778, %v1838
        %1840 = vmatmul.bf16.gmra.mxu0 %v1330
        %v1841 = vpop.f32.mrf.mxu0
        %v1842 = vpop.f32.mrf.mxu0
        %v1843 = vadd.f32 %v1782, %v1842
        %1844 = vmatmul.bf16.gmra.mxu0 %v1334
        %v1845 = vpop.f32.mrf.mxu0
        %v1846 = vadd.f32 %v1785, %v1845
        %v1847 = vpop.f32.mrf.mxu0
        %1848 = vmatmul.bf16.gmra.mxu0 %v1338
        %v1849 = vpop.f32.mrf.mxu0
        %v1850 = vadd.f32 %v1789, %v1849
        %v1851 = vpop.f32.mrf.mxu0
        %v1852 = vadd.f32 %v1791, %v1851
        %1853 = vmatmul.bf16.gmra.mxu0 %v1342
        %v1854 = vpop.f32.mrf.mxu0
        %v1855 = vpop.f32.mrf.mxu0
        %v1856 = vadd.f32 %v1795, %v1855
        %1857 = vmatmul.bf16.gmra.mxu0 %v1346
        %v1858 = vpop.f32.mrf.mxu0
        %v1859 = vadd.f32 %v1798, %v1858
        %v1860 = vpop.f32.mrf.mxu0
        %1861 = vmatmul.bf16.gmra.mxu0 %v1350
        %v1862 = vpop.f32.mrf.mxu0
        %v1863 = vadd.f32 %v1802, %v1862
        %v1864 = vpop.f32.mrf.mxu0
        %v1865 = vadd.f32 %v1804, %v1864
        %1866 = vmatmul.bf16.gmra.mxu0 %v1354
        %v1867 = vpop.f32.mrf.mxu0
        %v1868 = vpop.f32.mrf.mxu0
        %v1869 = vadd.f32 %v1808, %v1868
        %1870 = vmatmul.bf16.gmra.mxu0 %v1358
        %v1871 = vpop.f32.mrf.mxu0
        %v1872 = vadd.f32 %v1811, %v1871
        %v1873 = vpop.f32.mrf.mxu0
        %1874 = vdwg.mxu0
        %1875 = vmatpush.bf16.msra.mxu0 %v1623
        %1876 = vmatpush.bf16.msra.mxu0 %v1622
        %1877 = vmatpush.bf16.msra.mxu0 %v1621
        %1878 = vmatpush.bf16.msra.mxu0 %v1620
        %1879 = vmatpush.bf16.msra.mxu0 %v1619
        %1880 = vmatpush.bf16.msra.mxu0 %v1618
        %1881 = vmatpush.bf16.msra.mxu0 %v1617
        %1882 = vmatpush.bf16.msra.mxu0 %v1616
        %1883 = vmatmul.bf16.gmra.mxu0 %v1238
        %v1884 = vpop.f32.mrf.mxu0
        %v1885 = vadd.f32 %v1824, %v1884
        %v1886 = vpop.f32.mrf.mxu0
        %v1887 = vadd.f32 %v1826, %v1886
        %1888 = vmatmul.bf16.gmra.mxu0 %v1241
        %v1889 = vpop.f32.mrf.mxu0
        %v1890 = vpop.f32.mrf.mxu0
        %v1891 = vadd.f32 %v1830, %v1890
        %1892 = vmatmul.bf16.gmra.mxu0 %v1244
        %v1893 = vpop.f32.mrf.mxu0
        %v1894 = vadd.f32 %v1833, %v1893
        %v1895 = vpop.f32.mrf.mxu0
        %1896 = vmatmul.bf16.gmra.mxu0 %v1247
        %v1897 = vpop.f32.mrf.mxu0
        %v1898 = vadd.f32 %v1837, %v1897
        %v1899 = vpop.f32.mrf.mxu0
        %v1900 = vadd.f32 %v1839, %v1899
        %1901 = vmatmul.bf16.gmra.mxu0 %v1250
        %v1902 = vpop.f32.mrf.mxu0
        %v1903 = vpop.f32.mrf.mxu0
        %v1904 = vadd.f32 %v1843, %v1903
        %1905 = vmatmul.bf16.gmra.mxu0 %v1253
        %v1906 = vpop.f32.mrf.mxu0
        %v1907 = vadd.f32 %v1846, %v1906
        %v1908 = vpop.f32.mrf.mxu0
        %1909 = vmatmul.bf16.gmra.mxu0 %v1256
        %v1910 = vpop.f32.mrf.mxu0
        %v1911 = vadd.f32 %v1850, %v1910
        %v1912 = vpop.f32.mrf.mxu0
        %v1913 = vadd.f32 %v1852, %v1912
        %1914 = vmatmul.bf16.gmra.mxu0 %v1259
        %v1915 = vpop.f32.mrf.mxu0
        %v1916 = vpop.f32.mrf.mxu0
        %v1917 = vadd.f32 %v1856, %v1916
        %1918 = vmatmul.bf16.gmra.mxu0 %v1361
        %v1919 = vpop.f32.mrf.mxu0
        %v1920 = vadd.f32 %v1859, %v1919
        %v1921 = vpop.f32.mrf.mxu0
        %1922 = vmatmul.bf16.gmra.mxu0 %v1364
        %v1923 = vpop.f32.mrf.mxu0
        %v1924 = vadd.f32 %v1863, %v1923
        %v1925 = vpop.f32.mrf.mxu0
        %v1926 = vadd.f32 %v1865, %v1925
        %1927 = vmatmul.bf16.gmra.mxu0 %v1367
        %v1928 = vpop.f32.mrf.mxu0
        %v1929 = vpop.f32.mrf.mxu0
        %v1930 = vadd.f32 %v1869, %v1929
        %1931 = vmatmul.bf16.gmra.mxu0 %v1370
        %v1932 = vpop.f32.mrf.mxu0
        %v1933 = vadd.f32 %v1872, %v1932
        %v1934 = vpop.f32.mrf.mxu0
        %1935 = vdwg.mxu0
        %1936 = vmatpush.bf16.msra.mxu0 0
        %1937 = vmatpush.bf16.msra.mxu0 0
        %1938 = vmatpush.bf16.msra.mxu0 0
        %1939 = vmatpush.bf16.msra.mxu0 0
        %1940 = vmatpush.bf16.msra.mxu0 %v1627
        %1941 = vmatpush.bf16.msra.mxu0 %v1626
        %1942 = vmatpush.bf16.msra.mxu0 %v1625
        %1943 = vmatpush.bf16.msra.mxu0 %v1624
        %1944 = vmatmul.bf16.gmra.mxu0 %v1664
        %v1945 = vpop.f32.mrf.mxu0
        %v1946 = vadd.f32 %v1885, %v1945
        %v1947 = vpop.f32.mrf.mxu0
        %v1948 = vadd.f32 %v1887, %v1947
        %1949 = vmatmul.bf16.gmra.mxu0 %v1666
        %v1950 = vpop.f32.mrf.mxu0
        %v1951 = vpop.f32.mrf.mxu0
        %v1952 = vadd.f32 %v1891, %v1951
        %1953 = vmatmul.bf16.gmra.mxu0 %v1668
        %v1954 = vpop.f32.mrf.mxu0
        %v1955 = vadd.f32 %v1894, %v1954
        %v1956 = vpop.f32.mrf.mxu0
        %1957 = vmatmul.bf16.gmra.mxu0 %v1670
        %v1958 = vpop.f32.mrf.mxu0
        %v1959 = vadd.f32 %v1898, %v1958
        %v1960 = vpop.f32.mrf.mxu0
        %v1961 = vadd.f32 %v1900, %v1960
        %1962 = vmatmul.bf16.gmra.mxu0 %v1672
        %v1963 = vpop.f32.mrf.mxu0
        %v1964 = vpop.f32.mrf.mxu0
        %v1965 = vadd.f32 %v1904, %v1964
        %1966 = vmatmul.bf16.gmra.mxu0 %v1674
        %v1967 = vpop.f32.mrf.mxu0
        %v1968 = vadd.f32 %v1907, %v1967
        %v1969 = vpop.f32.mrf.mxu0
        %1970 = vmatmul.bf16.gmra.mxu0 %v1676
        %v1971 = vpop.f32.mrf.mxu0
        %v1972 = vadd.f32 %v1911, %v1971
        %v1973 = vpop.f32.mrf.mxu0
        %v1974 = vadd.f32 %v1913, %v1973
        %1975 = vmatmul.bf16.gmra.mxu0 %v1678
        %v1976 = vpop.f32.mrf.mxu0
        %v1977 = vpop.f32.mrf.mxu0
        %v1978 = vadd.f32 %v1917, %v1977
        %1979 = vmatmul.bf16.gmra.mxu0 %v1681
        %v1980 = vpop.f32.mrf.mxu0
        %v1981 = vadd.f32 %v1920, %v1980
        %v1982 = vpop.f32.mrf.mxu0
        %1983 = vmatmul.bf16.gmra.mxu0 %v1684
        %v1984 = vpop.f32.mrf.mxu0
        %v1985 = vadd.f32 %v1924, %v1984
        %v1986 = vpop.f32.mrf.mxu0
        %v1987 = vadd.f32 %v1926, %v1986
        %1988 = vmatmul.bf16.gmra.mxu0 %v1687
        %v1989 = vpop.f32.mrf.mxu0
        %v1990 = vpop.f32.mrf.mxu0
        %v1991 = vadd.f32 %v1930, %v1990
        %1992 = vmatmul.bf16.gmra.mxu0 %v1690
        %v1993 = vpop.f32.mrf.mxu0
        %v1994 = vadd.f32 %v1933, %v1993
        %v1995 = vpop.f32.mrf.mxu0
        %1996 = vdwg.mxu0
        %p1997 = scmp.eq.s32.totalorder %s29, 0
        %p1998 = scmp.eq.s32.totalorder %s30, 0
        %p1999 = pnand %p1997, %p1998
        %p2000 = pneg %p1999
        %p2001 = scmp.eq.s32.totalorder %s31, 0
        %p2002 = pnand %p2000, %p2001
        %p2003 = pneg %p2002
        // Predicated region
        $region61: #{srgan_g_forward.89} parent=51 // pred_check
          _
        $region62: #{srgan_g_forward.89} parent=51 // pred_check_branch
          %2005 = sbr.rel (%p2002) target = $region64
        $region63: #{srgan_g_forward.89} parent=51 // pred_region
          %vm2006 = vcmask 516096
          %2007 = vst.msk [vmem:[#allocation3] sm:$0x1] %vm2006, 0.0
          %2008 = vst.msk [vmem:[#allocation4] sm:$0x1] %vm2006, 0.0
        $region64: #{srgan_g_forward.89} parent=51 // pred_fallthru
          _
        // Predicated region
        $region65: #{srgan_g_forward.89} parent=51 // pred_check
          %p2009 = pneg %p1997
        $region66: #{srgan_g_forward.89} parent=51 // pred_check_branch
          %2011 = sbr.rel (%p2009) target = $region68
        $region67: #{srgan_g_forward.89} parent=51 // pred_region
          %v2012 = vsel %vm1227, %v1946, 0.0
          %v2013 = vsel %vm1227, %v1948, 0.0
          %v2014 = vadd.f32 %v2012, %v2013
          %v2015 = vsel %vm1227, %v1952, 0.0
          %v2016 = vadd.f32 %v2014, %v2015
          %v2017 = vsel %vm1227, %v1955, 0.0
          %v2018 = vadd.f32 %v2016, %v2017
          %v2019 = vsel %vm1227, %v1959, 0.0
          %v2020 = vadd.f32 %v2018, %v2019
          %v2021 = vsel %vm1227, %v1961, 0.0
          %v2022 = vadd.f32 %v2020, %v2021
          %v2023 = vsel %vm1227, %v1965, 0.0
          %v2024 = vadd.f32 %v2022, %v2023
          %v2025 = vsel %vm1227, %v1968, 0.0
          %v2026 = vadd.f32 %v2024, %v2025
          %v2027 = vsel %vm1227, %v1972, 0.0
          %v2028 = vadd.f32 %v2026, %v2027
          %v2029 = vsel %vm1227, %v1974, 0.0
          %v2030 = vadd.f32 %v2028, %v2029
          %v2031 = vsel %vm1227, %v1978, 0.0
          %v2032 = vadd.f32 %v2030, %v2031
          %v2033 = vsel %vm1227, %v1981, 0.0
          %v2034 = vadd.f32 %v2032, %v2033
          %v2035 = vsel %vm1227, %v1985, 0.0
          %v2036 = vadd.f32 %v2034, %v2035
          %v2037 = vsel %vm1227, %v1987, 0.0
          %v2038 = vadd.f32 %v2036, %v2037
          %v2039 = vsel %vm1227, %v1991, 0.0
          %v2040 = vadd.f32 %v2038, %v2039
          %v2041 = vsel %vm1227, %v1994, 0.0
          %v2042 = vadd.f32 %v2040, %v2041
          %v2043 = vrot.slane %v2042, 4
          %v2044 = vadd.f32 %v2042, %v2043
          %v2045 = vrot.slane %v2044, 2
          %v2046 = vadd.f32 %v2044, %v2045
          %v2047 = vrot.slane %v2046, 1
          %v2048 = vadd.f32 %v2046, %v2047
          %v2049 = vmul.f32 %v1946, %v1946
          %v2050 = vmul.f32 %v1948, %v1948
          %v2051 = vmul.f32 %v1952, %v1952
          %v2052 = vmul.f32 %v1955, %v1955
          %v2053 = vmul.f32 %v1959, %v1959
          %v2054 = vmul.f32 %v1961, %v1961
          %v2055 = vmul.f32 %v1965, %v1965
          %v2056 = vmul.f32 %v1968, %v1968
          %v2057 = vmul.f32 %v1972, %v1972
          %v2058 = vmul.f32 %v1974, %v1974
          %v2059 = vmul.f32 %v1978, %v1978
          %v2060 = vmul.f32 %v1981, %v1981
          %v2061 = vmul.f32 %v1985, %v1985
          %v2062 = vmul.f32 %v1987, %v1987
          %v2063 = vmul.f32 %v1991, %v1991
          %v2064 = vmul.f32 %v1994, %v1994
          %v2065 = vsel %vm1227, %v2049, 0.0
          %v2066 = vsel %vm1227, %v2050, 0.0
          %v2067 = vadd.f32 %v2065, %v2066
          %v2068 = vsel %vm1227, %v2051, 0.0
          %v2069 = vadd.f32 %v2067, %v2068
          %v2070 = vsel %vm1227, %v2052, 0.0
          %v2071 = vadd.f32 %v2069, %v2070
          %v2072 = vsel %vm1227, %v2053, 0.0
          %v2073 = vadd.f32 %v2071, %v2072
          %v2074 = vsel %vm1227, %v2054, 0.0
          %v2075 = vadd.f32 %v2073, %v2074
          %v2076 = vsel %vm1227, %v2055, 0.0
          %v2077 = vadd.f32 %v2075, %v2076
          %v2078 = vsel %vm1227, %v2056, 0.0
          %v2079 = vadd.f32 %v2077, %v2078
          %v2080 = vsel %vm1227, %v2057, 0.0
          %v2081 = vadd.f32 %v2079, %v2080
          %v2082 = vsel %vm1227, %v2058, 0.0
          %v2083 = vadd.f32 %v2081, %v2082
          %v2084 = vsel %vm1227, %v2059, 0.0
          %v2085 = vadd.f32 %v2083, %v2084
          %v2086 = vsel %vm1227, %v2060, 0.0
          %v2087 = vadd.f32 %v2085, %v2086
          %v2088 = vsel %vm1227, %v2061, 0.0
          %v2089 = vadd.f32 %v2087, %v2088
          %v2090 = vsel %vm1227, %v2062, 0.0
          %v2091 = vadd.f32 %v2089, %v2090
          %v2092 = vsel %vm1227, %v2063, 0.0
          %v2093 = vadd.f32 %v2091, %v2092
          %v2094 = vsel %vm1227, %v2064, 0.0
          %v2095 = vadd.f32 %v2093, %v2094
          %v2096 = vrot.slane %v2095, 4
          %v2097 = vadd.f32 %v2095, %v2096
          %v2098 = vrot.slane %v2097, 2
          %v2099 = vadd.f32 %v2097, %v2098
          %v2100 = vrot.slane %v2099, 1
          %v2101 = vadd.f32 %v2099, %v2100
          %v2102 = vld [vmem:[#allocation3] sm:$0x1]
          %v2103 = vadd.f32 %v2102, %v2048
          %vm2104 = vcmask 516096
          %2105 = vst.msk [vmem:[#allocation3] sm:$0x1] %vm2104, %v2103
          %v2106 = vld [vmem:[#allocation4] sm:$0x1]
          %v2107 = vadd.f32 %v2106, %v2101
          %2108 = vst.msk [vmem:[#allocation4] sm:$0x1] %vm2104, %v2107
        $region68: #{srgan_g_forward.89} parent=51 // pred_fallthru
          _
        // Predicated region
        $region69: #{srgan_g_forward.89} parent=51 // pred_check
          %p2109 = pneg %p377
        $region70: #{srgan_g_forward.89} parent=51 // pred_check_branch
          %2111 = sbr.rel (%p2109) target = $region72
        $region71: #{srgan_g_forward.89} parent=51 // pred_region
          %v2112 = vld [vmem:[#allocation3] sm:$0x1]
          %v2113 = vmul.f32 %v2112, 0.001953125
          %v2114 = vld [vmem:[#allocation4] sm:$0x1]
          %v2115 = vmul.f32 %v2114, 0.001953125
          %v2116 = vmul.f32 %v2113, %v2113
          %v2117 = vsub.f32 %v2115, %v2116
          %v2118 = vmax.f32 %v2117, 0.0
          %v2119 = vld [vmem:[%s3] sm:$0x1]
          %v2120 = vadd.f32 %v2118, 1e-05
          %v2121 = vrsqrt.pop %v2120
          %v2122 = vmul.f32 %v2121, %v2120
          %v2123 = vmul.f32 %v2122, %v2121
          %v2124 = vmul.f32 0.5, %v2123
          %v2125 = vsub.f32 1.5, %v2124
          %v2126 = vmul.f32 %v2121, %v2125
          %vm2127 = vweird.f32 %v2120
          %vm2128 = vweird.f32 %v2121
          %vm2129 = vmor %vm2127, %vm2128
          %v2130 = vsel %vm2129, %v2121, %v2126
          %v2131 = vmul.f32 %v2119, %v2130
          %v2132 = vld [vmem:[%s4] sm:$0x1]
          %v2133 = vmul.f32 %v2113, %v2131
          %v2134 = vsub.f32 %v2132, %v2133
          %v2136 = vperm.slane %v2131, 0
          %v2138 = vmul.f32 %v1946, %v2136
          %v2139 = vmul.f32 %v1948, %v2136
          %v2140 = vmul.f32 %v1952, %v2136
          %v2141 = vmul.f32 %v1955, %v2136
          %v2142 = vmul.f32 %v1959, %v2136
          %v2143 = vmul.f32 %v1961, %v2136
          %v2144 = vmul.f32 %v1965, %v2136
          %v2145 = vmul.f32 %v1968, %v2136
          %v2146 = vmul.f32 %v1972, %v2136
          %v2147 = vmul.f32 %v1974, %v2136
          %v2148 = vmul.f32 %v1978, %v2136
          %v2149 = vmul.f32 %v1981, %v2136
          %v2150 = vmul.f32 %v1985, %v2136
          %v2151 = vmul.f32 %v1987, %v2136
          %v2152 = vmul.f32 %v1991, %v2136
          %v2153 = vmul.f32 %v1994, %v2136
          %v2155 = vperm.slane %v2134, 0
          %v2157 = vadd.f32 %v2138, %v2155
          %v2158 = vadd.f32 %v2139, %v2155
          %v2159 = vadd.f32 %v2140, %v2155
          %v2160 = vadd.f32 %v2141, %v2155
          %v2161 = vadd.f32 %v2142, %v2155
          %v2162 = vadd.f32 %v2143, %v2155
          %v2163 = vadd.f32 %v2144, %v2155
          %v2164 = vadd.f32 %v2145, %v2155
          %v2165 = vadd.f32 %v2146, %v2155
          %v2166 = vadd.f32 %v2147, %v2155
          %v2167 = vadd.f32 %v2148, %v2155
          %v2168 = vadd.f32 %v2149, %v2155
          %v2169 = vadd.f32 %v2150, %v2155
          %v2170 = vadd.f32 %v2151, %v2155
          %v2171 = vadd.f32 %v2152, %v2155
          %v2172 = vadd.f32 %v2153, %v2155
          %v2173 = vmax.f32 %v2157, 0.0
          %v2174 = vmax.f32 %v2158, 0.0
          %v2175 = vmax.f32 %v2159, 0.0
          %v2176 = vmax.f32 %v2160, 0.0
          %v2177 = vmax.f32 %v2161, 0.0
          %v2178 = vmax.f32 %v2162, 0.0
          %v2179 = vmax.f32 %v2163, 0.0
          %v2180 = vmax.f32 %v2164, 0.0
          %v2181 = vmax.f32 %v2165, 0.0
          %v2182 = vmax.f32 %v2166, 0.0
          %v2183 = vmax.f32 %v2167, 0.0
          %v2184 = vmax.f32 %v2168, 0.0
          %v2185 = vmax.f32 %v2169, 0.0
          %v2186 = vmax.f32 %v2170, 0.0
          %v2187 = vmax.f32 %v2171, 0.0
          %v2188 = vmax.f32 %v2172, 0.0
          %v2189 = vld [vmem:[%s372] sm:$0xf]
          %v2190 = vld [vmem:[%s372 + $0x4] sm:$0xf]
          %v2191 = vld [vmem:[%s372 + $0x8] sm:$0xf]
          %v2192 = vld [vmem:[%s372 + $0xc] sm:$0xf]
          %v2193 = vld [vmem:[%s372 + $0x10] sm:$0xf]
          %v2194 = vld [vmem:[%s372 + $0x14] sm:$0xf]
          %v2195 = vld [vmem:[%s372 + $0x18] sm:$0xf]
          %v2196 = vld [vmem:[%s372 + $0x1c] sm:$0xf]
          %v2197 = vld [vmem:[%s372 + $0x20] sm:$0xf]
          %v2198 = vld [vmem:[%s372 + $0x24] sm:$0xf]
          %v2199 = vld [vmem:[%s372 + $0x28] sm:$0xf]
          %v2200 = vld [vmem:[%s372 + $0x2c] sm:$0xf]
          %v2201 = vld [vmem:[%s372 + $0x30] sm:$0xf]
          %v2202 = vld [vmem:[%s372 + $0x34] sm:$0xf]
          %v2203 = vld [vmem:[%s372 + $0x38] sm:$0xf]
          %v2204 = vld [vmem:[%s372 + $0x3c] sm:$0xf]
          %v2205 = vunpack.c.l.bf16 %v2189
          %v2206 = vunpack.c.l.bf16 %v2190
          %v2207 = vunpack.c.l.bf16 %v2191
          %v2208 = vunpack.c.l.bf16 %v2192
          %v2209 = vunpack.c.l.bf16 %v2193
          %v2210 = vunpack.c.l.bf16 %v2194
          %v2211 = vunpack.c.l.bf16 %v2195
          %v2212 = vunpack.c.l.bf16 %v2196
          %v2213 = vunpack.c.l.bf16 %v2197
          %v2214 = vunpack.c.l.bf16 %v2198
          %v2215 = vunpack.c.l.bf16 %v2199
          %v2216 = vunpack.c.l.bf16 %v2200
          %v2217 = vunpack.c.l.bf16 %v2201
          %v2218 = vunpack.c.l.bf16 %v2202
          %v2219 = vunpack.c.l.bf16 %v2203
          %v2220 = vunpack.c.l.bf16 %v2204
          %v2221 = vadd.f32 %v2173, %v2205
          %v2222 = vadd.f32 %v2174, %v2206
          %v2223 = vadd.f32 %v2175, %v2207
          %v2224 = vadd.f32 %v2176, %v2208
          %v2225 = vadd.f32 %v2177, %v2209
          %v2226 = vadd.f32 %v2178, %v2210
          %v2227 = vadd.f32 %v2179, %v2211
          %v2228 = vadd.f32 %v2180, %v2212
          %v2229 = vadd.f32 %v2181, %v2213
          %v2230 = vadd.f32 %v2182, %v2214
          %v2231 = vadd.f32 %v2183, %v2215
          %v2232 = vadd.f32 %v2184, %v2216
          %v2233 = vadd.f32 %v2185, %v2217
          %v2234 = vadd.f32 %v2186, %v2218
          %v2235 = vadd.f32 %v2187, %v2219
          %v2236 = vadd.f32 %v2188, %v2220
          %v2237 = vld [vmem:[%s6] sm:$0x1]
          %v2239 = vperm.slane %v2237, 0
          %v2241 = vmul.f32 %v2221, %v2239
          %v2242 = vmul.f32 %v2222, %v2239
          %v2243 = vmul.f32 %v2223, %v2239
          %v2244 = vmul.f32 %v2224, %v2239
          %v2245 = vmul.f32 %v2225, %v2239
          %v2246 = vmul.f32 %v2226, %v2239
          %v2247 = vmul.f32 %v2227, %v2239
          %v2248 = vmul.f32 %v2228, %v2239
          %v2249 = vmul.f32 %v2229, %v2239
          %v2250 = vmul.f32 %v2230, %v2239
          %v2251 = vmul.f32 %v2231, %v2239
          %v2252 = vmul.f32 %v2232, %v2239
          %v2253 = vmul.f32 %v2233, %v2239
          %v2254 = vmul.f32 %v2234, %v2239
          %v2255 = vmul.f32 %v2235, %v2239
          %v2256 = vmul.f32 %v2236, %v2239
          %v2257 = vsel %vm1227, %v2241, 0.0
          %2258 = vadd.xlane.f32.xlu0 %v2257
          %v2259 = vpop.xlane.xlu0 %2258
          %v2260 = vsel %vm1227, %v2242, 0.0
          %2261 = vadd.xlane.f32.xlu0 %v2260
          %v2262 = vpop.xlane.xlu0 %2261
          %v2263 = vsel %vm1227, %v2243, 0.0
          %2264 = vadd.xlane.f32.xlu0 %v2263
          %v2265 = vpop.xlane.xlu0 %2264
          %v2266 = vsel %vm1227, %v2244, 0.0
          %2267 = vadd.xlane.f32.xlu0 %v2266
          %v2268 = vpop.xlane.xlu0 %2267
          %v2269 = vsel %vm1227, %v2245, 0.0
          %2270 = vadd.xlane.f32.xlu0 %v2269
          %v2271 = vpop.xlane.xlu0 %2270
          %v2272 = vsel %vm1227, %v2246, 0.0
          %2273 = vadd.xlane.f32.xlu0 %v2272
          %v2274 = vpop.xlane.xlu0 %2273
          %v2275 = vsel %vm1227, %v2247, 0.0
          %2276 = vadd.xlane.f32.xlu0 %v2275
          %v2277 = vpop.xlane.xlu0 %2276
          %v2278 = vsel %vm1227, %v2248, 0.0
          %2279 = vadd.xlane.f32.xlu0 %v2278
          %v2280 = vpop.xlane.xlu0 %2279
          %v2281 = vsel %vm1227, %v2249, 0.0
          %2282 = vadd.xlane.f32.xlu0 %v2281
          %v2283 = vpop.xlane.xlu0 %2282
          %v2284 = vsel %vm1227, %v2250, 0.0
          %2285 = vadd.xlane.f32.xlu0 %v2284
          %v2286 = vpop.xlane.xlu0 %2285
          %v2287 = vsel %vm1227, %v2251, 0.0
          %2288 = vadd.xlane.f32.xlu0 %v2287
          %v2289 = vpop.xlane.xlu0 %2288
          %v2290 = vsel %vm1227, %v2252, 0.0
          %2291 = vadd.xlane.f32.xlu0 %v2290
          %v2292 = vpop.xlane.xlu0 %2291
          %v2293 = vsel %vm1227, %v2253, 0.0
          %2294 = vadd.xlane.f32.xlu0 %v2293
          %v2295 = vpop.xlane.xlu0 %2294
          %v2296 = vsel %vm1227, %v2254, 0.0
          %2297 = vadd.xlane.f32.xlu0 %v2296
          %v2298 = vpop.xlane.xlu0 %2297
          %v2299 = vsel %vm1227, %v2255, 0.0
          %2300 = vadd.xlane.f32.xlu0 %v2299
          %v2301 = vpop.xlane.xlu0 %2300
          %v2302 = vsel %vm1227, %v2256, 0.0
          %2303 = vadd.xlane.f32.xlu0 %v2302
          %v2304 = vpop.xlane.xlu0 %2303
          %v2305 = vld [vmem:[#allocation5] sm:$0x1]
          %v2307 = vperm.slane %v2305, 0
          %2308 = vset.pattern.permute.xlu0 0
          %2309 = vperm.xlu0 %2308, %v2307
          %v2310 = vpop.permute.xlu0 %2309
          %v2312 = vadd.f32 %v2259, %v2310
          %v2313 = vadd.f32 %v2262, %v2310
          %v2314 = vadd.f32 %v2265, %v2310
          %v2315 = vadd.f32 %v2268, %v2310
          %v2316 = vadd.f32 %v2271, %v2310
          %v2317 = vadd.f32 %v2274, %v2310
          %v2318 = vadd.f32 %v2277, %v2310
          %v2319 = vadd.f32 %v2280, %v2310
          %v2320 = vadd.f32 %v2283, %v2310
          %v2321 = vadd.f32 %v2286, %v2310
          %v2322 = vadd.f32 %v2289, %v2310
          %v2323 = vadd.f32 %v2292, %v2310
          %v2324 = vadd.f32 %v2295, %v2310
          %v2325 = vadd.f32 %v2298, %v2310
          %v2326 = vadd.f32 %v2301, %v2310
          %v2327 = vadd.f32 %v2304, %v2310
          %v2328 = vtanh.pop %v2312
          %v2329 = vtanh.pop %v2313
          %v2330 = vtanh.pop %v2314
          %v2331 = vtanh.pop %v2315
          %v2332 = vtanh.pop %v2316
          %v2333 = vtanh.pop %v2317
          %v2334 = vtanh.pop %v2318
          %v2335 = vtanh.pop %v2319
          %v2336 = vtanh.pop %v2320
          %v2337 = vtanh.pop %v2321
          %v2338 = vtanh.pop %v2322
          %v2339 = vtanh.pop %v2323
          %v2340 = vtanh.pop %v2324
          %v2341 = vtanh.pop %v2325
          %v2342 = vtanh.pop %v2326
          %v2343 = vtanh.pop %v2327
          %v2360 = vlaneseq
          %v2361 = vand.u32 %v2360, 127
          %v2362 = vperm.slane %v2328, %v2361
          %v2363 = vadd.s32 %v2361, 4294967288
          %v2364 = vperm.slane %v2329, %v2363
          %vm2365 = vcmask 130112
          %v2366 = vsel %vm2365, %v2364, %v2362
          %v2367 = vperm.slane %v2330, %v2361
          %v2368 = vperm.slane %v2331, %v2363
          %v2369 = vsel %vm2365, %v2368, %v2367
          %v2370 = vperm.slane %v2332, %v2361
          %v2371 = vperm.slane %v2333, %v2363
          %v2372 = vsel %vm2365, %v2371, %v2370
          %v2373 = vperm.slane %v2334, %v2361
          %v2374 = vperm.slane %v2335, %v2363
          %v2375 = vsel %vm2365, %v2374, %v2373
          %v2376 = vperm.slane %v2336, %v2361
          %v2377 = vperm.slane %v2337, %v2363
          %v2378 = vsel %vm2365, %v2377, %v2376
          %v2379 = vperm.slane %v2338, %v2361
          %v2380 = vperm.slane %v2339, %v2363
          %v2381 = vsel %vm2365, %v2380, %v2379
          %v2382 = vperm.slane %v2340, %v2361
          %v2383 = vperm.slane %v2341, %v2363
          %v2384 = vsel %vm2365, %v2383, %v2382
          %v2385 = vperm.slane %v2342, %v2361
          %v2386 = vperm.slane %v2343, %v2363
          %v2387 = vsel %vm2365, %v2386, %v2385
          %vm2388 = vcmask 1041409
          %v2389 = vsel %vm2388, %v2369, %v2366
          %vm2390 = vcmask 1042434
          %v2391 = vsel %vm2390, %v2372, %v2389
          %vm2392 = vcmask 1043459
          %v2393 = vsel %vm2392, %v2375, %v2391
          %vm2394 = vcmask 1044484
          %v2395 = vsel %vm2394, %v2378, %v2393
          %vm2396 = vcmask 1045509
          %v2397 = vsel %vm2396, %v2381, %v2395
          %vm2398 = vcmask 1046534
          %v2399 = vsel %vm2398, %v2384, %v2397
          %vm2400 = vcmask 1047559
          %v2401 = vsel %vm2400, %v2387, %v2399
          %vm2403 = vcmask 130048
          %2404 = vst.msk [vmem:[%s356] sm:$0xff] %vm2403, %v2401
        $region72: #{srgan_g_forward.89} parent=51 // pred_fallthru
          _
        %s2405 = sand.u32 %s237, 1
        %s2406 = scalar_lea.sflag [#allocation7], %s2405
        %s2407 = sand.u32 %s237, 1
        %s2408 = smul.addr %s2407, 8
        %s2409 = scalar_lea.vmem [#allocation6], %s2408
        // Predicated region
        $region73: #{srgan_g_forward.89} parent=51 // pred_check
          %p2410 = pneg %p247
        $region74: #{srgan_g_forward.89} parent=51 // pred_check_branch
          %2412 = sbr.rel (%p2410) target = $region76
        $region75: #{srgan_g_forward.89} parent=51 // pred_region
          %s2413 = smul.u32 %s31, %s29
          %2415 = vsyncadd %s2406, 0
          %s2416 = smul.addr %s30, 2
          %s2417 = sadd.s32 %s2413, %s2416
          %s2418 = smul.addr %s2417, 8
          %s2419 = scalar_lea.hbm %s8, %s2418
          %s2421 = sshll.u32 %s2409, 4
          %s2422 = int_to_ptr.vmem [resolvable:$true] %s2421
          %s2423 = sshll.u32 %s2419, 4
          %s2424 = int_to_ptr.hbm [resolvable:$true] %s2423
          %2426 = dma.vmem_to_hbm [thread:$0]  %s2422, 128, %s2424, %s2406
        $region76: #{srgan_g_forward.89} parent=51 // pred_fallthru
          _
      $region52: #{srgan_g_forward.89} parent=5 // pred_fallthru
        _
      %p2427 = scmp.le.s32.totalorder 2, %s19
      // Predicated region
      $region77: #{srgan_g_forward.89} parent=5 // pred_check
        %p2428 = pneg %p2427
      $region78: #{srgan_g_forward.89} parent=5 // pred_check_branch
        %2430 = sbr.rel (%p2428) target = $region80
      $region79: #{srgan_g_forward.89} parent=5 // pred_region
        %s2431 = ssub.s32 %s19, 2
        // Predicated region
        $region81: #{srgan_g_forward.89} parent=79 // pred_check
          %p2432 = pneg %p253
        $region82: #{srgan_g_forward.89} parent=79 // pred_check_branch
          %2434 = sbr.rel (%p2432) target = $region84
        $region83: #{srgan_g_forward.89} parent=79 // pred_region
          %s2435 = sand.u32 %s238, 1
          %s2436 = scalar_lea.sflag [#allocation7], %s2435
          %s2437 = sand.u32 %s238, 1
          %s2438 = smul.addr %s2437, 8
          %s2439 = scalar_lea.vmem [#allocation6], %s2438
          %2441 = dma.done %s2436, 128
        $region84: #{srgan_g_forward.89} parent=79 // pred_fallthru
          _
      $region80: #{srgan_g_forward.89} parent=5 // pred_fallthru
        _
    $region6: #{srgan_g_forward.89} parent=1 // loop_footer
      %s23 = sadd.s32 1, %s19
    $region7: #{srgan_g_forward.89} parent=1 // loop_footer_branch
      %18 = sbr.rel target = $region3
    $region8: #{srgan_g_forward.89} parent=1 // loop_exit
      _
    %2442 = vsyncpa [#allocation7], 1
    %s2443 = scalar_lea.sflag [#allocation7], 1
    %2444 = vsyncpa %s2443, 1

</llo_original>
